<compile_context>
chip_gen: v7x
topology: tpu7x:2x2x1
jax: 0.10.0
libtpu: 0.0.40
codegen_flags: <defaults>
</compile_context>

<pallas_src>
import math
from functools import partial

import jax
import jax.numpy as jnp
import numpy as np
from jax import lax
from jax.experimental import pallas as pl
from jax.experimental.pallas import tpu as pltpu


_PNA_KEYS = ("wm_src", "wm_dst", "wm_e", "bm", "wu", "bu",
             "gamma", "beta", "wmix", "bmix")
_BF16_KEYS = ("wm_src", "wm_dst", "wu", "wmix")     # candidates for bf16 + prefetch
_BF16_MIN_ELEMS = 128 * 128                         # below this keep f32 / auto-VMEM


def _mm(a, w):
    """MXU matmul: activation takes the weight's dtype (bf16 for the large
    weights -> fast MXU path on v5e/v6e/v7x), f32 accumulation."""
    return jnp.dot(a.astype(w.dtype), w, preferred_element_type=jnp.float32)


def _qw(w):
    """Reference-side weight quantization matching prepare_params()."""
    return w.astype(jnp.bfloat16) if w.size >= _BF16_MIN_ELEMS else w


class _LazyWeight:
    """Weight ref whose HBM->VMEM DMA was started at kernel entry; the wait
    is emitted lazily right before first use (trace-time bookkeeping only)."""

    def __init__(self, ref, copy=None):
        self._ref = ref
        self._copy = copy
        self._ready = copy is None

    @property
    def shape(self):
        return self._ref.shape

    def get(self):
        if not self._ready:
            self._copy.wait()
            self._ready = True
        return self._ref


# ---------------------------------------------------------------------------
# Fused kernel body
# ---------------------------------------------------------------------------
def _pna_layer_body(h_parts, e_val, P, *, B, N, last):
    """One PNAConv_Module layer, entirely in VMEM.

    h_parts : list of (B*N, F_i) f32 values whose (virtual) feature-concat is
              the layer input.  Weights are sliced into matching K-blocks so
              the concat is never materialized (split-K partial dots).
    e_val   : (B*N*N, E) dense edge features (loaded once for all layers).
    P       : 10 _LazyWeight handles in _PNA_KEYS order (wu already has the
              mean aggregator folded into sum and rows [self|max|sum|std]).
    """
    (wms, wmd, wme, bm, wu, bu, g, bt, wmx, bmx) = P
    fm = bm.shape[-1]                                 # message feature width
    part_dims = [int(h.shape[1]) for h in h_parts]
    self_dim = sum(part_dims)

    def split_dot(w_ref, base):
        acc = None
        off = base
        for h, fi in zip(h_parts, part_dims):
            d = _mm(h, w_ref[off:off + fi, :])
            acc = d if acc is None else acc + d
            off += fi
        return acc

    # message linear M([h_src, h_dst, e]) over B*N rows (batch folded into M).
    p_src = split_dot(wms.get(), 0)                   # (B*N, fm)
    p_dst = split_dot(wmd.get(), 0) + bm.get()[...]   # message bias folded once

    # edge projection hoisted out of the per-batch loop: a single
    # (B*N*N, E) x (E, fm) MXU matmul, sliced per batch element below.
    eproj_all = _mm(e_val, wme.get()[...])            # (B*N*N, fm)

    # Per-graph message construction + {max, sum, std} aggregation (mean was
    # folded into sum at weight-prep time).  p_dst is constant over the src
    # axis, so it is NOT broadcast into the slab: sum/max get the shift added
    # after the reduction and std is shift-invariant.
    inv_n = 1.0 / float(N)
    sums, maxs, stds = [], [], []
    for b in range(B):                                # B tiny -> unrolled
        ps = p_src[b * N:(b + 1) * N, :]              # (N, fm)
        pd = p_dst[b * N:(b + 1) * N, :]
        slab = (lax.broadcast_in_dim(ps, (N, N, fm), (0, 2))
                + eproj_all[b * N * N:(b + 1) * N * N, :].reshape(N, N, fm))
        s = jnp.sum(slab, axis=0)                     # reduce over src
        mx = jnp.max(slab, axis=0)
        ssq = jnp.sum(slab * slab, axis=0)
        mean_s = s * inv_n
        var = jnp.maximum(ssq * inv_n - mean_s * mean_s, 0.0)
        sums.append(s + float(N) * pd)                # sum of (slab + pd)
        maxs.append(mx + pd)                          # max of (slab + pd)
        stds.append(jnp.sqrt(var + 1e-30))            # shift-invariant
    sum_m = jnp.concatenate(sums, axis=0)             # (B*N, fm)
    max_m = jnp.concatenate(maxs, axis=0)
    std_m = jnp.concatenate(stds, axis=0)

    # U([h, max, sum_eff, std]) as split-K partial dots against wu row-slices.
    wu_r = wu.get()
    u = split_dot(wu_r, 0)                            # self part(s)
    off = self_dim
    for agg in (max_m, sum_m, std_m):
        u = u + _mm(agg, wu_r[off:off + fm, :])
        off += fm
    u = (u + bu.get()[...]) * math.sqrt(float(N))     # snorm_n = sqrt(N)

    # BatchNorm1d (training mode -> biased batch statistics over all B*N rows).
    bn_mean = jnp.mean(u, axis=0, keepdims=True)
    bn_var = jnp.maximum(jnp.mean(u * u, axis=0, keepdims=True)
                         - bn_mean * bn_mean, 0.0)
    scale = g.get()[...] * lax.rsqrt(bn_var + 1e-5)   # rsqrt -> EUP slot
    shift = bt.get()[...] - bn_mean * scale
    x = u * scale + shift

    # mixing linear + LeakyReLU(0.01) (+ ReLU if not the last PNA module)
    m = _mm(x, wmx.get()[...]) + bmx.get()[...]
    m = jnp.where(m > 0.0, m, 0.01 * m)
    if not last:
        m = jnp.maximum(m, 0.0)
    return m


def _actor_fused_kernel(*refs, B, N, n_in, hbm_flags):
    in_refs = refs[:n_in]
    out_ref = refs[n_in]
    n_hbm = sum(hbm_flags)
    wbufs = refs[n_in + 1:n_in + 1 + n_hbm]
    sem = refs[n_in + 1 + n_hbm]

    # Start every HBM->VMEM weight DMA up front (in order of use) so they
    # stream behind the dm-MLP / early-layer compute; each is waited lazily
    # right before first use inside the layer bodies.
    handles = []
    j = 0
    for i, r in enumerate(in_refs):
        if hbm_flags[i]:
            cp = pltpu.make_async_copy(r, wbufs[j], sem.at[j])
            cp.start()
            handles.append(_LazyWeight(wbufs[j], cp))
            j += 1
        else:
            handles.append(_LazyWeight(r))

    (ns_h, e_h, dm_h, mask_h, dw1_h, db1_h, dw2_h, db2_h) = handles[:8]
    p1 = handles[8:18]
    p2 = handles[18:28]
    p3 = handles[28:38]

    e_val = e_h.get()[...]                            # (B*N*N, E), reused 3x

    # distance-matrix MLP: Linear_2(Linear_1(dm)), no activation in between.
    d1 = _mm(dm_h.get()[...], dw1_h.get()[...]) + db1_h.get()[...]
    d2 = _mm(d1, dw2_h.get()[...]) + db2_h.get()[...]   # (B*N, 32)

    h1 = _pna_layer_body([ns_h.get()[...]], e_val, p1, B=B, N=N, last=False)
    # layer-2 input is concat([h1, d2]); kept as two pieces via split-K dots.
    h2 = _pna_layer_body([h1, d2], e_val, p2, B=B, N=N, last=False)
    h3 = _pna_layer_body([h2], e_val, p3, B=B, N=N, last=True)

    # masked softmax over each batch element's full (N * out3) logits.
    out3 = h3.shape[-1]
    xf = jnp.where(mask_h.get()[...] == 0.0, -100000.0, h3)   # (B*N, out3)
    xb = xf.reshape(B, N, out3)                        # leading-dim split only
    mx = jnp.max(jnp.max(xb, axis=2, keepdims=True), axis=1, keepdims=True)
    ex = jnp.exp(xb - mx)
    s = jnp.sum(jnp.sum(ex, axis=2, keepdims=True), axis=1, keepdims=True)
    prob = ex * pl.reciprocal(s, approx=True)          # EUP reciprocal
    out_ref[...] = prob.reshape(B * N, out3)


# ---------------------------------------------------------------------------
# One-time parameter packing (fold 'mean' into 'sum', cast big weights bf16)
# ---------------------------------------------------------------------------
def prepare_params(params, N):
    """Fold the 'mean' aggregator rows of U into the 'sum' rows
    (mean = sum/N), reorder U rows to [self | max | sum_eff | std], cast the
    large weights to bf16 (halves the weight DMA + bf16 MXU operands) and
    make all biases 2-D.  Called once, outside the hot path."""
    def prep_pna(p):
        self_dim, fm = p["wm_src"].shape
        wu = p["wu"]
        wu_self = wu[:self_dim]
        wu_mean = wu[self_dim:self_dim + fm]
        wu_max = wu[self_dim + fm:self_dim + 2 * fm]
        wu_sum = wu[self_dim + 2 * fm:self_dim + 3 * fm]
        wu_std = wu[self_dim + 3 * fm:self_dim + 4 * fm]
        wu_eff = jnp.concatenate(
            [wu_self, wu_max, wu_sum + wu_mean * (1.0 / float(N)), wu_std], axis=0)
        out = {}
        for k in _PNA_KEYS:
            v = wu_eff if k == "wu" else p[k]
            if v.ndim == 1:
                v = v[None, :]
            if k in _BF16_KEYS and v.size >= _BF16_MIN_ELEMS:
                v = v.astype(jnp.bfloat16)
            out[k] = v
        return out

    return {"dm": {k: (v if v.ndim > 1 else v[None, :])
                   for k, v in params["dm"].items()},
            "pna1": prep_pna(params["pna1"]),
            "pna2": prep_pna(params["pna2"]),
            "pna3": prep_pna(params["pna3"])}


# ---------------------------------------------------------------------------
# pallas_call wrapper
# ---------------------------------------------------------------------------
def actor_forward(prep, ns, e_feat, dm, mask_fv):
    B, N, F0 = ns.shape
    E = e_feat.shape[-1]
    out3 = mask_fv.shape[-1]

    flat = [ns.reshape(B * N, F0),
            e_feat.reshape(B * N * N, E),
            dm.reshape(B * N, -1),
            mask_fv.reshape(B * N, out3),
            prep["dm"]["w1"], prep["dm"]["b1"],
            prep["dm"]["w2"], prep["dm"]["b2"]]
    for lname in ("pna1", "pna2", "pna3"):
        flat += [prep[lname][k] for k in _PNA_KEYS]

    # bf16 weights go through manual prefetch (ANY + async copy), the rest
    # through the normal auto-VMEM path.
    hbm_flags = tuple(bool(a.dtype == jnp.bfloat16) for a in flat)
    in_specs = [pl.BlockSpec(memory_space=pl.ANY) if f
                else pl.BlockSpec(memory_space=pltpu.MemorySpace.VMEM)
                for f in hbm_flags]
    scratch = [pltpu.VMEM(a.shape, a.dtype)
               for a, f in zip(flat, hbm_flags) if f]
    n_hbm = len(scratch)
    scratch.append(pltpu.SemaphoreType.DMA((n_hbm,)))

    out = pl.pallas_call(
        partial(_actor_fused_kernel, B=B, N=N, n_in=len(flat),
                hbm_flags=hbm_flags),
        out_shape=jax.ShapeDtypeStruct((B * N, out3), jnp.float32),
        in_specs=in_specs,
        out_specs=pl.BlockSpec(memory_space=pltpu.MemorySpace.VMEM),
        scratch_shapes=scratch,
        compiler_params=pltpu.CompilerParams(
            vmem_limit_bytes=32 * 1024 * 1024),
    )(*flat)
    return out.reshape(B, N * out3)


# ---------------------------------------------------------------------------
# Pure-JAX reference (for correctness check only).  Uses the same bf16 weight
# quantization / operand casting as the kernel so the comparison isolates the
# kernel's structural transformations (split-K, mean-fold, shift-extracted
# aggregation, fused BN, EUP reciprocal).
# ---------------------------------------------------------------------------
def _pna_layer_ref(p, h, e, last):
    B, N, F = h.shape
    msg = (_mm(h, _qw(p["wm_src"]))[:, :, None, :]     # src part, bcast over dst
           + _mm(h, _qw(p["wm_dst"]))[:, None, :, :]   # dst part, bcast over src
           + _mm(e, p["wm_e"]) + p["bm"])              # (B, Ns, Nd, fm)
    sum_m = msg.sum(axis=1)
    mean_m = sum_m / N
    max_m = msg.max(axis=1)
    mean_sq = (msg * msg).mean(axis=1)
    std = jnp.sqrt(jnp.maximum(mean_sq - mean_m * mean_m, 0.0) + 1e-30)
    h_neigh = jnp.concatenate([mean_m, max_m, sum_m, std], axis=-1)
    u = _mm(jnp.concatenate([h, h_neigh], axis=-1), _qw(p["wu"])) + p["bu"]
    u = u * math.sqrt(float(N))
    mean = u.mean(axis=(0, 1))
    var = jnp.maximum((u * u).mean(axis=(0, 1)) - mean * mean, 0.0)
    xn = (u - mean) / jnp.sqrt(var + 1e-5) * p["gamma"] + p["beta"]
    m = _mm(xn, _qw(p["wmix"])) + p["bmix"]
    m = jnp.where(m > 0.0, m, 0.01 * m)
    if last == 0:
        m = jnp.maximum(m, 0.0)
    return m


def actor_forward_ref(params, ns, e_feat, dm, mask_fv):
    B, N, _ = ns.shape
    pd = params["dm"]
    d2 = (dm @ pd["w1"] + pd["b1"]) @ pd["w2"] + pd["b2"]
    h1 = _pna_layer_ref(params["pna1"], ns, e_feat, 0)
    h1c = jnp.concatenate([h1, d2], axis=-1)
    h2 = _pna_layer_ref(params["pna2"], h1c, e_feat, 0)
    h3 = _pna_layer_ref(params["pna3"], h2, e_feat, 1)
    logits = h3.reshape(B, -1)
    mask = mask_fv.reshape(B, -1)
    xf = jnp.where(mask == 0.0, -100000.0, logits)
    return jax.nn.softmax(xf, axis=-1)


# ---------------------------------------------------------------------------
# Deterministic parameter init
# ---------------------------------------------------------------------------
def _lin(key, fan_in, fan_out, scale=0.1):
    kw, kb = jax.random.split(key)
    w = scale * jax.random.normal(kw, (fan_in, fan_out), jnp.float32)
    b = scale * jax.random.normal(kb, (1, fan_out), jnp.float32)
    return w, b


def init_pna(key, f_in, f_out, e_dim):
    ks = jax.random.split(key, 5)
    wm, bm = _lin(ks[0], 2 * f_in + e_dim, f_in)          # M linear
    wu, bu = _lin(ks[1], 5 * f_in, f_out)                 # U linear (self + 4 aggs)
    wmix, bmix = _lin(ks[2], f_out, f_out)                # mixing linear
    gamma = 1.0 + 0.1 * jax.random.normal(ks[3], (f_out,), jnp.float32)
    beta = 0.1 * jax.random.normal(ks[4], (f_out,), jnp.float32)
    return dict(wm_src=wm[:f_in], wm_dst=wm[f_in:2 * f_in], wm_e=wm[2 * f_in:],
                bm=bm, wu=wu, bu=bu, gamma=gamma, beta=beta,
                wmix=wmix, bmix=bmix)


if __name__ == "__main__":
    # Small, module-consistent sizes.
    in_node_feats, in_edge_feats = 8, 4
    num_nodes, out_tool, out_proc = 8, 4, 4
    B = 2
    N = num_nodes
    out3 = out_tool * out_proc        # PNAConvModule_3 output size

    key = jax.random.PRNGKey(0)
    k_par, k_ns, k_e, k_dm, k_mask = jax.random.split(key, 5)
    kp = jax.random.split(k_par, 5)

    w1, b1 = _lin(kp[0], num_nodes, 64)      # Linear_1
    w2, b2 = _lin(kp[1], 64, 32)             # Linear_2
    params = {
        "dm": {"w1": w1, "b1": b1, "w2": w2, "b2": b2},
        "pna1": init_pna(kp[2], in_node_feats, 384, in_edge_feats),
        "pna2": init_pna(kp[3], 384 + 32, 384, in_edge_feats),
        "pna3": init_pna(kp[4], 384, out3, in_edge_feats),
    }
    prep = prepare_params(params, N)          # one-time packing (bf16 + mean fold)

    ns = jax.random.normal(k_ns, (B, N, in_node_feats), jnp.float32)
    e_feat = jax.random.normal(k_e, (B, N, N, in_edge_feats), jnp.float32)
    dm = jax.random.normal(k_dm, (B, N, num_nodes), jnp.float32)
    mask_fv = (jax.random.uniform(k_mask, (B, N, out3)) > 0.5).astype(jnp.float32)

    out = jax.block_until_ready(actor_forward(prep, ns, e_feat, dm, mask_fv))
    ref = jax.block_until_ready(actor_forward_ref(params, ns, e_feat, dm, mask_fv))

    assert out.shape == (B, N * out3)
    # Tolerance covers the (intentional) EUP approx-reciprocal in the softmax
    # epilogue and the bf16 quantization point of the folded sum/mean U rows;
    # all other matmul dtypes are matched between kernel and reference.
    np.testing.assert_allclose(np.asarray(out), np.asarray(ref),
                               rtol=2e-2, atol=1e-4)
    print("KERNEL_OK")
</pallas_src>

<mosaic_0001>
module attributes {stable_mosaic.version = 11 : i64} {
  func.func @_actor_fused_kernel(%arg0: memref<16x8xf32, #tpu.memory_space<vmem>>, %arg1: memref<128x4xf32, #tpu.memory_space<vmem>>, %arg2: memref<16x8xf32, #tpu.memory_space<vmem>>, %arg3: memref<16x16xf32, #tpu.memory_space<vmem>>, %arg4: memref<8x64xf32, #tpu.memory_space<vmem>>, %arg5: memref<1x64xf32, #tpu.memory_space<vmem>>, %arg6: memref<64x32xf32, #tpu.memory_space<vmem>>, %arg7: memref<1x32xf32, #tpu.memory_space<vmem>>, %arg8: memref<8x8xf32, #tpu.memory_space<vmem>>, %arg9: memref<8x8xf32, #tpu.memory_space<vmem>>, %arg10: memref<4x8xf32, #tpu.memory_space<vmem>>, %arg11: memref<1x8xf32, #tpu.memory_space<vmem>>, %arg12: memref<32x384xf32, #tpu.memory_space<vmem>>, %arg13: memref<1x384xf32, #tpu.memory_space<vmem>>, %arg14: memref<1x384xf32, #tpu.memory_space<vmem>>, %arg15: memref<1x384xf32, #tpu.memory_space<vmem>>, %arg16: memref<384x384xbf16, #tpu.memory_space<any>>, %arg17: memref<1x384xf32, #tpu.memory_space<vmem>>, %arg18: memref<416x416xbf16, #tpu.memory_space<any>>, %arg19: memref<416x416xbf16, #tpu.memory_space<any>>, %arg20: memref<4x416xf32, #tpu.memory_space<vmem>>, %arg21: memref<1x416xf32, #tpu.memory_space<vmem>>, %arg22: memref<1664x384xbf16, #tpu.memory_space<any>>, %arg23: memref<1x384xf32, #tpu.memory_space<vmem>>, %arg24: memref<1x384xf32, #tpu.memory_space<vmem>>, %arg25: memref<1x384xf32, #tpu.memory_space<vmem>>, %arg26: memref<384x384xbf16, #tpu.memory_space<any>>, %arg27: memref<1x384xf32, #tpu.memory_space<vmem>>, %arg28: memref<384x384xbf16, #tpu.memory_space<any>>, %arg29: memref<384x384xbf16, #tpu.memory_space<any>>, %arg30: memref<4x384xf32, #tpu.memory_space<vmem>>, %arg31: memref<1x384xf32, #tpu.memory_space<vmem>>, %arg32: memref<1536x16xbf16, #tpu.memory_space<any>>, %arg33: memref<1x16xf32, #tpu.memory_space<vmem>>, %arg34: memref<1x16xf32, #tpu.memory_space<vmem>>, %arg35: memref<1x16xf32, #tpu.memory_space<vmem>>, %arg36: memref<16x16xf32, #tpu.memory_space<vmem>>, %arg37: memref<1x16xf32, #tpu.memory_space<vmem>>, %arg38: memref<16x16xf32, #tpu.memory_space<vmem>>, %arg39: memref<384x384xbf16, #tpu.memory_space<vmem>>, %arg40: memref<416x416xbf16, #tpu.memory_space<vmem>>, %arg41: memref<416x416xbf16, #tpu.memory_space<vmem>>, %arg42: memref<1664x384xbf16, #tpu.memory_space<vmem>>, %arg43: memref<384x384xbf16, #tpu.memory_space<vmem>>, %arg44: memref<384x384xbf16, #tpu.memory_space<vmem>>, %arg45: memref<384x384xbf16, #tpu.memory_space<vmem>>, %arg46: memref<1536x16xbf16, #tpu.memory_space<vmem>>, %arg47: memref<8x!tpu.dma_semaphore, #tpu.memory_space<semaphore_mem>>) attributes {dimension_semantics = [], scalar_prefetch = 0 : i64, scratch_operands = 9 : i64, tpu.core_type = #tpu.core_type<tc>} {
    %c0_i32 = arith.constant 0 : i32
    %0 = tpu.memref_slice %arg47[%c0_i32] : memref<8x!tpu.dma_semaphore, #tpu.memory_space<semaphore_mem>> -> memref<1x!tpu.dma_semaphore, #tpu.memory_space<semaphore_mem>>
    %1 = tpu.memref_squeeze %0 : memref<1x!tpu.dma_semaphore, #tpu.memory_space<semaphore_mem>> -> memref<!tpu.dma_semaphore, #tpu.memory_space<semaphore_mem>>
    tpu.enqueue_dma source(%arg16 : memref<384x384xbf16, #tpu.memory_space<any>>) target(%arg39 : memref<384x384xbf16, #tpu.memory_space<vmem>>) target_semaphore(%1 : memref<!tpu.dma_semaphore, #tpu.memory_space<semaphore_mem>>)
    %c1_i32 = arith.constant 1 : i32
    %2 = tpu.memref_slice %arg47[%c1_i32] : memref<8x!tpu.dma_semaphore, #tpu.memory_space<semaphore_mem>> -> memref<1x!tpu.dma_semaphore, #tpu.memory_space<semaphore_mem>>
    %3 = tpu.memref_squeeze %2 : memref<1x!tpu.dma_semaphore, #tpu.memory_space<semaphore_mem>> -> memref<!tpu.dma_semaphore, #tpu.memory_space<semaphore_mem>>
    tpu.enqueue_dma source(%arg18 : memref<416x416xbf16, #tpu.memory_space<any>>) target(%arg40 : memref<416x416xbf16, #tpu.memory_space<vmem>>) target_semaphore(%3 : memref<!tpu.dma_semaphore, #tpu.memory_space<semaphore_mem>>)
    %c2_i32 = arith.constant 2 : i32
    %4 = tpu.memref_slice %arg47[%c2_i32] : memref<8x!tpu.dma_semaphore, #tpu.memory_space<semaphore_mem>> -> memref<1x!tpu.dma_semaphore, #tpu.memory_space<semaphore_mem>>
    %5 = tpu.memref_squeeze %4 : memref<1x!tpu.dma_semaphore, #tpu.memory_space<semaphore_mem>> -> memref<!tpu.dma_semaphore, #tpu.memory_space<semaphore_mem>>
    tpu.enqueue_dma source(%arg19 : memref<416x416xbf16, #tpu.memory_space<any>>) target(%arg41 : memref<416x416xbf16, #tpu.memory_space<vmem>>) target_semaphore(%5 : memref<!tpu.dma_semaphore, #tpu.memory_space<semaphore_mem>>)
    %c3_i32 = arith.constant 3 : i32
    %6 = tpu.memref_slice %arg47[%c3_i32] : memref<8x!tpu.dma_semaphore, #tpu.memory_space<semaphore_mem>> -> memref<1x!tpu.dma_semaphore, #tpu.memory_space<semaphore_mem>>
    %7 = tpu.memref_squeeze %6 : memref<1x!tpu.dma_semaphore, #tpu.memory_space<semaphore_mem>> -> memref<!tpu.dma_semaphore, #tpu.memory_space<semaphore_mem>>
    tpu.enqueue_dma source(%arg22 : memref<1664x384xbf16, #tpu.memory_space<any>>) target(%arg42 : memref<1664x384xbf16, #tpu.memory_space<vmem>>) target_semaphore(%7 : memref<!tpu.dma_semaphore, #tpu.memory_space<semaphore_mem>>)
    %c4_i32 = arith.constant 4 : i32
    %8 = tpu.memref_slice %arg47[%c4_i32] : memref<8x!tpu.dma_semaphore, #tpu.memory_space<semaphore_mem>> -> memref<1x!tpu.dma_semaphore, #tpu.memory_space<semaphore_mem>>
    %9 = tpu.memref_squeeze %8 : memref<1x!tpu.dma_semaphore, #tpu.memory_space<semaphore_mem>> -> memref<!tpu.dma_semaphore, #tpu.memory_space<semaphore_mem>>
    tpu.enqueue_dma source(%arg26 : memref<384x384xbf16, #tpu.memory_space<any>>) target(%arg43 : memref<384x384xbf16, #tpu.memory_space<vmem>>) target_semaphore(%9 : memref<!tpu.dma_semaphore, #tpu.memory_space<semaphore_mem>>)
    %c5_i32 = arith.constant 5 : i32
    %10 = tpu.memref_slice %arg47[%c5_i32] : memref<8x!tpu.dma_semaphore, #tpu.memory_space<semaphore_mem>> -> memref<1x!tpu.dma_semaphore, #tpu.memory_space<semaphore_mem>>
    %11 = tpu.memref_squeeze %10 : memref<1x!tpu.dma_semaphore, #tpu.memory_space<semaphore_mem>> -> memref<!tpu.dma_semaphore, #tpu.memory_space<semaphore_mem>>
    tpu.enqueue_dma source(%arg28 : memref<384x384xbf16, #tpu.memory_space<any>>) target(%arg44 : memref<384x384xbf16, #tpu.memory_space<vmem>>) target_semaphore(%11 : memref<!tpu.dma_semaphore, #tpu.memory_space<semaphore_mem>>)
    %c6_i32 = arith.constant 6 : i32
    %12 = tpu.memref_slice %arg47[%c6_i32] : memref<8x!tpu.dma_semaphore, #tpu.memory_space<semaphore_mem>> -> memref<1x!tpu.dma_semaphore, #tpu.memory_space<semaphore_mem>>
    %13 = tpu.memref_squeeze %12 : memref<1x!tpu.dma_semaphore, #tpu.memory_space<semaphore_mem>> -> memref<!tpu.dma_semaphore, #tpu.memory_space<semaphore_mem>>
    tpu.enqueue_dma source(%arg29 : memref<384x384xbf16, #tpu.memory_space<any>>) target(%arg45 : memref<384x384xbf16, #tpu.memory_space<vmem>>) target_semaphore(%13 : memref<!tpu.dma_semaphore, #tpu.memory_space<semaphore_mem>>)
    %c7_i32 = arith.constant 7 : i32
    %14 = tpu.memref_slice %arg47[%c7_i32] : memref<8x!tpu.dma_semaphore, #tpu.memory_space<semaphore_mem>> -> memref<1x!tpu.dma_semaphore, #tpu.memory_space<semaphore_mem>>
    %15 = tpu.memref_squeeze %14 : memref<1x!tpu.dma_semaphore, #tpu.memory_space<semaphore_mem>> -> memref<!tpu.dma_semaphore, #tpu.memory_space<semaphore_mem>>
    tpu.enqueue_dma source(%arg32 : memref<1536x16xbf16, #tpu.memory_space<any>>) target(%arg46 : memref<1536x16xbf16, #tpu.memory_space<vmem>>) target_semaphore(%15 : memref<!tpu.dma_semaphore, #tpu.memory_space<semaphore_mem>>)
    %c0 = arith.constant 0 : index
    %c0_0 = arith.constant 0 : index
    %16 = vector.load %arg1[%c0, %c0_0] : memref<128x4xf32, #tpu.memory_space<vmem>>, vector<128x4xf32>
    %c0_1 = arith.constant 0 : index
    %c0_2 = arith.constant 0 : index
    %17 = vector.load %arg2[%c0_1, %c0_2] : memref<16x8xf32, #tpu.memory_space<vmem>>, vector<16x8xf32>
    %c0_3 = arith.constant 0 : index
    %c0_4 = arith.constant 0 : index
    %18 = vector.load %arg4[%c0_3, %c0_4] : memref<8x64xf32, #tpu.memory_space<vmem>>, vector<8x64xf32>
    %cst = arith.constant dense<0.000000e+00> : vector<16x64xf32>
    %19 = tpu.matmul %17, %18, %cst {dimension_numbers = #tpu.dot_dimension_numbers<[1], [0], [0], [1], [0, 0, 1, 1], [], []>} : vector<16x8xf32>, vector<8x64xf32>, vector<16x64xf32> -> vector<16x64xf32>
    %c0_5 = arith.constant 0 : index
    %c0_6 = arith.constant 0 : index
    %20 = vector.load %arg5[%c0_5, %c0_6] : memref<1x64xf32, #tpu.memory_space<vmem>>, vector<1x64xf32>
    %21 = vector.broadcast %20 : vector<1x64xf32> to vector<16x64xf32>
    %22 = arith.addf %19, %21 : vector<16x64xf32>
    %c0_7 = arith.constant 0 : index
    %c0_8 = arith.constant 0 : index
    %23 = vector.load %arg6[%c0_7, %c0_8] : memref<64x32xf32, #tpu.memory_space<vmem>>, vector<64x32xf32>
    %cst_9 = arith.constant dense<0.000000e+00> : vector<16x32xf32>
    %24 = tpu.matmul %22, %23, %cst_9 {dimension_numbers = #tpu.dot_dimension_numbers<[1], [0], [0], [1], [0, 0, 1, 1], [], []>} : vector<16x64xf32>, vector<64x32xf32>, vector<16x32xf32> -> vector<16x32xf32>
    %c0_10 = arith.constant 0 : index
    %c0_11 = arith.constant 0 : index
    %25 = vector.load %arg7[%c0_10, %c0_11] : memref<1x32xf32, #tpu.memory_space<vmem>>, vector<1x32xf32>
    %26 = vector.broadcast %25 : vector<1x32xf32> to vector<16x32xf32>
    %27 = arith.addf %24, %26 : vector<16x32xf32>
    %c0_12 = arith.constant 0 : index
    %c0_13 = arith.constant 0 : index
    %28 = vector.load %arg0[%c0_12, %c0_13] : memref<16x8xf32, #tpu.memory_space<vmem>>, vector<16x8xf32>
    %c0_14 = arith.constant 0 : index
    %c0_15 = arith.constant 0 : index
    %29 = vector.load %arg8[%c0_14, %c0_15] : memref<8x8xf32, #tpu.memory_space<vmem>>, vector<8x8xf32>
    %cst_16 = arith.constant dense<0.000000e+00> : vector<16x8xf32>
    %30 = tpu.matmul %28, %29, %cst_16 {dimension_numbers = #tpu.dot_dimension_numbers<[1], [0], [0], [1], [0, 0, 1, 1], [], []>} : vector<16x8xf32>, vector<8x8xf32>, vector<16x8xf32> -> vector<16x8xf32>
    %c0_17 = arith.constant 0 : index
    %c0_18 = arith.constant 0 : index
    %31 = vector.load %arg9[%c0_17, %c0_18] : memref<8x8xf32, #tpu.memory_space<vmem>>, vector<8x8xf32>
    %cst_19 = arith.constant dense<0.000000e+00> : vector<16x8xf32>
    %32 = tpu.matmul %28, %31, %cst_19 {dimension_numbers = #tpu.dot_dimension_numbers<[1], [0], [0], [1], [0, 0, 1, 1], [], []>} : vector<16x8xf32>, vector<8x8xf32>, vector<16x8xf32> -> vector<16x8xf32>
    %c0_20 = arith.constant 0 : index
    %c0_21 = arith.constant 0 : index
    %33 = vector.load %arg11[%c0_20, %c0_21] : memref<1x8xf32, #tpu.memory_space<vmem>>, vector<1x8xf32>
    %34 = vector.broadcast %33 : vector<1x8xf32> to vector<16x8xf32>
    %35 = arith.addf %32, %34 : vector<16x8xf32>
    %c0_22 = arith.constant 0 : index
    %c0_23 = arith.constant 0 : index
    %36 = vector.load %arg10[%c0_22, %c0_23] : memref<4x8xf32, #tpu.memory_space<vmem>>, vector<4x8xf32>
    %cst_24 = arith.constant dense<0.000000e+00> : vector<128x8xf32>
    %37 = tpu.matmul %16, %36, %cst_24 {dimension_numbers = #tpu.dot_dimension_numbers<[1], [0], [0], [1], [0, 0, 1, 1], [], []>} : vector<128x4xf32>, vector<4x8xf32>, vector<128x8xf32> -> vector<128x8xf32>
    %38 = vector.extract_strided_slice %30 {offsets = [0, 0], sizes = [8, 8], strides = [1, 1]} : vector<16x8xf32> to vector<8x8xf32>
    %39 = vector.extract_strided_slice %35 {offsets = [0, 0], sizes = [8, 8], strides = [1, 1]} : vector<16x8xf32> to vector<8x8xf32>
    %40 = vector.shape_cast %38 : vector<8x8xf32> to vector<8x1x8xf32>
    %41 = vector.broadcast %40 : vector<8x1x8xf32> to vector<8x8x8xf32>
    %42 = vector.extract_strided_slice %37 {offsets = [0, 0], sizes = [64, 8], strides = [1, 1]} : vector<128x8xf32> to vector<64x8xf32>
    %43 = vector.shape_cast %42 : vector<64x8xf32> to vector<8x8x8xf32>
    %44 = arith.addf %41, %43 : vector<8x8x8xf32>
    %cst_25 = arith.constant dense<0.000000e+00> : vector<8x8xf32>
    %45 = vector.multi_reduction <add>, %44, %cst_25 [0] : vector<8x8x8xf32> to vector<8x8xf32>
    %cst_26 = arith.constant dense<0xFF800000> : vector<8x8xf32>
    %46 = vector.multi_reduction <maximumf>, %44, %cst_26 [0] : vector<8x8x8xf32> to vector<8x8xf32>
    %47 = arith.mulf %44, %44 : vector<8x8x8xf32>
    %cst_27 = arith.constant dense<0.000000e+00> : vector<8x8xf32>
    %48 = vector.multi_reduction <add>, %47, %cst_27 [0] : vector<8x8x8xf32> to vector<8x8xf32>
    %cst_28 = arith.constant 1.250000e-01 : f32
    %49 = vector.broadcast %cst_28 : f32 to vector<8x8xf32>
    %50 = arith.mulf %45, %49 : vector<8x8xf32>
    %cst_29 = arith.constant 1.250000e-01 : f32
    %51 = vector.broadcast %cst_29 : f32 to vector<8x8xf32>
    %52 = arith.mulf %48, %51 : vector<8x8xf32>
    %53 = arith.mulf %50, %50 : vector<8x8xf32>
    %54 = arith.subf %52, %53 : vector<8x8xf32>
    %cst_30 = arith.constant 0.000000e+00 : f32
    %55 = vector.broadcast %cst_30 : f32 to vector<8x8xf32>
    %56 = arith.maximumf %54, %55 : vector<8x8xf32>
    %cst_31 = arith.constant 8.000000e+00 : f32
    %57 = vector.broadcast %cst_31 : f32 to vector<8x8xf32>
    %58 = arith.mulf %57, %39 : vector<8x8xf32>
    %59 = arith.addf %45, %58 : vector<8x8xf32>
    %60 = arith.addf %46, %39 : vector<8x8xf32>
    %cst_32 = arith.constant 1.000000e-30 : f32
    %61 = vector.broadcast %cst_32 : f32 to vector<8x8xf32>
    %62 = arith.addf %56, %61 : vector<8x8xf32>
    %63 = math.sqrt %62 : vector<8x8xf32>
    %64 = vector.extract_strided_slice %30 {offsets = [8, 0], sizes = [8, 8], strides = [1, 1]} : vector<16x8xf32> to vector<8x8xf32>
    %65 = vector.extract_strided_slice %35 {offsets = [8, 0], sizes = [8, 8], strides = [1, 1]} : vector<16x8xf32> to vector<8x8xf32>
    %66 = vector.shape_cast %64 : vector<8x8xf32> to vector<8x1x8xf32>
    %67 = vector.broadcast %66 : vector<8x1x8xf32> to vector<8x8x8xf32>
    %68 = vector.extract_strided_slice %37 {offsets = [64, 0], sizes = [64, 8], strides = [1, 1]} : vector<128x8xf32> to vector<64x8xf32>
    %69 = vector.shape_cast %68 : vector<64x8xf32> to vector<8x8x8xf32>
    %70 = arith.addf %67, %69 : vector<8x8x8xf32>
    %cst_33 = arith.constant dense<0.000000e+00> : vector<8x8xf32>
    %71 = vector.multi_reduction <add>, %70, %cst_33 [0] : vector<8x8x8xf32> to vector<8x8xf32>
    %cst_34 = arith.constant dense<0xFF800000> : vector<8x8xf32>
    %72 = vector.multi_reduction <maximumf>, %70, %cst_34 [0] : vector<8x8x8xf32> to vector<8x8xf32>
    %73 = arith.mulf %70, %70 : vector<8x8x8xf32>
    %cst_35 = arith.constant dense<0.000000e+00> : vector<8x8xf32>
    %74 = vector.multi_reduction <add>, %73, %cst_35 [0] : vector<8x8x8xf32> to vector<8x8xf32>
    %cst_36 = arith.constant 1.250000e-01 : f32
    %75 = vector.broadcast %cst_36 : f32 to vector<8x8xf32>
    %76 = arith.mulf %71, %75 : vector<8x8xf32>
    %cst_37 = arith.constant 1.250000e-01 : f32
    %77 = vector.broadcast %cst_37 : f32 to vector<8x8xf32>
    %78 = arith.mulf %74, %77 : vector<8x8xf32>
    %79 = arith.mulf %76, %76 : vector<8x8xf32>
    %80 = arith.subf %78, %79 : vector<8x8xf32>
    %cst_38 = arith.constant 0.000000e+00 : f32
    %81 = vector.broadcast %cst_38 : f32 to vector<8x8xf32>
    %82 = arith.maximumf %80, %81 : vector<8x8xf32>
    %cst_39 = arith.constant 8.000000e+00 : f32
    %83 = vector.broadcast %cst_39 : f32 to vector<8x8xf32>
    %84 = arith.mulf %83, %65 : vector<8x8xf32>
    %85 = arith.addf %71, %84 : vector<8x8xf32>
    %86 = arith.addf %72, %65 : vector<8x8xf32>
    %cst_40 = arith.constant 1.000000e-30 : f32
    %87 = vector.broadcast %cst_40 : f32 to vector<8x8xf32>
    %88 = arith.addf %82, %87 : vector<8x8xf32>
    %89 = math.sqrt %88 : vector<8x8xf32>
    %90 = tpu.concatenate %59, %85 in 0 : vector<8x8xf32>, vector<8x8xf32> -> vector<16x8xf32>
    %91 = tpu.concatenate %60, %86 in 0 : vector<8x8xf32>, vector<8x8xf32> -> vector<16x8xf32>
    %92 = tpu.concatenate %63, %89 in 0 : vector<8x8xf32>, vector<8x8xf32> -> vector<16x8xf32>
    %c0_41 = arith.constant 0 : index
    %c0_42 = arith.constant 0 : index
    %93 = vector.load %arg12[%c0_41, %c0_42] : memref<32x384xf32, #tpu.memory_space<vmem>>, vector<8x384xf32>
    %cst_43 = arith.constant dense<0.000000e+00> : vector<16x384xf32>
    %94 = tpu.matmul %28, %93, %cst_43 {dimension_numbers = #tpu.dot_dimension_numbers<[1], [0], [0], [1], [0, 0, 1, 1], [], []>} : vector<16x8xf32>, vector<8x384xf32>, vector<16x384xf32> -> vector<16x384xf32>
    %c8 = arith.constant 8 : index
    %c0_44 = arith.constant 0 : index
    %95 = vector.load %arg12[%c8, %c0_44] : memref<32x384xf32, #tpu.memory_space<vmem>>, vector<8x384xf32>
    %cst_45 = arith.constant dense<0.000000e+00> : vector<16x384xf32>
    %96 = tpu.matmul %91, %95, %cst_45 {dimension_numbers = #tpu.dot_dimension_numbers<[1], [0], [0], [1], [0, 0, 1, 1], [], []>} : vector<16x8xf32>, vector<8x384xf32>, vector<16x384xf32> -> vector<16x384xf32>
    %97 = arith.addf %94, %96 : vector<16x384xf32>
    %c16 = arith.constant 16 : index
    %c0_46 = arith.constant 0 : index
    %98 = vector.load %arg12[%c16, %c0_46] : memref<32x384xf32, #tpu.memory_space<vmem>>, vector<8x384xf32>
    %cst_47 = arith.constant dense<0.000000e+00> : vector<16x384xf32>
    %99 = tpu.matmul %90, %98, %cst_47 {dimension_numbers = #tpu.dot_dimension_numbers<[1], [0], [0], [1], [0, 0, 1, 1], [], []>} : vector<16x8xf32>, vector<8x384xf32>, vector<16x384xf32> -> vector<16x384xf32>
    %100 = arith.addf %97, %99 : vector<16x384xf32>
    %c24 = arith.constant 24 : index
    %c0_48 = arith.constant 0 : index
    %101 = vector.load %arg12[%c24, %c0_48] : memref<32x384xf32, #tpu.memory_space<vmem>>, vector<8x384xf32>
    %cst_49 = arith.constant dense<0.000000e+00> : vector<16x384xf32>
    %102 = tpu.matmul %92, %101, %cst_49 {dimension_numbers = #tpu.dot_dimension_numbers<[1], [0], [0], [1], [0, 0, 1, 1], [], []>} : vector<16x8xf32>, vector<8x384xf32>, vector<16x384xf32> -> vector<16x384xf32>
    %103 = arith.addf %100, %102 : vector<16x384xf32>
    %c0_50 = arith.constant 0 : index
    %c0_51 = arith.constant 0 : index
    %104 = vector.load %arg13[%c0_50, %c0_51] : memref<1x384xf32, #tpu.memory_space<vmem>>, vector<1x384xf32>
    %105 = vector.broadcast %104 : vector<1x384xf32> to vector<16x384xf32>
    %106 = arith.addf %103, %105 : vector<16x384xf32>
    %cst_52 = arith.constant 2.82842708 : f32
    %107 = vector.broadcast %cst_52 : f32 to vector<16x384xf32>
    %108 = arith.mulf %106, %107 : vector<16x384xf32>
    %cst_53 = arith.constant dense<0.000000e+00> : vector<384xf32>
    %109 = vector.multi_reduction <add>, %108, %cst_53 [0] : vector<16x384xf32> to vector<384xf32>
    %110 = vector.shape_cast %109 : vector<384xf32> to vector<1x384xf32>
    %cst_54 = arith.constant 1.600000e+01 : f32
    %111 = vector.broadcast %cst_54 : f32 to vector<1x384xf32>
    %112 = arith.divf %110, %111 : vector<1x384xf32>
    %113 = arith.mulf %108, %108 : vector<16x384xf32>
    %cst_55 = arith.constant dense<0.000000e+00> : vector<384xf32>
    %114 = vector.multi_reduction <add>, %113, %cst_55 [0] : vector<16x384xf32> to vector<384xf32>
    %115 = vector.shape_cast %114 : vector<384xf32> to vector<1x384xf32>
    %cst_56 = arith.constant 1.600000e+01 : f32
    %116 = vector.broadcast %cst_56 : f32 to vector<1x384xf32>
    %117 = arith.divf %115, %116 : vector<1x384xf32>
    %118 = arith.mulf %112, %112 : vector<1x384xf32>
    %119 = arith.subf %117, %118 : vector<1x384xf32>
    %cst_57 = arith.constant 0.000000e+00 : f32
    %120 = vector.broadcast %cst_57 : f32 to vector<1x384xf32>
    %121 = arith.maximumf %119, %120 : vector<1x384xf32>
    %c0_58 = arith.constant 0 : index
    %c0_59 = arith.constant 0 : index
    %122 = vector.load %arg14[%c0_58, %c0_59] : memref<1x384xf32, #tpu.memory_space<vmem>>, vector<1x384xf32>
    %cst_60 = arith.constant 9.99999974E-6 : f32
    %123 = vector.broadcast %cst_60 : f32 to vector<1x384xf32>
    %124 = arith.addf %121, %123 : vector<1x384xf32>
    %125 = math.rsqrt %124 : vector<1x384xf32>
    %126 = arith.mulf %122, %125 : vector<1x384xf32>
    %c0_61 = arith.constant 0 : index
    %c0_62 = arith.constant 0 : index
    %127 = vector.load %arg15[%c0_61, %c0_62] : memref<1x384xf32, #tpu.memory_space<vmem>>, vector<1x384xf32>
    %128 = arith.mulf %112, %126 : vector<1x384xf32>
    %129 = arith.subf %127, %128 : vector<1x384xf32>
    %130 = vector.broadcast %126 : vector<1x384xf32> to vector<16x384xf32>
    %131 = arith.mulf %108, %130 : vector<16x384xf32>
    %132 = vector.broadcast %129 : vector<1x384xf32> to vector<16x384xf32>
    %133 = arith.addf %131, %132 : vector<16x384xf32>
    %c0_i32_63 = arith.constant 0 : i32
    %134 = tpu.memref_slice %arg47[%c0_i32_63] : memref<8x!tpu.dma_semaphore, #tpu.memory_space<semaphore_mem>> -> memref<1x!tpu.dma_semaphore, #tpu.memory_space<semaphore_mem>>
    %135 = tpu.memref_squeeze %134 : memref<1x!tpu.dma_semaphore, #tpu.memory_space<semaphore_mem>> -> memref<!tpu.dma_semaphore, #tpu.memory_space<semaphore_mem>>
    tpu.wait_dma2 semaphore(%135 : memref<!tpu.dma_semaphore, #tpu.memory_space<semaphore_mem>>) src(%arg16 : memref<384x384xbf16, #tpu.memory_space<any>>) dst(%arg39 : memref<384x384xbf16, #tpu.memory_space<vmem>>)
    %c0_64 = arith.constant 0 : index
    %c0_65 = arith.constant 0 : index
    %136 = vector.load %arg39[%c0_64, %c0_65] : memref<384x384xbf16, #tpu.memory_space<vmem>>, vector<384x384xbf16>
    %137 = arith.truncf %133 : vector<16x384xf32> to vector<16x384xbf16>
    %cst_66 = arith.constant dense<0.000000e+00> : vector<16x384xf32>
    %138 = tpu.matmul %137, %136, %cst_66 {dimension_numbers = #tpu.dot_dimension_numbers<[1], [0], [0], [1], [0, 0, 1, 1], [], []>} : vector<16x384xbf16>, vector<384x384xbf16>, vector<16x384xf32> -> vector<16x384xf32>
    %c0_67 = arith.constant 0 : index
    %c0_68 = arith.constant 0 : index
    %139 = vector.load %arg17[%c0_67, %c0_68] : memref<1x384xf32, #tpu.memory_space<vmem>>, vector<1x384xf32>
    %140 = vector.broadcast %139 : vector<1x384xf32> to vector<16x384xf32>
    %141 = arith.addf %138, %140 : vector<16x384xf32>
    %cst_69 = arith.constant 0.000000e+00 : f32
    %142 = vector.broadcast %cst_69 : f32 to vector<16x384xf32>
    %143 = arith.cmpf ogt, %141, %142 : vector<16x384xf32>
    %cst_70 = arith.constant 0.00999999977 : f32
    %144 = vector.broadcast %cst_70 : f32 to vector<16x384xf32>
    %145 = arith.mulf %144, %141 : vector<16x384xf32>
    %146 = arith.select %143, %141, %145 : vector<16x384xi1>, vector<16x384xf32>
    %cst_71 = arith.constant 0.000000e+00 : f32
    %147 = vector.broadcast %cst_71 : f32 to vector<16x384xf32>
    %148 = arith.maximumf %146, %147 : vector<16x384xf32>
    %c1_i32_72 = arith.constant 1 : i32
    %149 = tpu.memref_slice %arg47[%c1_i32_72] : memref<8x!tpu.dma_semaphore, #tpu.memory_space<semaphore_mem>> -> memref<1x!tpu.dma_semaphore, #tpu.memory_space<semaphore_mem>>
    %150 = tpu.memref_squeeze %149 : memref<1x!tpu.dma_semaphore, #tpu.memory_space<semaphore_mem>> -> memref<!tpu.dma_semaphore, #tpu.memory_space<semaphore_mem>>
    tpu.wait_dma2 semaphore(%150 : memref<!tpu.dma_semaphore, #tpu.memory_space<semaphore_mem>>) src(%arg18 : memref<416x416xbf16, #tpu.memory_space<any>>) dst(%arg40 : memref<416x416xbf16, #tpu.memory_space<vmem>>)
    %c0_73 = arith.constant 0 : index
    %c0_74 = arith.constant 0 : index
    %151 = vector.load %arg40[%c0_73, %c0_74] : memref<416x416xbf16, #tpu.memory_space<vmem>>, vector<384x416xbf16>
    %152 = arith.truncf %148 : vector<16x384xf32> to vector<16x384xbf16>
    %cst_75 = arith.constant dense<0.000000e+00> : vector<16x416xf32>
    %153 = tpu.matmul %152, %151, %cst_75 {dimension_numbers = #tpu.dot_dimension_numbers<[1], [0], [0], [1], [0, 0, 1, 1], [], []>} : vector<16x384xbf16>, vector<384x416xbf16>, vector<16x416xf32> -> vector<16x416xf32>
    %c384 = arith.constant 384 : index
    %c0_76 = arith.constant 0 : index
    %154 = vector.load %arg40[%c384, %c0_76] : memref<416x416xbf16, #tpu.memory_space<vmem>>, vector<32x416xbf16>
    %155 = arith.truncf %27 : vector<16x32xf32> to vector<16x32xbf16>
    %cst_77 = arith.constant dense<0.000000e+00> : vector<16x416xf32>
    %156 = tpu.matmul %155, %154, %cst_77 {dimension_numbers = #tpu.dot_dimension_numbers<[1], [0], [0], [1], [0, 0, 1, 1], [], []>} : vector<16x32xbf16>, vector<32x416xbf16>, vector<16x416xf32> -> vector<16x416xf32>
    %157 = arith.addf %153, %156 : vector<16x416xf32>
    %c2_i32_78 = arith.constant 2 : i32
    %158 = tpu.memref_slice %arg47[%c2_i32_78] : memref<8x!tpu.dma_semaphore, #tpu.memory_space<semaphore_mem>> -> memref<1x!tpu.dma_semaphore, #tpu.memory_space<semaphore_mem>>
    %159 = tpu.memref_squeeze %158 : memref<1x!tpu.dma_semaphore, #tpu.memory_space<semaphore_mem>> -> memref<!tpu.dma_semaphore, #tpu.memory_space<semaphore_mem>>
    tpu.wait_dma2 semaphore(%159 : memref<!tpu.dma_semaphore, #tpu.memory_space<semaphore_mem>>) src(%arg19 : memref<416x416xbf16, #tpu.memory_space<any>>) dst(%arg41 : memref<416x416xbf16, #tpu.memory_space<vmem>>)
    %c0_79 = arith.constant 0 : index
    %c0_80 = arith.constant 0 : index
    %160 = vector.load %arg41[%c0_79, %c0_80] : memref<416x416xbf16, #tpu.memory_space<vmem>>, vector<384x416xbf16>
    %161 = arith.truncf %148 : vector<16x384xf32> to vector<16x384xbf16>
    %cst_81 = arith.constant dense<0.000000e+00> : vector<16x416xf32>
    %162 = tpu.matmul %161, %160, %cst_81 {dimension_numbers = #tpu.dot_dimension_numbers<[1], [0], [0], [1], [0, 0, 1, 1], [], []>} : vector<16x384xbf16>, vector<384x416xbf16>, vector<16x416xf32> -> vector<16x416xf32>
    %c384_82 = arith.constant 384 : index
    %c0_83 = arith.constant 0 : index
    %163 = vector.load %arg41[%c384_82, %c0_83] : memref<416x416xbf16, #tpu.memory_space<vmem>>, vector<32x416xbf16>
    %164 = arith.truncf %27 : vector<16x32xf32> to vector<16x32xbf16>
    %cst_84 = arith.constant dense<0.000000e+00> : vector<16x416xf32>
    %165 = tpu.matmul %164, %163, %cst_84 {dimension_numbers = #tpu.dot_dimension_numbers<[1], [0], [0], [1], [0, 0, 1, 1], [], []>} : vector<16x32xbf16>, vector<32x416xbf16>, vector<16x416xf32> -> vector<16x416xf32>
    %166 = arith.addf %162, %165 : vector<16x416xf32>
    %c0_85 = arith.constant 0 : index
    %c0_86 = arith.constant 0 : index
    %167 = vector.load %arg21[%c0_85, %c0_86] : memref<1x416xf32, #tpu.memory_space<vmem>>, vector<1x416xf32>
    %168 = vector.broadcast %167 : vector<1x416xf32> to vector<16x416xf32>
    %169 = arith.addf %166, %168 : vector<16x416xf32>
    %c0_87 = arith.constant 0 : index
    %c0_88 = arith.constant 0 : index
    %170 = vector.load %arg20[%c0_87, %c0_88] : memref<4x416xf32, #tpu.memory_space<vmem>>, vector<4x416xf32>
    %cst_89 = arith.constant dense<0.000000e+00> : vector<128x416xf32>
    %171 = tpu.matmul %16, %170, %cst_89 {dimension_numbers = #tpu.dot_dimension_numbers<[1], [0], [0], [1], [0, 0, 1, 1], [], []>} : vector<128x4xf32>, vector<4x416xf32>, vector<128x416xf32> -> vector<128x416xf32>
    %172 = vector.extract_strided_slice %157 {offsets = [0, 0], sizes = [8, 416], strides = [1, 1]} : vector<16x416xf32> to vector<8x416xf32>
    %173 = vector.extract_strided_slice %169 {offsets = [0, 0], sizes = [8, 416], strides = [1, 1]} : vector<16x416xf32> to vector<8x416xf32>
    %174 = vector.shape_cast %172 : vector<8x416xf32> to vector<8x1x416xf32>
    %175 = vector.broadcast %174 : vector<8x1x416xf32> to vector<8x8x416xf32>
    %176 = vector.extract_strided_slice %171 {offsets = [0, 0], sizes = [64, 416], strides = [1, 1]} : vector<128x416xf32> to vector<64x416xf32>
    %177 = vector.shape_cast %176 : vector<64x416xf32> to vector<8x8x416xf32>
    %178 = arith.addf %175, %177 : vector<8x8x416xf32>
    %cst_90 = arith.constant dense<0.000000e+00> : vector<8x416xf32>
    %179 = vector.multi_reduction <add>, %178, %cst_90 [0] : vector<8x8x416xf32> to vector<8x416xf32>
    %cst_91 = arith.constant dense<0xFF800000> : vector<8x416xf32>
    %180 = vector.multi_reduction <maximumf>, %178, %cst_91 [0] : vector<8x8x416xf32> to vector<8x416xf32>
    %181 = arith.mulf %178, %178 : vector<8x8x416xf32>
    %cst_92 = arith.constant dense<0.000000e+00> : vector<8x416xf32>
    %182 = vector.multi_reduction <add>, %181, %cst_92 [0] : vector<8x8x416xf32> to vector<8x416xf32>
    %cst_93 = arith.constant 1.250000e-01 : f32
    %183 = vector.broadcast %cst_93 : f32 to vector<8x416xf32>
    %184 = arith.mulf %179, %183 : vector<8x416xf32>
    %cst_94 = arith.constant 1.250000e-01 : f32
    %185 = vector.broadcast %cst_94 : f32 to vector<8x416xf32>
    %186 = arith.mulf %182, %185 : vector<8x416xf32>
    %187 = arith.mulf %184, %184 : vector<8x416xf32>
    %188 = arith.subf %186, %187 : vector<8x416xf32>
    %cst_95 = arith.constant 0.000000e+00 : f32
    %189 = vector.broadcast %cst_95 : f32 to vector<8x416xf32>
    %190 = arith.maximumf %188, %189 : vector<8x416xf32>
    %cst_96 = arith.constant 8.000000e+00 : f32
    %191 = vector.broadcast %cst_96 : f32 to vector<8x416xf32>
    %192 = arith.mulf %191, %173 : vector<8x416xf32>
    %193 = arith.addf %179, %192 : vector<8x416xf32>
    %194 = arith.addf %180, %173 : vector<8x416xf32>
    %cst_97 = arith.constant 1.000000e-30 : f32
    %195 = vector.broadcast %cst_97 : f32 to vector<8x416xf32>
    %196 = arith.addf %190, %195 : vector<8x416xf32>
    %197 = math.sqrt %196 : vector<8x416xf32>
    %198 = vector.extract_strided_slice %157 {offsets = [8, 0], sizes = [8, 416], strides = [1, 1]} : vector<16x416xf32> to vector<8x416xf32>
    %199 = vector.extract_strided_slice %169 {offsets = [8, 0], sizes = [8, 416], strides = [1, 1]} : vector<16x416xf32> to vector<8x416xf32>
    %200 = vector.shape_cast %198 : vector<8x416xf32> to vector<8x1x416xf32>
    %201 = vector.broadcast %200 : vector<8x1x416xf32> to vector<8x8x416xf32>
    %202 = vector.extract_strided_slice %171 {offsets = [64, 0], sizes = [64, 416], strides = [1, 1]} : vector<128x416xf32> to vector<64x416xf32>
    %203 = vector.shape_cast %202 : vector<64x416xf32> to vector<8x8x416xf32>
    %204 = arith.addf %201, %203 : vector<8x8x416xf32>
    %cst_98 = arith.constant dense<0.000000e+00> : vector<8x416xf32>
    %205 = vector.multi_reduction <add>, %204, %cst_98 [0] : vector<8x8x416xf32> to vector<8x416xf32>
    %cst_99 = arith.constant dense<0xFF800000> : vector<8x416xf32>
    %206 = vector.multi_reduction <maximumf>, %204, %cst_99 [0] : vector<8x8x416xf32> to vector<8x416xf32>
    %207 = arith.mulf %204, %204 : vector<8x8x416xf32>
    %cst_100 = arith.constant dense<0.000000e+00> : vector<8x416xf32>
    %208 = vector.multi_reduction <add>, %207, %cst_100 [0] : vector<8x8x416xf32> to vector<8x416xf32>
    %cst_101 = arith.constant 1.250000e-01 : f32
    %209 = vector.broadcast %cst_101 : f32 to vector<8x416xf32>
    %210 = arith.mulf %205, %209 : vector<8x416xf32>
    %cst_102 = arith.constant 1.250000e-01 : f32
    %211 = vector.broadcast %cst_102 : f32 to vector<8x416xf32>
    %212 = arith.mulf %208, %211 : vector<8x416xf32>
    %213 = arith.mulf %210, %210 : vector<8x416xf32>
    %214 = arith.subf %212, %213 : vector<8x416xf32>
    %cst_103 = arith.constant 0.000000e+00 : f32
    %215 = vector.broadcast %cst_103 : f32 to vector<8x416xf32>
    %216 = arith.maximumf %214, %215 : vector<8x416xf32>
    %cst_104 = arith.constant 8.000000e+00 : f32
    %217 = vector.broadcast %cst_104 : f32 to vector<8x416xf32>
    %218 = arith.mulf %217, %199 : vector<8x416xf32>
    %219 = arith.addf %205, %218 : vector<8x416xf32>
    %220 = arith.addf %206, %199 : vector<8x416xf32>
    %cst_105 = arith.constant 1.000000e-30 : f32
    %221 = vector.broadcast %cst_105 : f32 to vector<8x416xf32>
    %222 = arith.addf %216, %221 : vector<8x416xf32>
    %223 = math.sqrt %222 : vector<8x416xf32>
    %224 = tpu.concatenate %193, %219 in 0 : vector<8x416xf32>, vector<8x416xf32> -> vector<16x416xf32>
    %225 = tpu.concatenate %194, %220 in 0 : vector<8x416xf32>, vector<8x416xf32> -> vector<16x416xf32>
    %226 = tpu.concatenate %197, %223 in 0 : vector<8x416xf32>, vector<8x416xf32> -> vector<16x416xf32>
    %c3_i32_106 = arith.constant 3 : i32
    %227 = tpu.memref_slice %arg47[%c3_i32_106] : memref<8x!tpu.dma_semaphore, #tpu.memory_space<semaphore_mem>> -> memref<1x!tpu.dma_semaphore, #tpu.memory_space<semaphore_mem>>
    %228 = tpu.memref_squeeze %227 : memref<1x!tpu.dma_semaphore, #tpu.memory_space<semaphore_mem>> -> memref<!tpu.dma_semaphore, #tpu.memory_space<semaphore_mem>>
    tpu.wait_dma2 semaphore(%228 : memref<!tpu.dma_semaphore, #tpu.memory_space<semaphore_mem>>) src(%arg22 : memref<1664x384xbf16, #tpu.memory_space<any>>) dst(%arg42 : memref<1664x384xbf16, #tpu.memory_space<vmem>>)
    %c0_107 = arith.constant 0 : index
    %c0_108 = arith.constant 0 : index
    %229 = vector.load %arg42[%c0_107, %c0_108] : memref<1664x384xbf16, #tpu.memory_space<vmem>>, vector<384x384xbf16>
    %230 = arith.truncf %148 : vector<16x384xf32> to vector<16x384xbf16>
    %cst_109 = arith.constant dense<0.000000e+00> : vector<16x384xf32>
    %231 = tpu.matmul %230, %229, %cst_109 {dimension_numbers = #tpu.dot_dimension_numbers<[1], [0], [0], [1], [0, 0, 1, 1], [], []>} : vector<16x384xbf16>, vector<384x384xbf16>, vector<16x384xf32> -> vector<16x384xf32>
    %c384_110 = arith.constant 384 : index
    %c0_111 = arith.constant 0 : index
    %232 = vector.load %arg42[%c384_110, %c0_111] : memref<1664x384xbf16, #tpu.memory_space<vmem>>, vector<32x384xbf16>
    %233 = arith.truncf %27 : vector<16x32xf32> to vector<16x32xbf16>
    %cst_112 = arith.constant dense<0.000000e+00> : vector<16x384xf32>
    %234 = tpu.matmul %233, %232, %cst_112 {dimension_numbers = #tpu.dot_dimension_numbers<[1], [0], [0], [1], [0, 0, 1, 1], [], []>} : vector<16x32xbf16>, vector<32x384xbf16>, vector<16x384xf32> -> vector<16x384xf32>
    %235 = arith.addf %231, %234 : vector<16x384xf32>
    %c416 = arith.constant 416 : index
    %c0_113 = arith.constant 0 : index
    %236 = vector.load %arg42[%c416, %c0_113] : memref<1664x384xbf16, #tpu.memory_space<vmem>>, vector<416x384xbf16>
    %237 = arith.truncf %225 : vector<16x416xf32> to vector<16x416xbf16>
    %cst_114 = arith.constant dense<0.000000e+00> : vector<16x384xf32>
    %238 = tpu.matmul %237, %236, %cst_114 {dimension_numbers = #tpu.dot_dimension_numbers<[1], [0], [0], [1], [0, 0, 1, 1], [], []>} : vector<16x416xbf16>, vector<416x384xbf16>, vector<16x384xf32> -> vector<16x384xf32>
    %239 = arith.addf %235, %238 : vector<16x384xf32>
    %c832 = arith.constant 832 : index
    %c0_115 = arith.constant 0 : index
    %240 = vector.load %arg42[%c832, %c0_115] : memref<1664x384xbf16, #tpu.memory_space<vmem>>, vector<416x384xbf16>
    %241 = arith.truncf %224 : vector<16x416xf32> to vector<16x416xbf16>
    %cst_116 = arith.constant dense<0.000000e+00> : vector<16x384xf32>
    %242 = tpu.matmul %241, %240, %cst_116 {dimension_numbers = #tpu.dot_dimension_numbers<[1], [0], [0], [1], [0, 0, 1, 1], [], []>} : vector<16x416xbf16>, vector<416x384xbf16>, vector<16x384xf32> -> vector<16x384xf32>
    %243 = arith.addf %239, %242 : vector<16x384xf32>
    %c1248 = arith.constant 1248 : index
    %c0_117 = arith.constant 0 : index
    %244 = vector.load %arg42[%c1248, %c0_117] : memref<1664x384xbf16, #tpu.memory_space<vmem>>, vector<416x384xbf16>
    %245 = arith.truncf %226 : vector<16x416xf32> to vector<16x416xbf16>
    %cst_118 = arith.constant dense<0.000000e+00> : vector<16x384xf32>
    %246 = tpu.matmul %245, %244, %cst_118 {dimension_numbers = #tpu.dot_dimension_numbers<[1], [0], [0], [1], [0, 0, 1, 1], [], []>} : vector<16x416xbf16>, vector<416x384xbf16>, vector<16x384xf32> -> vector<16x384xf32>
    %247 = arith.addf %243, %246 : vector<16x384xf32>
    %c0_119 = arith.constant 0 : index
    %c0_120 = arith.constant 0 : index
    %248 = vector.load %arg23[%c0_119, %c0_120] : memref<1x384xf32, #tpu.memory_space<vmem>>, vector<1x384xf32>
    %249 = vector.broadcast %248 : vector<1x384xf32> to vector<16x384xf32>
    %250 = arith.addf %247, %249 : vector<16x384xf32>
    %cst_121 = arith.constant 2.82842708 : f32
    %251 = vector.broadcast %cst_121 : f32 to vector<16x384xf32>
    %252 = arith.mulf %250, %251 : vector<16x384xf32>
    %cst_122 = arith.constant dense<0.000000e+00> : vector<384xf32>
    %253 = vector.multi_reduction <add>, %252, %cst_122 [0] : vector<16x384xf32> to vector<384xf32>
    %254 = vector.shape_cast %253 : vector<384xf32> to vector<1x384xf32>
    %cst_123 = arith.constant 1.600000e+01 : f32
    %255 = vector.broadcast %cst_123 : f32 to vector<1x384xf32>
    %256 = arith.divf %254, %255 : vector<1x384xf32>
    %257 = arith.mulf %252, %252 : vector<16x384xf32>
    %cst_124 = arith.constant dense<0.000000e+00> : vector<384xf32>
    %258 = vector.multi_reduction <add>, %257, %cst_124 [0] : vector<16x384xf32> to vector<384xf32>
    %259 = vector.shape_cast %258 : vector<384xf32> to vector<1x384xf32>
    %cst_125 = arith.constant 1.600000e+01 : f32
    %260 = vector.broadcast %cst_125 : f32 to vector<1x384xf32>
    %261 = arith.divf %259, %260 : vector<1x384xf32>
    %262 = arith.mulf %256, %256 : vector<1x384xf32>
    %263 = arith.subf %261, %262 : vector<1x384xf32>
    %cst_126 = arith.constant 0.000000e+00 : f32
    %264 = vector.broadcast %cst_126 : f32 to vector<1x384xf32>
    %265 = arith.maximumf %263, %264 : vector<1x384xf32>
    %c0_127 = arith.constant 0 : index
    %c0_128 = arith.constant 0 : index
    %266 = vector.load %arg24[%c0_127, %c0_128] : memref<1x384xf32, #tpu.memory_space<vmem>>, vector<1x384xf32>
    %cst_129 = arith.constant 9.99999974E-6 : f32
    %267 = vector.broadcast %cst_129 : f32 to vector<1x384xf32>
    %268 = arith.addf %265, %267 : vector<1x384xf32>
    %269 = math.rsqrt %268 : vector<1x384xf32>
    %270 = arith.mulf %266, %269 : vector<1x384xf32>
    %c0_130 = arith.constant 0 : index
    %c0_131 = arith.constant 0 : index
    %271 = vector.load %arg25[%c0_130, %c0_131] : memref<1x384xf32, #tpu.memory_space<vmem>>, vector<1x384xf32>
    %272 = arith.mulf %256, %270 : vector<1x384xf32>
    %273 = arith.subf %271, %272 : vector<1x384xf32>
    %274 = vector.broadcast %270 : vector<1x384xf32> to vector<16x384xf32>
    %275 = arith.mulf %252, %274 : vector<16x384xf32>
    %276 = vector.broadcast %273 : vector<1x384xf32> to vector<16x384xf32>
    %277 = arith.addf %275, %276 : vector<16x384xf32>
    %c4_i32_132 = arith.constant 4 : i32
    %278 = tpu.memref_slice %arg47[%c4_i32_132] : memref<8x!tpu.dma_semaphore, #tpu.memory_space<semaphore_mem>> -> memref<1x!tpu.dma_semaphore, #tpu.memory_space<semaphore_mem>>
    %279 = tpu.memref_squeeze %278 : memref<1x!tpu.dma_semaphore, #tpu.memory_space<semaphore_mem>> -> memref<!tpu.dma_semaphore, #tpu.memory_space<semaphore_mem>>
    tpu.wait_dma2 semaphore(%279 : memref<!tpu.dma_semaphore, #tpu.memory_space<semaphore_mem>>) src(%arg26 : memref<384x384xbf16, #tpu.memory_space<any>>) dst(%arg43 : memref<384x384xbf16, #tpu.memory_space<vmem>>)
    %c0_133 = arith.constant 0 : index
    %c0_134 = arith.constant 0 : index
    %280 = vector.load %arg43[%c0_133, %c0_134] : memref<384x384xbf16, #tpu.memory_space<vmem>>, vector<384x384xbf16>
    %281 = arith.truncf %277 : vector<16x384xf32> to vector<16x384xbf16>
    %cst_135 = arith.constant dense<0.000000e+00> : vector<16x384xf32>
    %282 = tpu.matmul %281, %280, %cst_135 {dimension_numbers = #tpu.dot_dimension_numbers<[1], [0], [0], [1], [0, 0, 1, 1], [], []>} : vector<16x384xbf16>, vector<384x384xbf16>, vector<16x384xf32> -> vector<16x384xf32>
    %c0_136 = arith.constant 0 : index
    %c0_137 = arith.constant 0 : index
    %283 = vector.load %arg27[%c0_136, %c0_137] : memref<1x384xf32, #tpu.memory_space<vmem>>, vector<1x384xf32>
    %284 = vector.broadcast %283 : vector<1x384xf32> to vector<16x384xf32>
    %285 = arith.addf %282, %284 : vector<16x384xf32>
    %cst_138 = arith.constant 0.000000e+00 : f32
    %286 = vector.broadcast %cst_138 : f32 to vector<16x384xf32>
    %287 = arith.cmpf ogt, %285, %286 : vector<16x384xf32>
    %cst_139 = arith.constant 0.00999999977 : f32
    %288 = vector.broadcast %cst_139 : f32 to vector<16x384xf32>
    %289 = arith.mulf %288, %285 : vector<16x384xf32>
    %290 = arith.select %287, %285, %289 : vector<16x384xi1>, vector<16x384xf32>
    %cst_140 = arith.constant 0.000000e+00 : f32
    %291 = vector.broadcast %cst_140 : f32 to vector<16x384xf32>
    %292 = arith.maximumf %290, %291 : vector<16x384xf32>
    %c5_i32_141 = arith.constant 5 : i32
    %293 = tpu.memref_slice %arg47[%c5_i32_141] : memref<8x!tpu.dma_semaphore, #tpu.memory_space<semaphore_mem>> -> memref<1x!tpu.dma_semaphore, #tpu.memory_space<semaphore_mem>>
    %294 = tpu.memref_squeeze %293 : memref<1x!tpu.dma_semaphore, #tpu.memory_space<semaphore_mem>> -> memref<!tpu.dma_semaphore, #tpu.memory_space<semaphore_mem>>
    tpu.wait_dma2 semaphore(%294 : memref<!tpu.dma_semaphore, #tpu.memory_space<semaphore_mem>>) src(%arg28 : memref<384x384xbf16, #tpu.memory_space<any>>) dst(%arg44 : memref<384x384xbf16, #tpu.memory_space<vmem>>)
    %c0_142 = arith.constant 0 : index
    %c0_143 = arith.constant 0 : index
    %295 = vector.load %arg44[%c0_142, %c0_143] : memref<384x384xbf16, #tpu.memory_space<vmem>>, vector<384x384xbf16>
    %296 = arith.truncf %292 : vector<16x384xf32> to vector<16x384xbf16>
    %cst_144 = arith.constant dense<0.000000e+00> : vector<16x384xf32>
    %297 = tpu.matmul %296, %295, %cst_144 {dimension_numbers = #tpu.dot_dimension_numbers<[1], [0], [0], [1], [0, 0, 1, 1], [], []>} : vector<16x384xbf16>, vector<384x384xbf16>, vector<16x384xf32> -> vector<16x384xf32>
    %c6_i32_145 = arith.constant 6 : i32
    %298 = tpu.memref_slice %arg47[%c6_i32_145] : memref<8x!tpu.dma_semaphore, #tpu.memory_space<semaphore_mem>> -> memref<1x!tpu.dma_semaphore, #tpu.memory_space<semaphore_mem>>
    %299 = tpu.memref_squeeze %298 : memref<1x!tpu.dma_semaphore, #tpu.memory_space<semaphore_mem>> -> memref<!tpu.dma_semaphore, #tpu.memory_space<semaphore_mem>>
    tpu.wait_dma2 semaphore(%299 : memref<!tpu.dma_semaphore, #tpu.memory_space<semaphore_mem>>) src(%arg29 : memref<384x384xbf16, #tpu.memory_space<any>>) dst(%arg45 : memref<384x384xbf16, #tpu.memory_space<vmem>>)
    %c0_146 = arith.constant 0 : index
    %c0_147 = arith.constant 0 : index
    %300 = vector.load %arg45[%c0_146, %c0_147] : memref<384x384xbf16, #tpu.memory_space<vmem>>, vector<384x384xbf16>
    %301 = arith.truncf %292 : vector<16x384xf32> to vector<16x384xbf16>
    %cst_148 = arith.constant dense<0.000000e+00> : vector<16x384xf32>
    %302 = tpu.matmul %301, %300, %cst_148 {dimension_numbers = #tpu.dot_dimension_numbers<[1], [0], [0], [1], [0, 0, 1, 1], [], []>} : vector<16x384xbf16>, vector<384x384xbf16>, vector<16x384xf32> -> vector<16x384xf32>
    %c0_149 = arith.constant 0 : index
    %c0_150 = arith.constant 0 : index
    %303 = vector.load %arg31[%c0_149, %c0_150] : memref<1x384xf32, #tpu.memory_space<vmem>>, vector<1x384xf32>
    %304 = vector.broadcast %303 : vector<1x384xf32> to vector<16x384xf32>
    %305 = arith.addf %302, %304 : vector<16x384xf32>
    %c0_151 = arith.constant 0 : index
    %c0_152 = arith.constant 0 : index
    %306 = vector.load %arg30[%c0_151, %c0_152] : memref<4x384xf32, #tpu.memory_space<vmem>>, vector<4x384xf32>
    %cst_153 = arith.constant dense<0.000000e+00> : vector<128x384xf32>
    %307 = tpu.matmul %16, %306, %cst_153 {dimension_numbers = #tpu.dot_dimension_numbers<[1], [0], [0], [1], [0, 0, 1, 1], [], []>} : vector<128x4xf32>, vector<4x384xf32>, vector<128x384xf32> -> vector<128x384xf32>
    %308 = vector.extract_strided_slice %297 {offsets = [0, 0], sizes = [8, 384], strides = [1, 1]} : vector<16x384xf32> to vector<8x384xf32>
    %309 = vector.extract_strided_slice %305 {offsets = [0, 0], sizes = [8, 384], strides = [1, 1]} : vector<16x384xf32> to vector<8x384xf32>
    %310 = vector.shape_cast %308 : vector<8x384xf32> to vector<8x1x384xf32>
    %311 = vector.broadcast %310 : vector<8x1x384xf32> to vector<8x8x384xf32>
    %312 = vector.extract_strided_slice %307 {offsets = [0, 0], sizes = [64, 384], strides = [1, 1]} : vector<128x384xf32> to vector<64x384xf32>
    %313 = vector.shape_cast %312 : vector<64x384xf32> to vector<8x8x384xf32>
    %314 = arith.addf %311, %313 : vector<8x8x384xf32>
    %cst_154 = arith.constant dense<0.000000e+00> : vector<8x384xf32>
    %315 = vector.multi_reduction <add>, %314, %cst_154 [0] : vector<8x8x384xf32> to vector<8x384xf32>
    %cst_155 = arith.constant dense<0xFF800000> : vector<8x384xf32>
    %316 = vector.multi_reduction <maximumf>, %314, %cst_155 [0] : vector<8x8x384xf32> to vector<8x384xf32>
    %317 = arith.mulf %314, %314 : vector<8x8x384xf32>
    %cst_156 = arith.constant dense<0.000000e+00> : vector<8x384xf32>
    %318 = vector.multi_reduction <add>, %317, %cst_156 [0] : vector<8x8x384xf32> to vector<8x384xf32>
    %cst_157 = arith.constant 1.250000e-01 : f32
    %319 = vector.broadcast %cst_157 : f32 to vector<8x384xf32>
    %320 = arith.mulf %315, %319 : vector<8x384xf32>
    %cst_158 = arith.constant 1.250000e-01 : f32
    %321 = vector.broadcast %cst_158 : f32 to vector<8x384xf32>
    %322 = arith.mulf %318, %321 : vector<8x384xf32>
    %323 = arith.mulf %320, %320 : vector<8x384xf32>
    %324 = arith.subf %322, %323 : vector<8x384xf32>
    %cst_159 = arith.constant 0.000000e+00 : f32
    %325 = vector.broadcast %cst_159 : f32 to vector<8x384xf32>
    %326 = arith.maximumf %324, %325 : vector<8x384xf32>
    %cst_160 = arith.constant 8.000000e+00 : f32
    %327 = vector.broadcast %cst_160 : f32 to vector<8x384xf32>
    %328 = arith.mulf %327, %309 : vector<8x384xf32>
    %329 = arith.addf %315, %328 : vector<8x384xf32>
    %330 = arith.addf %316, %309 : vector<8x384xf32>
    %cst_161 = arith.constant 1.000000e-30 : f32
    %331 = vector.broadcast %cst_161 : f32 to vector<8x384xf32>
    %332 = arith.addf %326, %331 : vector<8x384xf32>
    %333 = math.sqrt %332 : vector<8x384xf32>
    %334 = vector.extract_strided_slice %297 {offsets = [8, 0], sizes = [8, 384], strides = [1, 1]} : vector<16x384xf32> to vector<8x384xf32>
    %335 = vector.extract_strided_slice %305 {offsets = [8, 0], sizes = [8, 384], strides = [1, 1]} : vector<16x384xf32> to vector<8x384xf32>
    %336 = vector.shape_cast %334 : vector<8x384xf32> to vector<8x1x384xf32>
    %337 = vector.broadcast %336 : vector<8x1x384xf32> to vector<8x8x384xf32>
    %338 = vector.extract_strided_slice %307 {offsets = [64, 0], sizes = [64, 384], strides = [1, 1]} : vector<128x384xf32> to vector<64x384xf32>
    %339 = vector.shape_cast %338 : vector<64x384xf32> to vector<8x8x384xf32>
    %340 = arith.addf %337, %339 : vector<8x8x384xf32>
    %cst_162 = arith.constant dense<0.000000e+00> : vector<8x384xf32>
    %341 = vector.multi_reduction <add>, %340, %cst_162 [0] : vector<8x8x384xf32> to vector<8x384xf32>
    %cst_163 = arith.constant dense<0xFF800000> : vector<8x384xf32>
    %342 = vector.multi_reduction <maximumf>, %340, %cst_163 [0] : vector<8x8x384xf32> to vector<8x384xf32>
    %343 = arith.mulf %340, %340 : vector<8x8x384xf32>
    %cst_164 = arith.constant dense<0.000000e+00> : vector<8x384xf32>
    %344 = vector.multi_reduction <add>, %343, %cst_164 [0] : vector<8x8x384xf32> to vector<8x384xf32>
    %cst_165 = arith.constant 1.250000e-01 : f32
    %345 = vector.broadcast %cst_165 : f32 to vector<8x384xf32>
    %346 = arith.mulf %341, %345 : vector<8x384xf32>
    %cst_166 = arith.constant 1.250000e-01 : f32
    %347 = vector.broadcast %cst_166 : f32 to vector<8x384xf32>
    %348 = arith.mulf %344, %347 : vector<8x384xf32>
    %349 = arith.mulf %346, %346 : vector<8x384xf32>
    %350 = arith.subf %348, %349 : vector<8x384xf32>
    %cst_167 = arith.constant 0.000000e+00 : f32
    %351 = vector.broadcast %cst_167 : f32 to vector<8x384xf32>
    %352 = arith.maximumf %350, %351 : vector<8x384xf32>
    %cst_168 = arith.constant 8.000000e+00 : f32
    %353 = vector.broadcast %cst_168 : f32 to vector<8x384xf32>
    %354 = arith.mulf %353, %335 : vector<8x384xf32>
    %355 = arith.addf %341, %354 : vector<8x384xf32>
    %356 = arith.addf %342, %335 : vector<8x384xf32>
    %cst_169 = arith.constant 1.000000e-30 : f32
    %357 = vector.broadcast %cst_169 : f32 to vector<8x384xf32>
    %358 = arith.addf %352, %357 : vector<8x384xf32>
    %359 = math.sqrt %358 : vector<8x384xf32>
    %360 = tpu.concatenate %329, %355 in 0 : vector<8x384xf32>, vector<8x384xf32> -> vector<16x384xf32>
    %361 = tpu.concatenate %330, %356 in 0 : vector<8x384xf32>, vector<8x384xf32> -> vector<16x384xf32>
    %362 = tpu.concatenate %333, %359 in 0 : vector<8x384xf32>, vector<8x384xf32> -> vector<16x384xf32>
    %c7_i32_170 = arith.constant 7 : i32
    %363 = tpu.memref_slice %arg47[%c7_i32_170] : memref<8x!tpu.dma_semaphore, #tpu.memory_space<semaphore_mem>> -> memref<1x!tpu.dma_semaphore, #tpu.memory_space<semaphore_mem>>
    %364 = tpu.memref_squeeze %363 : memref<1x!tpu.dma_semaphore, #tpu.memory_space<semaphore_mem>> -> memref<!tpu.dma_semaphore, #tpu.memory_space<semaphore_mem>>
    tpu.wait_dma2 semaphore(%364 : memref<!tpu.dma_semaphore, #tpu.memory_space<semaphore_mem>>) src(%arg32 : memref<1536x16xbf16, #tpu.memory_space<any>>) dst(%arg46 : memref<1536x16xbf16, #tpu.memory_space<vmem>>)
    %c0_171 = arith.constant 0 : index
    %c0_172 = arith.constant 0 : index
    %365 = vector.load %arg46[%c0_171, %c0_172] : memref<1536x16xbf16, #tpu.memory_space<vmem>>, vector<384x16xbf16>
    %366 = arith.truncf %292 : vector<16x384xf32> to vector<16x384xbf16>
    %cst_173 = arith.constant dense<0.000000e+00> : vector<16x16xf32>
    %367 = tpu.matmul %366, %365, %cst_173 {dimension_numbers = #tpu.dot_dimension_numbers<[1], [0], [0], [1], [0, 0, 1, 1], [], []>} : vector<16x384xbf16>, vector<384x16xbf16>, vector<16x16xf32> -> vector<16x16xf32>
    %c384_174 = arith.constant 384 : index
    %c0_175 = arith.constant 0 : index
    %368 = vector.load %arg46[%c384_174, %c0_175] : memref<1536x16xbf16, #tpu.memory_space<vmem>>, vector<384x16xbf16>
    %369 = arith.truncf %361 : vector<16x384xf32> to vector<16x384xbf16>
    %cst_176 = arith.constant dense<0.000000e+00> : vector<16x16xf32>
    %370 = tpu.matmul %369, %368, %cst_176 {dimension_numbers = #tpu.dot_dimension_numbers<[1], [0], [0], [1], [0, 0, 1, 1], [], []>} : vector<16x384xbf16>, vector<384x16xbf16>, vector<16x16xf32> -> vector<16x16xf32>
    %371 = arith.addf %367, %370 : vector<16x16xf32>
    %c768 = arith.constant 768 : index
    %c0_177 = arith.constant 0 : index
    %372 = vector.load %arg46[%c768, %c0_177] : memref<1536x16xbf16, #tpu.memory_space<vmem>>, vector<384x16xbf16>
    %373 = arith.truncf %360 : vector<16x384xf32> to vector<16x384xbf16>
    %cst_178 = arith.constant dense<0.000000e+00> : vector<16x16xf32>
    %374 = tpu.matmul %373, %372, %cst_178 {dimension_numbers = #tpu.dot_dimension_numbers<[1], [0], [0], [1], [0, 0, 1, 1], [], []>} : vector<16x384xbf16>, vector<384x16xbf16>, vector<16x16xf32> -> vector<16x16xf32>
    %375 = arith.addf %371, %374 : vector<16x16xf32>
    %c1152 = arith.constant 1152 : index
    %c0_179 = arith.constant 0 : index
    %376 = vector.load %arg46[%c1152, %c0_179] : memref<1536x16xbf16, #tpu.memory_space<vmem>>, vector<384x16xbf16>
    %377 = arith.truncf %362 : vector<16x384xf32> to vector<16x384xbf16>
    %cst_180 = arith.constant dense<0.000000e+00> : vector<16x16xf32>
    %378 = tpu.matmul %377, %376, %cst_180 {dimension_numbers = #tpu.dot_dimension_numbers<[1], [0], [0], [1], [0, 0, 1, 1], [], []>} : vector<16x384xbf16>, vector<384x16xbf16>, vector<16x16xf32> -> vector<16x16xf32>
    %379 = arith.addf %375, %378 : vector<16x16xf32>
    %c0_181 = arith.constant 0 : index
    %c0_182 = arith.constant 0 : index
    %380 = vector.load %arg33[%c0_181, %c0_182] : memref<1x16xf32, #tpu.memory_space<vmem>>, vector<1x16xf32>
    %381 = vector.broadcast %380 : vector<1x16xf32> to vector<16x16xf32>
    %382 = arith.addf %379, %381 : vector<16x16xf32>
    %cst_183 = arith.constant 2.82842708 : f32
    %383 = vector.broadcast %cst_183 : f32 to vector<16x16xf32>
    %384 = arith.mulf %382, %383 : vector<16x16xf32>
    %cst_184 = arith.constant dense<0.000000e+00> : vector<16xf32>
    %385 = vector.multi_reduction <add>, %384, %cst_184 [0] : vector<16x16xf32> to vector<16xf32>
    %386 = vector.shape_cast %385 : vector<16xf32> to vector<1x16xf32>
    %cst_185 = arith.constant 1.600000e+01 : f32
    %387 = vector.broadcast %cst_185 : f32 to vector<1x16xf32>
    %388 = arith.divf %386, %387 : vector<1x16xf32>
    %389 = arith.mulf %384, %384 : vector<16x16xf32>
    %cst_186 = arith.constant dense<0.000000e+00> : vector<16xf32>
    %390 = vector.multi_reduction <add>, %389, %cst_186 [0] : vector<16x16xf32> to vector<16xf32>
    %391 = vector.shape_cast %390 : vector<16xf32> to vector<1x16xf32>
    %cst_187 = arith.constant 1.600000e+01 : f32
    %392 = vector.broadcast %cst_187 : f32 to vector<1x16xf32>
    %393 = arith.divf %391, %392 : vector<1x16xf32>
    %394 = arith.mulf %388, %388 : vector<1x16xf32>
    %395 = arith.subf %393, %394 : vector<1x16xf32>
    %cst_188 = arith.constant 0.000000e+00 : f32
    %396 = vector.broadcast %cst_188 : f32 to vector<1x16xf32>
    %397 = arith.maximumf %395, %396 : vector<1x16xf32>
    %c0_189 = arith.constant 0 : index
    %c0_190 = arith.constant 0 : index
    %398 = vector.load %arg34[%c0_189, %c0_190] : memref<1x16xf32, #tpu.memory_space<vmem>>, vector<1x16xf32>
    %cst_191 = arith.constant 9.99999974E-6 : f32
    %399 = vector.broadcast %cst_191 : f32 to vector<1x16xf32>
    %400 = arith.addf %397, %399 : vector<1x16xf32>
    %401 = math.rsqrt %400 : vector<1x16xf32>
    %402 = arith.mulf %398, %401 : vector<1x16xf32>
    %c0_192 = arith.constant 0 : index
    %c0_193 = arith.constant 0 : index
    %403 = vector.load %arg35[%c0_192, %c0_193] : memref<1x16xf32, #tpu.memory_space<vmem>>, vector<1x16xf32>
    %404 = arith.mulf %388, %402 : vector<1x16xf32>
    %405 = arith.subf %403, %404 : vector<1x16xf32>
    %406 = vector.broadcast %402 : vector<1x16xf32> to vector<16x16xf32>
    %407 = arith.mulf %384, %406 : vector<16x16xf32>
    %408 = vector.broadcast %405 : vector<1x16xf32> to vector<16x16xf32>
    %409 = arith.addf %407, %408 : vector<16x16xf32>
    %c0_194 = arith.constant 0 : index
    %c0_195 = arith.constant 0 : index
    %410 = vector.load %arg36[%c0_194, %c0_195] : memref<16x16xf32, #tpu.memory_space<vmem>>, vector<16x16xf32>
    %cst_196 = arith.constant dense<0.000000e+00> : vector<16x16xf32>
    %411 = tpu.matmul %409, %410, %cst_196 {dimension_numbers = #tpu.dot_dimension_numbers<[1], [0], [0], [1], [0, 0, 1, 1], [], []>} : vector<16x16xf32>, vector<16x16xf32>, vector<16x16xf32> -> vector<16x16xf32>
    %c0_197 = arith.constant 0 : index
    %c0_198 = arith.constant 0 : index
    %412 = vector.load %arg37[%c0_197, %c0_198] : memref<1x16xf32, #tpu.memory_space<vmem>>, vector<1x16xf32>
    %413 = vector.broadcast %412 : vector<1x16xf32> to vector<16x16xf32>
    %414 = arith.addf %411, %413 : vector<16x16xf32>
    %cst_199 = arith.constant 0.000000e+00 : f32
    %415 = vector.broadcast %cst_199 : f32 to vector<16x16xf32>
    %416 = arith.cmpf ogt, %414, %415 : vector<16x16xf32>
    %cst_200 = arith.constant 0.00999999977 : f32
    %417 = vector.broadcast %cst_200 : f32 to vector<16x16xf32>
    %418 = arith.mulf %417, %414 : vector<16x16xf32>
    %419 = arith.select %416, %414, %418 : vector<16x16xi1>, vector<16x16xf32>
    %c0_201 = arith.constant 0 : index
    %c0_202 = arith.constant 0 : index
    %420 = vector.load %arg3[%c0_201, %c0_202] : memref<16x16xf32, #tpu.memory_space<vmem>>, vector<16x16xf32>
    %cst_203 = arith.constant 0.000000e+00 : f32
    %421 = vector.broadcast %cst_203 : f32 to vector<16x16xf32>
    %422 = arith.cmpf oeq, %420, %421 : vector<16x16xf32>
    %cst_204 = arith.constant -1.000000e+05 : f32
    %423 = vector.broadcast %cst_204 : f32 to vector<16x16xf32>
    %424 = arith.select %422, %423, %419 : vector<16x16xi1>, vector<16x16xf32>
    %425 = vector.shape_cast %424 : vector<16x16xf32> to vector<2x8x16xf32>
    %cst_205 = arith.constant dense<0xFF800000> : vector<2x8xf32>
    %426 = vector.multi_reduction <maximumf>, %425, %cst_205 [2] : vector<2x8x16xf32> to vector<2x8xf32>
    %427 = vector.shape_cast %426 : vector<2x8xf32> to vector<2x8x1xf32>
    %cst_206 = arith.constant dense<0xFF800000> : vector<2x1xf32>
    %428 = vector.multi_reduction <maximumf>, %427, %cst_206 [1] : vector<2x8x1xf32> to vector<2x1xf32>
    %429 = vector.shape_cast %428 : vector<2x1xf32> to vector<2x1x1xf32>
    %430 = vector.broadcast %429 : vector<2x1x1xf32> to vector<2x8x16xf32>
    %431 = arith.subf %425, %430 : vector<2x8x16xf32>
    %432 = math.exp %431 : vector<2x8x16xf32>
    %cst_207 = arith.constant dense<0.000000e+00> : vector<2x8xf32>
    %433 = vector.multi_reduction <add>, %432, %cst_207 [2] : vector<2x8x16xf32> to vector<2x8xf32>
    %434 = vector.shape_cast %433 : vector<2x8xf32> to vector<2x8x1xf32>
    %cst_208 = arith.constant dense<0.000000e+00> : vector<2x1xf32>
    %435 = vector.multi_reduction <add>, %434, %cst_208 [1] : vector<2x8x1xf32> to vector<2x1xf32>
    %436 = vector.shape_cast %435 : vector<2x1xf32> to vector<2x1x1xf32>
    %437 = tpu.reciprocal %436 {approx = true} : vector<2x1x1xf32> -> vector<2x1x1xf32>
    %438 = vector.broadcast %437 : vector<2x1x1xf32> to vector<2x8x16xf32>
    %439 = arith.mulf %432, %438 : vector<2x8x16xf32>
    %440 = vector.shape_cast %439 : vector<2x8x16xf32> to vector<16x16xf32>
    %c0_209 = arith.constant 0 : index
    %c0_210 = arith.constant 0 : index
    %441 = vector.load %arg38[%c0_209, %c0_210] : memref<16x16xf32, #tpu.memory_space<vmem>>, vector<16x16xf32>
    tpu.vector_store %arg38[%c0_209, %c0_210], %440 {strides = array<i32>} : memref<16x16xf32, #tpu.memory_space<vmem>>, vector<16x16xf32>,
    return
  }
}

</mosaic_0001>

<llo_original>
// kernel: tpu_custom_call.1
$region0: #{tpu_custom_call.1}
  #allocation0 [shape = 'u32[]', space=smem, size = 0x4, offset = 0x4, fixed_abs, tag = 'smem constant byte address 0x4 - core index']
  #allocation1 [shape = 'u32[144,128]{1,0:T(1,128)}', space=vmem, size = 0x12000, scoped, tag = 'internal scratch']
  #allocation2 [shape = 'bf16[384,384]{1,0:T(16,128)(2,1)}', space=vmem, size = 0x48000, scoped, tag = 'scratch operand']
  #allocation3 [shape = 'bf16[416,416]{1,0:T(16,128)(2,1)}', space=vmem, size = 0x68000, scoped, tag = 'scratch operand']
  #allocation4 [shape = 'bf16[416,416]{1,0:T(16,128)(2,1)}', space=vmem, size = 0x68000, scoped, tag = 'scratch operand']
  #allocation5 [shape = 'bf16[1664,384]{1,0:T(16,128)(2,1)}', space=vmem, size = 0x138000, scoped, tag = 'scratch operand']
  #allocation6 [shape = 'bf16[384,384]{1,0:T(16,128)(2,1)}', space=vmem, size = 0x48000, scoped, tag = 'scratch operand']
  #allocation7 [shape = 'bf16[384,384]{1,0:T(16,128)(2,1)}', space=vmem, size = 0x48000, scoped, tag = 'scratch operand']
  #allocation8 [shape = 'bf16[384,384]{1,0:T(16,128)(2,1)}', space=vmem, size = 0x48000, scoped, tag = 'scratch operand']
  #allocation9 [shape = 'bf16[1536,16]{1,0:T(16,128)(2,1)}', space=vmem, size = 0x60000, scoped, tag = 'scratch operand']
  #allocation10 [shape = 's32[8]{0}', space=sflag, size = 0x20, scoped, tag = 'scratch operand']
  #allocation53 [shape = 's32[]', space=sflag, size = 0x4, offset = 0, fixed_abs, tag = 'sflag constant byte address 0x0 - dummy sync flag']
  #allocation55 [shape = 's32[]', space=sflag, size = 0x4, offset = 0, fixed_abs, tag = 'sflag constant byte address 0x0 - dummy sync flag']
  #allocation57 [shape = 's32[]', space=sflag, size = 0x4, offset = 0, fixed_abs, tag = 'sflag constant byte address 0x0 - dummy sync flag']
  #allocation59 [shape = 's32[]', space=sflag, size = 0x4, offset = 0, fixed_abs, tag = 'sflag constant byte address 0x0 - dummy sync flag']
  #allocation61 [shape = 's32[]', space=sflag, size = 0x4, offset = 0, fixed_abs, tag = 'sflag constant byte address 0x0 - dummy sync flag']
  #allocation63 [shape = 's32[]', space=sflag, size = 0x4, offset = 0, fixed_abs, tag = 'sflag constant byte address 0x0 - dummy sync flag']
  #allocation65 [shape = 's32[]', space=sflag, size = 0x4, offset = 0, fixed_abs, tag = 'sflag constant byte address 0x0 - dummy sync flag']
  #allocation67 [shape = 's32[]', space=sflag, size = 0x4, offset = 0, fixed_abs, tag = 'sflag constant byte address 0x0 - dummy sync flag']
  %s0 = inlined_call_operand.smem [shape: u32[39], index: -1, kind: input, shape index: {}]
  %s1 = sld [smem:[%s0]]
  %s2 = scalar_lea.smem %s0, 1
  %s3 = sld [smem:[%s2]]
  %s4 = scalar_lea.smem %s0, 2
  %s5 = sld [smem:[%s4]]
  %s6 = scalar_lea.smem %s0, 3
  %s7 = sld [smem:[%s6]]
  %s8 = scalar_lea.smem %s0, 4
  %s9 = sld [smem:[%s8]]
  %s10 = scalar_lea.smem %s0, 5
  %s11 = sld [smem:[%s10]]
  %s12 = scalar_lea.smem %s0, 6
  %s13 = sld [smem:[%s12]]
  %s14 = scalar_lea.smem %s0, 7
  %s15 = sld [smem:[%s14]]
  %s16 = scalar_lea.smem %s0, 8
  %s17 = sld [smem:[%s16]]
  %s18 = scalar_lea.smem %s0, 9
  %s19 = sld [smem:[%s18]]
  %s20 = scalar_lea.smem %s0, 10
  %s21 = sld [smem:[%s20]]
  %s22 = scalar_lea.smem %s0, 11
  %s23 = sld [smem:[%s22]]
  %s24 = scalar_lea.smem %s0, 12
  %s25 = sld [smem:[%s24]]
  %s26 = scalar_lea.smem %s0, 13
  %s27 = sld [smem:[%s26]]
  %s28 = scalar_lea.smem %s0, 14
  %s29 = sld [smem:[%s28]]
  %s30 = scalar_lea.smem %s0, 15
  %s31 = sld [smem:[%s30]]
  %s32 = scalar_lea.smem %s0, 16
  %s33 = sld [smem:[%s32]]
  %s34 = scalar_lea.smem %s0, 17
  %s35 = sld [smem:[%s34]]
  %s36 = scalar_lea.smem %s0, 18
  %s37 = sld [smem:[%s36]]
  %s38 = scalar_lea.smem %s0, 19
  %s39 = sld [smem:[%s38]]
  %s40 = scalar_lea.smem %s0, 20
  %s41 = sld [smem:[%s40]]
  %s42 = scalar_lea.smem %s0, 21
  %s43 = sld [smem:[%s42]]
  %s44 = scalar_lea.smem %s0, 22
  %s45 = sld [smem:[%s44]]
  %s46 = scalar_lea.smem %s0, 23
  %s47 = sld [smem:[%s46]]
  %s48 = scalar_lea.smem %s0, 24
  %s49 = sld [smem:[%s48]]
  %s50 = scalar_lea.smem %s0, 25
  %s51 = sld [smem:[%s50]]
  %s52 = scalar_lea.smem %s0, 26
  %s53 = sld [smem:[%s52]]
  %s54 = scalar_lea.smem %s0, 27
  %s55 = sld [smem:[%s54]]
  %s56 = scalar_lea.smem %s0, 28
  %s57 = sld [smem:[%s56]]
  %s58 = scalar_lea.smem %s0, 29
  %s59 = sld [smem:[%s58]]
  %s60 = scalar_lea.smem %s0, 30
  %s61 = sld [smem:[%s60]]
  %s62 = scalar_lea.smem %s0, 31
  %s63 = sld [smem:[%s62]]
  %s64 = scalar_lea.smem %s0, 32
  %s65 = sld [smem:[%s64]]
  %s66 = scalar_lea.smem %s0, 33
  %s67 = sld [smem:[%s66]]
  %s68 = scalar_lea.smem %s0, 34
  %s69 = sld [smem:[%s68]]
  %s70 = scalar_lea.smem %s0, 35
  %s71 = sld [smem:[%s70]]
  %s72 = scalar_lea.smem %s0, 36
  %s73 = sld [smem:[%s72]]
  %s74 = scalar_lea.smem %s0, 37
  %s75 = sld [smem:[%s74]]
  %s76 = scalar_lea.smem %s0, 38
  %s77 = sld [smem:[%s76]]
  %s78 = sld [smem:[#allocation0]]
  $region268: #{tpu_custom_call.1} parent=0
    _
  %s80 = ssub.s32 1, %s78
  %s81 = scalar_select 0, %s80, %s78
  $region1: #{tpu_custom_call.1} parent=0
    #allocation11 [shape = 'u8[8192]{0}', space=vmem, size = 0x2000, scoped, tag = 'input window, operand 3, single buffered']
    #allocation12 [shape = 's32[1]{0}', space=sflag, size = 0x4, scoped, tag = 'scoped memory for tpu_custom_call.1']
    #allocation13 [shape = 's32[1]{0}', space=sflag, size = 0x4, scoped, tag = 'scoped memory for tpu_custom_call.1']
    #allocation14 [shape = 'u8[4096]{0}', space=vmem, size = 0x1000, scoped, tag = 'input window, operand 4, single buffered']
    #allocation15 [shape = 's32[1]{0}', space=sflag, size = 0x4, scoped, tag = 'scoped memory for tpu_custom_call.1']
    #allocation16 [shape = 'u8[512]{0}', space=vmem, size = 0x400, scoped, tag = 'input window, operand 5, single buffered']
    #allocation17 [shape = 'u8[512]{0}', space=vmem, size = 0x400, scoped, tag = 'input window, operand 7, single buffered']
    #allocation18 [shape = 's32[1]{0}', space=sflag, size = 0x4, scoped, tag = 'scoped memory for tpu_custom_call.1']
    #allocation19 [shape = 'u8[4096]{0}', space=vmem, size = 0x1000, scoped, tag = 'input window, operand 8, single buffered']
    #allocation20 [shape = 'u8[4096]{0}', space=vmem, size = 0x1000, scoped, tag = 'input window, operand 9, single buffered']
    #allocation21 [shape = 's32[1]{0}', space=sflag, size = 0x4, scoped, tag = 'scoped memory for tpu_custom_call.1']
    #allocation22 [shape = 'u8[2048]{0}', space=vmem, size = 0x800, scoped, tag = 'input window, operand 10, single buffered']
    #allocation23 [shape = 'u8[512]{0}', space=vmem, size = 0x400, scoped, tag = 'input window, operand 11, single buffered']
    #allocation24 [shape = 's32[1]{0}', space=sflag, size = 0x4, scoped, tag = 'scoped memory for tpu_custom_call.1']
    #allocation25 [shape = 'u8[49152]{0}', space=vmem, size = 0xc000, scoped, tag = 'input window, operand 12, single buffered']
    #allocation26 [shape = 'u8[1536]{0}', space=vmem, size = 0x800, scoped, tag = 'input window, operand 13, single buffered']
    #allocation27 [shape = 's32[1]{0}', space=sflag, size = 0x4, scoped, tag = 'scoped memory for tpu_custom_call.1']
    #allocation28 [shape = 'u8[1536]{0}', space=vmem, size = 0x800, scoped, tag = 'input window, operand 14, single buffered']
    #allocation29 [shape = 'u8[1536]{0}', space=vmem, size = 0x800, scoped, tag = 'input window, operand 15, single buffered']
    #allocation30 [shape = 's32[1]{0}', space=sflag, size = 0x4, scoped, tag = 'scoped memory for tpu_custom_call.1']
    #allocation31 [shape = 'u8[1536]{0}', space=vmem, size = 0x800, scoped, tag = 'input window, operand 17, single buffered']
    #allocation32 [shape = 'u8[8192]{0}', space=vmem, size = 0x2000, scoped, tag = 'input window, operand 20, single buffered']
    #allocation33 [shape = 's32[1]{0}', space=sflag, size = 0x4, scoped, tag = 'scoped memory for tpu_custom_call.1']
    #allocation34 [shape = 'u8[2048]{0}', space=vmem, size = 0x800, scoped, tag = 'input window, operand 21, single buffered']
    #allocation35 [shape = 'u8[1536]{0}', space=vmem, size = 0x800, scoped, tag = 'input window, operand 23, single buffered']
    #allocation36 [shape = 's32[1]{0}', space=sflag, size = 0x4, scoped, tag = 'scoped memory for tpu_custom_call.1']
    #allocation37 [shape = 'u8[1536]{0}', space=vmem, size = 0x800, scoped, tag = 'input window, operand 24, single buffered']
    #allocation38 [shape = 'u8[1536]{0}', space=vmem, size = 0x800, scoped, tag = 'input window, operand 25, single buffered']
    #allocation39 [shape = 's32[1]{0}', space=sflag, size = 0x4, scoped, tag = 'scoped memory for tpu_custom_call.1']
    #allocation40 [shape = 'u8[1536]{0}', space=vmem, size = 0x800, scoped, tag = 'input window, operand 27, single buffered']
    #allocation41 [shape = 'u8[6144]{0}', space=vmem, size = 0x1800, scoped, tag = 'input window, operand 30, single buffered']
    #allocation42 [shape = 's32[1]{0}', space=sflag, size = 0x4, scoped, tag = 'scoped memory for tpu_custom_call.1']
    #allocation43 [shape = 'u8[1536]{0}', space=vmem, size = 0x800, scoped, tag = 'input window, operand 31, single buffered']
    #allocation44 [shape = 'u8[512]{0}', space=vmem, size = 0x400, scoped, tag = 'input window, operand 33, single buffered']
    #allocation45 [shape = 's32[1]{0}', space=sflag, size = 0x4, scoped, tag = 'scoped memory for tpu_custom_call.1']
    #allocation46 [shape = 'u8[512]{0}', space=vmem, size = 0x400, scoped, tag = 'input window, operand 34, single buffered']
    #allocation47 [shape = 'u8[512]{0}', space=vmem, size = 0x400, scoped, tag = 'input window, operand 35, single buffered']
    #allocation48 [shape = 's32[1]{0}', space=sflag, size = 0x4, scoped, tag = 'scoped memory for tpu_custom_call.1']
    #allocation49 [shape = 'u8[8192]{0}', space=vmem, size = 0x2000, scoped, tag = 'input window, operand 36, single buffered']
    #allocation50 [shape = 'u8[512]{0}', space=vmem, size = 0x400, scoped, tag = 'input window, operand 37, single buffered']
    #allocation51 [shape = 's32[1]{0}', space=sflag, size = 0x4, scoped, tag = 'scoped memory for tpu_custom_call.1']
    #allocation52 [shape = 'u8[8192]{0}', space=vmem, size = 0x2000, scoped, tag = 'output window, operand 0, single buffered']
    #allocation54 [shape = 'u32[9]{0}', space=smem, size = 0x24, scoped, tag = 'DMA stride descriptor']
    #allocation56 [shape = 'u32[9]{0}', space=smem, size = 0x24, scoped, tag = 'DMA stride descriptor']
    #allocation58 [shape = 'u32[9]{0}', space=smem, size = 0x24, scoped, tag = 'DMA stride descriptor']
    #allocation60 [shape = 'u32[9]{0}', space=smem, size = 0x24, scoped, tag = 'DMA stride descriptor']
    #allocation62 [shape = 'u32[9]{0}', space=smem, size = 0x24, scoped, tag = 'DMA stride descriptor']
    #allocation64 [shape = 'u32[9]{0}', space=smem, size = 0x24, scoped, tag = 'DMA stride descriptor']
    #allocation66 [shape = 'u32[9]{0}', space=smem, size = 0x24, scoped, tag = 'DMA stride descriptor']
    %82 = vsyncpa [#allocation12], 0
    %83 = vsyncpa [#allocation15], 0
    %84 = vsyncpa [#allocation18], 0
    %85 = vsyncpa [#allocation21], 0
    %86 = vsyncpa [#allocation24], 0
    %87 = vsyncpa [#allocation27], 0
    %88 = vsyncpa [#allocation30], 0
    %89 = vsyncpa [#allocation33], 0
    %90 = vsyncpa [#allocation36], 0
    %91 = vsyncpa [#allocation39], 0
    %92 = vsyncpa [#allocation42], 0
    %93 = vsyncpa [#allocation45], 0
    %94 = vsyncpa [#allocation48], 0
    %95 = vsyncpa [#allocation51], 0
    %96 = vsyncpa [#allocation13], 0
    // Predicated region
    $region2: #{tpu_custom_call.1} parent=1 // pred_check
      _
    $region3: #{tpu_custom_call.1} parent=1 // pred_check_branch
      %98 = sbr.rel (0) target = $region5
    $region4: #{tpu_custom_call.1} parent=1 // pred_region
      _
    $region5: #{tpu_custom_call.1} parent=1 // pred_fallthru
      _
    // Predicated region
    $region6: #{tpu_custom_call.1} parent=1 // pred_check
      _
    $region7: #{tpu_custom_call.1} parent=1 // pred_check_branch
      %100 = sbr.rel (0) target = $region9
    $region8: #{tpu_custom_call.1} parent=1 // pred_region
      _
    $region9: #{tpu_custom_call.1} parent=1 // pred_fallthru
      _
    // Predicated region
    $region10: #{tpu_custom_call.1} parent=1 // pred_check
      _
    $region11: #{tpu_custom_call.1} parent=1 // pred_check_branch
      %102 = sbr.rel (0) target = $region13
    $region12: #{tpu_custom_call.1} parent=1 // pred_region
      _
    $region13: #{tpu_custom_call.1} parent=1 // pred_fallthru
      _
    // Predicated region
    $region14: #{tpu_custom_call.1} parent=1 // pred_check
      _
    $region15: #{tpu_custom_call.1} parent=1 // pred_check_branch
      %104 = sbr.rel (0) target = $region17
    $region16: #{tpu_custom_call.1} parent=1 // pred_region
      %s106 = ssub.s32 256, 256
      %107 = vsyncadd [#allocation12], %s106
      %s108 = sshll.u32 [#allocation11], 4
      %s109 = int_to_ptr.vmem [resolvable:$true] %s108
      %114 = dma.hbm_to_vmem [thread:$0]  %s7, 256, %s109, [#allocation12], 128, 128, 8
    $region17: #{tpu_custom_call.1} parent=1 // pred_fallthru
      _
    // Predicated region
    $region18: #{tpu_custom_call.1} parent=1 // pred_check
      _
    $region19: #{tpu_custom_call.1} parent=1 // pred_check_branch
      %116 = sbr.rel (0) target = $region21
    $region20: #{tpu_custom_call.1} parent=1 // pred_region
      %s118 = ssub.s32 128, 128
      %119 = vsyncadd [#allocation15], %s118
      %s121 = sshll.u32 [#allocation14], 4
      %s122 = int_to_ptr.vmem [resolvable:$true] %s121
      %124 = dma.hbm_to_vmem [thread:$0]  %s9, 128, %s122, [#allocation15]
    $region21: #{tpu_custom_call.1} parent=1 // pred_fallthru
      _
    // Predicated region
    $region22: #{tpu_custom_call.1} parent=1 // pred_check
      _
    $region23: #{tpu_custom_call.1} parent=1 // pred_check_branch
      %126 = sbr.rel (0) target = $region25
    $region24: #{tpu_custom_call.1} parent=1 // pred_region
      %s128 = ssub.s32 16, 16
      %129 = vsyncadd [#allocation15], %s128
      %s131 = sshll.u32 [#allocation16], 4
      %s132 = int_to_ptr.vmem [resolvable:$true] %s131
      %134 = dma.hbm_to_vmem [thread:$0]  %s11, 16, %s132, [#allocation15]
    $region25: #{tpu_custom_call.1} parent=1 // pred_fallthru
      _
    // Predicated region
    $region26: #{tpu_custom_call.1} parent=1 // pred_check
      _
    $region27: #{tpu_custom_call.1} parent=1 // pred_check_branch
      %136 = sbr.rel (0) target = $region29
    $region28: #{tpu_custom_call.1} parent=1 // pred_region
      _
    $region29: #{tpu_custom_call.1} parent=1 // pred_fallthru
      _
    // Predicated region
    $region30: #{tpu_custom_call.1} parent=1 // pred_check
      _
    $region31: #{tpu_custom_call.1} parent=1 // pred_check_branch
      %138 = sbr.rel (0) target = $region33
    $region32: #{tpu_custom_call.1} parent=1 // pred_region
      %s140 = ssub.s32 16, 16
      %141 = vsyncadd [#allocation18], %s140
      %s143 = sshll.u32 [#allocation17], 4
      %s144 = int_to_ptr.vmem [resolvable:$true] %s143
      %146 = dma.hbm_to_vmem [thread:$0]  %s15, 16, %s144, [#allocation18]
    $region33: #{tpu_custom_call.1} parent=1 // pred_fallthru
      _
    // Predicated region
    $region34: #{tpu_custom_call.1} parent=1 // pred_check
      _
    $region35: #{tpu_custom_call.1} parent=1 // pred_check_branch
      %148 = sbr.rel (0) target = $region37
    $region36: #{tpu_custom_call.1} parent=1 // pred_region
      %s150 = ssub.s32 128, 128
      %151 = vsyncadd [#allocation18], %s150
      %s153 = sshll.u32 [#allocation19], 4
      %s154 = int_to_ptr.vmem [resolvable:$true] %s153
      %156 = dma.hbm_to_vmem [thread:$0]  %s17, 128, %s154, [#allocation18]
    $region37: #{tpu_custom_call.1} parent=1 // pred_fallthru
      _
    // Predicated region
    $region38: #{tpu_custom_call.1} parent=1 // pred_check
      _
    $region39: #{tpu_custom_call.1} parent=1 // pred_check_branch
      %158 = sbr.rel (0) target = $region41
    $region40: #{tpu_custom_call.1} parent=1 // pred_region
      %s160 = ssub.s32 128, 128
      %161 = vsyncadd [#allocation21], %s160
      %s163 = sshll.u32 [#allocation20], 4
      %s164 = int_to_ptr.vmem [resolvable:$true] %s163
      %166 = dma.hbm_to_vmem [thread:$0]  %s19, 128, %s164, [#allocation21]
    $region41: #{tpu_custom_call.1} parent=1 // pred_fallthru
      _
    // Predicated region
    $region42: #{tpu_custom_call.1} parent=1 // pred_check
      _
    $region43: #{tpu_custom_call.1} parent=1 // pred_check_branch
      %168 = sbr.rel (0) target = $region45
    $region44: #{tpu_custom_call.1} parent=1 // pred_region
      %s170 = ssub.s32 64, 64
      %171 = vsyncadd [#allocation21], %s170
      %s173 = sshll.u32 [#allocation22], 4
      %s174 = int_to_ptr.vmem [resolvable:$true] %s173
      %176 = dma.hbm_to_vmem [thread:$0]  %s21, 64, %s174, [#allocation21]
    $region45: #{tpu_custom_call.1} parent=1 // pred_fallthru
      _
    // Predicated region
    $region46: #{tpu_custom_call.1} parent=1 // pred_check
      _
    $region47: #{tpu_custom_call.1} parent=1 // pred_check_branch
      %178 = sbr.rel (0) target = $region49
    $region48: #{tpu_custom_call.1} parent=1 // pred_region
      %s180 = ssub.s32 16, 16
      %181 = vsyncadd [#allocation24], %s180
      %s183 = sshll.u32 [#allocation23], 4
      %s184 = int_to_ptr.vmem [resolvable:$true] %s183
      %186 = dma.hbm_to_vmem [thread:$0]  %s23, 16, %s184, [#allocation24]
    $region49: #{tpu_custom_call.1} parent=1 // pred_fallthru
      _
    // Predicated region
    $region50: #{tpu_custom_call.1} parent=1 // pred_check
      _
    $region51: #{tpu_custom_call.1} parent=1 // pred_check_branch
      %188 = sbr.rel (0) target = $region53
    $region52: #{tpu_custom_call.1} parent=1 // pred_region
      %s190 = ssub.s32 1536, 1536
      %191 = vsyncadd [#allocation24], %s190
      %s192 = sshll.u32 [#allocation25], 4
      %s193 = int_to_ptr.vmem [resolvable:$true] %s192
      %198 = dma.hbm_to_vmem [thread:$0]  %s25, 1536, %s193, [#allocation24], 384, 384, 24
    $region53: #{tpu_custom_call.1} parent=1 // pred_fallthru
      _
    // Predicated region
    $region54: #{tpu_custom_call.1} parent=1 // pred_check
      _
    $region55: #{tpu_custom_call.1} parent=1 // pred_check_branch
      %200 = sbr.rel (0) target = $region57
    $region56: #{tpu_custom_call.1} parent=1 // pred_region
      %s202 = ssub.s32 48, 48
      %203 = vsyncadd [#allocation27], %s202
      %s205 = sshll.u32 [#allocation26], 4
      %s206 = int_to_ptr.vmem [resolvable:$true] %s205
      %208 = dma.hbm_to_vmem [thread:$0]  %s27, 48, %s206, [#allocation27]
    $region57: #{tpu_custom_call.1} parent=1 // pred_fallthru
      _
    // Predicated region
    $region58: #{tpu_custom_call.1} parent=1 // pred_check
      _
    $region59: #{tpu_custom_call.1} parent=1 // pred_check_branch
      %210 = sbr.rel (0) target = $region61
    $region60: #{tpu_custom_call.1} parent=1 // pred_region
      %s212 = ssub.s32 48, 48
      %213 = vsyncadd [#allocation27], %s212
      %s215 = sshll.u32 [#allocation28], 4
      %s216 = int_to_ptr.vmem [resolvable:$true] %s215
      %218 = dma.hbm_to_vmem [thread:$0]  %s29, 48, %s216, [#allocation27]
    $region61: #{tpu_custom_call.1} parent=1 // pred_fallthru
      _
    // Predicated region
    $region62: #{tpu_custom_call.1} parent=1 // pred_check
      _
    $region63: #{tpu_custom_call.1} parent=1 // pred_check_branch
      %220 = sbr.rel (0) target = $region65
    $region64: #{tpu_custom_call.1} parent=1 // pred_region
      %s222 = ssub.s32 48, 48
      %223 = vsyncadd [#allocation30], %s222
      %s225 = sshll.u32 [#allocation29], 4
      %s226 = int_to_ptr.vmem [resolvable:$true] %s225
      %228 = dma.hbm_to_vmem [thread:$0]  %s31, 48, %s226, [#allocation30]
    $region65: #{tpu_custom_call.1} parent=1 // pred_fallthru
      _
    // Predicated region
    $region66: #{tpu_custom_call.1} parent=1 // pred_check
      _
    $region67: #{tpu_custom_call.1} parent=1 // pred_check_branch
      %230 = sbr.rel (0) target = $region69
    $region68: #{tpu_custom_call.1} parent=1 // pred_region
      %s232 = ssub.s32 48, 48
      %233 = vsyncadd [#allocation30], %s232
      %s235 = sshll.u32 [#allocation31], 4
      %s236 = int_to_ptr.vmem [resolvable:$true] %s235
      %238 = dma.hbm_to_vmem [thread:$0]  %s35, 48, %s236, [#allocation30]
    $region69: #{tpu_custom_call.1} parent=1 // pred_fallthru
      _
    // Predicated region
    $region70: #{tpu_custom_call.1} parent=1 // pred_check
      _
    $region71: #{tpu_custom_call.1} parent=1 // pred_check_branch
      %240 = sbr.rel (0) target = $region73
    $region72: #{tpu_custom_call.1} parent=1 // pred_region
      %s242 = ssub.s32 256, 256
      %243 = vsyncadd [#allocation33], %s242
      %s245 = sshll.u32 [#allocation32], 4
      %s246 = int_to_ptr.vmem [resolvable:$true] %s245
      %248 = dma.hbm_to_vmem [thread:$0]  %s41, 256, %s246, [#allocation33]
    $region73: #{tpu_custom_call.1} parent=1 // pred_fallthru
      _
    // Predicated region
    $region74: #{tpu_custom_call.1} parent=1 // pred_check
      _
    $region75: #{tpu_custom_call.1} parent=1 // pred_check_branch
      %250 = sbr.rel (0) target = $region77
    $region76: #{tpu_custom_call.1} parent=1 // pred_region
      %s252 = ssub.s32 64, 64
      %253 = vsyncadd [#allocation33], %s252
      %s255 = sshll.u32 [#allocation34], 4
      %s256 = int_to_ptr.vmem [resolvable:$true] %s255
      %258 = dma.hbm_to_vmem [thread:$0]  %s43, 64, %s256, [#allocation33]
    $region77: #{tpu_custom_call.1} parent=1 // pred_fallthru
      _
    // Predicated region
    $region78: #{tpu_custom_call.1} parent=1 // pred_check
      _
    $region79: #{tpu_custom_call.1} parent=1 // pred_check_branch
      %260 = sbr.rel (0) target = $region81
    $region80: #{tpu_custom_call.1} parent=1 // pred_region
      %s262 = ssub.s32 48, 48
      %263 = vsyncadd [#allocation36], %s262
      %s265 = sshll.u32 [#allocation35], 4
      %s266 = int_to_ptr.vmem [resolvable:$true] %s265
      %268 = dma.hbm_to_vmem [thread:$0]  %s47, 48, %s266, [#allocation36]
    $region81: #{tpu_custom_call.1} parent=1 // pred_fallthru
      _
    // Predicated region
    $region82: #{tpu_custom_call.1} parent=1 // pred_check
      _
    $region83: #{tpu_custom_call.1} parent=1 // pred_check_branch
      %270 = sbr.rel (0) target = $region85
    $region84: #{tpu_custom_call.1} parent=1 // pred_region
      %s272 = ssub.s32 48, 48
      %273 = vsyncadd [#allocation36], %s272
      %s275 = sshll.u32 [#allocation37], 4
      %s276 = int_to_ptr.vmem [resolvable:$true] %s275
      %278 = dma.hbm_to_vmem [thread:$0]  %s49, 48, %s276, [#allocation36]
    $region85: #{tpu_custom_call.1} parent=1 // pred_fallthru
      _
    // Predicated region
    $region86: #{tpu_custom_call.1} parent=1 // pred_check
      _
    $region87: #{tpu_custom_call.1} parent=1 // pred_check_branch
      %280 = sbr.rel (0) target = $region89
    $region88: #{tpu_custom_call.1} parent=1 // pred_region
      %s282 = ssub.s32 48, 48
      %283 = vsyncadd [#allocation39], %s282
      %s285 = sshll.u32 [#allocation38], 4
      %s286 = int_to_ptr.vmem [resolvable:$true] %s285
      %288 = dma.hbm_to_vmem [thread:$0]  %s51, 48, %s286, [#allocation39]
    $region89: #{tpu_custom_call.1} parent=1 // pred_fallthru
      _
    // Predicated region
    $region90: #{tpu_custom_call.1} parent=1 // pred_check
      _
    $region91: #{tpu_custom_call.1} parent=1 // pred_check_branch
      %290 = sbr.rel (0) target = $region93
    $region92: #{tpu_custom_call.1} parent=1 // pred_region
      %s292 = ssub.s32 48, 48
      %293 = vsyncadd [#allocation39], %s292
      %s295 = sshll.u32 [#allocation40], 4
      %s296 = int_to_ptr.vmem [resolvable:$true] %s295
      %298 = dma.hbm_to_vmem [thread:$0]  %s55, 48, %s296, [#allocation39]
    $region93: #{tpu_custom_call.1} parent=1 // pred_fallthru
      _
    // Predicated region
    $region94: #{tpu_custom_call.1} parent=1 // pred_check
      _
    $region95: #{tpu_custom_call.1} parent=1 // pred_check_branch
      %300 = sbr.rel (0) target = $region97
    $region96: #{tpu_custom_call.1} parent=1 // pred_region
      %s302 = ssub.s32 192, 192
      %303 = vsyncadd [#allocation42], %s302
      %s305 = sshll.u32 [#allocation41], 4
      %s306 = int_to_ptr.vmem [resolvable:$true] %s305
      %308 = dma.hbm_to_vmem [thread:$0]  %s61, 192, %s306, [#allocation42]
    $region97: #{tpu_custom_call.1} parent=1 // pred_fallthru
      _
    // Predicated region
    $region98: #{tpu_custom_call.1} parent=1 // pred_check
      _
    $region99: #{tpu_custom_call.1} parent=1 // pred_check_branch
      %310 = sbr.rel (0) target = $region101
    $region100: #{tpu_custom_call.1} parent=1 // pred_region
      %s312 = ssub.s32 48, 48
      %313 = vsyncadd [#allocation42], %s312
      %s315 = sshll.u32 [#allocation43], 4
      %s316 = int_to_ptr.vmem [resolvable:$true] %s315
      %318 = dma.hbm_to_vmem [thread:$0]  %s63, 48, %s316, [#allocation42]
    $region101: #{tpu_custom_call.1} parent=1 // pred_fallthru
      _
    // Predicated region
    $region102: #{tpu_custom_call.1} parent=1 // pred_check
      _
    $region103: #{tpu_custom_call.1} parent=1 // pred_check_branch
      %320 = sbr.rel (0) target = $region105
    $region104: #{tpu_custom_call.1} parent=1 // pred_region
      %s322 = ssub.s32 16, 16
      %323 = vsyncadd [#allocation45], %s322
      %s325 = sshll.u32 [#allocation44], 4
      %s326 = int_to_ptr.vmem [resolvable:$true] %s325
      %328 = dma.hbm_to_vmem [thread:$0]  %s67, 16, %s326, [#allocation45]
    $region105: #{tpu_custom_call.1} parent=1 // pred_fallthru
      _
    // Predicated region
    $region106: #{tpu_custom_call.1} parent=1 // pred_check
      _
    $region107: #{tpu_custom_call.1} parent=1 // pred_check_branch
      %330 = sbr.rel (0) target = $region109
    $region108: #{tpu_custom_call.1} parent=1 // pred_region
      %s332 = ssub.s32 16, 16
      %333 = vsyncadd [#allocation45], %s332
      %s335 = sshll.u32 [#allocation46], 4
      %s336 = int_to_ptr.vmem [resolvable:$true] %s335
      %338 = dma.hbm_to_vmem [thread:$0]  %s69, 16, %s336, [#allocation45]
    $region109: #{tpu_custom_call.1} parent=1 // pred_fallthru
      _
    // Predicated region
    $region110: #{tpu_custom_call.1} parent=1 // pred_check
      _
    $region111: #{tpu_custom_call.1} parent=1 // pred_check_branch
      %340 = sbr.rel (0) target = $region113
    $region112: #{tpu_custom_call.1} parent=1 // pred_region
      %s342 = ssub.s32 16, 16
      %343 = vsyncadd [#allocation48], %s342
      %s345 = sshll.u32 [#allocation47], 4
      %s346 = int_to_ptr.vmem [resolvable:$true] %s345
      %348 = dma.hbm_to_vmem [thread:$0]  %s71, 16, %s346, [#allocation48]
    $region113: #{tpu_custom_call.1} parent=1 // pred_fallthru
      _
    // Predicated region
    $region114: #{tpu_custom_call.1} parent=1 // pred_check
      _
    $region115: #{tpu_custom_call.1} parent=1 // pred_check_branch
      %350 = sbr.rel (0) target = $region117
    $region116: #{tpu_custom_call.1} parent=1 // pred_region
      %s352 = ssub.s32 256, 256
      %353 = vsyncadd [#allocation48], %s352
      %s354 = sshll.u32 [#allocation49], 4
      %s355 = int_to_ptr.vmem [resolvable:$true] %s354
      %360 = dma.hbm_to_vmem [thread:$0]  %s73, 256, %s355, [#allocation48], 128, 128, 8
    $region117: #{tpu_custom_call.1} parent=1 // pred_fallthru
      _
    // Predicated region
    $region118: #{tpu_custom_call.1} parent=1 // pred_check
      _
    $region119: #{tpu_custom_call.1} parent=1 // pred_check_branch
      %362 = sbr.rel (0) target = $region121
    $region120: #{tpu_custom_call.1} parent=1 // pred_region
      %s364 = ssub.s32 16, 16
      %365 = vsyncadd [#allocation51], %s364
      %s367 = sshll.u32 [#allocation50], 4
      %s368 = int_to_ptr.vmem [resolvable:$true] %s367
      %370 = dma.hbm_to_vmem [thread:$0]  %s75, 16, %s368, [#allocation51]
    $region121: #{tpu_custom_call.1} parent=1 // pred_fallthru
      _
    // Predicated region
    $region122: #{tpu_custom_call.1} parent=1 // pred_check
      _
    $region123: #{tpu_custom_call.1} parent=1 // pred_check_branch
      %372 = sbr.rel (0) target = $region125
    $region124: #{tpu_custom_call.1} parent=1 // pred_region
      %373 = dma.done [#allocation12], 256
    $region125: #{tpu_custom_call.1} parent=1 // pred_fallthru
      _
    // Predicated region
    $region126: #{tpu_custom_call.1} parent=1 // pred_check
      _
    $region127: #{tpu_custom_call.1} parent=1 // pred_check_branch
      %375 = sbr.rel (0) target = $region129
    $region128: #{tpu_custom_call.1} parent=1 // pred_region
      %376 = dma.done [#allocation15], 128
    $region129: #{tpu_custom_call.1} parent=1 // pred_fallthru
      _
    // Predicated region
    $region130: #{tpu_custom_call.1} parent=1 // pred_check
      _
    $region131: #{tpu_custom_call.1} parent=1 // pred_check_branch
      %378 = sbr.rel (0) target = $region133
    $region132: #{tpu_custom_call.1} parent=1 // pred_region
      %379 = dma.done [#allocation15], 16
    $region133: #{tpu_custom_call.1} parent=1 // pred_fallthru
      _
    // Predicated region
    $region134: #{tpu_custom_call.1} parent=1 // pred_check
      _
    $region135: #{tpu_custom_call.1} parent=1 // pred_check_branch
      %381 = sbr.rel (0) target = $region137
    $region136: #{tpu_custom_call.1} parent=1 // pred_region
      %382 = dma.done [#allocation18], 16
    $region137: #{tpu_custom_call.1} parent=1 // pred_fallthru
      _
    // Predicated region
    $region138: #{tpu_custom_call.1} parent=1 // pred_check
      _
    $region139: #{tpu_custom_call.1} parent=1 // pred_check_branch
      %384 = sbr.rel (0) target = $region141
    $region140: #{tpu_custom_call.1} parent=1 // pred_region
      %385 = dma.done [#allocation18], 128
    $region141: #{tpu_custom_call.1} parent=1 // pred_fallthru
      _
    // Predicated region
    $region142: #{tpu_custom_call.1} parent=1 // pred_check
      _
    $region143: #{tpu_custom_call.1} parent=1 // pred_check_branch
      %387 = sbr.rel (0) target = $region145
    $region144: #{tpu_custom_call.1} parent=1 // pred_region
      %388 = dma.done [#allocation21], 128
    $region145: #{tpu_custom_call.1} parent=1 // pred_fallthru
      _
    // Predicated region
    $region146: #{tpu_custom_call.1} parent=1 // pred_check
      _
    $region147: #{tpu_custom_call.1} parent=1 // pred_check_branch
      %390 = sbr.rel (0) target = $region149
    $region148: #{tpu_custom_call.1} parent=1 // pred_region
      %391 = dma.done [#allocation21], 64
    $region149: #{tpu_custom_call.1} parent=1 // pred_fallthru
      _
    // Predicated region
    $region150: #{tpu_custom_call.1} parent=1 // pred_check
      _
    $region151: #{tpu_custom_call.1} parent=1 // pred_check_branch
      %393 = sbr.rel (0) target = $region153
    $region152: #{tpu_custom_call.1} parent=1 // pred_region
      %394 = dma.done [#allocation24], 16
    $region153: #{tpu_custom_call.1} parent=1 // pred_fallthru
      _
    // Predicated region
    $region154: #{tpu_custom_call.1} parent=1 // pred_check
      _
    $region155: #{tpu_custom_call.1} parent=1 // pred_check_branch
      %396 = sbr.rel (0) target = $region157
    $region156: #{tpu_custom_call.1} parent=1 // pred_region
      %397 = dma.done [#allocation24], 1536
    $region157: #{tpu_custom_call.1} parent=1 // pred_fallthru
      _
    // Predicated region
    $region158: #{tpu_custom_call.1} parent=1 // pred_check
      _
    $region159: #{tpu_custom_call.1} parent=1 // pred_check_branch
      %399 = sbr.rel (0) target = $region161
    $region160: #{tpu_custom_call.1} parent=1 // pred_region
      %400 = dma.done [#allocation27], 48
    $region161: #{tpu_custom_call.1} parent=1 // pred_fallthru
      _
    // Predicated region
    $region162: #{tpu_custom_call.1} parent=1 // pred_check
      _
    $region163: #{tpu_custom_call.1} parent=1 // pred_check_branch
      %402 = sbr.rel (0) target = $region165
    $region164: #{tpu_custom_call.1} parent=1 // pred_region
      %403 = dma.done [#allocation27], 48
    $region165: #{tpu_custom_call.1} parent=1 // pred_fallthru
      _
    // Predicated region
    $region166: #{tpu_custom_call.1} parent=1 // pred_check
      _
    $region167: #{tpu_custom_call.1} parent=1 // pred_check_branch
      %405 = sbr.rel (0) target = $region169
    $region168: #{tpu_custom_call.1} parent=1 // pred_region
      %406 = dma.done [#allocation30], 48
    $region169: #{tpu_custom_call.1} parent=1 // pred_fallthru
      _
    // Predicated region
    $region170: #{tpu_custom_call.1} parent=1 // pred_check
      _
    $region171: #{tpu_custom_call.1} parent=1 // pred_check_branch
      %408 = sbr.rel (0) target = $region173
    $region172: #{tpu_custom_call.1} parent=1 // pred_region
      %409 = dma.done [#allocation30], 48
    $region173: #{tpu_custom_call.1} parent=1 // pred_fallthru
      _
    // Predicated region
    $region174: #{tpu_custom_call.1} parent=1 // pred_check
      _
    $region175: #{tpu_custom_call.1} parent=1 // pred_check_branch
      %411 = sbr.rel (0) target = $region177
    $region176: #{tpu_custom_call.1} parent=1 // pred_region
      %412 = dma.done [#allocation33], 256
    $region177: #{tpu_custom_call.1} parent=1 // pred_fallthru
      _
    // Predicated region
    $region178: #{tpu_custom_call.1} parent=1 // pred_check
      _
    $region179: #{tpu_custom_call.1} parent=1 // pred_check_branch
      %414 = sbr.rel (0) target = $region181
    $region180: #{tpu_custom_call.1} parent=1 // pred_region
      %415 = dma.done [#allocation33], 64
    $region181: #{tpu_custom_call.1} parent=1 // pred_fallthru
      _
    // Predicated region
    $region182: #{tpu_custom_call.1} parent=1 // pred_check
      _
    $region183: #{tpu_custom_call.1} parent=1 // pred_check_branch
      %417 = sbr.rel (0) target = $region185
    $region184: #{tpu_custom_call.1} parent=1 // pred_region
      %418 = dma.done [#allocation36], 48
    $region185: #{tpu_custom_call.1} parent=1 // pred_fallthru
      _
    // Predicated region
    $region186: #{tpu_custom_call.1} parent=1 // pred_check
      _
    $region187: #{tpu_custom_call.1} parent=1 // pred_check_branch
      %420 = sbr.rel (0) target = $region189
    $region188: #{tpu_custom_call.1} parent=1 // pred_region
      %421 = dma.done [#allocation36], 48
    $region189: #{tpu_custom_call.1} parent=1 // pred_fallthru
      _
    // Predicated region
    $region190: #{tpu_custom_call.1} parent=1 // pred_check
      _
    $region191: #{tpu_custom_call.1} parent=1 // pred_check_branch
      %423 = sbr.rel (0) target = $region193
    $region192: #{tpu_custom_call.1} parent=1 // pred_region
      %424 = dma.done [#allocation39], 48
    $region193: #{tpu_custom_call.1} parent=1 // pred_fallthru
      _
    // Predicated region
    $region194: #{tpu_custom_call.1} parent=1 // pred_check
      _
    $region195: #{tpu_custom_call.1} parent=1 // pred_check_branch
      %426 = sbr.rel (0) target = $region197
    $region196: #{tpu_custom_call.1} parent=1 // pred_region
      %427 = dma.done [#allocation39], 48
    $region197: #{tpu_custom_call.1} parent=1 // pred_fallthru
      _
    // Predicated region
    $region198: #{tpu_custom_call.1} parent=1 // pred_check
      _
    $region199: #{tpu_custom_call.1} parent=1 // pred_check_branch
      %429 = sbr.rel (0) target = $region201
    $region200: #{tpu_custom_call.1} parent=1 // pred_region
      %430 = dma.done [#allocation42], 192
    $region201: #{tpu_custom_call.1} parent=1 // pred_fallthru
      _
    // Predicated region
    $region202: #{tpu_custom_call.1} parent=1 // pred_check
      _
    $region203: #{tpu_custom_call.1} parent=1 // pred_check_branch
      %432 = sbr.rel (0) target = $region205
    $region204: #{tpu_custom_call.1} parent=1 // pred_region
      %433 = dma.done [#allocation42], 48
    $region205: #{tpu_custom_call.1} parent=1 // pred_fallthru
      _
    // Predicated region
    $region206: #{tpu_custom_call.1} parent=1 // pred_check
      _
    $region207: #{tpu_custom_call.1} parent=1 // pred_check_branch
      %435 = sbr.rel (0) target = $region209
    $region208: #{tpu_custom_call.1} parent=1 // pred_region
      %436 = dma.done [#allocation45], 16
    $region209: #{tpu_custom_call.1} parent=1 // pred_fallthru
      _
    // Predicated region
    $region210: #{tpu_custom_call.1} parent=1 // pred_check
      _
    $region211: #{tpu_custom_call.1} parent=1 // pred_check_branch
      %438 = sbr.rel (0) target = $region213
    $region212: #{tpu_custom_call.1} parent=1 // pred_region
      %439 = dma.done [#allocation45], 16
    $region213: #{tpu_custom_call.1} parent=1 // pred_fallthru
      _
    // Predicated region
    $region214: #{tpu_custom_call.1} parent=1 // pred_check
      _
    $region215: #{tpu_custom_call.1} parent=1 // pred_check_branch
      %441 = sbr.rel (0) target = $region217
    $region216: #{tpu_custom_call.1} parent=1 // pred_region
      %442 = dma.done [#allocation48], 16
    $region217: #{tpu_custom_call.1} parent=1 // pred_fallthru
      _
    // Predicated region
    $region218: #{tpu_custom_call.1} parent=1 // pred_check
      _
    $region219: #{tpu_custom_call.1} parent=1 // pred_check_branch
      %444 = sbr.rel (0) target = $region221
    $region220: #{tpu_custom_call.1} parent=1 // pred_region
      %445 = dma.done [#allocation48], 256
    $region221: #{tpu_custom_call.1} parent=1 // pred_fallthru
      _
    // Predicated region
    $region222: #{tpu_custom_call.1} parent=1 // pred_check
      _
    $region223: #{tpu_custom_call.1} parent=1 // pred_check_branch
      %447 = sbr.rel (0) target = $region225
    $region224: #{tpu_custom_call.1} parent=1 // pred_region
      %448 = dma.done [#allocation51], 16
    $region225: #{tpu_custom_call.1} parent=1 // pred_fallthru
      _
    %s451 = sshll.u32 1, 14
    %s452 = sxor.u32 4294967295, %s451
    %s454 = sld [smem:[#allocation0]]
    %s455 = sadd.s32 2, %s454
    %s457 = sshll.u32 7, 26
    %s458 = sxor.u32 4294967295, %s457
    %s459 = sand.u32 0, %s458
    %s460 = sshll.u32 %s455, 26
    %s461 = sor.u32 %s459, %s460
    %s462 = sshll.u32 [#allocation2], 4
    %s463 = int_to_ptr.vmem [resolvable:$true] %s462
    %466 = sst [smem:[#allocation54]] 384
    %s467 = scalar_lea.smem [#allocation54], 1
    %468 = sst [smem:[%s467]] 384
    %s469 = scalar_lea.smem [#allocation54], 2
    %470 = sst [smem:[%s469]] 3
    %s471 = scalar_lea.smem [#allocation54], 3
    %472 = sst [smem:[%s471]] 64
    %s473 = scalar_lea.smem [#allocation54], 4
    %474 = sst [smem:[%s473]] 128
    %s475 = scalar_lea.smem [#allocation54], 5
    %476 = sst [smem:[%s475]] 2
    %s477 = scalar_lea.smem [#allocation54], 6
    %478 = sst [smem:[%s477]] 192
    %s479 = scalar_lea.smem [#allocation54], 7
    %480 = sst [smem:[%s479]] 64
    %s481 = scalar_lea.smem [#allocation54], 8
    %482 = sst [smem:[%s481]] 4
    %484 = dma.general %s33, 9216, %s463, [#allocation10], [#allocation53], [#allocation54], %s461, 0
    %s485 = scalar_lea.sflag [#allocation10], 1
    %s487 = sshll.u32 1, 14
    %s488 = sxor.u32 4294967295, %s487
    %s490 = sadd.s32 2, %s454
    %s492 = sshll.u32 7, 26
    %s493 = sxor.u32 4294967295, %s492
    %s494 = sand.u32 0, %s493
    %s495 = sshll.u32 %s490, 26
    %s496 = sor.u32 %s494, %s495
    %s497 = sshll.u32 [#allocation3], 4
    %s498 = int_to_ptr.vmem [resolvable:$true] %s497
    %501 = sst [smem:[#allocation56]] 512
    %s502 = scalar_lea.smem [#allocation56], 1
    %503 = sst [smem:[%s502]] 512
    %s504 = scalar_lea.smem [#allocation56], 2
    %505 = sst [smem:[%s504]] 4
    %s506 = scalar_lea.smem [#allocation56], 3
    %507 = sst [smem:[%s506]] 64
    %s508 = scalar_lea.smem [#allocation56], 4
    %509 = sst [smem:[%s508]] 128
    %s510 = scalar_lea.smem [#allocation56], 5
    %511 = sst [smem:[%s510]] 2
    %s512 = scalar_lea.smem [#allocation56], 6
    %513 = sst [smem:[%s512]] 256
    %s514 = scalar_lea.smem [#allocation56], 7
    %515 = sst [smem:[%s514]] 64
    %s516 = scalar_lea.smem [#allocation56], 8
    %517 = sst [smem:[%s516]] 4
    %519 = dma.general %s37, 13312, %s498, %s485, [#allocation55], [#allocation56], %s496, 0
    %s520 = scalar_lea.sflag [#allocation10], 2
    %s522 = sshll.u32 1, 14
    %s523 = sxor.u32 4294967295, %s522
    %s525 = sadd.s32 2, %s454
    %s527 = sshll.u32 7, 26
    %s528 = sxor.u32 4294967295, %s527
    %s529 = sand.u32 0, %s528
    %s530 = sshll.u32 %s525, 26
    %s531 = sor.u32 %s529, %s530
    %s532 = sshll.u32 [#allocation4], 4
    %s533 = int_to_ptr.vmem [resolvable:$true] %s532
    %536 = sst [smem:[#allocation58]] 512
    %s537 = scalar_lea.smem [#allocation58], 1
    %538 = sst [smem:[%s537]] 512
    %s539 = scalar_lea.smem [#allocation58], 2
    %540 = sst [smem:[%s539]] 4
    %s541 = scalar_lea.smem [#allocation58], 3
    %542 = sst [smem:[%s541]] 64
    %s543 = scalar_lea.smem [#allocation58], 4
    %544 = sst [smem:[%s543]] 128
    %s545 = scalar_lea.smem [#allocation58], 5
    %546 = sst [smem:[%s545]] 2
    %s547 = scalar_lea.smem [#allocation58], 6
    %548 = sst [smem:[%s547]] 256
    %s549 = scalar_lea.smem [#allocation58], 7
    %550 = sst [smem:[%s549]] 64
    %s551 = scalar_lea.smem [#allocation58], 8
    %552 = sst [smem:[%s551]] 4
    %554 = dma.general %s39, 13312, %s533, %s520, [#allocation57], [#allocation58], %s531, 0
    %s555 = scalar_lea.sflag [#allocation10], 3
    %s557 = sshll.u32 1, 14
    %s558 = sxor.u32 4294967295, %s557
    %s560 = sadd.s32 2, %s454
    %s562 = sshll.u32 7, 26
    %s563 = sxor.u32 4294967295, %s562
    %s564 = sand.u32 0, %s563
    %s565 = sshll.u32 %s560, 26
    %s566 = sor.u32 %s564, %s565
    %s567 = sshll.u32 [#allocation5], 4
    %s568 = int_to_ptr.vmem [resolvable:$true] %s567
    %571 = sst [smem:[#allocation60]] 384
    %s572 = scalar_lea.smem [#allocation60], 1
    %573 = sst [smem:[%s572]] 384
    %s574 = scalar_lea.smem [#allocation60], 2
    %575 = sst [smem:[%s574]] 3
    %s576 = scalar_lea.smem [#allocation60], 3
    %577 = sst [smem:[%s576]] 64
    %s578 = scalar_lea.smem [#allocation60], 4
    %579 = sst [smem:[%s578]] 128
    %s580 = scalar_lea.smem [#allocation60], 5
    %581 = sst [smem:[%s580]] 2
    %s582 = scalar_lea.smem [#allocation60], 6
    %583 = sst [smem:[%s582]] 192
    %s584 = scalar_lea.smem [#allocation60], 7
    %585 = sst [smem:[%s584]] 64
    %s586 = scalar_lea.smem [#allocation60], 8
    %587 = sst [smem:[%s586]] 4
    %589 = dma.general %s45, 39936, %s568, %s555, [#allocation59], [#allocation60], %s566, 0
    %s590 = scalar_lea.sflag [#allocation10], 4
    %s592 = sshll.u32 1, 14
    %s593 = sxor.u32 4294967295, %s592
    %s595 = sadd.s32 2, %s454
    %s597 = sshll.u32 7, 26
    %s598 = sxor.u32 4294967295, %s597
    %s599 = sand.u32 0, %s598
    %s600 = sshll.u32 %s595, 26
    %s601 = sor.u32 %s599, %s600
    %s602 = sshll.u32 [#allocation6], 4
    %s603 = int_to_ptr.vmem [resolvable:$true] %s602
    %606 = sst [smem:[#allocation62]] 384
    %s607 = scalar_lea.smem [#allocation62], 1
    %608 = sst [smem:[%s607]] 384
    %s609 = scalar_lea.smem [#allocation62], 2
    %610 = sst [smem:[%s609]] 3
    %s611 = scalar_lea.smem [#allocation62], 3
    %612 = sst [smem:[%s611]] 64
    %s613 = scalar_lea.smem [#allocation62], 4
    %614 = sst [smem:[%s613]] 128
    %s615 = scalar_lea.smem [#allocation62], 5
    %616 = sst [smem:[%s615]] 2
    %s617 = scalar_lea.smem [#allocation62], 6
    %618 = sst [smem:[%s617]] 192
    %s619 = scalar_lea.smem [#allocation62], 7
    %620 = sst [smem:[%s619]] 64
    %s621 = scalar_lea.smem [#allocation62], 8
    %622 = sst [smem:[%s621]] 4
    %624 = dma.general %s53, 9216, %s603, %s590, [#allocation61], [#allocation62], %s601, 0
    %s625 = scalar_lea.sflag [#allocation10], 5
    %s627 = sshll.u32 1, 14
    %s628 = sxor.u32 4294967295, %s627
    %s630 = sadd.s32 2, %s454
    %s632 = sshll.u32 7, 26
    %s633 = sxor.u32 4294967295, %s632
    %s634 = sand.u32 0, %s633
    %s635 = sshll.u32 %s630, 26
    %s636 = sor.u32 %s634, %s635
    %s637 = sshll.u32 [#allocation7], 4
    %s638 = int_to_ptr.vmem [resolvable:$true] %s637
    %641 = sst [smem:[#allocation64]] 384
    %s642 = scalar_lea.smem [#allocation64], 1
    %643 = sst [smem:[%s642]] 384
    %s644 = scalar_lea.smem [#allocation64], 2
    %645 = sst [smem:[%s644]] 3
    %s646 = scalar_lea.smem [#allocation64], 3
    %647 = sst [smem:[%s646]] 64
    %s648 = scalar_lea.smem [#allocation64], 4
    %649 = sst [smem:[%s648]] 128
    %s650 = scalar_lea.smem [#allocation64], 5
    %651 = sst [smem:[%s650]] 2
    %s652 = scalar_lea.smem [#allocation64], 6
    %653 = sst [smem:[%s652]] 192
    %s654 = scalar_lea.smem [#allocation64], 7
    %655 = sst [smem:[%s654]] 64
    %s656 = scalar_lea.smem [#allocation64], 8
    %657 = sst [smem:[%s656]] 4
    %659 = dma.general %s57, 9216, %s638, %s625, [#allocation63], [#allocation64], %s636, 0
    %s660 = scalar_lea.sflag [#allocation10], 6
    %s662 = sshll.u32 1, 14
    %s663 = sxor.u32 4294967295, %s662
    %s665 = sadd.s32 2, %s454
    %s667 = sshll.u32 7, 26
    %s668 = sxor.u32 4294967295, %s667
    %s669 = sand.u32 0, %s668
    %s670 = sshll.u32 %s665, 26
    %s671 = sor.u32 %s669, %s670
    %s672 = sshll.u32 [#allocation8], 4
    %s673 = int_to_ptr.vmem [resolvable:$true] %s672
    %676 = sst [smem:[#allocation66]] 384
    %s677 = scalar_lea.smem [#allocation66], 1
    %678 = sst [smem:[%s677]] 384
    %s679 = scalar_lea.smem [#allocation66], 2
    %680 = sst [smem:[%s679]] 3
    %s681 = scalar_lea.smem [#allocation66], 3
    %682 = sst [smem:[%s681]] 64
    %s683 = scalar_lea.smem [#allocation66], 4
    %684 = sst [smem:[%s683]] 128
    %s685 = scalar_lea.smem [#allocation66], 5
    %686 = sst [smem:[%s685]] 2
    %s687 = scalar_lea.smem [#allocation66], 6
    %688 = sst [smem:[%s687]] 192
    %s689 = scalar_lea.smem [#allocation66], 7
    %690 = sst [smem:[%s689]] 64
    %s691 = scalar_lea.smem [#allocation66], 8
    %692 = sst [smem:[%s691]] 4
    %694 = dma.general %s59, 9216, %s673, %s660, [#allocation65], [#allocation66], %s671, 0
    %s695 = scalar_lea.sflag [#allocation10], 7
    %p697 = scmp.lt.u32.totalorder 768, 8
    %p698 = pneg %p697
    // Predicated region
    $region226: #{tpu_custom_call.1} parent=1 // pred_check
      _
    $region227: #{tpu_custom_call.1} parent=1 // pred_check_branch
      %700 = sbr.rel (%p697) target = $region229
    $region228: #{tpu_custom_call.1} parent=1 // pred_region
      %s715 = sand.u32 768, 7
      %p716 = scmp.eq.s32.totalorder %s715, 0
      // Predicated region
      $region241: #{tpu_custom_call.1} parent=228 // pred_check
        %p717 = pneg %p716
      $region242: #{tpu_custom_call.1} parent=228 // pred_check_branch
        %719 = sbr.rel (%p717) target = $region244
      $region243: #{tpu_custom_call.1} parent=228 // pred_region
        loop: start=0, step=1, limit=1
        $region245: #{tpu_custom_call.1} parent=243 // loop_pre_header
          _
        $region246: #{tpu_custom_call.1} parent=243 // loop_header
          %s721 = sphi 0, %s725
          %p722 = scmp.ge.s32.totalorder %s721, 1
          %s726 = sphi %s65, %s65
          %s727 = sphi [#allocation9], [#allocation9]
        $region247: #{tpu_custom_call.1} parent=243 // loop_header_branch
          %724 = sbr.rel (%p722) target = $region251
        $region248: #{tpu_custom_call.1} parent=243 // loop_body
          %v728 = vld [vmem:[%s726] sm:$0xff]
          %729 = vst [vmem:[%s727] sm:$0xff] %v728
          %v730 = vld [vmem:[%s726 + $0x8] sm:$0xff]
          %731 = vst [vmem:[%s727 + $0x8] sm:$0xff] %v730
          %v732 = vld [vmem:[%s726 + $0x10] sm:$0xff]
          %733 = vst [vmem:[%s727 + $0x10] sm:$0xff] %v732
          %v734 = vld [vmem:[%s726 + $0x18] sm:$0xff]
          %735 = vst [vmem:[%s727 + $0x18] sm:$0xff] %v734
          %v736 = vld [vmem:[%s726 + $0x20] sm:$0xff]
          %737 = vst [vmem:[%s727 + $0x20] sm:$0xff] %v736
          %v738 = vld [vmem:[%s726 + $0x28] sm:$0xff]
          %739 = vst [vmem:[%s727 + $0x28] sm:$0xff] %v738
          %v740 = vld [vmem:[%s726 + $0x30] sm:$0xff]
          %741 = vst [vmem:[%s727 + $0x30] sm:$0xff] %v740
          %v742 = vld [vmem:[%s726 + $0x38] sm:$0xff]
          %743 = vst [vmem:[%s727 + $0x38] sm:$0xff] %v742
          %v744 = vld [vmem:[%s726 + $0x40] sm:$0xff]
          %745 = vst [vmem:[%s727 + $0x40] sm:$0xff] %v744
          %v746 = vld [vmem:[%s726 + $0x48] sm:$0xff]
          %747 = vst [vmem:[%s727 + $0x48] sm:$0xff] %v746
          %v748 = vld [vmem:[%s726 + $0x50] sm:$0xff]
          %749 = vst [vmem:[%s727 + $0x50] sm:$0xff] %v748
          %v750 = vld [vmem:[%s726 + $0x58] sm:$0xff]
          %751 = vst [vmem:[%s727 + $0x58] sm:$0xff] %v750
          %v752 = vld [vmem:[%s726 + $0x60] sm:$0xff]
          %753 = vst [vmem:[%s727 + $0x60] sm:$0xff] %v752
          %v754 = vld [vmem:[%s726 + $0x68] sm:$0xff]
          %755 = vst [vmem:[%s727 + $0x68] sm:$0xff] %v754
          %v756 = vld [vmem:[%s726 + $0x70] sm:$0xff]
          %757 = vst [vmem:[%s727 + $0x70] sm:$0xff] %v756
          %v758 = vld [vmem:[%s726 + $0x78] sm:$0xff]
          %759 = vst [vmem:[%s727 + $0x78] sm:$0xff] %v758
          %v760 = vld [vmem:[%s726 + $0x80] sm:$0xff]
          %761 = vst [vmem:[%s727 + $0x80] sm:$0xff] %v760
          %v762 = vld [vmem:[%s726 + $0x88] sm:$0xff]
          %763 = vst [vmem:[%s727 + $0x88] sm:$0xff] %v762
          %v764 = vld [vmem:[%s726 + $0x90] sm:$0xff]
          %765 = vst [vmem:[%s727 + $0x90] sm:$0xff] %v764
          %v766 = vld [vmem:[%s726 + $0x98] sm:$0xff]
          %767 = vst [vmem:[%s727 + $0x98] sm:$0xff] %v766
          %v768 = vld [vmem:[%s726 + $0xa0] sm:$0xff]
          %769 = vst [vmem:[%s727 + $0xa0] sm:$0xff] %v768
          %v770 = vld [vmem:[%s726 + $0xa8] sm:$0xff]
          %771 = vst [vmem:[%s727 + $0xa8] sm:$0xff] %v770
          %v772 = vld [vmem:[%s726 + $0xb0] sm:$0xff]
          %773 = vst [vmem:[%s727 + $0xb0] sm:$0xff] %v772
          %v774 = vld [vmem:[%s726 + $0xb8] sm:$0xff]
          %775 = vst [vmem:[%s727 + $0xb8] sm:$0xff] %v774
          %v776 = vld [vmem:[%s726 + $0xc0] sm:$0xff]
          %777 = vst [vmem:[%s727 + $0xc0] sm:$0xff] %v776
          %v778 = vld [vmem:[%s726 + $0xc8] sm:$0xff]
          %779 = vst [vmem:[%s727 + $0xc8] sm:$0xff] %v778
          %v780 = vld [vmem:[%s726 + $0xd0] sm:$0xff]
          %781 = vst [vmem:[%s727 + $0xd0] sm:$0xff] %v780
          %v782 = vld [vmem:[%s726 + $0xd8] sm:$0xff]
          %783 = vst [vmem:[%s727 + $0xd8] sm:$0xff] %v782
          %v784 = vld [vmem:[%s726 + $0xe0] sm:$0xff]
          %785 = vst [vmem:[%s727 + $0xe0] sm:$0xff] %v784
          %v786 = vld [vmem:[%s726 + $0xe8] sm:$0xff]
          %787 = vst [vmem:[%s727 + $0xe8] sm:$0xff] %v786
          %v788 = vld [vmem:[%s726 + $0xf0] sm:$0xff]
          %789 = vst [vmem:[%s727 + $0xf0] sm:$0xff] %v788
          %v790 = vld [vmem:[%s726 + $0xf8] sm:$0xff]
          %791 = vst [vmem:[%s727 + $0xf8] sm:$0xff] %v790
          %v792 = vld [vmem:[%s726 + $0x100] sm:$0xff]
          %793 = vst [vmem:[%s727 + $0x100] sm:$0xff] %v792
          %v794 = vld [vmem:[%s726 + $0x108] sm:$0xff]
          %795 = vst [vmem:[%s727 + $0x108] sm:$0xff] %v794
          %v796 = vld [vmem:[%s726 + $0x110] sm:$0xff]
          %797 = vst [vmem:[%s727 + $0x110] sm:$0xff] %v796
          %v798 = vld [vmem:[%s726 + $0x118] sm:$0xff]
          %799 = vst [vmem:[%s727 + $0x118] sm:$0xff] %v798
          %v800 = vld [vmem:[%s726 + $0x120] sm:$0xff]
          %801 = vst [vmem:[%s727 + $0x120] sm:$0xff] %v800
          %v802 = vld [vmem:[%s726 + $0x128] sm:$0xff]
          %803 = vst [vmem:[%s727 + $0x128] sm:$0xff] %v802
          %v804 = vld [vmem:[%s726 + $0x130] sm:$0xff]
          %805 = vst [vmem:[%s727 + $0x130] sm:$0xff] %v804
          %v806 = vld [vmem:[%s726 + $0x138] sm:$0xff]
          %807 = vst [vmem:[%s727 + $0x138] sm:$0xff] %v806
          %v808 = vld [vmem:[%s726 + $0x140] sm:$0xff]
          %809 = vst [vmem:[%s727 + $0x140] sm:$0xff] %v808
          %v810 = vld [vmem:[%s726 + $0x148] sm:$0xff]
          %811 = vst [vmem:[%s727 + $0x148] sm:$0xff] %v810
          %v812 = vld [vmem:[%s726 + $0x150] sm:$0xff]
          %813 = vst [vmem:[%s727 + $0x150] sm:$0xff] %v812
          %v814 = vld [vmem:[%s726 + $0x158] sm:$0xff]
          %815 = vst [vmem:[%s727 + $0x158] sm:$0xff] %v814
          %v816 = vld [vmem:[%s726 + $0x160] sm:$0xff]
          %817 = vst [vmem:[%s727 + $0x160] sm:$0xff] %v816
          %v818 = vld [vmem:[%s726 + $0x168] sm:$0xff]
          %819 = vst [vmem:[%s727 + $0x168] sm:$0xff] %v818
          %v820 = vld [vmem:[%s726 + $0x170] sm:$0xff]
          %821 = vst [vmem:[%s727 + $0x170] sm:$0xff] %v820
          %v822 = vld [vmem:[%s726 + $0x178] sm:$0xff]
          %823 = vst [vmem:[%s727 + $0x178] sm:$0xff] %v822
          %v824 = vld [vmem:[%s726 + $0x180] sm:$0xff]
          %825 = vst [vmem:[%s727 + $0x180] sm:$0xff] %v824
          %v826 = vld [vmem:[%s726 + $0x188] sm:$0xff]
          %827 = vst [vmem:[%s727 + $0x188] sm:$0xff] %v826
          %v828 = vld [vmem:[%s726 + $0x190] sm:$0xff]
          %829 = vst [vmem:[%s727 + $0x190] sm:$0xff] %v828
          %v830 = vld [vmem:[%s726 + $0x198] sm:$0xff]
          %831 = vst [vmem:[%s727 + $0x198] sm:$0xff] %v830
          %v832 = vld [vmem:[%s726 + $0x1a0] sm:$0xff]
          %833 = vst [vmem:[%s727 + $0x1a0] sm:$0xff] %v832
          %v834 = vld [vmem:[%s726 + $0x1a8] sm:$0xff]
          %835 = vst [vmem:[%s727 + $0x1a8] sm:$0xff] %v834
          %v836 = vld [vmem:[%s726 + $0x1b0] sm:$0xff]
          %837 = vst [vmem:[%s727 + $0x1b0] sm:$0xff] %v836
          %v838 = vld [vmem:[%s726 + $0x1b8] sm:$0xff]
          %839 = vst [vmem:[%s727 + $0x1b8] sm:$0xff] %v838
          %v840 = vld [vmem:[%s726 + $0x1c0] sm:$0xff]
          %841 = vst [vmem:[%s727 + $0x1c0] sm:$0xff] %v840
          %v842 = vld [vmem:[%s726 + $0x1c8] sm:$0xff]
          %843 = vst [vmem:[%s727 + $0x1c8] sm:$0xff] %v842
          %v844 = vld [vmem:[%s726 + $0x1d0] sm:$0xff]
          %845 = vst [vmem:[%s727 + $0x1d0] sm:$0xff] %v844
          %v846 = vld [vmem:[%s726 + $0x1d8] sm:$0xff]
          %847 = vst [vmem:[%s727 + $0x1d8] sm:$0xff] %v846
          %v848 = vld [vmem:[%s726 + $0x1e0] sm:$0xff]
          %849 = vst [vmem:[%s727 + $0x1e0] sm:$0xff] %v848
          %v850 = vld [vmem:[%s726 + $0x1e8] sm:$0xff]
          %851 = vst [vmem:[%s727 + $0x1e8] sm:$0xff] %v850
          %v852 = vld [vmem:[%s726 + $0x1f0] sm:$0xff]
          %853 = vst [vmem:[%s727 + $0x1f0] sm:$0xff] %v852
          %v854 = vld [vmem:[%s726 + $0x1f8] sm:$0xff]
          %855 = vst [vmem:[%s727 + $0x1f8] sm:$0xff] %v854
          %v856 = vld [vmem:[%s726 + $0x200] sm:$0xff]
          %857 = vst [vmem:[%s727 + $0x200] sm:$0xff] %v856
          %v858 = vld [vmem:[%s726 + $0x208] sm:$0xff]
          %859 = vst [vmem:[%s727 + $0x208] sm:$0xff] %v858
          %v860 = vld [vmem:[%s726 + $0x210] sm:$0xff]
          %861 = vst [vmem:[%s727 + $0x210] sm:$0xff] %v860
          %v862 = vld [vmem:[%s726 + $0x218] sm:$0xff]
          %863 = vst [vmem:[%s727 + $0x218] sm:$0xff] %v862
          %v864 = vld [vmem:[%s726 + $0x220] sm:$0xff]
          %865 = vst [vmem:[%s727 + $0x220] sm:$0xff] %v864
          %v866 = vld [vmem:[%s726 + $0x228] sm:$0xff]
          %867 = vst [vmem:[%s727 + $0x228] sm:$0xff] %v866
          %v868 = vld [vmem:[%s726 + $0x230] sm:$0xff]
          %869 = vst [vmem:[%s727 + $0x230] sm:$0xff] %v868
          %v870 = vld [vmem:[%s726 + $0x238] sm:$0xff]
          %871 = vst [vmem:[%s727 + $0x238] sm:$0xff] %v870
          %v872 = vld [vmem:[%s726 + $0x240] sm:$0xff]
          %873 = vst [vmem:[%s727 + $0x240] sm:$0xff] %v872
          %v874 = vld [vmem:[%s726 + $0x248] sm:$0xff]
          %875 = vst [vmem:[%s727 + $0x248] sm:$0xff] %v874
          %v876 = vld [vmem:[%s726 + $0x250] sm:$0xff]
          %877 = vst [vmem:[%s727 + $0x250] sm:$0xff] %v876
          %v878 = vld [vmem:[%s726 + $0x258] sm:$0xff]
          %879 = vst [vmem:[%s727 + $0x258] sm:$0xff] %v878
          %v880 = vld [vmem:[%s726 + $0x260] sm:$0xff]
          %881 = vst [vmem:[%s727 + $0x260] sm:$0xff] %v880
          %v882 = vld [vmem:[%s726 + $0x268] sm:$0xff]
          %883 = vst [vmem:[%s727 + $0x268] sm:$0xff] %v882
          %v884 = vld [vmem:[%s726 + $0x270] sm:$0xff]
          %885 = vst [vmem:[%s727 + $0x270] sm:$0xff] %v884
          %v886 = vld [vmem:[%s726 + $0x278] sm:$0xff]
          %887 = vst [vmem:[%s727 + $0x278] sm:$0xff] %v886
          %v888 = vld [vmem:[%s726 + $0x280] sm:$0xff]
          %889 = vst [vmem:[%s727 + $0x280] sm:$0xff] %v888
          %v890 = vld [vmem:[%s726 + $0x288] sm:$0xff]
          %891 = vst [vmem:[%s727 + $0x288] sm:$0xff] %v890
          %v892 = vld [vmem:[%s726 + $0x290] sm:$0xff]
          %893 = vst [vmem:[%s727 + $0x290] sm:$0xff] %v892
          %v894 = vld [vmem:[%s726 + $0x298] sm:$0xff]
          %895 = vst [vmem:[%s727 + $0x298] sm:$0xff] %v894
          %v896 = vld [vmem:[%s726 + $0x2a0] sm:$0xff]
          %897 = vst [vmem:[%s727 + $0x2a0] sm:$0xff] %v896
          %v898 = vld [vmem:[%s726 + $0x2a8] sm:$0xff]
          %899 = vst [vmem:[%s727 + $0x2a8] sm:$0xff] %v898
          %v900 = vld [vmem:[%s726 + $0x2b0] sm:$0xff]
          %901 = vst [vmem:[%s727 + $0x2b0] sm:$0xff] %v900
          %v902 = vld [vmem:[%s726 + $0x2b8] sm:$0xff]
          %903 = vst [vmem:[%s727 + $0x2b8] sm:$0xff] %v902
          %v904 = vld [vmem:[%s726 + $0x2c0] sm:$0xff]
          %905 = vst [vmem:[%s727 + $0x2c0] sm:$0xff] %v904
          %v906 = vld [vmem:[%s726 + $0x2c8] sm:$0xff]
          %907 = vst [vmem:[%s727 + $0x2c8] sm:$0xff] %v906
          %v908 = vld [vmem:[%s726 + $0x2d0] sm:$0xff]
          %909 = vst [vmem:[%s727 + $0x2d0] sm:$0xff] %v908
          %v910 = vld [vmem:[%s726 + $0x2d8] sm:$0xff]
          %911 = vst [vmem:[%s727 + $0x2d8] sm:$0xff] %v910
          %v912 = vld [vmem:[%s726 + $0x2e0] sm:$0xff]
          %913 = vst [vmem:[%s727 + $0x2e0] sm:$0xff] %v912
          %v914 = vld [vmem:[%s726 + $0x2e8] sm:$0xff]
          %915 = vst [vmem:[%s727 + $0x2e8] sm:$0xff] %v914
          %v916 = vld [vmem:[%s726 + $0x2f0] sm:$0xff]
          %917 = vst [vmem:[%s727 + $0x2f0] sm:$0xff] %v916
          %v918 = vld [vmem:[%s726 + $0x2f8] sm:$0xff]
          %919 = vst [vmem:[%s727 + $0x2f8] sm:$0xff] %v918
        $region249: #{tpu_custom_call.1} parent=243 // loop_footer
          %s725 = sadd.s32 1, %s721
        $region250: #{tpu_custom_call.1} parent=243 // loop_footer_branch
          %720 = sbr.rel target = $region246
        $region251: #{tpu_custom_call.1} parent=243 // loop_exit
          _
      $region244: #{tpu_custom_call.1} parent=228 // pred_fallthru
        _
      %p920 = pneg %p716
      // Predicated region
      $region252: #{tpu_custom_call.1} parent=228 // pred_check
        _
      $region253: #{tpu_custom_call.1} parent=228 // pred_check_branch
        %922 = sbr.rel (%p716) target = $region255
      $region254: #{tpu_custom_call.1} parent=228 // pred_region
        %s923 = sand.u32 768, 7
      $region255: #{tpu_custom_call.1} parent=228 // pred_fallthru
        _
    $region229: #{tpu_custom_call.1} parent=1 // pred_fallthru
      _
    // Predicated region
    $region230: #{tpu_custom_call.1} parent=1 // pred_check
      %p701 = pneg %p697
    $region231: #{tpu_custom_call.1} parent=1 // pred_check_branch
      %703 = sbr.rel (%p701) target = $region233
    $region232: #{tpu_custom_call.1} parent=1 // pred_region
      %s704 = sshllo.u32 0, 768
      loop: start=0, step=1, limit=1
      $region234: #{tpu_custom_call.1} parent=232 // loop_pre_header
        _
      $region235: #{tpu_custom_call.1} parent=232 // loop_header
        %s706 = sphi 0, %s710
        %p707 = scmp.ge.s32.totalorder %s706, 1
        %s711 = sphi %s65, %s65
        %s712 = sphi [#allocation9], [#allocation9]
      $region236: #{tpu_custom_call.1} parent=232 // loop_header_branch
        %709 = sbr.rel (%p707) target = $region240
      $region237: #{tpu_custom_call.1} parent=232 // loop_body
        %v713 = vld [vmem:[%s711] sm:%s704]
        %714 = vst [vmem:[%s712] sm:%s704] %v713
      $region238: #{tpu_custom_call.1} parent=232 // loop_footer
        %s710 = sadd.s32 1, %s706
      $region239: #{tpu_custom_call.1} parent=232 // loop_footer_branch
        %705 = sbr.rel target = $region235
      $region240: #{tpu_custom_call.1} parent=232 // loop_exit
        _
    $region233: #{tpu_custom_call.1} parent=1 // pred_fallthru
      _
    // Predicated region
    $region256: #{tpu_custom_call.1} parent=1 // pred_check
      _
    $region257: #{tpu_custom_call.1} parent=1 // pred_check_branch
      %926 = sbr.rel (0) target = $region259
    $region258: #{tpu_custom_call.1} parent=1 // pred_region
      %927 = vsyncadd %s695, 12288
    $region259: #{tpu_custom_call.1} parent=1 // pred_fallthru
      _
    %v928 = vld [vmem:[%s3] sm:$0xff]
    %v929 = vld [vmem:[%s3 + $0x8] sm:$0xff]
    %v930 = vld [vmem:[%s3 + $0x10] sm:$0xff]
    %v931 = vld [vmem:[%s3 + $0x18] sm:$0xff]
    %v932 = vld [vmem:[%s3 + $0x20] sm:$0xff]
    %v933 = vld [vmem:[%s3 + $0x28] sm:$0xff]
    %v934 = vld [vmem:[%s3 + $0x30] sm:$0xff]
    %v935 = vld [vmem:[%s3 + $0x38] sm:$0xff]
    %v936 = vld [vmem:[%s3 + $0x40] sm:$0xff]
    %v937 = vld [vmem:[%s3 + $0x48] sm:$0xff]
    %v938 = vld [vmem:[%s3 + $0x50] sm:$0xff]
    %v939 = vld [vmem:[%s3 + $0x58] sm:$0xff]
    %v940 = vld [vmem:[%s3 + $0x60] sm:$0xff]
    %v941 = vld [vmem:[%s3 + $0x68] sm:$0xff]
    %v942 = vld [vmem:[%s3 + $0x70] sm:$0xff]
    %v943 = vld [vmem:[%s3 + $0x78] sm:$0xff]
    %v944 = vld [vmem:[%s5] sm:$0xff]
    %v945 = vld [vmem:[%s5 + $0x8] sm:$0xff]
    %v946 = vld [vmem:[#allocation14] sm:$0xff]
    %v947 = vld [vmem:[#allocation16] sm:$0x1]
    %v949 = vlaneseq
    %v950 = vshrl.u32 %v949, 7
    %v951 = vsub.s32 0, %v950
    %v952 = vrot.slane %v947, %v951
    %vm954 = vcmask 64512
    %v956 = vsel %vm954, %v944, 0
    %v959 = vsel %vm954, %v945, 0
    %961 = vmatprep.subr.mxu0 0.0
    %962 = vmatpush1.msra.mxu0 %v946
    %963 = vmatprep.subr.mxu0 0.0
    %964 = vmatpush1.msra.mxu0 0.0
    %965 = vmatprep.subr.mxu0 0.0
    %966 = vmatpush1.msra.mxu0 0.0
    %967 = vmatprep.subr.mxu0 0.0
    %968 = vmatpush1.msra.mxu0 0.0
    %969 = vmatprep.subr.mxu0 0.0
    %970 = vmatpush1.msra.mxu0 0.0
    %971 = vmatprep.subr.mxu0 0.0
    %972 = vmatpush1.msra.mxu0 0.0
    %973 = vmatprep.subr.mxu0 0.0
    %974 = vmatpush1.msra.mxu0 0.0
    %975 = vmatprep.subr.mxu0 0.0
    %976 = vmatpush1.msra.mxu0 0.0
    %977 = vmatprep.subr.mxu0 0.0
    %978 = vmatpush1.msra.mxu0 0.0
    %979 = vmatprep.subr.mxu0 0.0
    %980 = vmatpush1.msra.mxu0 0.0
    %981 = vmatprep.subr.mxu0 0.0
    %982 = vmatpush1.msra.mxu0 0.0
    %983 = vmatprep.subr.mxu0 0.0
    %984 = vmatpush1.msra.mxu0 0.0
    %985 = vmatprep.subr.mxu0 0.0
    %986 = vmatpush1.msra.mxu0 0.0
    %987 = vmatprep.subr.mxu0 0.0
    %988 = vmatpush1.msra.mxu0 0.0
    %989 = vmatprep.subr.mxu0 0.0
    %990 = vmatpush1.msra.mxu0 0.0
    %991 = vmatprep.subr.mxu0 0.0
    %992 = vmatpush1.msra.mxu0 0.0
    %993 = vmatprep.subr.mxu0 0.0
    %994 = vmatpush1.msra.mxu0 0.0
    %995 = vmatprep.subr.mxu0 0.0
    %996 = vmatpush1.msra.mxu0 0.0
    %997 = vmatprep.subr.mxu0 0.0
    %998 = vmatpush1.msra.mxu0 0.0
    %999 = vmatprep.subr.mxu0 0.0
    %1000 = vmatpush1.msra.mxu0 0.0
    %1001 = vmatprep.subr.mxu0 0.0
    %1002 = vmatpush1.msra.mxu0 0.0
    %1003 = vmatprep.subr.mxu0 0.0
    %1004 = vmatpush1.msra.mxu0 0.0
    %1005 = vmatprep.subr.mxu0 0.0
    %1006 = vmatpush1.msra.mxu0 0.0
    %1007 = vmatprep.subr.mxu0 0.0
    %1008 = vmatpush1.msra.mxu0 0.0
    %1009 = vmatprep.subr.mxu0 0.0
    %1010 = vmatpush1.msra.mxu0 0.0
    %1011 = vmatprep.subr.mxu0 0.0
    %1012 = vmatpush1.msra.mxu0 0.0
    %1013 = vmatprep.subr.mxu0 0.0
    %1014 = vmatpush1.msra.mxu0 0.0
    %1015 = vmatprep.subr.mxu0 0.0
    %1016 = vmatpush1.msra.mxu0 0.0
    %1017 = vmatprep.subr.mxu0 0.0
    %1018 = vmatpush1.msra.mxu0 0.0
    %1019 = vmatprep.subr.mxu0 0.0
    %1020 = vmatpush1.msra.mxu0 0.0
    %1021 = vmatprep.subr.mxu0 0.0
    %1022 = vmatpush1.msra.mxu0 0.0
    %1023 = vmatprep.subr.mxu0 0.0
    %1024 = vmatpush1.msra.mxu0 0.0
    %1025 = vmatprep.mubr.f32.mxu0 0.0
    %1026 = vmatmul.mubr.f32.gmra.mrb[0].mxu0 %v956
    %v1027 = vpop.f32.mrb[0].mxu0
    %v1028 = vadd.f32 %v952, %v1027
    %v1029 = vpop.f32.mrb[0].mxu0
    %1030 = vmatprep.mubr.f32.mxu0 0.0
    %1031 = vmatmul.mubr.f32.gmra.mrb[0].mxu0 %v959
    %v1032 = vpop.f32.mrb[0].mxu0
    %v1033 = vadd.f32 %v952, %v1032
    %v1034 = vpop.f32.mrb[0].mxu0
    %1035 = vdwg.mxu0
    %v1036 = vld [vmem:[%s13] sm:$0xff]
    %v1037 = vld [vmem:[%s13 + $0x8] sm:$0xff]
    %v1038 = vld [vmem:[%s13 + $0x10] sm:$0xff]
    %v1039 = vld [vmem:[%s13 + $0x18] sm:$0xff]
    %v1040 = vld [vmem:[%s13 + $0x20] sm:$0xff]
    %v1041 = vld [vmem:[%s13 + $0x28] sm:$0xff]
    %v1042 = vld [vmem:[%s13 + $0x30] sm:$0xff]
    %v1043 = vld [vmem:[%s13 + $0x38] sm:$0xff]
    %v1044 = vld [vmem:[#allocation17] sm:$0x1]
    %v1046 = vlaneseq
    %v1047 = vshrl.u32 %v1046, 7
    %v1048 = vsub.s32 0, %v1047
    %v1049 = vrot.slane %v1044, %v1048
    %vm1051 = vcmask 523264
    %v1053 = vsel %vm1051, %v1028, 0
    %v1056 = vsel %vm1051, %v1033, 0
    %1058 = vmatprep.subr.mxu0 0.0
    %1059 = vmatpush1.msra.mxu0 %v1036
    %1060 = vmatprep.subr.mxu0 0.0
    %1061 = vmatpush1.msra.mxu0 %v1037
    %1062 = vmatprep.subr.mxu0 0.0
    %1063 = vmatpush1.msra.mxu0 %v1038
    %1064 = vmatprep.subr.mxu0 0.0
    %1065 = vmatpush1.msra.mxu0 %v1039
    %1066 = vmatprep.subr.mxu0 0.0
    %1067 = vmatpush1.msra.mxu0 %v1040
    %1068 = vmatprep.subr.mxu0 0.0
    %1069 = vmatpush1.msra.mxu0 %v1041
    %1070 = vmatprep.subr.mxu0 0.0
    %1071 = vmatpush1.msra.mxu0 %v1042
    %1072 = vmatprep.subr.mxu0 0.0
    %1073 = vmatpush1.msra.mxu0 %v1043
    %1074 = vmatprep.subr.mxu0 0.0
    %1075 = vmatpush1.msra.mxu0 0.0
    %1076 = vmatprep.subr.mxu0 0.0
    %1077 = vmatpush1.msra.mxu0 0.0
    %1078 = vmatprep.subr.mxu0 0.0
    %1079 = vmatpush1.msra.mxu0 0.0
    %1080 = vmatprep.subr.mxu0 0.0
    %1081 = vmatpush1.msra.mxu0 0.0
    %1082 = vmatprep.subr.mxu0 0.0
    %1083 = vmatpush1.msra.mxu0 0.0
    %1084 = vmatprep.subr.mxu0 0.0
    %1085 = vmatpush1.msra.mxu0 0.0
    %1086 = vmatprep.subr.mxu0 0.0
    %1087 = vmatpush1.msra.mxu0 0.0
    %1088 = vmatprep.subr.mxu0 0.0
    %1089 = vmatpush1.msra.mxu0 0.0
    %1090 = vmatprep.subr.mxu0 0.0
    %1091 = vmatpush1.msra.mxu0 0.0
    %1092 = vmatprep.subr.mxu0 0.0
    %1093 = vmatpush1.msra.mxu0 0.0
    %1094 = vmatprep.subr.mxu0 0.0
    %1095 = vmatpush1.msra.mxu0 0.0
    %1096 = vmatprep.subr.mxu0 0.0
    %1097 = vmatpush1.msra.mxu0 0.0
    %1098 = vmatprep.subr.mxu0 0.0
    %1099 = vmatpush1.msra.mxu0 0.0
    %1100 = vmatprep.subr.mxu0 0.0
    %1101 = vmatpush1.msra.mxu0 0.0
    %1102 = vmatprep.subr.mxu0 0.0
    %1103 = vmatpush1.msra.mxu0 0.0
    %1104 = vmatprep.subr.mxu0 0.0
    %1105 = vmatpush1.msra.mxu0 0.0
    %1106 = vmatprep.subr.mxu0 0.0
    %1107 = vmatpush1.msra.mxu0 0.0
    %1108 = vmatprep.subr.mxu0 0.0
    %1109 = vmatpush1.msra.mxu0 0.0
    %1110 = vmatprep.subr.mxu0 0.0
    %1111 = vmatpush1.msra.mxu0 0.0
    %1112 = vmatprep.subr.mxu0 0.0
    %1113 = vmatpush1.msra.mxu0 0.0
    %1114 = vmatprep.subr.mxu0 0.0
    %1115 = vmatpush1.msra.mxu0 0.0
    %1116 = vmatprep.subr.mxu0 0.0
    %1117 = vmatpush1.msra.mxu0 0.0
    %1118 = vmatprep.subr.mxu0 0.0
    %1119 = vmatpush1.msra.mxu0 0.0
    %1120 = vmatprep.subr.mxu0 0.0
    %1121 = vmatpush1.msra.mxu0 0.0
    %1122 = vmatprep.mubr.f32.mxu0 0.0
    %1123 = vmatmul.mubr.f32.gmra.mrb[0].mxu0 %v1053
    %v1124 = vpop.f32.mrb[0].mxu0
    %v1125 = vadd.f32 %v1049, %v1124
    %v1126 = vpop.f32.mrb[0].mxu0
    %1127 = vmatprep.mubr.f32.mxu0 0.0
    %1128 = vmatmul.mubr.f32.gmra.mrb[0].mxu0 %v1056
    %v1129 = vpop.f32.mrb[0].mxu0
    %v1130 = vadd.f32 %v1049, %v1129
    %v1131 = vpop.f32.mrb[0].mxu0
    %1132 = vdwg.mxu0
    %v1133 = vld [vmem:[%s1] sm:$0xff]
    %v1134 = vld [vmem:[%s1 + $0x8] sm:$0xff]
    %v1135 = vld [vmem:[#allocation19] sm:$0xff]
    %v1137 = vsel %vm954, %v1133, 0
    %v1140 = vsel %vm954, %v1134, 0
    %1142 = vmatprep.subr.mxu0 0.0
    %1143 = vmatpush1.msra.mxu0 %v1135
    %1144 = vmatprep.subr.mxu0 0.0
    %1145 = vmatpush1.msra.mxu0 0.0
    %1146 = vmatprep.subr.mxu0 0.0
    %1147 = vmatpush1.msra.mxu0 0.0
    %1148 = vmatprep.subr.mxu0 0.0
    %1149 = vmatpush1.msra.mxu0 0.0
    %1150 = vmatprep.subr.mxu0 0.0
    %1151 = vmatpush1.msra.mxu0 0.0
    %1152 = vmatprep.subr.mxu0 0.0
    %1153 = vmatpush1.msra.mxu0 0.0
    %1154 = vmatprep.subr.mxu0 0.0
    %1155 = vmatpush1.msra.mxu0 0.0
    %1156 = vmatprep.subr.mxu0 0.0
    %1157 = vmatpush1.msra.mxu0 0.0
    %1158 = vmatprep.subr.mxu0 0.0
    %1159 = vmatpush1.msra.mxu0 0.0
    %1160 = vmatprep.subr.mxu0 0.0
    %1161 = vmatpush1.msra.mxu0 0.0
    %1162 = vmatprep.subr.mxu0 0.0
    %1163 = vmatpush1.msra.mxu0 0.0
    %1164 = vmatprep.subr.mxu0 0.0
    %1165 = vmatpush1.msra.mxu0 0.0
    %1166 = vmatprep.subr.mxu0 0.0
    %1167 = vmatpush1.msra.mxu0 0.0
    %1168 = vmatprep.subr.mxu0 0.0
    %1169 = vmatpush1.msra.mxu0 0.0
    %1170 = vmatprep.subr.mxu0 0.0
    %1171 = vmatpush1.msra.mxu0 0.0
    %1172 = vmatprep.subr.mxu0 0.0
    %1173 = vmatpush1.msra.mxu0 0.0
    %1174 = vmatprep.subr.mxu0 0.0
    %1175 = vmatpush1.msra.mxu0 0.0
    %1176 = vmatprep.subr.mxu0 0.0
    %1177 = vmatpush1.msra.mxu0 0.0
    %1178 = vmatprep.subr.mxu0 0.0
    %1179 = vmatpush1.msra.mxu0 0.0
    %1180 = vmatprep.subr.mxu0 0.0
    %1181 = vmatpush1.msra.mxu0 0.0
    %1182 = vmatprep.subr.mxu0 0.0
    %1183 = vmatpush1.msra.mxu0 0.0
    %1184 = vmatprep.subr.mxu0 0.0
    %1185 = vmatpush1.msra.mxu0 0.0
    %1186 = vmatprep.subr.mxu0 0.0
    %1187 = vmatpush1.msra.mxu0 0.0
    %1188 = vmatprep.subr.mxu0 0.0
    %1189 = vmatpush1.msra.mxu0 0.0
    %1190 = vmatprep.subr.mxu0 0.0
    %1191 = vmatpush1.msra.mxu0 0.0
    %1192 = vmatprep.subr.mxu0 0.0
    %1193 = vmatpush1.msra.mxu0 0.0
    %1194 = vmatprep.subr.mxu0 0.0
    %1195 = vmatpush1.msra.mxu0 0.0
    %1196 = vmatprep.subr.mxu0 0.0
    %1197 = vmatpush1.msra.mxu0 0.0
    %1198 = vmatprep.subr.mxu0 0.0
    %1199 = vmatpush1.msra.mxu0 0.0
    %1200 = vmatprep.subr.mxu0 0.0
    %1201 = vmatpush1.msra.mxu0 0.0
    %1202 = vmatprep.subr.mxu0 0.0
    %1203 = vmatpush1.msra.mxu0 0.0
    %1204 = vmatprep.subr.mxu0 0.0
    %1205 = vmatpush1.msra.mxu0 0.0
    %1206 = vmatprep.mubr.f32.mxu0 0.0
    %1207 = vmatmul.mubr.f32.gmra.mrb[0].mxu0 %v1137
    %v1208 = vpop.f32.mrb[0].mxu0
    %v1209 = vadd.f32 0.0, %v1208
    %v1210 = vpop.f32.mrb[0].mxu0
    %1211 = vmatprep.mubr.f32.mxu0 0.0
    %1212 = vmatmul.mubr.f32.gmra.mrb[0].mxu0 %v1140
    %v1213 = vpop.f32.mrb[0].mxu0
    %v1214 = vadd.f32 0.0, %v1213
    %v1215 = vpop.f32.mrb[0].mxu0
    %1216 = vdwg.mxu0
    %v1217 = vld [vmem:[#allocation20] sm:$0xff]
    %v1218 = vld [vmem:[#allocation23] sm:$0x1]
    %v1220 = vlaneseq
    %v1221 = vshrl.u32 %v1220, 7
    %v1222 = vsub.s32 0, %v1221
    %v1223 = vrot.slane %v1218, %v1222
    %1225 = vmatprep.subr.mxu0 0.0
    %1226 = vmatpush1.msra.mxu0 %v1217
    %1227 = vmatprep.subr.mxu0 0.0
    %1228 = vmatpush1.msra.mxu0 0.0
    %1229 = vmatprep.subr.mxu0 0.0
    %1230 = vmatpush1.msra.mxu0 0.0
    %1231 = vmatprep.subr.mxu0 0.0
    %1232 = vmatpush1.msra.mxu0 0.0
    %1233 = vmatprep.subr.mxu0 0.0
    %1234 = vmatpush1.msra.mxu0 0.0
    %1235 = vmatprep.subr.mxu0 0.0
    %1236 = vmatpush1.msra.mxu0 0.0
    %1237 = vmatprep.subr.mxu0 0.0
    %1238 = vmatpush1.msra.mxu0 0.0
    %1239 = vmatprep.subr.mxu0 0.0
    %1240 = vmatpush1.msra.mxu0 0.0
    %1241 = vmatprep.subr.mxu0 0.0
    %1242 = vmatpush1.msra.mxu0 0.0
    %1243 = vmatprep.subr.mxu0 0.0
    %1244 = vmatpush1.msra.mxu0 0.0
    %1245 = vmatprep.subr.mxu0 0.0
    %1246 = vmatpush1.msra.mxu0 0.0
    %1247 = vmatprep.subr.mxu0 0.0
    %1248 = vmatpush1.msra.mxu0 0.0
    %1249 = vmatprep.subr.mxu0 0.0
    %1250 = vmatpush1.msra.mxu0 0.0
    %1251 = vmatprep.subr.mxu0 0.0
    %1252 = vmatpush1.msra.mxu0 0.0
    %1253 = vmatprep.subr.mxu0 0.0
    %1254 = vmatpush1.msra.mxu0 0.0
    %1255 = vmatprep.subr.mxu0 0.0
    %1256 = vmatpush1.msra.mxu0 0.0
    %1257 = vmatprep.subr.mxu0 0.0
    %1258 = vmatpush1.msra.mxu0 0.0
    %1259 = vmatprep.subr.mxu0 0.0
    %1260 = vmatpush1.msra.mxu0 0.0
    %1261 = vmatprep.subr.mxu0 0.0
    %1262 = vmatpush1.msra.mxu0 0.0
    %1263 = vmatprep.subr.mxu0 0.0
    %1264 = vmatpush1.msra.mxu0 0.0
    %1265 = vmatprep.subr.mxu0 0.0
    %1266 = vmatpush1.msra.mxu0 0.0
    %1267 = vmatprep.subr.mxu0 0.0
    %1268 = vmatpush1.msra.mxu0 0.0
    %1269 = vmatprep.subr.mxu0 0.0
    %1270 = vmatpush1.msra.mxu0 0.0
    %1271 = vmatprep.subr.mxu0 0.0
    %1272 = vmatpush1.msra.mxu0 0.0
    %1273 = vmatprep.subr.mxu0 0.0
    %1274 = vmatpush1.msra.mxu0 0.0
    %1275 = vmatprep.subr.mxu0 0.0
    %1276 = vmatpush1.msra.mxu0 0.0
    %1277 = vmatprep.subr.mxu0 0.0
    %1278 = vmatpush1.msra.mxu0 0.0
    %1279 = vmatprep.subr.mxu0 0.0
    %1280 = vmatpush1.msra.mxu0 0.0
    %1281 = vmatprep.subr.mxu0 0.0
    %1282 = vmatpush1.msra.mxu0 0.0
    %1283 = vmatprep.subr.mxu0 0.0
    %1284 = vmatpush1.msra.mxu0 0.0
    %1285 = vmatprep.subr.mxu0 0.0
    %1286 = vmatpush1.msra.mxu0 0.0
    %1287 = vmatprep.subr.mxu0 0.0
    %1288 = vmatpush1.msra.mxu0 0.0
    %1289 = vmatprep.mubr.f32.mxu0 0.0
    %1290 = vmatmul.mubr.f32.gmra.mrb[0].mxu0 %v1137
    %v1291 = vpop.f32.mrb[0].mxu0
    %v1292 = vadd.f32 %v1223, %v1291
    %v1293 = vpop.f32.mrb[0].mxu0
    %1294 = vmatprep.mubr.f32.mxu0 0.0
    %1295 = vmatmul.mubr.f32.gmra.mrb[0].mxu0 %v1140
    %v1296 = vpop.f32.mrb[0].mxu0
    %v1297 = vadd.f32 %v1223, %v1296
    %v1298 = vpop.f32.mrb[0].mxu0
    %1299 = vdwg.mxu0
    %v1300 = vld [vmem:[#allocation22] sm:$0xf]
    %vm1301 = vcmask 31744
    %v1303 = vsel %vm1301, %v928, 0
    %v1306 = vsel %vm1301, %v929, 0
    %v1309 = vsel %vm1301, %v930, 0
    %v1312 = vsel %vm1301, %v931, 0
    %v1315 = vsel %vm1301, %v932, 0
    %v1318 = vsel %vm1301, %v933, 0
    %v1321 = vsel %vm1301, %v934, 0
    %v1324 = vsel %vm1301, %v935, 0
    %v1327 = vsel %vm1301, %v936, 0
    %v1330 = vsel %vm1301, %v937, 0
    %v1333 = vsel %vm1301, %v938, 0
    %v1336 = vsel %vm1301, %v939, 0
    %v1339 = vsel %vm1301, %v940, 0
    %v1342 = vsel %vm1301, %v941, 0
    %v1345 = vsel %vm1301, %v942, 0
    %v1348 = vsel %vm1301, %v943, 0
    %vm1350 = vcmask 1043456
    %v1352 = vsel %vm1350, %v1300, 0
    %1354 = vmatprep.subr.mxu0 0.0
    %1355 = vmatpush1.msra.mxu0 %v1352
    %1356 = vmatprep.subr.mxu0 0.0
    %1357 = vmatpush1.msra.mxu0 0.0
    %1358 = vmatprep.subr.mxu0 0.0
    %1359 = vmatpush1.msra.mxu0 0.0
    %1360 = vmatprep.subr.mxu0 0.0
    %1361 = vmatpush1.msra.mxu0 0.0
    %1362 = vmatprep.subr.mxu0 0.0
    %1363 = vmatpush1.msra.mxu0 0.0
    %1364 = vmatprep.subr.mxu0 0.0
    %1365 = vmatpush1.msra.mxu0 0.0
    %1366 = vmatprep.subr.mxu0 0.0
    %1367 = vmatpush1.msra.mxu0 0.0
    %1368 = vmatprep.subr.mxu0 0.0
    %1369 = vmatpush1.msra.mxu0 0.0
    %1370 = vmatprep.subr.mxu0 0.0
    %1371 = vmatpush1.msra.mxu0 0.0
    %1372 = vmatprep.subr.mxu0 0.0
    %1373 = vmatpush1.msra.mxu0 0.0
    %1374 = vmatprep.subr.mxu0 0.0
    %1375 = vmatpush1.msra.mxu0 0.0
    %1376 = vmatprep.subr.mxu0 0.0
    %1377 = vmatpush1.msra.mxu0 0.0
    %1378 = vmatprep.subr.mxu0 0.0
    %1379 = vmatpush1.msra.mxu0 0.0
    %1380 = vmatprep.subr.mxu0 0.0
    %1381 = vmatpush1.msra.mxu0 0.0
    %1382 = vmatprep.subr.mxu0 0.0
    %1383 = vmatpush1.msra.mxu0 0.0
    %1384 = vmatprep.subr.mxu0 0.0
    %1385 = vmatpush1.msra.mxu0 0.0
    %1386 = vmatprep.subr.mxu0 0.0
    %1387 = vmatpush1.msra.mxu0 0.0
    %1388 = vmatprep.subr.mxu0 0.0
    %1389 = vmatpush1.msra.mxu0 0.0
    %1390 = vmatprep.subr.mxu0 0.0
    %1391 = vmatpush1.msra.mxu0 0.0
    %1392 = vmatprep.subr.mxu0 0.0
    %1393 = vmatpush1.msra.mxu0 0.0
    %1394 = vmatprep.subr.mxu0 0.0
    %1395 = vmatpush1.msra.mxu0 0.0
    %1396 = vmatprep.subr.mxu0 0.0
    %1397 = vmatpush1.msra.mxu0 0.0
    %1398 = vmatprep.subr.mxu0 0.0
    %1399 = vmatpush1.msra.mxu0 0.0
    %1400 = vmatprep.subr.mxu0 0.0
    %1401 = vmatpush1.msra.mxu0 0.0
    %1402 = vmatprep.subr.mxu0 0.0
    %1403 = vmatpush1.msra.mxu0 0.0
    %1404 = vmatprep.subr.mxu0 0.0
    %1405 = vmatpush1.msra.mxu0 0.0
    %1406 = vmatprep.subr.mxu0 0.0
    %1407 = vmatpush1.msra.mxu0 0.0
    %1408 = vmatprep.subr.mxu0 0.0
    %1409 = vmatpush1.msra.mxu0 0.0
    %1410 = vmatprep.subr.mxu0 0.0
    %1411 = vmatpush1.msra.mxu0 0.0
    %1412 = vmatprep.subr.mxu0 0.0
    %1413 = vmatpush1.msra.mxu0 0.0
    %1414 = vmatprep.subr.mxu0 0.0
    %1415 = vmatpush1.msra.mxu0 0.0
    %1416 = vmatprep.subr.mxu0 0.0
    %1417 = vmatpush1.msra.mxu0 0.0
    %1418 = vmatprep.mubr.f32.mxu0 0.0
    %1419 = vmatmul.mubr.f32.gmra.mrb[0].mxu0 %v1303
    %v1420 = vpop.f32.mrb[0].mxu0
    %v1421 = vadd.f32 0.0, %v1420
    %v1422 = vpop.f32.mrb[0].mxu0
    %1423 = vmatprep.mubr.f32.mxu0 0.0
    %1424 = vmatmul.mubr.f32.gmra.mrb[0].mxu0 %v1306
    %v1425 = vpop.f32.mrb[0].mxu0
    %v1426 = vadd.f32 0.0, %v1425
    %v1427 = vpop.f32.mrb[0].mxu0
    %1428 = vmatprep.mubr.f32.mxu0 0.0
    %1429 = vmatmul.mubr.f32.gmra.mrb[0].mxu0 %v1309
    %v1430 = vpop.f32.mrb[0].mxu0
    %v1431 = vadd.f32 0.0, %v1430
    %v1432 = vpop.f32.mrb[0].mxu0
    %1433 = vmatprep.mubr.f32.mxu0 0.0
    %1434 = vmatmul.mubr.f32.gmra.mrb[0].mxu0 %v1312
    %v1435 = vpop.f32.mrb[0].mxu0
    %v1436 = vadd.f32 0.0, %v1435
    %v1437 = vpop.f32.mrb[0].mxu0
    %1438 = vmatprep.mubr.f32.mxu0 0.0
    %1439 = vmatmul.mubr.f32.gmra.mrb[0].mxu0 %v1315
    %v1440 = vpop.f32.mrb[0].mxu0
    %v1441 = vadd.f32 0.0, %v1440
    %v1442 = vpop.f32.mrb[0].mxu0
    %1443 = vmatprep.mubr.f32.mxu0 0.0
    %1444 = vmatmul.mubr.f32.gmra.mrb[0].mxu0 %v1318
    %v1445 = vpop.f32.mrb[0].mxu0
    %v1446 = vadd.f32 0.0, %v1445
    %v1447 = vpop.f32.mrb[0].mxu0
    %1448 = vmatprep.mubr.f32.mxu0 0.0
    %1449 = vmatmul.mubr.f32.gmra.mrb[0].mxu0 %v1321
    %v1450 = vpop.f32.mrb[0].mxu0
    %v1451 = vadd.f32 0.0, %v1450
    %v1452 = vpop.f32.mrb[0].mxu0
    %1453 = vmatprep.mubr.f32.mxu0 0.0
    %1454 = vmatmul.mubr.f32.gmra.mrb[0].mxu0 %v1324
    %v1455 = vpop.f32.mrb[0].mxu0
    %v1456 = vadd.f32 0.0, %v1455
    %v1457 = vpop.f32.mrb[0].mxu0
    %1458 = vmatprep.mubr.f32.mxu0 0.0
    %1459 = vmatmul.mubr.f32.gmra.mrb[0].mxu0 %v1327
    %v1460 = vpop.f32.mrb[0].mxu0
    %v1461 = vadd.f32 0.0, %v1460
    %v1462 = vpop.f32.mrb[0].mxu0
    %1463 = vmatprep.mubr.f32.mxu0 0.0
    %1464 = vmatmul.mubr.f32.gmra.mrb[0].mxu0 %v1330
    %v1465 = vpop.f32.mrb[0].mxu0
    %v1466 = vadd.f32 0.0, %v1465
    %v1467 = vpop.f32.mrb[0].mxu0
    %1468 = vmatprep.mubr.f32.mxu0 0.0
    %1469 = vmatmul.mubr.f32.gmra.mrb[0].mxu0 %v1333
    %v1470 = vpop.f32.mrb[0].mxu0
    %v1471 = vadd.f32 0.0, %v1470
    %v1472 = vpop.f32.mrb[0].mxu0
    %1473 = vmatprep.mubr.f32.mxu0 0.0
    %1474 = vmatmul.mubr.f32.gmra.mrb[0].mxu0 %v1336
    %v1475 = vpop.f32.mrb[0].mxu0
    %v1476 = vadd.f32 0.0, %v1475
    %v1477 = vpop.f32.mrb[0].mxu0
    %1478 = vmatprep.mubr.f32.mxu0 0.0
    %1479 = vmatmul.mubr.f32.gmra.mrb[0].mxu0 %v1339
    %v1480 = vpop.f32.mrb[0].mxu0
    %v1481 = vadd.f32 0.0, %v1480
    %v1482 = vpop.f32.mrb[0].mxu0
    %1483 = vmatprep.mubr.f32.mxu0 0.0
    %1484 = vmatmul.mubr.f32.gmra.mrb[0].mxu0 %v1342
    %v1485 = vpop.f32.mrb[0].mxu0
    %v1486 = vadd.f32 0.0, %v1485
    %v1487 = vpop.f32.mrb[0].mxu0
    %1488 = vmatprep.mubr.f32.mxu0 0.0
    %1489 = vmatmul.mubr.f32.gmra.mrb[0].mxu0 %v1345
    %v1490 = vpop.f32.mrb[0].mxu0
    %v1491 = vadd.f32 0.0, %v1490
    %v1492 = vpop.f32.mrb[0].mxu0
    %1493 = vmatprep.mubr.f32.mxu0 0.0
    %1494 = vmatmul.mubr.f32.gmra.mrb[0].mxu0 %v1348
    %v1495 = vpop.f32.mrb[0].mxu0
    %v1496 = vadd.f32 0.0, %v1495
    %v1497 = vpop.f32.mrb[0].mxu0
    %1498 = vdwg.mxu0
    %v1500 = vcombine.high %v1209, %v1209
    %v1502 = vunpack.c.l.s4 1966171168
    %v1503 = vunpack.c.0.s8 %v1502
    %v1504 = vlaneseq
    %v1505 = vshrl.u32 %v1504, 7
    %v1506 = vsub.s32 %v1503, %v1505
    %v1507 = vrot.slane %v1209, %v1506
    %v1509 = vunpack.c.l.s4 1966171168
    %v1510 = vunpack.c.0.s8 %v1509
    %v1511 = vlaneseq
    %v1512 = vshrl.u32 %v1511, 7
    %v1513 = vsub.s32 %v1510, %v1512
    %v1514 = vrot.slane %v1500, %v1513
    %v1515 = vcombine.high %v1507, %v1507
    %v1516 = vcombine.high %v1514, %v1514
    %v1518 = vunpack.c.l.s4 1966171168
    %v1519 = vunpack.c.0.s8 %v1518
    %v1520 = vlaneseq
    %v1521 = vshrl.u32 %v1520, 7
    %v1522 = vsub.s32 %v1519, %v1521
    %v1523 = vrot.slane %v1507, %v1522
    %v1525 = vunpack.c.l.s4 1966171168
    %v1526 = vunpack.c.0.s8 %v1525
    %v1527 = vlaneseq
    %v1528 = vshrl.u32 %v1527, 7
    %v1529 = vsub.s32 %v1526, %v1528
    %v1530 = vrot.slane %v1514, %v1529
    %v1532 = vunpack.c.l.s4 1966171168
    %v1533 = vunpack.c.0.s8 %v1532
    %v1534 = vlaneseq
    %v1535 = vshrl.u32 %v1534, 7
    %v1536 = vsub.s32 %v1533, %v1535
    %v1537 = vrot.slane %v1515, %v1536
    %v1539 = vunpack.c.l.s4 1966171168
    %v1540 = vunpack.c.0.s8 %v1539
    %v1541 = vlaneseq
    %v1542 = vshrl.u32 %v1541, 7
    %v1543 = vsub.s32 %v1540, %v1542
    %v1544 = vrot.slane %v1516, %v1543
    %v1545 = vcombine.high %v1523, %v1523
    %v1546 = vcombine.high %v1530, %v1530
    %v1547 = vcombine.high %v1537, %v1537
    %v1548 = vcombine.high %v1544, %v1544
    %v1549 = vlaneseq
    %v1550 = vshrl.u32 %v1549, 7
    %v1551 = vsub.s32 0, %v1550
    %v1552 = vrot.slane %v1523, %v1551
    %v1553 = vlaneseq
    %v1554 = vshrl.u32 %v1553, 7
    %v1555 = vsub.s32 0, %v1554
    %v1556 = vrot.slane %v1537, %v1555
    %v1557 = vlaneseq
    %v1558 = vshrl.u32 %v1557, 7
    %v1559 = vsub.s32 0, %v1558
    %v1560 = vrot.slane %v1545, %v1559
    %v1561 = vlaneseq
    %v1562 = vshrl.u32 %v1561, 7
    %v1563 = vsub.s32 0, %v1562
    %v1564 = vrot.slane %v1547, %v1563
    %v1565 = vlaneseq
    %v1566 = vshrl.u32 %v1565, 7
    %v1567 = vsub.s32 0, %v1566
    %v1568 = vrot.slane %v1530, %v1567
    %v1569 = vlaneseq
    %v1570 = vshrl.u32 %v1569, 7
    %v1571 = vsub.s32 0, %v1570
    %v1572 = vrot.slane %v1544, %v1571
    %v1573 = vlaneseq
    %v1574 = vshrl.u32 %v1573, 7
    %v1575 = vsub.s32 0, %v1574
    %v1576 = vrot.slane %v1546, %v1575
    %v1577 = vlaneseq
    %v1578 = vshrl.u32 %v1577, 7
    %v1579 = vsub.s32 0, %v1578
    %v1580 = vrot.slane %v1548, %v1579
    %v1589 = vadd.f32 %v1552, %v1421
    %v1590 = vadd.f32 %v1556, %v1426
    %v1591 = vadd.f32 %v1560, %v1431
    %v1592 = vadd.f32 %v1564, %v1436
    %v1593 = vadd.f32 %v1568, %v1441
    %v1594 = vadd.f32 %v1572, %v1446
    %v1595 = vadd.f32 %v1576, %v1451
    %v1596 = vadd.f32 %v1580, %v1456
    %v1597 = vsel %vm954, %v1589, 0.0
    %v1598 = vsel %vm954, %v1590, 0.0
    %v1599 = vadd.f32 %v1597, %v1598
    %v1600 = vsel %vm954, %v1591, 0.0
    %v1601 = vadd.f32 %v1599, %v1600
    %v1602 = vsel %vm954, %v1592, 0.0
    %v1603 = vadd.f32 %v1601, %v1602
    %v1604 = vsel %vm954, %v1593, 0.0
    %v1605 = vadd.f32 %v1603, %v1604
    %v1606 = vsel %vm954, %v1594, 0.0
    %v1607 = vadd.f32 %v1605, %v1606
    %v1608 = vsel %vm954, %v1595, 0.0
    %v1609 = vadd.f32 %v1607, %v1608
    %v1610 = vsel %vm954, %v1596, 0.0
    %v1611 = vadd.f32 %v1609, %v1610
    %v1612 = vsel %vm954, %v1589, -inf
    %v1613 = vsel %vm954, %v1590, -inf
    %v1614 = vsel %vm954, %v1591, -inf
    %v1615 = vsel %vm954, %v1592, -inf
    %v1616 = vsel %vm954, %v1593, -inf
    %v1617 = vmax.f32 %v1612, %v1616
    %v1618 = vsel %vm954, %v1594, -inf
    %v1619 = vmax.f32 %v1613, %v1618
    %v1620 = vsel %vm954, %v1595, -inf
    %v1621 = vmax.f32 %v1614, %v1620
    %v1622 = vsel %vm954, %v1596, -inf
    %v1623 = vmax.f32 %v1615, %v1622
    %v1624 = vmax.f32 %v1617, %v1619
    %v1625 = vmax.f32 %v1621, %v1623
    %v1626 = vmax.f32 %v1624, %v1625
    %v1627 = vmul.f32 %v1589, %v1589
    %v1628 = vmul.f32 %v1590, %v1590
    %v1629 = vmul.f32 %v1591, %v1591
    %v1630 = vmul.f32 %v1592, %v1592
    %v1631 = vmul.f32 %v1593, %v1593
    %v1632 = vmul.f32 %v1594, %v1594
    %v1633 = vmul.f32 %v1595, %v1595
    %v1634 = vmul.f32 %v1596, %v1596
    %v1635 = vsel %vm954, %v1627, 0.0
    %v1636 = vsel %vm954, %v1628, 0.0
    %v1637 = vadd.f32 %v1635, %v1636
    %v1638 = vsel %vm954, %v1629, 0.0
    %v1639 = vadd.f32 %v1637, %v1638
    %v1640 = vsel %vm954, %v1630, 0.0
    %v1641 = vadd.f32 %v1639, %v1640
    %v1642 = vsel %vm954, %v1631, 0.0
    %v1643 = vadd.f32 %v1641, %v1642
    %v1644 = vsel %vm954, %v1632, 0.0
    %v1645 = vadd.f32 %v1643, %v1644
    %v1646 = vsel %vm954, %v1633, 0.0
    %v1647 = vadd.f32 %v1645, %v1646
    %v1648 = vsel %vm954, %v1634, 0.0
    %v1649 = vadd.f32 %v1647, %v1648
    %v1650 = vmul.f32 %v1611, 0.125
    %v1651 = vmul.f32 %v1649, 0.125
    %v1652 = vmul.f32 %v1650, %v1650
    %v1653 = vsub.f32 %v1651, %v1652
    %v1654 = vmax.f32 %v1653, 0.0
    %v1655 = vmul.f32 %v1292, 8.0
    %v1656 = vadd.f32 %v1611, %v1655
    %v1657 = vadd.f32 %v1626, %v1292
    %v1658 = vadd.f32 %v1654, 1e-30
    %v1659 = vrsqrt.pop %v1658
    %v1660 = vmul.f32 %v1658, %v1659
    %vm1661 = vcmp.eq.f32.partialorder %v1658, inf
    %v1662 = vsel %vm1661, %v1658, %v1660
    %vm1663 = vcmp.eq.f32.partialorder %v1658, 0.0
    %v1664 = vand.u32 %v1658, 2147483648
    %v1665 = vsel %vm1663, %v1664, %v1662
    %v1667 = vcombine.high %v1214, %v1214
    %v1669 = vunpack.c.l.s4 1966171168
    %v1670 = vunpack.c.0.s8 %v1669
    %v1671 = vlaneseq
    %v1672 = vshrl.u32 %v1671, 7
    %v1673 = vsub.s32 %v1670, %v1672
    %v1674 = vrot.slane %v1214, %v1673
    %v1676 = vunpack.c.l.s4 1966171168
    %v1677 = vunpack.c.0.s8 %v1676
    %v1678 = vlaneseq
    %v1679 = vshrl.u32 %v1678, 7
    %v1680 = vsub.s32 %v1677, %v1679
    %v1681 = vrot.slane %v1667, %v1680
    %v1682 = vcombine.high %v1674, %v1674
    %v1683 = vcombine.high %v1681, %v1681
    %v1685 = vunpack.c.l.s4 1966171168
    %v1686 = vunpack.c.0.s8 %v1685
    %v1687 = vlaneseq
    %v1688 = vshrl.u32 %v1687, 7
    %v1689 = vsub.s32 %v1686, %v1688
    %v1690 = vrot.slane %v1674, %v1689
    %v1692 = vunpack.c.l.s4 1966171168
    %v1693 = vunpack.c.0.s8 %v1692
    %v1694 = vlaneseq
    %v1695 = vshrl.u32 %v1694, 7
    %v1696 = vsub.s32 %v1693, %v1695
    %v1697 = vrot.slane %v1681, %v1696
    %v1699 = vunpack.c.l.s4 1966171168
    %v1700 = vunpack.c.0.s8 %v1699
    %v1701 = vlaneseq
    %v1702 = vshrl.u32 %v1701, 7
    %v1703 = vsub.s32 %v1700, %v1702
    %v1704 = vrot.slane %v1682, %v1703
    %v1706 = vunpack.c.l.s4 1966171168
    %v1707 = vunpack.c.0.s8 %v1706
    %v1708 = vlaneseq
    %v1709 = vshrl.u32 %v1708, 7
    %v1710 = vsub.s32 %v1707, %v1709
    %v1711 = vrot.slane %v1683, %v1710
    %v1712 = vcombine.high %v1690, %v1690
    %v1713 = vcombine.high %v1697, %v1697
    %v1714 = vcombine.high %v1704, %v1704
    %v1715 = vcombine.high %v1711, %v1711
    %v1716 = vlaneseq
    %v1717 = vshrl.u32 %v1716, 7
    %v1718 = vsub.s32 0, %v1717
    %v1719 = vrot.slane %v1690, %v1718
    %v1720 = vlaneseq
    %v1721 = vshrl.u32 %v1720, 7
    %v1722 = vsub.s32 0, %v1721
    %v1723 = vrot.slane %v1704, %v1722
    %v1724 = vlaneseq
    %v1725 = vshrl.u32 %v1724, 7
    %v1726 = vsub.s32 0, %v1725
    %v1727 = vrot.slane %v1712, %v1726
    %v1728 = vlaneseq
    %v1729 = vshrl.u32 %v1728, 7
    %v1730 = vsub.s32 0, %v1729
    %v1731 = vrot.slane %v1714, %v1730
    %v1732 = vlaneseq
    %v1733 = vshrl.u32 %v1732, 7
    %v1734 = vsub.s32 0, %v1733
    %v1735 = vrot.slane %v1697, %v1734
    %v1736 = vlaneseq
    %v1737 = vshrl.u32 %v1736, 7
    %v1738 = vsub.s32 0, %v1737
    %v1739 = vrot.slane %v1711, %v1738
    %v1740 = vlaneseq
    %v1741 = vshrl.u32 %v1740, 7
    %v1742 = vsub.s32 0, %v1741
    %v1743 = vrot.slane %v1713, %v1742
    %v1744 = vlaneseq
    %v1745 = vshrl.u32 %v1744, 7
    %v1746 = vsub.s32 0, %v1745
    %v1747 = vrot.slane %v1715, %v1746
    %v1756 = vadd.f32 %v1719, %v1461
    %v1757 = vadd.f32 %v1723, %v1466
    %v1758 = vadd.f32 %v1727, %v1471
    %v1759 = vadd.f32 %v1731, %v1476
    %v1760 = vadd.f32 %v1735, %v1481
    %v1761 = vadd.f32 %v1739, %v1486
    %v1762 = vadd.f32 %v1743, %v1491
    %v1763 = vadd.f32 %v1747, %v1496
    %v1764 = vsel %vm954, %v1756, 0.0
    %v1765 = vsel %vm954, %v1757, 0.0
    %v1766 = vadd.f32 %v1764, %v1765
    %v1767 = vsel %vm954, %v1758, 0.0
    %v1768 = vadd.f32 %v1766, %v1767
    %v1769 = vsel %vm954, %v1759, 0.0
    %v1770 = vadd.f32 %v1768, %v1769
    %v1771 = vsel %vm954, %v1760, 0.0
    %v1772 = vadd.f32 %v1770, %v1771
    %v1773 = vsel %vm954, %v1761, 0.0
    %v1774 = vadd.f32 %v1772, %v1773
    %v1775 = vsel %vm954, %v1762, 0.0
    %v1776 = vadd.f32 %v1774, %v1775
    %v1777 = vsel %vm954, %v1763, 0.0
    %v1778 = vadd.f32 %v1776, %v1777
    %v1779 = vsel %vm954, %v1756, -inf
    %v1780 = vsel %vm954, %v1757, -inf
    %v1781 = vsel %vm954, %v1758, -inf
    %v1782 = vsel %vm954, %v1759, -inf
    %v1783 = vsel %vm954, %v1760, -inf
    %v1784 = vmax.f32 %v1779, %v1783
    %v1785 = vsel %vm954, %v1761, -inf
    %v1786 = vmax.f32 %v1780, %v1785
    %v1787 = vsel %vm954, %v1762, -inf
    %v1788 = vmax.f32 %v1781, %v1787
    %v1789 = vsel %vm954, %v1763, -inf
    %v1790 = vmax.f32 %v1782, %v1789
    %v1791 = vmax.f32 %v1784, %v1786
    %v1792 = vmax.f32 %v1788, %v1790
    %v1793 = vmax.f32 %v1791, %v1792
    %v1794 = vmul.f32 %v1756, %v1756
    %v1795 = vmul.f32 %v1757, %v1757
    %v1796 = vmul.f32 %v1758, %v1758
    %v1797 = vmul.f32 %v1759, %v1759
    %v1798 = vmul.f32 %v1760, %v1760
    %v1799 = vmul.f32 %v1761, %v1761
    %v1800 = vmul.f32 %v1762, %v1762
    %v1801 = vmul.f32 %v1763, %v1763
    %v1802 = vsel %vm954, %v1794, 0.0
    %v1803 = vsel %vm954, %v1795, 0.0
    %v1804 = vadd.f32 %v1802, %v1803
    %v1805 = vsel %vm954, %v1796, 0.0
    %v1806 = vadd.f32 %v1804, %v1805
    %v1807 = vsel %vm954, %v1797, 0.0
    %v1808 = vadd.f32 %v1806, %v1807
    %v1809 = vsel %vm954, %v1798, 0.0
    %v1810 = vadd.f32 %v1808, %v1809
    %v1811 = vsel %vm954, %v1799, 0.0
    %v1812 = vadd.f32 %v1810, %v1811
    %v1813 = vsel %vm954, %v1800, 0.0
    %v1814 = vadd.f32 %v1812, %v1813
    %v1815 = vsel %vm954, %v1801, 0.0
    %v1816 = vadd.f32 %v1814, %v1815
    %v1817 = vmul.f32 %v1778, 0.125
    %v1818 = vmul.f32 %v1816, 0.125
    %v1819 = vmul.f32 %v1817, %v1817
    %v1820 = vsub.f32 %v1818, %v1819
    %v1821 = vmax.f32 %v1820, 0.0
    %v1822 = vmul.f32 %v1297, 8.0
    %v1823 = vadd.f32 %v1778, %v1822
    %v1824 = vadd.f32 %v1793, %v1297
    %v1825 = vadd.f32 %v1821, 1e-30
    %v1826 = vrsqrt.pop %v1825
    %v1827 = vmul.f32 %v1825, %v1826
    %vm1828 = vcmp.eq.f32.partialorder %v1825, inf
    %v1829 = vsel %vm1828, %v1825, %v1827
    %vm1830 = vcmp.eq.f32.partialorder %v1825, 0.0
    %v1831 = vand.u32 %v1825, 2147483648
    %v1832 = vsel %vm1830, %v1831, %v1829
    %v1833 = vld [vmem:[#allocation25] sm:$0xff]
    %v1834 = vld [vmem:[#allocation25 + $0x8] sm:$0xff]
    %v1835 = vld [vmem:[#allocation25 + $0x10] sm:$0xff]
    %v1836 = vld [vmem:[#allocation25 + $0x18] sm:$0xff]
    %v1837 = vld [vmem:[#allocation25 + $0x20] sm:$0xff]
    %v1838 = vld [vmem:[#allocation25 + $0x28] sm:$0xff]
    %v1840 = vsel %vm954, %v1657, 0
    %v1843 = vsel %vm954, %v1824, 0
    %1845 = vmatprep.subr.mxu0 %v1837
    %1846 = vmatpush1.msra.mxu0 %v1836
    %1847 = vmatprep.subr.mxu0 0.0
    %1848 = vmatpush1.msra.mxu0 0.0
    %1849 = vmatprep.subr.mxu0 0.0
    %1850 = vmatpush1.msra.mxu0 0.0
    %1851 = vmatprep.subr.mxu0 0.0
    %1852 = vmatpush1.msra.mxu0 0.0
    %1853 = vmatprep.subr.mxu0 0.0
    %1854 = vmatpush1.msra.mxu0 0.0
    %1855 = vmatprep.subr.mxu0 0.0
    %1856 = vmatpush1.msra.mxu0 0.0
    %1857 = vmatprep.subr.mxu0 0.0
    %1858 = vmatpush1.msra.mxu0 0.0
    %1859 = vmatprep.subr.mxu0 0.0
    %1860 = vmatpush1.msra.mxu0 0.0
    %1861 = vmatprep.subr.mxu0 0.0
    %1862 = vmatpush1.msra.mxu0 0.0
    %1863 = vmatprep.subr.mxu0 0.0
    %1864 = vmatpush1.msra.mxu0 0.0
    %1865 = vmatprep.subr.mxu0 0.0
    %1866 = vmatpush1.msra.mxu0 0.0
    %1867 = vmatprep.subr.mxu0 0.0
    %1868 = vmatpush1.msra.mxu0 0.0
    %1869 = vmatprep.subr.mxu0 0.0
    %1870 = vmatpush1.msra.mxu0 0.0
    %1871 = vmatprep.subr.mxu0 0.0
    %1872 = vmatpush1.msra.mxu0 0.0
    %1873 = vmatprep.subr.mxu0 0.0
    %1874 = vmatpush1.msra.mxu0 0.0
    %1875 = vmatprep.subr.mxu0 0.0
    %1876 = vmatpush1.msra.mxu0 0.0
    %1877 = vmatprep.subr.mxu0 0.0
    %1878 = vmatpush1.msra.mxu0 0.0
    %1879 = vmatprep.subr.mxu0 0.0
    %1880 = vmatpush1.msra.mxu0 0.0
    %1881 = vmatprep.subr.mxu0 0.0
    %1882 = vmatpush1.msra.mxu0 0.0
    %1883 = vmatprep.subr.mxu0 0.0
    %1884 = vmatpush1.msra.mxu0 0.0
    %1885 = vmatprep.subr.mxu0 0.0
    %1886 = vmatpush1.msra.mxu0 0.0
    %1887 = vmatprep.subr.mxu0 0.0
    %1888 = vmatpush1.msra.mxu0 0.0
    %1889 = vmatprep.subr.mxu0 0.0
    %1890 = vmatpush1.msra.mxu0 0.0
    %1891 = vmatprep.subr.mxu0 0.0
    %1892 = vmatpush1.msra.mxu0 0.0
    %1893 = vmatprep.subr.mxu0 0.0
    %1894 = vmatpush1.msra.mxu0 0.0
    %1895 = vmatprep.subr.mxu0 0.0
    %1896 = vmatpush1.msra.mxu0 0.0
    %1897 = vmatprep.subr.mxu0 0.0
    %1898 = vmatpush1.msra.mxu0 0.0
    %1899 = vmatprep.subr.mxu0 0.0
    %1900 = vmatpush1.msra.mxu0 0.0
    %1901 = vmatprep.subr.mxu0 0.0
    %1902 = vmatpush1.msra.mxu0 0.0
    %1903 = vmatprep.subr.mxu0 0.0
    %1904 = vmatpush1.msra.mxu0 0.0
    %1905 = vmatprep.subr.mxu0 0.0
    %1906 = vmatpush1.msra.mxu0 0.0
    %1907 = vmatprep.subr.mxu0 0.0
    %1908 = vmatpush1.msra.mxu0 0.0
    %1909 = vmatprep.mubr.f32.mxu0 0.0
    %1910 = vmatmul.mubr.f32.gmra.mrb[0].mxu0 %v1840
    %v1911 = vpop.f32.mrb[0].mxu0
    %v1912 = vadd.f32 0.0, %v1911
    %v1913 = vpop.f32.mrb[0].mxu0
    %v1914 = vadd.f32 0.0, %v1913
    %1915 = vmatprep.mubr.f32.mxu0 0.0
    %1916 = vmatmul.mubr.f32.gmra.mrb[0].mxu0 %v1843
    %v1917 = vpop.f32.mrb[0].mxu0
    %v1918 = vadd.f32 0.0, %v1917
    %v1919 = vpop.f32.mrb[0].mxu0
    %v1920 = vadd.f32 0.0, %v1919
    %1921 = vdwg.mxu0
    %1922 = vmatprep.subr.mxu0 0.0
    %1923 = vmatpush1.msra.mxu0 %v1838
    %1924 = vmatprep.subr.mxu0 0.0
    %1925 = vmatpush1.msra.mxu0 0.0
    %1926 = vmatprep.subr.mxu0 0.0
    %1927 = vmatpush1.msra.mxu0 0.0
    %1928 = vmatprep.subr.mxu0 0.0
    %1929 = vmatpush1.msra.mxu0 0.0
    %1930 = vmatprep.subr.mxu0 0.0
    %1931 = vmatpush1.msra.mxu0 0.0
    %1932 = vmatprep.subr.mxu0 0.0
    %1933 = vmatpush1.msra.mxu0 0.0
    %1934 = vmatprep.subr.mxu0 0.0
    %1935 = vmatpush1.msra.mxu0 0.0
    %1936 = vmatprep.subr.mxu0 0.0
    %1937 = vmatpush1.msra.mxu0 0.0
    %1938 = vmatprep.subr.mxu0 0.0
    %1939 = vmatpush1.msra.mxu0 0.0
    %1940 = vmatprep.subr.mxu0 0.0
    %1941 = vmatpush1.msra.mxu0 0.0
    %1942 = vmatprep.subr.mxu0 0.0
    %1943 = vmatpush1.msra.mxu0 0.0
    %1944 = vmatprep.subr.mxu0 0.0
    %1945 = vmatpush1.msra.mxu0 0.0
    %1946 = vmatprep.subr.mxu0 0.0
    %1947 = vmatpush1.msra.mxu0 0.0
    %1948 = vmatprep.subr.mxu0 0.0
    %1949 = vmatpush1.msra.mxu0 0.0
    %1950 = vmatprep.subr.mxu0 0.0
    %1951 = vmatpush1.msra.mxu0 0.0
    %1952 = vmatprep.subr.mxu0 0.0
    %1953 = vmatpush1.msra.mxu0 0.0
    %1954 = vmatprep.subr.mxu0 0.0
    %1955 = vmatpush1.msra.mxu0 0.0
    %1956 = vmatprep.subr.mxu0 0.0
    %1957 = vmatpush1.msra.mxu0 0.0
    %1958 = vmatprep.subr.mxu0 0.0
    %1959 = vmatpush1.msra.mxu0 0.0
    %1960 = vmatprep.subr.mxu0 0.0
    %1961 = vmatpush1.msra.mxu0 0.0
    %1962 = vmatprep.subr.mxu0 0.0
    %1963 = vmatpush1.msra.mxu0 0.0
    %1964 = vmatprep.subr.mxu0 0.0
    %1965 = vmatpush1.msra.mxu0 0.0
    %1966 = vmatprep.subr.mxu0 0.0
    %1967 = vmatpush1.msra.mxu0 0.0
    %1968 = vmatprep.subr.mxu0 0.0
    %1969 = vmatpush1.msra.mxu0 0.0
    %1970 = vmatprep.subr.mxu0 0.0
    %1971 = vmatpush1.msra.mxu0 0.0
    %1972 = vmatprep.subr.mxu0 0.0
    %1973 = vmatpush1.msra.mxu0 0.0
    %1974 = vmatprep.subr.mxu0 0.0
    %1975 = vmatpush1.msra.mxu0 0.0
    %1976 = vmatprep.subr.mxu0 0.0
    %1977 = vmatpush1.msra.mxu0 0.0
    %1978 = vmatprep.subr.mxu0 0.0
    %1979 = vmatpush1.msra.mxu0 0.0
    %1980 = vmatprep.subr.mxu0 0.0
    %1981 = vmatpush1.msra.mxu0 0.0
    %1982 = vmatprep.subr.mxu0 0.0
    %1983 = vmatpush1.msra.mxu0 0.0
    %1984 = vmatprep.subr.mxu0 0.0
    %1985 = vmatpush1.msra.mxu0 0.0
    %1986 = vmatprep.mubr.f32.mxu0 0.0
    %1987 = vmatmul.mubr.f32.gmra.mrb[0].mxu0 %v1840
    %v1988 = vpop.f32.mrb[0].mxu0
    %v1989 = vadd.f32 0.0, %v1988
    %v1990 = vpop.f32.mrb[0].mxu0
    %1991 = vmatprep.mubr.f32.mxu0 0.0
    %1992 = vmatmul.mubr.f32.gmra.mrb[0].mxu0 %v1843
    %v1993 = vpop.f32.mrb[0].mxu0
    %v1994 = vadd.f32 0.0, %v1993
    %v1995 = vpop.f32.mrb[0].mxu0
    %1996 = vdwg.mxu0
    %1997 = vmatprep.subr.mxu0 %v1834
    %1998 = vmatpush1.msra.mxu0 %v1833
    %1999 = vmatprep.subr.mxu0 0.0
    %2000 = vmatpush1.msra.mxu0 0.0
    %2001 = vmatprep.subr.mxu0 0.0
    %2002 = vmatpush1.msra.mxu0 0.0
    %2003 = vmatprep.subr.mxu0 0.0
    %2004 = vmatpush1.msra.mxu0 0.0
    %2005 = vmatprep.subr.mxu0 0.0
    %2006 = vmatpush1.msra.mxu0 0.0
    %2007 = vmatprep.subr.mxu0 0.0
    %2008 = vmatpush1.msra.mxu0 0.0
    %2009 = vmatprep.subr.mxu0 0.0
    %2010 = vmatpush1.msra.mxu0 0.0
    %2011 = vmatprep.subr.mxu0 0.0
    %2012 = vmatpush1.msra.mxu0 0.0
    %2013 = vmatprep.subr.mxu0 0.0
    %2014 = vmatpush1.msra.mxu0 0.0
    %2015 = vmatprep.subr.mxu0 0.0
    %2016 = vmatpush1.msra.mxu0 0.0
    %2017 = vmatprep.subr.mxu0 0.0
    %2018 = vmatpush1.msra.mxu0 0.0
    %2019 = vmatprep.subr.mxu0 0.0
    %2020 = vmatpush1.msra.mxu0 0.0
    %2021 = vmatprep.subr.mxu0 0.0
    %2022 = vmatpush1.msra.mxu0 0.0
    %2023 = vmatprep.subr.mxu0 0.0
    %2024 = vmatpush1.msra.mxu0 0.0
    %2025 = vmatprep.subr.mxu0 0.0
    %2026 = vmatpush1.msra.mxu0 0.0
    %2027 = vmatprep.subr.mxu0 0.0
    %2028 = vmatpush1.msra.mxu0 0.0
    %2029 = vmatprep.subr.mxu0 0.0
    %2030 = vmatpush1.msra.mxu0 0.0
    %2031 = vmatprep.subr.mxu0 0.0
    %2032 = vmatpush1.msra.mxu0 0.0
    %2033 = vmatprep.subr.mxu0 0.0
    %2034 = vmatpush1.msra.mxu0 0.0
    %2035 = vmatprep.subr.mxu0 0.0
    %2036 = vmatpush1.msra.mxu0 0.0
    %2037 = vmatprep.subr.mxu0 0.0
    %2038 = vmatpush1.msra.mxu0 0.0
    %2039 = vmatprep.subr.mxu0 0.0
    %2040 = vmatpush1.msra.mxu0 0.0
    %2041 = vmatprep.subr.mxu0 0.0
    %2042 = vmatpush1.msra.mxu0 0.0
    %2043 = vmatprep.subr.mxu0 0.0
    %2044 = vmatpush1.msra.mxu0 0.0
    %2045 = vmatprep.subr.mxu0 0.0
    %2046 = vmatpush1.msra.mxu0 0.0
    %2047 = vmatprep.subr.mxu0 0.0
    %2048 = vmatpush1.msra.mxu0 0.0
    %2049 = vmatprep.subr.mxu0 0.0
    %2050 = vmatpush1.msra.mxu0 0.0
    %2051 = vmatprep.subr.mxu0 0.0
    %2052 = vmatpush1.msra.mxu0 0.0
    %2053 = vmatprep.subr.mxu0 0.0
    %2054 = vmatpush1.msra.mxu0 0.0
    %2055 = vmatprep.subr.mxu0 0.0
    %2056 = vmatpush1.msra.mxu0 0.0
    %2057 = vmatprep.subr.mxu0 0.0
    %2058 = vmatpush1.msra.mxu0 0.0
    %2059 = vmatprep.subr.mxu0 0.0
    %2060 = vmatpush1.msra.mxu0 0.0
    %2061 = vmatprep.mubr.f32.mxu0 0.0
    %2062 = vmatmul.mubr.f32.gmra.mrb[0].mxu0 %v1137
    %v2063 = vpop.f32.mrb[0].mxu0
    %v2064 = vadd.f32 %v1912, %v2063
    %v2065 = vpop.f32.mrb[0].mxu0
    %v2066 = vadd.f32 %v1914, %v2065
    %2067 = vmatprep.mubr.f32.mxu0 0.0
    %2068 = vmatmul.mubr.f32.gmra.mrb[0].mxu0 %v1140
    %v2069 = vpop.f32.mrb[0].mxu0
    %v2070 = vadd.f32 %v1918, %v2069
    %v2071 = vpop.f32.mrb[0].mxu0
    %v2072 = vadd.f32 %v1920, %v2071
    %2073 = vdwg.mxu0
    %2074 = vmatprep.subr.mxu0 0.0
    %2075 = vmatpush1.msra.mxu0 %v1835
    %2076 = vmatprep.subr.mxu0 0.0
    %2077 = vmatpush1.msra.mxu0 0.0
    %2078 = vmatprep.subr.mxu0 0.0
    %2079 = vmatpush1.msra.mxu0 0.0
    %2080 = vmatprep.subr.mxu0 0.0
    %2081 = vmatpush1.msra.mxu0 0.0
    %2082 = vmatprep.subr.mxu0 0.0
    %2083 = vmatpush1.msra.mxu0 0.0
    %2084 = vmatprep.subr.mxu0 0.0
    %2085 = vmatpush1.msra.mxu0 0.0
    %2086 = vmatprep.subr.mxu0 0.0
    %2087 = vmatpush1.msra.mxu0 0.0
    %2088 = vmatprep.subr.mxu0 0.0
    %2089 = vmatpush1.msra.mxu0 0.0
    %2090 = vmatprep.subr.mxu0 0.0
    %2091 = vmatpush1.msra.mxu0 0.0
    %2092 = vmatprep.subr.mxu0 0.0
    %2093 = vmatpush1.msra.mxu0 0.0
    %2094 = vmatprep.subr.mxu0 0.0
    %2095 = vmatpush1.msra.mxu0 0.0
    %2096 = vmatprep.subr.mxu0 0.0
    %2097 = vmatpush1.msra.mxu0 0.0
    %2098 = vmatprep.subr.mxu0 0.0
    %2099 = vmatpush1.msra.mxu0 0.0
    %2100 = vmatprep.subr.mxu0 0.0
    %2101 = vmatpush1.msra.mxu0 0.0
    %2102 = vmatprep.subr.mxu0 0.0
    %2103 = vmatpush1.msra.mxu0 0.0
    %2104 = vmatprep.subr.mxu0 0.0
    %2105 = vmatpush1.msra.mxu0 0.0
    %2106 = vmatprep.subr.mxu0 0.0
    %2107 = vmatpush1.msra.mxu0 0.0
    %2108 = vmatprep.subr.mxu0 0.0
    %2109 = vmatpush1.msra.mxu0 0.0
    %2110 = vmatprep.subr.mxu0 0.0
    %2111 = vmatpush1.msra.mxu0 0.0
    %2112 = vmatprep.subr.mxu0 0.0
    %2113 = vmatpush1.msra.mxu0 0.0
    %2114 = vmatprep.subr.mxu0 0.0
    %2115 = vmatpush1.msra.mxu0 0.0
    %2116 = vmatprep.subr.mxu0 0.0
    %2117 = vmatpush1.msra.mxu0 0.0
    %2118 = vmatprep.subr.mxu0 0.0
    %2119 = vmatpush1.msra.mxu0 0.0
    %2120 = vmatprep.subr.mxu0 0.0
    %2121 = vmatpush1.msra.mxu0 0.0
    %2122 = vmatprep.subr.mxu0 0.0
    %2123 = vmatpush1.msra.mxu0 0.0
    %2124 = vmatprep.subr.mxu0 0.0
    %2125 = vmatpush1.msra.mxu0 0.0
    %2126 = vmatprep.subr.mxu0 0.0
    %2127 = vmatpush1.msra.mxu0 0.0
    %2128 = vmatprep.subr.mxu0 0.0
    %2129 = vmatpush1.msra.mxu0 0.0
    %2130 = vmatprep.subr.mxu0 0.0
    %2131 = vmatpush1.msra.mxu0 0.0
    %2132 = vmatprep.subr.mxu0 0.0
    %2133 = vmatpush1.msra.mxu0 0.0
    %2134 = vmatprep.subr.mxu0 0.0
    %2135 = vmatpush1.msra.mxu0 0.0
    %2136 = vmatprep.subr.mxu0 0.0
    %2137 = vmatpush1.msra.mxu0 0.0
    %2138 = vmatprep.mubr.f32.mxu0 0.0
    %2139 = vmatmul.mubr.f32.gmra.mrb[0].mxu0 %v1137
    %v2140 = vpop.f32.mrb[0].mxu0
    %v2141 = vadd.f32 %v1989, %v2140
    %v2142 = vpop.f32.mrb[0].mxu0
    %2143 = vmatprep.mubr.f32.mxu0 0.0
    %2144 = vmatmul.mubr.f32.gmra.mrb[0].mxu0 %v1140
    %v2145 = vpop.f32.mrb[0].mxu0
    %v2146 = vadd.f32 %v1994, %v2145
    %v2147 = vpop.f32.mrb[0].mxu0
    %2148 = vdwg.mxu0
    %v2149 = vld [vmem:[#allocation25 + $0x30] sm:$0xff]
    %v2150 = vld [vmem:[#allocation25 + $0x38] sm:$0xff]
    %v2151 = vld [vmem:[#allocation25 + $0x40] sm:$0xff]
    %v2153 = vsel %vm954, %v1656, 0
    %v2156 = vsel %vm954, %v1823, 0
    %2158 = vmatprep.subr.mxu0 %v2150
    %2159 = vmatpush1.msra.mxu0 %v2149
    %2160 = vmatprep.subr.mxu0 0.0
    %2161 = vmatpush1.msra.mxu0 0.0
    %2162 = vmatprep.subr.mxu0 0.0
    %2163 = vmatpush1.msra.mxu0 0.0
    %2164 = vmatprep.subr.mxu0 0.0
    %2165 = vmatpush1.msra.mxu0 0.0
    %2166 = vmatprep.subr.mxu0 0.0
    %2167 = vmatpush1.msra.mxu0 0.0
    %2168 = vmatprep.subr.mxu0 0.0
    %2169 = vmatpush1.msra.mxu0 0.0
    %2170 = vmatprep.subr.mxu0 0.0
    %2171 = vmatpush1.msra.mxu0 0.0
    %2172 = vmatprep.subr.mxu0 0.0
    %2173 = vmatpush1.msra.mxu0 0.0
    %2174 = vmatprep.subr.mxu0 0.0
    %2175 = vmatpush1.msra.mxu0 0.0
    %2176 = vmatprep.subr.mxu0 0.0
    %2177 = vmatpush1.msra.mxu0 0.0
    %2178 = vmatprep.subr.mxu0 0.0
    %2179 = vmatpush1.msra.mxu0 0.0
    %2180 = vmatprep.subr.mxu0 0.0
    %2181 = vmatpush1.msra.mxu0 0.0
    %2182 = vmatprep.subr.mxu0 0.0
    %2183 = vmatpush1.msra.mxu0 0.0
    %2184 = vmatprep.subr.mxu0 0.0
    %2185 = vmatpush1.msra.mxu0 0.0
    %2186 = vmatprep.subr.mxu0 0.0
    %2187 = vmatpush1.msra.mxu0 0.0
    %2188 = vmatprep.subr.mxu0 0.0
    %2189 = vmatpush1.msra.mxu0 0.0
    %2190 = vmatprep.subr.mxu0 0.0
    %2191 = vmatpush1.msra.mxu0 0.0
    %2192 = vmatprep.subr.mxu0 0.0
    %2193 = vmatpush1.msra.mxu0 0.0
    %2194 = vmatprep.subr.mxu0 0.0
    %2195 = vmatpush1.msra.mxu0 0.0
    %2196 = vmatprep.subr.mxu0 0.0
    %2197 = vmatpush1.msra.mxu0 0.0
    %2198 = vmatprep.subr.mxu0 0.0
    %2199 = vmatpush1.msra.mxu0 0.0
    %2200 = vmatprep.subr.mxu0 0.0
    %2201 = vmatpush1.msra.mxu0 0.0
    %2202 = vmatprep.subr.mxu0 0.0
    %2203 = vmatpush1.msra.mxu0 0.0
    %2204 = vmatprep.subr.mxu0 0.0
    %2205 = vmatpush1.msra.mxu0 0.0
    %2206 = vmatprep.subr.mxu0 0.0
    %2207 = vmatpush1.msra.mxu0 0.0
    %2208 = vmatprep.subr.mxu0 0.0
    %2209 = vmatpush1.msra.mxu0 0.0
    %2210 = vmatprep.subr.mxu0 0.0
    %2211 = vmatpush1.msra.mxu0 0.0
    %2212 = vmatprep.subr.mxu0 0.0
    %2213 = vmatpush1.msra.mxu0 0.0
    %2214 = vmatprep.subr.mxu0 0.0
    %2215 = vmatpush1.msra.mxu0 0.0
    %2216 = vmatprep.subr.mxu0 0.0
    %2217 = vmatpush1.msra.mxu0 0.0
    %2218 = vmatprep.subr.mxu0 0.0
    %2219 = vmatpush1.msra.mxu0 0.0
    %2220 = vmatprep.subr.mxu0 0.0
    %2221 = vmatpush1.msra.mxu0 0.0
    %2222 = vmatprep.mubr.f32.mxu0 0.0
    %2223 = vmatmul.mubr.f32.gmra.mrb[0].mxu0 %v2153
    %v2224 = vpop.f32.mrb[0].mxu0
    %v2225 = vadd.f32 0.0, %v2224
    %v2226 = vpop.f32.mrb[0].mxu0
    %v2227 = vadd.f32 0.0, %v2226
    %2228 = vmatprep.mubr.f32.mxu0 0.0
    %2229 = vmatmul.mubr.f32.gmra.mrb[0].mxu0 %v2156
    %v2230 = vpop.f32.mrb[0].mxu0
    %v2231 = vadd.f32 0.0, %v2230
    %v2232 = vpop.f32.mrb[0].mxu0
    %v2233 = vadd.f32 0.0, %v2232
    %2234 = vdwg.mxu0
    %2235 = vmatprep.subr.mxu0 0.0
    %2236 = vmatpush1.msra.mxu0 %v2151
    %2237 = vmatprep.subr.mxu0 0.0
    %2238 = vmatpush1.msra.mxu0 0.0
    %2239 = vmatprep.subr.mxu0 0.0
    %2240 = vmatpush1.msra.mxu0 0.0
    %2241 = vmatprep.subr.mxu0 0.0
    %2242 = vmatpush1.msra.mxu0 0.0
    %2243 = vmatprep.subr.mxu0 0.0
    %2244 = vmatpush1.msra.mxu0 0.0
    %2245 = vmatprep.subr.mxu0 0.0
    %2246 = vmatpush1.msra.mxu0 0.0
    %2247 = vmatprep.subr.mxu0 0.0
    %2248 = vmatpush1.msra.mxu0 0.0
    %2249 = vmatprep.subr.mxu0 0.0
    %2250 = vmatpush1.msra.mxu0 0.0
    %2251 = vmatprep.subr.mxu0 0.0
    %2252 = vmatpush1.msra.mxu0 0.0
    %2253 = vmatprep.subr.mxu0 0.0
    %2254 = vmatpush1.msra.mxu0 0.0
    %2255 = vmatprep.subr.mxu0 0.0
    %2256 = vmatpush1.msra.mxu0 0.0
    %2257 = vmatprep.subr.mxu0 0.0
    %2258 = vmatpush1.msra.mxu0 0.0
    %2259 = vmatprep.subr.mxu0 0.0
    %2260 = vmatpush1.msra.mxu0 0.0
    %2261 = vmatprep.subr.mxu0 0.0
    %2262 = vmatpush1.msra.mxu0 0.0
    %2263 = vmatprep.subr.mxu0 0.0
    %2264 = vmatpush1.msra.mxu0 0.0
    %2265 = vmatprep.subr.mxu0 0.0
    %2266 = vmatpush1.msra.mxu0 0.0
    %2267 = vmatprep.subr.mxu0 0.0
    %2268 = vmatpush1.msra.mxu0 0.0
    %2269 = vmatprep.subr.mxu0 0.0
    %2270 = vmatpush1.msra.mxu0 0.0
    %2271 = vmatprep.subr.mxu0 0.0
    %2272 = vmatpush1.msra.mxu0 0.0
    %2273 = vmatprep.subr.mxu0 0.0
    %2274 = vmatpush1.msra.mxu0 0.0
    %2275 = vmatprep.subr.mxu0 0.0
    %2276 = vmatpush1.msra.mxu0 0.0
    %2277 = vmatprep.subr.mxu0 0.0
    %2278 = vmatpush1.msra.mxu0 0.0
    %2279 = vmatprep.subr.mxu0 0.0
    %2280 = vmatpush1.msra.mxu0 0.0
    %2281 = vmatprep.subr.mxu0 0.0
    %2282 = vmatpush1.msra.mxu0 0.0
    %2283 = vmatprep.subr.mxu0 0.0
    %2284 = vmatpush1.msra.mxu0 0.0
    %2285 = vmatprep.subr.mxu0 0.0
    %2286 = vmatpush1.msra.mxu0 0.0
    %2287 = vmatprep.subr.mxu0 0.0
    %2288 = vmatpush1.msra.mxu0 0.0
    %2289 = vmatprep.subr.mxu0 0.0
    %2290 = vmatpush1.msra.mxu0 0.0
    %2291 = vmatprep.subr.mxu0 0.0
    %2292 = vmatpush1.msra.mxu0 0.0
    %2293 = vmatprep.subr.mxu0 0.0
    %2294 = vmatpush1.msra.mxu0 0.0
    %2295 = vmatprep.subr.mxu0 0.0
    %2296 = vmatpush1.msra.mxu0 0.0
    %2297 = vmatprep.subr.mxu0 0.0
    %2298 = vmatpush1.msra.mxu0 0.0
    %2299 = vmatprep.mubr.f32.mxu0 0.0
    %2300 = vmatmul.mubr.f32.gmra.mrb[0].mxu0 %v2153
    %v2301 = vpop.f32.mrb[0].mxu0
    %v2302 = vadd.f32 0.0, %v2301
    %v2303 = vpop.f32.mrb[0].mxu0
    %2304 = vmatprep.mubr.f32.mxu0 0.0
    %2305 = vmatmul.mubr.f32.gmra.mrb[0].mxu0 %v2156
    %v2306 = vpop.f32.mrb[0].mxu0
    %v2307 = vadd.f32 0.0, %v2306
    %v2308 = vpop.f32.mrb[0].mxu0
    %2309 = vdwg.mxu0
    %v2310 = vadd.f32 %v2064, %v2225
    %v2311 = vadd.f32 %v2066, %v2227
    %v2312 = vadd.f32 %v2141, %v2302
    %v2313 = vadd.f32 %v2070, %v2231
    %v2314 = vadd.f32 %v2072, %v2233
    %v2315 = vadd.f32 %v2146, %v2307
    %v2316 = vld [vmem:[#allocation25 + $0x48] sm:$0xff]
    %v2317 = vld [vmem:[#allocation25 + $0x50] sm:$0xff]
    %v2318 = vld [vmem:[#allocation25 + $0x58] sm:$0xff]
    %v2320 = vsel %vm954, %v1665, 0
    %v2323 = vsel %vm954, %v1832, 0
    %2325 = vmatprep.subr.mxu0 %v2317
    %2326 = vmatpush1.msra.mxu0 %v2316
    %2327 = vmatprep.subr.mxu0 0.0
    %2328 = vmatpush1.msra.mxu0 0.0
    %2329 = vmatprep.subr.mxu0 0.0
    %2330 = vmatpush1.msra.mxu0 0.0
    %2331 = vmatprep.subr.mxu0 0.0
    %2332 = vmatpush1.msra.mxu0 0.0
    %2333 = vmatprep.subr.mxu0 0.0
    %2334 = vmatpush1.msra.mxu0 0.0
    %2335 = vmatprep.subr.mxu0 0.0
    %2336 = vmatpush1.msra.mxu0 0.0
    %2337 = vmatprep.subr.mxu0 0.0
    %2338 = vmatpush1.msra.mxu0 0.0
    %2339 = vmatprep.subr.mxu0 0.0
    %2340 = vmatpush1.msra.mxu0 0.0
    %2341 = vmatprep.subr.mxu0 0.0
    %2342 = vmatpush1.msra.mxu0 0.0
    %2343 = vmatprep.subr.mxu0 0.0
    %2344 = vmatpush1.msra.mxu0 0.0
    %2345 = vmatprep.subr.mxu0 0.0
    %2346 = vmatpush1.msra.mxu0 0.0
    %2347 = vmatprep.subr.mxu0 0.0
    %2348 = vmatpush1.msra.mxu0 0.0
    %2349 = vmatprep.subr.mxu0 0.0
    %2350 = vmatpush1.msra.mxu0 0.0
    %2351 = vmatprep.subr.mxu0 0.0
    %2352 = vmatpush1.msra.mxu0 0.0
    %2353 = vmatprep.subr.mxu0 0.0
    %2354 = vmatpush1.msra.mxu0 0.0
    %2355 = vmatprep.subr.mxu0 0.0
    %2356 = vmatpush1.msra.mxu0 0.0
    %2357 = vmatprep.subr.mxu0 0.0
    %2358 = vmatpush1.msra.mxu0 0.0
    %2359 = vmatprep.subr.mxu0 0.0
    %2360 = vmatpush1.msra.mxu0 0.0
    %2361 = vmatprep.subr.mxu0 0.0
    %2362 = vmatpush1.msra.mxu0 0.0
    %2363 = vmatprep.subr.mxu0 0.0
    %2364 = vmatpush1.msra.mxu0 0.0
    %2365 = vmatprep.subr.mxu0 0.0
    %2366 = vmatpush1.msra.mxu0 0.0
    %2367 = vmatprep.subr.mxu0 0.0
    %2368 = vmatpush1.msra.mxu0 0.0
    %2369 = vmatprep.subr.mxu0 0.0
    %2370 = vmatpush1.msra.mxu0 0.0
    %2371 = vmatprep.subr.mxu0 0.0
    %2372 = vmatpush1.msra.mxu0 0.0
    %2373 = vmatprep.subr.mxu0 0.0
    %2374 = vmatpush1.msra.mxu0 0.0
    %2375 = vmatprep.subr.mxu0 0.0
    %2376 = vmatpush1.msra.mxu0 0.0
    %2377 = vmatprep.subr.mxu0 0.0
    %2378 = vmatpush1.msra.mxu0 0.0
    %2379 = vmatprep.subr.mxu0 0.0
    %2380 = vmatpush1.msra.mxu0 0.0
    %2381 = vmatprep.subr.mxu0 0.0
    %2382 = vmatpush1.msra.mxu0 0.0
    %2383 = vmatprep.subr.mxu0 0.0
    %2384 = vmatpush1.msra.mxu0 0.0
    %2385 = vmatprep.subr.mxu0 0.0
    %2386 = vmatpush1.msra.mxu0 0.0
    %2387 = vmatprep.subr.mxu0 0.0
    %2388 = vmatpush1.msra.mxu0 0.0
    %2389 = vmatprep.mubr.f32.mxu0 0.0
    %2390 = vmatmul.mubr.f32.gmra.mrb[0].mxu0 %v2320
    %v2391 = vpop.f32.mrb[0].mxu0
    %v2392 = vadd.f32 0.0, %v2391
    %v2393 = vpop.f32.mrb[0].mxu0
    %v2394 = vadd.f32 0.0, %v2393
    %2395 = vmatprep.mubr.f32.mxu0 0.0
    %2396 = vmatmul.mubr.f32.gmra.mrb[0].mxu0 %v2323
    %v2397 = vpop.f32.mrb[0].mxu0
    %v2398 = vadd.f32 0.0, %v2397
    %v2399 = vpop.f32.mrb[0].mxu0
    %v2400 = vadd.f32 0.0, %v2399
    %2401 = vdwg.mxu0
    %2402 = vmatprep.subr.mxu0 0.0
    %2403 = vmatpush1.msra.mxu0 %v2318
    %2404 = vmatprep.subr.mxu0 0.0
    %2405 = vmatpush1.msra.mxu0 0.0
    %2406 = vmatprep.subr.mxu0 0.0
    %2407 = vmatpush1.msra.mxu0 0.0
    %2408 = vmatprep.subr.mxu0 0.0
    %2409 = vmatpush1.msra.mxu0 0.0
    %2410 = vmatprep.subr.mxu0 0.0
    %2411 = vmatpush1.msra.mxu0 0.0
    %2412 = vmatprep.subr.mxu0 0.0
    %2413 = vmatpush1.msra.mxu0 0.0
    %2414 = vmatprep.subr.mxu0 0.0
    %2415 = vmatpush1.msra.mxu0 0.0
    %2416 = vmatprep.subr.mxu0 0.0
    %2417 = vmatpush1.msra.mxu0 0.0
    %2418 = vmatprep.subr.mxu0 0.0
    %2419 = vmatpush1.msra.mxu0 0.0
    %2420 = vmatprep.subr.mxu0 0.0
    %2421 = vmatpush1.msra.mxu0 0.0
    %2422 = vmatprep.subr.mxu0 0.0
    %2423 = vmatpush1.msra.mxu0 0.0
    %2424 = vmatprep.subr.mxu0 0.0
    %2425 = vmatpush1.msra.mxu0 0.0
    %2426 = vmatprep.subr.mxu0 0.0
    %2427 = vmatpush1.msra.mxu0 0.0
    %2428 = vmatprep.subr.mxu0 0.0
    %2429 = vmatpush1.msra.mxu0 0.0
    %2430 = vmatprep.subr.mxu0 0.0
    %2431 = vmatpush1.msra.mxu0 0.0
    %2432 = vmatprep.subr.mxu0 0.0
    %2433 = vmatpush1.msra.mxu0 0.0
    %2434 = vmatprep.subr.mxu0 0.0
    %2435 = vmatpush1.msra.mxu0 0.0
    %2436 = vmatprep.subr.mxu0 0.0
    %2437 = vmatpush1.msra.mxu0 0.0
    %2438 = vmatprep.subr.mxu0 0.0
    %2439 = vmatpush1.msra.mxu0 0.0
    %2440 = vmatprep.subr.mxu0 0.0
    %2441 = vmatpush1.msra.mxu0 0.0
    %2442 = vmatprep.subr.mxu0 0.0
    %2443 = vmatpush1.msra.mxu0 0.0
    %2444 = vmatprep.subr.mxu0 0.0
    %2445 = vmatpush1.msra.mxu0 0.0
    %2446 = vmatprep.subr.mxu0 0.0
    %2447 = vmatpush1.msra.mxu0 0.0
    %2448 = vmatprep.subr.mxu0 0.0
    %2449 = vmatpush1.msra.mxu0 0.0
    %2450 = vmatprep.subr.mxu0 0.0
    %2451 = vmatpush1.msra.mxu0 0.0
    %2452 = vmatprep.subr.mxu0 0.0
    %2453 = vmatpush1.msra.mxu0 0.0
    %2454 = vmatprep.subr.mxu0 0.0
    %2455 = vmatpush1.msra.mxu0 0.0
    %2456 = vmatprep.subr.mxu0 0.0
    %2457 = vmatpush1.msra.mxu0 0.0
    %2458 = vmatprep.subr.mxu0 0.0
    %2459 = vmatpush1.msra.mxu0 0.0
    %2460 = vmatprep.subr.mxu0 0.0
    %2461 = vmatpush1.msra.mxu0 0.0
    %2462 = vmatprep.subr.mxu0 0.0
    %2463 = vmatpush1.msra.mxu0 0.0
    %2464 = vmatprep.subr.mxu0 0.0
    %2465 = vmatpush1.msra.mxu0 0.0
    %2466 = vmatprep.mubr.f32.mxu0 0.0
    %2467 = vmatmul.mubr.f32.gmra.mrb[0].mxu0 %v2320
    %v2468 = vpop.f32.mrb[0].mxu0
    %v2469 = vadd.f32 0.0, %v2468
    %v2470 = vpop.f32.mrb[0].mxu0
    %2471 = vmatprep.mubr.f32.mxu0 0.0
    %2472 = vmatmul.mubr.f32.gmra.mrb[0].mxu0 %v2323
    %v2473 = vpop.f32.mrb[0].mxu0
    %v2474 = vadd.f32 0.0, %v2473
    %v2475 = vpop.f32.mrb[0].mxu0
    %2476 = vdwg.mxu0
    %v2477 = vadd.f32 %v2310, %v2392
    %v2478 = vadd.f32 %v2311, %v2394
    %v2479 = vadd.f32 %v2312, %v2469
    %v2480 = vadd.f32 %v2313, %v2398
    %v2481 = vadd.f32 %v2314, %v2400
    %v2482 = vadd.f32 %v2315, %v2474
    %v2483 = vld [vmem:[#allocation26] sm:$0x7]
    %v2485 = vlaneseq
    %v2486 = vshrl.u32 %v2485, 7
    %v2487 = vsub.s32 0, %v2486
    %v2488 = vrot.slane %v2483, %v2487
    %v2489 = vlaneseq
    %v2490 = vshrl.u32 %v2489, 7
    %v2491 = vsub.s32 1, %v2490
    %v2492 = vrot.slane %v2483, %v2491
    %v2493 = vlaneseq
    %v2494 = vshrl.u32 %v2493, 7
    %v2495 = vsub.s32 2, %v2494
    %v2496 = vrot.slane %v2483, %v2495
    %v2500 = vadd.f32 %v2477, %v2488
    %v2501 = vadd.f32 %v2478, %v2492
    %v2502 = vadd.f32 %v2479, %v2496
    %v2503 = vadd.f32 %v2480, %v2488
    %v2504 = vadd.f32 %v2481, %v2492
    %v2505 = vadd.f32 %v2482, %v2496
    %v2506 = vmul.f32 %v2500, 2.828427
    %v2507 = vmul.f32 %v2501, 2.828427
    %v2508 = vmul.f32 %v2502, 2.828427
    %v2509 = vmul.f32 %v2503, 2.828427
    %v2510 = vmul.f32 %v2504, 2.828427
    %v2511 = vmul.f32 %v2505, 2.828427
    %v2512 = vadd.f32 %v2506, %v2509
    %v2513 = vrot.slane %v2512, 4
    %v2514 = vadd.f32 %v2512, %v2513
    %v2515 = vrot.slane %v2514, 2
    %v2516 = vadd.f32 %v2514, %v2515
    %v2517 = vrot.slane %v2516, 1
    %v2518 = vadd.f32 %v2516, %v2517
    %v2519 = vadd.f32 %v2507, %v2510
    %v2520 = vrot.slane %v2519, 4
    %v2521 = vadd.f32 %v2519, %v2520
    %v2522 = vrot.slane %v2521, 2
    %v2523 = vadd.f32 %v2521, %v2522
    %v2524 = vrot.slane %v2523, 1
    %v2525 = vadd.f32 %v2523, %v2524
    %v2526 = vadd.f32 %v2508, %v2511
    %v2527 = vrot.slane %v2526, 4
    %v2528 = vadd.f32 %v2526, %v2527
    %v2529 = vrot.slane %v2528, 2
    %v2530 = vadd.f32 %v2528, %v2529
    %v2531 = vrot.slane %v2530, 1
    %v2532 = vadd.f32 %v2530, %v2531
    %v2533 = vrcp.pop 16.0
    %v2534 = vmul.f32 %v2518, %v2533
    %v2535 = vmul.f32 %v2525, %v2533
    %v2536 = vmul.f32 %v2532, %v2533
    %v2537 = vmul.f32 %v2506, %v2506
    %v2538 = vmul.f32 %v2507, %v2507
    %v2539 = vmul.f32 %v2508, %v2508
    %v2540 = vmul.f32 %v2509, %v2509
    %v2541 = vmul.f32 %v2510, %v2510
    %v2542 = vmul.f32 %v2511, %v2511
    %v2543 = vadd.f32 %v2537, %v2540
    %v2544 = vrot.slane %v2543, 4
    %v2545 = vadd.f32 %v2543, %v2544
    %v2546 = vrot.slane %v2545, 2
    %v2547 = vadd.f32 %v2545, %v2546
    %v2548 = vrot.slane %v2547, 1
    %v2549 = vadd.f32 %v2547, %v2548
    %v2550 = vadd.f32 %v2538, %v2541
    %v2551 = vrot.slane %v2550, 4
    %v2552 = vadd.f32 %v2550, %v2551
    %v2553 = vrot.slane %v2552, 2
    %v2554 = vadd.f32 %v2552, %v2553
    %v2555 = vrot.slane %v2554, 1
    %v2556 = vadd.f32 %v2554, %v2555
    %v2557 = vadd.f32 %v2539, %v2542
    %v2558 = vrot.slane %v2557, 4
    %v2559 = vadd.f32 %v2557, %v2558
    %v2560 = vrot.slane %v2559, 2
    %v2561 = vadd.f32 %v2559, %v2560
    %v2562 = vrot.slane %v2561, 1
    %v2563 = vadd.f32 %v2561, %v2562
    %v2564 = vmul.f32 %v2549, %v2533
    %v2565 = vmul.f32 %v2556, %v2533
    %v2566 = vmul.f32 %v2563, %v2533
    %v2567 = vmul.f32 %v2534, %v2534
    %v2568 = vmul.f32 %v2535, %v2535
    %v2569 = vmul.f32 %v2536, %v2536
    %v2570 = vsub.f32 %v2564, %v2567
    %v2571 = vsub.f32 %v2565, %v2568
    %v2572 = vsub.f32 %v2566, %v2569
    %v2573 = vmax.f32 %v2570, 0.0
    %v2574 = vmax.f32 %v2571, 0.0
    %v2575 = vmax.f32 %v2572, 0.0
    %v2576 = vld [vmem:[#allocation28] sm:$0x7]
    %v2577 = vadd.f32 %v2573, 1e-05
    %v2578 = vadd.f32 %v2574, 1e-05
    %v2579 = vadd.f32 %v2575, 1e-05
    %v2580 = vrsqrt.pop %v2577
    %v2581 = vrsqrt.pop %v2578
    %v2582 = vrsqrt.pop %v2579
    %v2586 = vcombine.low %v2580, %v2581
    %v2588 = vunpack.c.l.s4 1966171168
    %v2589 = vunpack.c.0.s8 %v2588
    %v2590 = vlaneseq
    %v2591 = vshrl.u32 %v2590, 7
    %v2592 = vsub.s32 %v2589, %v2591
    %v2593 = vrot.slane %v2586, %v2592
    %v2595 = vunpack.c.l.s4 1966171168
    %v2596 = vunpack.c.0.s8 %v2595
    %v2597 = vlaneseq
    %v2598 = vshrl.u32 %v2597, 7
    %v2599 = vsub.s32 %v2596, %v2598
    %v2600 = vrot.slane %v2582, %v2599
    %v2601 = vcombine.low %v2593, %v2600
    %v2603 = vunpack.c.l.s4 1966171168
    %v2604 = vunpack.c.0.s8 %v2603
    %v2605 = vlaneseq
    %v2606 = vshrl.u32 %v2605, 7
    %v2607 = vsub.s32 %v2604, %v2606
    %v2608 = vrot.slane %v2601, %v2607
    %v2610 = vmul.f32 %v2576, %v2608
    %v2611 = vld [vmem:[#allocation29] sm:$0x7]
    %v2613 = vlaneseq
    %v2614 = vshrl.u32 %v2613, 7
    %v2615 = vsub.s32 0, %v2614
    %v2616 = vrot.slane %v2610, %v2615
    %v2617 = vlaneseq
    %v2618 = vshrl.u32 %v2617, 7
    %v2619 = vsub.s32 1, %v2618
    %v2620 = vrot.slane %v2610, %v2619
    %v2621 = vlaneseq
    %v2622 = vshrl.u32 %v2621, 7
    %v2623 = vsub.s32 2, %v2622
    %v2624 = vrot.slane %v2610, %v2623
    %v2628 = vmul.f32 %v2534, %v2616
    %v2629 = vmul.f32 %v2535, %v2620
    %v2630 = vmul.f32 %v2536, %v2624
    %v2634 = vcombine.low %v2628, %v2629
    %v2636 = vunpack.c.l.s4 1966171168
    %v2637 = vunpack.c.0.s8 %v2636
    %v2638 = vlaneseq
    %v2639 = vshrl.u32 %v2638, 7
    %v2640 = vsub.s32 %v2637, %v2639
    %v2641 = vrot.slane %v2634, %v2640
    %v2643 = vunpack.c.l.s4 1966171168
    %v2644 = vunpack.c.0.s8 %v2643
    %v2645 = vlaneseq
    %v2646 = vshrl.u32 %v2645, 7
    %v2647 = vsub.s32 %v2644, %v2646
    %v2648 = vrot.slane %v2630, %v2647
    %v2649 = vcombine.low %v2641, %v2648
    %v2651 = vunpack.c.l.s4 1966171168
    %v2652 = vunpack.c.0.s8 %v2651
    %v2653 = vlaneseq
    %v2654 = vshrl.u32 %v2653, 7
    %v2655 = vsub.s32 %v2652, %v2654
    %v2656 = vrot.slane %v2649, %v2655
    %v2658 = vsub.f32 %v2611, %v2656
    %v2659 = vmul.f32 %v2506, %v2616
    %v2660 = vmul.f32 %v2507, %v2620
    %v2661 = vmul.f32 %v2508, %v2624
    %v2662 = vmul.f32 %v2509, %v2616
    %v2663 = vmul.f32 %v2510, %v2620
    %v2664 = vmul.f32 %v2511, %v2624
    %v2666 = vlaneseq
    %v2667 = vshrl.u32 %v2666, 7
    %v2668 = vsub.s32 0, %v2667
    %v2669 = vrot.slane %v2658, %v2668
    %v2670 = vlaneseq
    %v2671 = vshrl.u32 %v2670, 7
    %v2672 = vsub.s32 1, %v2671
    %v2673 = vrot.slane %v2658, %v2672
    %v2674 = vlaneseq
    %v2675 = vshrl.u32 %v2674, 7
    %v2676 = vsub.s32 2, %v2675
    %v2677 = vrot.slane %v2658, %v2676
    %v2681 = vadd.f32 %v2659, %v2669
    %v2682 = vadd.f32 %v2660, %v2673
    %v2683 = vadd.f32 %v2661, %v2677
    %v2684 = vadd.f32 %v2662, %v2669
    %v2685 = vadd.f32 %v2663, %v2673
    %v2686 = vadd.f32 %v2664, %v2677
    %s2687 = smul.u32 4, 48
    %s2688 = smul.u32 %s2687, 3
    %s2689 = sshll.u32 %s2688, 4
    %2690 = dma.done [#allocation10], %s2689
    %v2691 = vld [vmem:[#allocation2] sm:$0xff]
    %v2692 = vld [vmem:[#allocation2 + $0x8] sm:$0xff]
    %v2693 = vld [vmem:[#allocation2 + $0x10] sm:$0xff]
    %v2694 = vld [vmem:[#allocation2 + $0x18] sm:$0xff]
    %v2695 = vld [vmem:[#allocation2 + $0x20] sm:$0xff]
    %v2696 = vld [vmem:[#allocation2 + $0x28] sm:$0xff]
    %v2697 = vld [vmem:[#allocation2 + $0x30] sm:$0xff]
    %v2698 = vld [vmem:[#allocation2 + $0x38] sm:$0xff]
    %v2699 = vld [vmem:[#allocation2 + $0x40] sm:$0xff]
    %v2700 = vld [vmem:[#allocation2 + $0x48] sm:$0xff]
    %v2701 = vld [vmem:[#allocation2 + $0x50] sm:$0xff]
    %v2702 = vld [vmem:[#allocation2 + $0x58] sm:$0xff]
    %v2703 = vld [vmem:[#allocation2 + $0x60] sm:$0xff]
    %v2704 = vld [vmem:[#allocation2 + $0x68] sm:$0xff]
    %v2705 = vld [vmem:[#allocation2 + $0x70] sm:$0xff]
    %v2706 = vld [vmem:[#allocation2 + $0x78] sm:$0xff]
    %v2707 = vld [vmem:[#allocation2 + $0x80] sm:$0xff]
    %v2708 = vld [vmem:[#allocation2 + $0x88] sm:$0xff]
    %v2709 = vld [vmem:[#allocation2 + $0x90] sm:$0xff]
    %v2710 = vld [vmem:[#allocation2 + $0x98] sm:$0xff]
    %v2711 = vld [vmem:[#allocation2 + $0xa0] sm:$0xff]
    %v2712 = vld [vmem:[#allocation2 + $0xa8] sm:$0xff]
    %v2713 = vld [vmem:[#allocation2 + $0xb0] sm:$0xff]
    %v2714 = vld [vmem:[#allocation2 + $0xb8] sm:$0xff]
    %v2715 = vld [vmem:[#allocation2 + $0xc0] sm:$0xff]
    %v2716 = vld [vmem:[#allocation2 + $0xc8] sm:$0xff]
    %v2717 = vld [vmem:[#allocation2 + $0xd0] sm:$0xff]
    %v2718 = vld [vmem:[#allocation2 + $0xd8] sm:$0xff]
    %v2719 = vld [vmem:[#allocation2 + $0xe0] sm:$0xff]
    %v2720 = vld [vmem:[#allocation2 + $0xe8] sm:$0xff]
    %v2721 = vld [vmem:[#allocation2 + $0xf0] sm:$0xff]
    %v2722 = vld [vmem:[#allocation2 + $0xf8] sm:$0xff]
    %v2723 = vld [vmem:[#allocation2 + $0x100] sm:$0xff]
    %v2724 = vld [vmem:[#allocation2 + $0x108] sm:$0xff]
    %v2725 = vld [vmem:[#allocation2 + $0x110] sm:$0xff]
    %v2726 = vld [vmem:[#allocation2 + $0x118] sm:$0xff]
    %v2727 = vld [vmem:[#allocation2 + $0x120] sm:$0xff]
    %v2728 = vld [vmem:[#allocation2 + $0x128] sm:$0xff]
    %v2729 = vld [vmem:[#allocation2 + $0x130] sm:$0xff]
    %v2730 = vld [vmem:[#allocation2 + $0x138] sm:$0xff]
    %v2731 = vld [vmem:[#allocation2 + $0x140] sm:$0xff]
    %v2732 = vld [vmem:[#allocation2 + $0x148] sm:$0xff]
    %v2733 = vld [vmem:[#allocation2 + $0x150] sm:$0xff]
    %v2734 = vld [vmem:[#allocation2 + $0x158] sm:$0xff]
    %v2735 = vld [vmem:[#allocation2 + $0x160] sm:$0xff]
    %v2736 = vld [vmem:[#allocation2 + $0x168] sm:$0xff]
    %v2737 = vld [vmem:[#allocation2 + $0x170] sm:$0xff]
    %v2738 = vld [vmem:[#allocation2 + $0x178] sm:$0xff]
    %v2739 = vld [vmem:[#allocation2 + $0x180] sm:$0xff]
    %v2740 = vld [vmem:[#allocation2 + $0x188] sm:$0xff]
    %v2741 = vld [vmem:[#allocation2 + $0x190] sm:$0xff]
    %v2742 = vld [vmem:[#allocation2 + $0x198] sm:$0xff]
    %v2743 = vld [vmem:[#allocation2 + $0x1a0] sm:$0xff]
    %v2744 = vld [vmem:[#allocation2 + $0x1a8] sm:$0xff]
    %v2745 = vld [vmem:[#allocation2 + $0x1b0] sm:$0xff]
    %v2746 = vld [vmem:[#allocation2 + $0x1b8] sm:$0xff]
    %v2747 = vld [vmem:[#allocation2 + $0x1c0] sm:$0xff]
    %v2748 = vld [vmem:[#allocation2 + $0x1c8] sm:$0xff]
    %v2749 = vld [vmem:[#allocation2 + $0x1d0] sm:$0xff]
    %v2750 = vld [vmem:[#allocation2 + $0x1d8] sm:$0xff]
    %v2751 = vld [vmem:[#allocation2 + $0x1e0] sm:$0xff]
    %v2752 = vld [vmem:[#allocation2 + $0x1e8] sm:$0xff]
    %v2753 = vld [vmem:[#allocation2 + $0x1f0] sm:$0xff]
    %v2754 = vld [vmem:[#allocation2 + $0x1f8] sm:$0xff]
    %v2755 = vld [vmem:[#allocation2 + $0x200] sm:$0xff]
    %v2756 = vld [vmem:[#allocation2 + $0x208] sm:$0xff]
    %v2757 = vld [vmem:[#allocation2 + $0x210] sm:$0xff]
    %v2758 = vld [vmem:[#allocation2 + $0x218] sm:$0xff]
    %v2759 = vld [vmem:[#allocation2 + $0x220] sm:$0xff]
    %v2760 = vld [vmem:[#allocation2 + $0x228] sm:$0xff]
    %v2761 = vld [vmem:[#allocation2 + $0x230] sm:$0xff]
    %v2762 = vld [vmem:[#allocation2 + $0x238] sm:$0xff]
    %v2763 = vpack.c.bf16 %v2684, %v2681
    %v2764 = vpack.c.bf16 %v2685, %v2682
    %v2765 = vpack.c.bf16 %v2686, %v2683
    %v2766 = vld [vmem:[#allocation31] sm:$0x7]
    %v2768 = vlaneseq
    %v2769 = vshrl.u32 %v2768, 7
    %v2770 = vsub.s32 0, %v2769
    %v2771 = vrot.slane %v2766, %v2770
    %v2772 = vlaneseq
    %v2773 = vshrl.u32 %v2772, 7
    %v2774 = vsub.s32 1, %v2773
    %v2775 = vrot.slane %v2766, %v2774
    %v2776 = vlaneseq
    %v2777 = vshrl.u32 %v2776, 7
    %v2778 = vsub.s32 2, %v2777
    %v2779 = vrot.slane %v2766, %v2778
    %2783 = vmatprep.subr.bf16.mxu0 %v2692
    %2784 = vmatpush1.bf16.msra.mxu0 %v2691
    %2785 = vmatprep.subr.bf16.mxu0 %v2695
    %2786 = vmatpush1.bf16.msra.mxu0 %v2694
    %2787 = vmatprep.subr.bf16.mxu0 %v2698
    %2788 = vmatpush1.bf16.msra.mxu0 %v2697
    %2789 = vmatprep.subr.bf16.mxu0 %v2701
    %2790 = vmatpush1.bf16.msra.mxu0 %v2700
    %2791 = vmatprep.subr.bf16.mxu0 %v2704
    %2792 = vmatpush1.bf16.msra.mxu0 %v2703
    %2793 = vmatprep.subr.bf16.mxu0 %v2707
    %2794 = vmatpush1.bf16.msra.mxu0 %v2706
    %2795 = vmatprep.subr.bf16.mxu0 %v2710
    %2796 = vmatpush1.bf16.msra.mxu0 %v2709
    %2797 = vmatprep.subr.bf16.mxu0 %v2713
    %2798 = vmatpush1.bf16.msra.mxu0 %v2712
    %2799 = vmatprep.subr.bf16.mxu0 %v2716
    %2800 = vmatpush1.bf16.msra.mxu0 %v2715
    %2801 = vmatprep.subr.bf16.mxu0 %v2719
    %2802 = vmatpush1.bf16.msra.mxu0 %v2718
    %2803 = vmatprep.subr.bf16.mxu0 %v2722
    %2804 = vmatpush1.bf16.msra.mxu0 %v2721
    %2805 = vmatprep.subr.bf16.mxu0 %v2725
    %2806 = vmatpush1.bf16.msra.mxu0 %v2724
    %2807 = vmatprep.subr.bf16.mxu0 %v2728
    %2808 = vmatpush1.bf16.msra.mxu0 %v2727
    %2809 = vmatprep.subr.bf16.mxu0 %v2731
    %2810 = vmatpush1.bf16.msra.mxu0 %v2730
    %2811 = vmatprep.subr.bf16.mxu0 %v2734
    %2812 = vmatpush1.bf16.msra.mxu0 %v2733
    %2813 = vmatprep.subr.bf16.mxu0 %v2737
    %2814 = vmatpush1.bf16.msra.mxu0 %v2736
    %2815 = vmatprep.mubr.bf16.mxu0 %v2764
    %2816 = vmatmul.mubr.bf16.gmra.mrb[0].mxu0 %v2763
    %v2817 = vpop.f32.mrb[0].mxu0
    %v2818 = vadd.f32 %v2771, %v2817
    %v2819 = vpop.f32.mrb[0].mxu0
    %v2820 = vadd.f32 %v2775, %v2819
    %v2821 = vpop.f32.mrb[0].mxu0
    %v2822 = vadd.f32 %v2771, %v2821
    %v2823 = vpop.f32.mrb[0].mxu0
    %v2824 = vadd.f32 %v2775, %v2823
    %2825 = vdwg.mxu0
    %2826 = vmatprep.subr.bf16.mxu0 %v2740
    %2827 = vmatpush1.bf16.msra.mxu0 %v2739
    %2828 = vmatprep.subr.bf16.mxu0 %v2743
    %2829 = vmatpush1.bf16.msra.mxu0 %v2742
    %2830 = vmatprep.subr.bf16.mxu0 %v2746
    %2831 = vmatpush1.bf16.msra.mxu0 %v2745
    %2832 = vmatprep.subr.bf16.mxu0 %v2749
    %2833 = vmatpush1.bf16.msra.mxu0 %v2748
    %2834 = vmatprep.subr.bf16.mxu0 %v2752
    %2835 = vmatpush1.bf16.msra.mxu0 %v2751
    %2836 = vmatprep.subr.bf16.mxu0 %v2755
    %2837 = vmatpush1.bf16.msra.mxu0 %v2754
    %2838 = vmatprep.subr.bf16.mxu0 %v2758
    %2839 = vmatpush1.bf16.msra.mxu0 %v2757
    %2840 = vmatprep.subr.bf16.mxu0 %v2761
    %2841 = vmatpush1.bf16.msra.mxu0 %v2760
    %2842 = vmatprep.subr.bf16.mxu0 0
    %2843 = vmatpush1.bf16.msra.mxu0 0
    %2844 = vmatprep.subr.bf16.mxu0 0
    %2845 = vmatpush1.bf16.msra.mxu0 0
    %2846 = vmatprep.subr.bf16.mxu0 0
    %2847 = vmatpush1.bf16.msra.mxu0 0
    %2848 = vmatprep.subr.bf16.mxu0 0
    %2849 = vmatpush1.bf16.msra.mxu0 0
    %2850 = vmatprep.subr.bf16.mxu0 0
    %2851 = vmatpush1.bf16.msra.mxu0 0
    %2852 = vmatprep.subr.bf16.mxu0 0
    %2853 = vmatpush1.bf16.msra.mxu0 0
    %2854 = vmatprep.subr.bf16.mxu0 0
    %2855 = vmatpush1.bf16.msra.mxu0 0
    %2856 = vmatprep.subr.bf16.mxu0 0
    %2857 = vmatpush1.bf16.msra.mxu0 0
    %2858 = vmatprep.mubr.bf16.mxu0 0
    %2859 = vmatmul.mubr.bf16.gmra.mrb[0].mxu0 %v2765
    %v2860 = vpop.f32.mrb[0].mxu0
    %v2861 = vadd.f32 %v2818, %v2860
    %v2862 = vpop.f32.mrb[0].mxu0
    %v2863 = vadd.f32 %v2820, %v2862
    %v2864 = vpop.f32.mrb[0].mxu0
    %v2865 = vadd.f32 %v2822, %v2864
    %v2866 = vpop.f32.mrb[0].mxu0
    %v2867 = vadd.f32 %v2824, %v2866
    %2868 = vdwg.mxu0
    %2869 = vmatprep.subr.bf16.mxu0 0
    %2870 = vmatpush1.bf16.msra.mxu0 %v2693
    %2871 = vmatprep.subr.bf16.mxu0 0
    %2872 = vmatpush1.bf16.msra.mxu0 %v2696
    %2873 = vmatprep.subr.bf16.mxu0 0
    %2874 = vmatpush1.bf16.msra.mxu0 %v2699
    %2875 = vmatprep.subr.bf16.mxu0 0
    %2876 = vmatpush1.bf16.msra.mxu0 %v2702
    %2877 = vmatprep.subr.bf16.mxu0 0
    %2878 = vmatpush1.bf16.msra.mxu0 %v2705
    %2879 = vmatprep.subr.bf16.mxu0 0
    %2880 = vmatpush1.bf16.msra.mxu0 %v2708
    %2881 = vmatprep.subr.bf16.mxu0 0
    %2882 = vmatpush1.bf16.msra.mxu0 %v2711
    %2883 = vmatprep.subr.bf16.mxu0 0
    %2884 = vmatpush1.bf16.msra.mxu0 %v2714
    %2885 = vmatprep.subr.bf16.mxu0 0
    %2886 = vmatpush1.bf16.msra.mxu0 %v2717
    %2887 = vmatprep.subr.bf16.mxu0 0
    %2888 = vmatpush1.bf16.msra.mxu0 %v2720
    %2889 = vmatprep.subr.bf16.mxu0 0
    %2890 = vmatpush1.bf16.msra.mxu0 %v2723
    %2891 = vmatprep.subr.bf16.mxu0 0
    %2892 = vmatpush1.bf16.msra.mxu0 %v2726
    %2893 = vmatprep.subr.bf16.mxu0 0
    %2894 = vmatpush1.bf16.msra.mxu0 %v2729
    %2895 = vmatprep.subr.bf16.mxu0 0
    %2896 = vmatpush1.bf16.msra.mxu0 %v2732
    %2897 = vmatprep.subr.bf16.mxu0 0
    %2898 = vmatpush1.bf16.msra.mxu0 %v2735
    %2899 = vmatprep.subr.bf16.mxu0 0
    %2900 = vmatpush1.bf16.msra.mxu0 %v2738
    %2901 = vmatprep.mubr.bf16.mxu0 %v2764
    %2902 = vmatmul.mubr.bf16.gmra.mrb[0].mxu0 %v2763
    %v2903 = vpop.f32.mrb[0].mxu0
    %v2904 = vadd.f32 %v2779, %v2903
    %v2905 = vpop.f32.mrb[0].mxu0
    %v2906 = vpop.f32.mrb[0].mxu0
    %v2907 = vadd.f32 %v2779, %v2906
    %v2908 = vpop.f32.mrb[0].mxu0
    %2909 = vdwg.mxu0
    %2910 = vmatprep.subr.bf16.mxu0 0
    %2911 = vmatpush1.bf16.msra.mxu0 %v2741
    %2912 = vmatprep.subr.bf16.mxu0 0
    %2913 = vmatpush1.bf16.msra.mxu0 %v2744
    %2914 = vmatprep.subr.bf16.mxu0 0
    %2915 = vmatpush1.bf16.msra.mxu0 %v2747
    %2916 = vmatprep.subr.bf16.mxu0 0
    %2917 = vmatpush1.bf16.msra.mxu0 %v2750
    %2918 = vmatprep.subr.bf16.mxu0 0
    %2919 = vmatpush1.bf16.msra.mxu0 %v2753
    %2920 = vmatprep.subr.bf16.mxu0 0
    %2921 = vmatpush1.bf16.msra.mxu0 %v2756
    %2922 = vmatprep.subr.bf16.mxu0 0
    %2923 = vmatpush1.bf16.msra.mxu0 %v2759
    %2924 = vmatprep.subr.bf16.mxu0 0
    %2925 = vmatpush1.bf16.msra.mxu0 %v2762
    %2926 = vmatprep.subr.bf16.mxu0 0
    %2927 = vmatpush1.bf16.msra.mxu0 0
    %2928 = vmatprep.subr.bf16.mxu0 0
    %2929 = vmatpush1.bf16.msra.mxu0 0
    %2930 = vmatprep.subr.bf16.mxu0 0
    %2931 = vmatpush1.bf16.msra.mxu0 0
    %2932 = vmatprep.subr.bf16.mxu0 0
    %2933 = vmatpush1.bf16.msra.mxu0 0
    %2934 = vmatprep.subr.bf16.mxu0 0
    %2935 = vmatpush1.bf16.msra.mxu0 0
    %2936 = vmatprep.subr.bf16.mxu0 0
    %2937 = vmatpush1.bf16.msra.mxu0 0
    %2938 = vmatprep.subr.bf16.mxu0 0
    %2939 = vmatpush1.bf16.msra.mxu0 0
    %2940 = vmatprep.subr.bf16.mxu0 0
    %2941 = vmatpush1.bf16.msra.mxu0 0
    %2942 = vmatprep.mubr.bf16.mxu0 0
    %2943 = vmatmul.mubr.bf16.gmra.mrb[0].mxu0 %v2765
    %v2944 = vpop.f32.mrb[0].mxu0
    %v2945 = vadd.f32 %v2904, %v2944
    %v2946 = vpop.f32.mrb[0].mxu0
    %v2947 = vpop.f32.mrb[0].mxu0
    %v2948 = vadd.f32 %v2907, %v2947
    %v2949 = vpop.f32.mrb[0].mxu0
    %2950 = vdwg.mxu0
    %vm2951 = vcmp.gt.f32.partialorder %v2861, 0.0
    %vm2952 = vcmp.gt.f32.partialorder %v2863, 0.0
    %vm2953 = vcmp.gt.f32.partialorder %v2945, 0.0
    %vm2954 = vcmp.gt.f32.partialorder %v2865, 0.0
    %vm2955 = vcmp.gt.f32.partialorder %v2867, 0.0
    %vm2956 = vcmp.gt.f32.partialorder %v2948, 0.0
    %v2957 = vmul.f32 %v2861, 0.01
    %v2958 = vmul.f32 %v2863, 0.01
    %v2959 = vmul.f32 %v2945, 0.01
    %v2960 = vmul.f32 %v2865, 0.01
    %v2961 = vmul.f32 %v2867, 0.01
    %v2962 = vmul.f32 %v2948, 0.01
    %v2963 = vsel %vm2951, %v2861, %v2957
    %v2964 = vsel %vm2952, %v2863, %v2958
    %v2965 = vsel %vm2953, %v2945, %v2959
    %v2966 = vsel %vm2954, %v2865, %v2960
    %v2967 = vsel %vm2955, %v2867, %v2961
    %v2968 = vsel %vm2956, %v2948, %v2962
    %v2969 = vmax.f32 %v2963, 0.0
    %v2970 = vmax.f32 %v2964, 0.0
    %v2971 = vmax.f32 %v2965, 0.0
    %v2972 = vmax.f32 %v2966, 0.0
    %v2973 = vmax.f32 %v2967, 0.0
    %v2974 = vmax.f32 %v2968, 0.0
    %s2975 = smul.u32 4, 52
    %s2976 = smul.u32 %s2975, 4
    %s2977 = sshll.u32 %s2976, 4
    %2978 = dma.done %s485, %s2977
    %v2979 = vld [vmem:[#allocation3] sm:$0xff]
    %v2980 = vld [vmem:[#allocation3 + $0x8] sm:$0xff]
    %v2981 = vld [vmem:[#allocation3 + $0x10] sm:$0xff]
    %v2982 = vld [vmem:[#allocation3 + $0x18] sm:$0xff]
    %v2983 = vld [vmem:[#allocation3 + $0x20] sm:$0xff]
    %v2984 = vld [vmem:[#allocation3 + $0x28] sm:$0xff]
    %v2985 = vld [vmem:[#allocation3 + $0x30] sm:$0xff]
    %v2986 = vld [vmem:[#allocation3 + $0x38] sm:$0xff]
    %v2987 = vld [vmem:[#allocation3 + $0x40] sm:$0xff]
    %v2988 = vld [vmem:[#allocation3 + $0x48] sm:$0xff]
    %v2989 = vld [vmem:[#allocation3 + $0x50] sm:$0xff]
    %v2990 = vld [vmem:[#allocation3 + $0x58] sm:$0xff]
    %v2991 = vld [vmem:[#allocation3 + $0x60] sm:$0xff]
    %v2992 = vld [vmem:[#allocation3 + $0x68] sm:$0xff]
    %v2993 = vld [vmem:[#allocation3 + $0x70] sm:$0xff]
    %v2994 = vld [vmem:[#allocation3 + $0x78] sm:$0xff]
    %v2995 = vld [vmem:[#allocation3 + $0x80] sm:$0xff]
    %v2996 = vld [vmem:[#allocation3 + $0x88] sm:$0xff]
    %v2997 = vld [vmem:[#allocation3 + $0x90] sm:$0xff]
    %v2998 = vld [vmem:[#allocation3 + $0x98] sm:$0xff]
    %v2999 = vld [vmem:[#allocation3 + $0xa0] sm:$0xff]
    %v3000 = vld [vmem:[#allocation3 + $0xa8] sm:$0xff]
    %v3001 = vld [vmem:[#allocation3 + $0xb0] sm:$0xff]
    %v3002 = vld [vmem:[#allocation3 + $0xb8] sm:$0xff]
    %v3003 = vld [vmem:[#allocation3 + $0xc0] sm:$0xff]
    %v3004 = vld [vmem:[#allocation3 + $0xc8] sm:$0xff]
    %v3005 = vld [vmem:[#allocation3 + $0xd0] sm:$0xff]
    %v3006 = vld [vmem:[#allocation3 + $0xd8] sm:$0xff]
    %v3007 = vld [vmem:[#allocation3 + $0xe0] sm:$0xff]
    %v3008 = vld [vmem:[#allocation3 + $0xe8] sm:$0xff]
    %v3009 = vld [vmem:[#allocation3 + $0xf0] sm:$0xff]
    %v3010 = vld [vmem:[#allocation3 + $0xf8] sm:$0xff]
    %v3011 = vld [vmem:[#allocation3 + $0x100] sm:$0xff]
    %v3012 = vld [vmem:[#allocation3 + $0x108] sm:$0xff]
    %v3013 = vld [vmem:[#allocation3 + $0x110] sm:$0xff]
    %v3014 = vld [vmem:[#allocation3 + $0x118] sm:$0xff]
    %v3015 = vld [vmem:[#allocation3 + $0x120] sm:$0xff]
    %v3016 = vld [vmem:[#allocation3 + $0x128] sm:$0xff]
    %v3017 = vld [vmem:[#allocation3 + $0x130] sm:$0xff]
    %v3018 = vld [vmem:[#allocation3 + $0x138] sm:$0xff]
    %v3019 = vld [vmem:[#allocation3 + $0x140] sm:$0xff]
    %v3020 = vld [vmem:[#allocation3 + $0x148] sm:$0xff]
    %v3021 = vld [vmem:[#allocation3 + $0x150] sm:$0xff]
    %v3022 = vld [vmem:[#allocation3 + $0x158] sm:$0xff]
    %v3023 = vld [vmem:[#allocation3 + $0x160] sm:$0xff]
    %v3024 = vld [vmem:[#allocation3 + $0x168] sm:$0xff]
    %v3025 = vld [vmem:[#allocation3 + $0x170] sm:$0xff]
    %v3026 = vld [vmem:[#allocation3 + $0x178] sm:$0xff]
    %v3027 = vld [vmem:[#allocation3 + $0x180] sm:$0xff]
    %v3028 = vld [vmem:[#allocation3 + $0x188] sm:$0xff]
    %v3029 = vld [vmem:[#allocation3 + $0x190] sm:$0xff]
    %v3030 = vld [vmem:[#allocation3 + $0x198] sm:$0xff]
    %v3031 = vld [vmem:[#allocation3 + $0x1a0] sm:$0xff]
    %v3032 = vld [vmem:[#allocation3 + $0x1a8] sm:$0xff]
    %v3033 = vld [vmem:[#allocation3 + $0x1b0] sm:$0xff]
    %v3034 = vld [vmem:[#allocation3 + $0x1b8] sm:$0xff]
    %v3035 = vld [vmem:[#allocation3 + $0x1c0] sm:$0xff]
    %v3036 = vld [vmem:[#allocation3 + $0x1c8] sm:$0xff]
    %v3037 = vld [vmem:[#allocation3 + $0x1d0] sm:$0xff]
    %v3038 = vld [vmem:[#allocation3 + $0x1d8] sm:$0xff]
    %v3039 = vld [vmem:[#allocation3 + $0x1e0] sm:$0xff]
    %v3040 = vld [vmem:[#allocation3 + $0x1e8] sm:$0xff]
    %v3041 = vld [vmem:[#allocation3 + $0x1f0] sm:$0xff]
    %v3042 = vld [vmem:[#allocation3 + $0x1f8] sm:$0xff]
    %v3043 = vld [vmem:[#allocation3 + $0x200] sm:$0xff]
    %v3044 = vld [vmem:[#allocation3 + $0x208] sm:$0xff]
    %v3045 = vld [vmem:[#allocation3 + $0x210] sm:$0xff]
    %v3046 = vld [vmem:[#allocation3 + $0x218] sm:$0xff]
    %v3047 = vld [vmem:[#allocation3 + $0x220] sm:$0xff]
    %v3048 = vld [vmem:[#allocation3 + $0x228] sm:$0xff]
    %v3049 = vld [vmem:[#allocation3 + $0x230] sm:$0xff]
    %v3050 = vld [vmem:[#allocation3 + $0x238] sm:$0xff]
    %v3051 = vld [vmem:[#allocation3 + $0x240] sm:$0xff]
    %v3052 = vld [vmem:[#allocation3 + $0x248] sm:$0xff]
    %v3053 = vld [vmem:[#allocation3 + $0x250] sm:$0xff]
    %v3054 = vld [vmem:[#allocation3 + $0x258] sm:$0xff]
    %v3055 = vld [vmem:[#allocation3 + $0x260] sm:$0xff]
    %v3056 = vld [vmem:[#allocation3 + $0x268] sm:$0xff]
    %v3057 = vld [vmem:[#allocation3 + $0x270] sm:$0xff]
    %v3058 = vld [vmem:[#allocation3 + $0x278] sm:$0xff]
    %v3059 = vld [vmem:[#allocation3 + $0x280] sm:$0xff]
    %v3060 = vld [vmem:[#allocation3 + $0x288] sm:$0xff]
    %v3061 = vld [vmem:[#allocation3 + $0x290] sm:$0xff]
    %v3062 = vld [vmem:[#allocation3 + $0x298] sm:$0xff]
    %v3063 = vld [vmem:[#allocation3 + $0x2a0] sm:$0xff]
    %v3064 = vld [vmem:[#allocation3 + $0x2a8] sm:$0xff]
    %v3065 = vld [vmem:[#allocation3 + $0x2b0] sm:$0xff]
    %v3066 = vld [vmem:[#allocation3 + $0x2b8] sm:$0xff]
    %v3067 = vld [vmem:[#allocation3 + $0x2c0] sm:$0xff]
    %v3068 = vld [vmem:[#allocation3 + $0x2c8] sm:$0xff]
    %v3069 = vld [vmem:[#allocation3 + $0x2d0] sm:$0xff]
    %v3070 = vld [vmem:[#allocation3 + $0x2d8] sm:$0xff]
    %v3071 = vld [vmem:[#allocation3 + $0x2e0] sm:$0xff]
    %v3072 = vld [vmem:[#allocation3 + $0x2e8] sm:$0xff]
    %v3073 = vld [vmem:[#allocation3 + $0x2f0] sm:$0xff]
    %v3074 = vld [vmem:[#allocation3 + $0x2f8] sm:$0xff]
    %v3075 = vpack.c.bf16 %v2972, %v2969
    %v3076 = vpack.c.bf16 %v2973, %v2970
    %v3077 = vpack.c.bf16 %v2974, %v2971
    %v3078 = vld [vmem:[#allocation3 + $0x300] sm:$0xff]
    %v3079 = vld [vmem:[#allocation3 + $0x308] sm:$0xff]
    %v3080 = vld [vmem:[#allocation3 + $0x310] sm:$0xff]
    %v3081 = vld [vmem:[#allocation3 + $0x318] sm:$0xff]
    %v3082 = vld [vmem:[#allocation3 + $0x320] sm:$0xff]
    %v3083 = vld [vmem:[#allocation3 + $0x328] sm:$0xff]
    %v3084 = vld [vmem:[#allocation3 + $0x330] sm:$0xff]
    %v3085 = vld [vmem:[#allocation3 + $0x338] sm:$0xff]
    %v3086 = vpack.c.bf16 %v1130, %v1125
    %vm3087 = vcmask 261120
    %v3089 = vsel %vm3087, %v3086, 0
    %3091 = vmatprep.subr.bf16.mxu0 %v3079
    %3092 = vmatpush1.bf16.msra.mxu0 %v3078
    %3093 = vmatprep.subr.bf16.mxu0 %v3083
    %3094 = vmatpush1.bf16.msra.mxu0 %v3082
    %3095 = vmatprep.subr.bf16.mxu0 0
    %3096 = vmatpush1.bf16.msra.mxu0 0
    %3097 = vmatprep.subr.bf16.mxu0 0
    %3098 = vmatpush1.bf16.msra.mxu0 0
    %3099 = vmatprep.subr.bf16.mxu0 0
    %3100 = vmatpush1.bf16.msra.mxu0 0
    %3101 = vmatprep.subr.bf16.mxu0 0
    %3102 = vmatpush1.bf16.msra.mxu0 0
    %3103 = vmatprep.subr.bf16.mxu0 0
    %3104 = vmatpush1.bf16.msra.mxu0 0
    %3105 = vmatprep.subr.bf16.mxu0 0
    %3106 = vmatpush1.bf16.msra.mxu0 0
    %3107 = vmatprep.subr.bf16.mxu0 0
    %3108 = vmatpush1.bf16.msra.mxu0 0
    %3109 = vmatprep.subr.bf16.mxu0 0
    %3110 = vmatpush1.bf16.msra.mxu0 0
    %3111 = vmatprep.subr.bf16.mxu0 0
    %3112 = vmatpush1.bf16.msra.mxu0 0
    %3113 = vmatprep.subr.bf16.mxu0 0
    %3114 = vmatpush1.bf16.msra.mxu0 0
    %3115 = vmatprep.subr.bf16.mxu0 0
    %3116 = vmatpush1.bf16.msra.mxu0 0
    %3117 = vmatprep.subr.bf16.mxu0 0
    %3118 = vmatpush1.bf16.msra.mxu0 0
    %3119 = vmatprep.subr.bf16.mxu0 0
    %3120 = vmatpush1.bf16.msra.mxu0 0
    %3121 = vmatprep.subr.bf16.mxu0 0
    %3122 = vmatpush1.bf16.msra.mxu0 0
    %3123 = vmatprep.mubr.bf16.mxu0 0
    %3124 = vmatmul.mubr.bf16.gmra.mrb[0].mxu0 %v3089
    %v3125 = vpop.f32.mrb[0].mxu0
    %v3126 = vadd.f32 0.0, %v3125
    %v3127 = vpop.f32.mrb[0].mxu0
    %v3128 = vadd.f32 0.0, %v3127
    %v3129 = vpop.f32.mrb[0].mxu0
    %v3130 = vadd.f32 0.0, %v3129
    %v3131 = vpop.f32.mrb[0].mxu0
    %v3132 = vadd.f32 0.0, %v3131
    %3133 = vdwg.mxu0
    %3134 = vmatprep.subr.bf16.mxu0 %v3081
    %3135 = vmatpush1.bf16.msra.mxu0 %v3080
    %3136 = vmatprep.subr.bf16.mxu0 %v3085
    %3137 = vmatpush1.bf16.msra.mxu0 %v3084
    %3138 = vmatprep.subr.bf16.mxu0 0
    %3139 = vmatpush1.bf16.msra.mxu0 0
    %3140 = vmatprep.subr.bf16.mxu0 0
    %3141 = vmatpush1.bf16.msra.mxu0 0
    %3142 = vmatprep.subr.bf16.mxu0 0
    %3143 = vmatpush1.bf16.msra.mxu0 0
    %3144 = vmatprep.subr.bf16.mxu0 0
    %3145 = vmatpush1.bf16.msra.mxu0 0
    %3146 = vmatprep.subr.bf16.mxu0 0
    %3147 = vmatpush1.bf16.msra.mxu0 0
    %3148 = vmatprep.subr.bf16.mxu0 0
    %3149 = vmatpush1.bf16.msra.mxu0 0
    %3150 = vmatprep.subr.bf16.mxu0 0
    %3151 = vmatpush1.bf16.msra.mxu0 0
    %3152 = vmatprep.subr.bf16.mxu0 0
    %3153 = vmatpush1.bf16.msra.mxu0 0
    %3154 = vmatprep.subr.bf16.mxu0 0
    %3155 = vmatpush1.bf16.msra.mxu0 0
    %3156 = vmatprep.subr.bf16.mxu0 0
    %3157 = vmatpush1.bf16.msra.mxu0 0
    %3158 = vmatprep.subr.bf16.mxu0 0
    %3159 = vmatpush1.bf16.msra.mxu0 0
    %3160 = vmatprep.subr.bf16.mxu0 0
    %3161 = vmatpush1.bf16.msra.mxu0 0
    %3162 = vmatprep.subr.bf16.mxu0 0
    %3163 = vmatpush1.bf16.msra.mxu0 0
    %3164 = vmatprep.subr.bf16.mxu0 0
    %3165 = vmatpush1.bf16.msra.mxu0 0
    %3166 = vmatprep.mubr.bf16.mxu0 0
    %3167 = vmatmul.mubr.bf16.gmra.mrb[0].mxu0 %v3089
    %v3168 = vpop.f32.mrb[0].mxu0
    %v3169 = vadd.f32 0.0, %v3168
    %v3170 = vpop.f32.mrb[0].mxu0
    %v3171 = vadd.f32 0.0, %v3170
    %v3172 = vpop.f32.mrb[0].mxu0
    %v3173 = vadd.f32 0.0, %v3172
    %v3174 = vpop.f32.mrb[0].mxu0
    %v3175 = vadd.f32 0.0, %v3174
    %3176 = vdwg.mxu0
    %3177 = vmatprep.subr.bf16.mxu0 %v2980
    %3178 = vmatpush1.bf16.msra.mxu0 %v2979
    %3179 = vmatprep.subr.bf16.mxu0 %v2984
    %3180 = vmatpush1.bf16.msra.mxu0 %v2983
    %3181 = vmatprep.subr.bf16.mxu0 %v2988
    %3182 = vmatpush1.bf16.msra.mxu0 %v2987
    %3183 = vmatprep.subr.bf16.mxu0 %v2992
    %3184 = vmatpush1.bf16.msra.mxu0 %v2991
    %3185 = vmatprep.subr.bf16.mxu0 %v2996
    %3186 = vmatpush1.bf16.msra.mxu0 %v2995
    %3187 = vmatprep.subr.bf16.mxu0 %v3000
    %3188 = vmatpush1.bf16.msra.mxu0 %v2999
    %3189 = vmatprep.subr.bf16.mxu0 %v3004
    %3190 = vmatpush1.bf16.msra.mxu0 %v3003
    %3191 = vmatprep.subr.bf16.mxu0 %v3008
    %3192 = vmatpush1.bf16.msra.mxu0 %v3007
    %3193 = vmatprep.subr.bf16.mxu0 %v3012
    %3194 = vmatpush1.bf16.msra.mxu0 %v3011
    %3195 = vmatprep.subr.bf16.mxu0 %v3016
    %3196 = vmatpush1.bf16.msra.mxu0 %v3015
    %3197 = vmatprep.subr.bf16.mxu0 %v3020
    %3198 = vmatpush1.bf16.msra.mxu0 %v3019
    %3199 = vmatprep.subr.bf16.mxu0 %v3024
    %3200 = vmatpush1.bf16.msra.mxu0 %v3023
    %3201 = vmatprep.subr.bf16.mxu0 %v3028
    %3202 = vmatpush1.bf16.msra.mxu0 %v3027
    %3203 = vmatprep.subr.bf16.mxu0 %v3032
    %3204 = vmatpush1.bf16.msra.mxu0 %v3031
    %3205 = vmatprep.subr.bf16.mxu0 %v3036
    %3206 = vmatpush1.bf16.msra.mxu0 %v3035
    %3207 = vmatprep.subr.bf16.mxu0 %v3040
    %3208 = vmatpush1.bf16.msra.mxu0 %v3039
    %3209 = vmatprep.mubr.bf16.mxu0 %v3076
    %3210 = vmatmul.mubr.bf16.gmra.mrb[0].mxu0 %v3075
    %v3211 = vpop.f32.mrb[0].mxu0
    %v3212 = vadd.f32 %v3126, %v3211
    %v3213 = vpop.f32.mrb[0].mxu0
    %v3214 = vadd.f32 %v3128, %v3213
    %v3215 = vpop.f32.mrb[0].mxu0
    %v3216 = vadd.f32 %v3130, %v3215
    %v3217 = vpop.f32.mrb[0].mxu0
    %v3218 = vadd.f32 %v3132, %v3217
    %3219 = vdwg.mxu0
    %3220 = vmatprep.subr.bf16.mxu0 %v3044
    %3221 = vmatpush1.bf16.msra.mxu0 %v3043
    %3222 = vmatprep.subr.bf16.mxu0 %v3048
    %3223 = vmatpush1.bf16.msra.mxu0 %v3047
    %3224 = vmatprep.subr.bf16.mxu0 %v3052
    %3225 = vmatpush1.bf16.msra.mxu0 %v3051
    %3226 = vmatprep.subr.bf16.mxu0 %v3056
    %3227 = vmatpush1.bf16.msra.mxu0 %v3055
    %3228 = vmatprep.subr.bf16.mxu0 %v3060
    %3229 = vmatpush1.bf16.msra.mxu0 %v3059
    %3230 = vmatprep.subr.bf16.mxu0 %v3064
    %3231 = vmatpush1.bf16.msra.mxu0 %v3063
    %3232 = vmatprep.subr.bf16.mxu0 %v3068
    %3233 = vmatpush1.bf16.msra.mxu0 %v3067
    %3234 = vmatprep.subr.bf16.mxu0 %v3072
    %3235 = vmatpush1.bf16.msra.mxu0 %v3071
    %3236 = vmatprep.subr.bf16.mxu0 0
    %3237 = vmatpush1.bf16.msra.mxu0 0
    %3238 = vmatprep.subr.bf16.mxu0 0
    %3239 = vmatpush1.bf16.msra.mxu0 0
    %3240 = vmatprep.subr.bf16.mxu0 0
    %3241 = vmatpush1.bf16.msra.mxu0 0
    %3242 = vmatprep.subr.bf16.mxu0 0
    %3243 = vmatpush1.bf16.msra.mxu0 0
    %3244 = vmatprep.subr.bf16.mxu0 0
    %3245 = vmatpush1.bf16.msra.mxu0 0
    %3246 = vmatprep.subr.bf16.mxu0 0
    %3247 = vmatpush1.bf16.msra.mxu0 0
    %3248 = vmatprep.subr.bf16.mxu0 0
    %3249 = vmatpush1.bf16.msra.mxu0 0
    %3250 = vmatprep.subr.bf16.mxu0 0
    %3251 = vmatpush1.bf16.msra.mxu0 0
    %3252 = vmatprep.mubr.bf16.mxu0 0
    %3253 = vmatmul.mubr.bf16.gmra.mrb[0].mxu0 %v3077
    %v3254 = vpop.f32.mrb[0].mxu0
    %v3255 = vadd.f32 %v3212, %v3254
    %v3256 = vpop.f32.mrb[0].mxu0
    %v3257 = vadd.f32 %v3214, %v3256
    %v3258 = vpop.f32.mrb[0].mxu0
    %v3259 = vadd.f32 %v3216, %v3258
    %v3260 = vpop.f32.mrb[0].mxu0
    %v3261 = vadd.f32 %v3218, %v3260
    %3262 = vdwg.mxu0
    %3263 = vmatprep.subr.bf16.mxu0 %v2982
    %3264 = vmatpush1.bf16.msra.mxu0 %v2981
    %3265 = vmatprep.subr.bf16.mxu0 %v2986
    %3266 = vmatpush1.bf16.msra.mxu0 %v2985
    %3267 = vmatprep.subr.bf16.mxu0 %v2990
    %3268 = vmatpush1.bf16.msra.mxu0 %v2989
    %3269 = vmatprep.subr.bf16.mxu0 %v2994
    %3270 = vmatpush1.bf16.msra.mxu0 %v2993
    %3271 = vmatprep.subr.bf16.mxu0 %v2998
    %3272 = vmatpush1.bf16.msra.mxu0 %v2997
    %3273 = vmatprep.subr.bf16.mxu0 %v3002
    %3274 = vmatpush1.bf16.msra.mxu0 %v3001
    %3275 = vmatprep.subr.bf16.mxu0 %v3006
    %3276 = vmatpush1.bf16.msra.mxu0 %v3005
    %3277 = vmatprep.subr.bf16.mxu0 %v3010
    %3278 = vmatpush1.bf16.msra.mxu0 %v3009
    %3279 = vmatprep.subr.bf16.mxu0 %v3014
    %3280 = vmatpush1.bf16.msra.mxu0 %v3013
    %3281 = vmatprep.subr.bf16.mxu0 %v3018
    %3282 = vmatpush1.bf16.msra.mxu0 %v3017
    %3283 = vmatprep.subr.bf16.mxu0 %v3022
    %3284 = vmatpush1.bf16.msra.mxu0 %v3021
    %3285 = vmatprep.subr.bf16.mxu0 %v3026
    %3286 = vmatpush1.bf16.msra.mxu0 %v3025
    %3287 = vmatprep.subr.bf16.mxu0 %v3030
    %3288 = vmatpush1.bf16.msra.mxu0 %v3029
    %3289 = vmatprep.subr.bf16.mxu0 %v3034
    %3290 = vmatpush1.bf16.msra.mxu0 %v3033
    %3291 = vmatprep.subr.bf16.mxu0 %v3038
    %3292 = vmatpush1.bf16.msra.mxu0 %v3037
    %3293 = vmatprep.subr.bf16.mxu0 %v3042
    %3294 = vmatpush1.bf16.msra.mxu0 %v3041
    %3295 = vmatprep.mubr.bf16.mxu0 %v3076
    %3296 = vmatmul.mubr.bf16.gmra.mrb[0].mxu0 %v3075
    %v3297 = vpop.f32.mrb[0].mxu0
    %v3298 = vadd.f32 %v3169, %v3297
    %v3299 = vpop.f32.mrb[0].mxu0
    %v3300 = vadd.f32 %v3171, %v3299
    %v3301 = vpop.f32.mrb[0].mxu0
    %v3302 = vadd.f32 %v3173, %v3301
    %v3303 = vpop.f32.mrb[0].mxu0
    %v3304 = vadd.f32 %v3175, %v3303
    %3305 = vdwg.mxu0
    %3306 = vmatprep.subr.bf16.mxu0 %v3046
    %3307 = vmatpush1.bf16.msra.mxu0 %v3045
    %3308 = vmatprep.subr.bf16.mxu0 %v3050
    %3309 = vmatpush1.bf16.msra.mxu0 %v3049
    %3310 = vmatprep.subr.bf16.mxu0 %v3054
    %3311 = vmatpush1.bf16.msra.mxu0 %v3053
    %3312 = vmatprep.subr.bf16.mxu0 %v3058
    %3313 = vmatpush1.bf16.msra.mxu0 %v3057
    %3314 = vmatprep.subr.bf16.mxu0 %v3062
    %3315 = vmatpush1.bf16.msra.mxu0 %v3061
    %3316 = vmatprep.subr.bf16.mxu0 %v3066
    %3317 = vmatpush1.bf16.msra.mxu0 %v3065
    %3318 = vmatprep.subr.bf16.mxu0 %v3070
    %3319 = vmatpush1.bf16.msra.mxu0 %v3069
    %3320 = vmatprep.subr.bf16.mxu0 %v3074
    %3321 = vmatpush1.bf16.msra.mxu0 %v3073
    %3322 = vmatprep.subr.bf16.mxu0 0
    %3323 = vmatpush1.bf16.msra.mxu0 0
    %3324 = vmatprep.subr.bf16.mxu0 0
    %3325 = vmatpush1.bf16.msra.mxu0 0
    %3326 = vmatprep.subr.bf16.mxu0 0
    %3327 = vmatpush1.bf16.msra.mxu0 0
    %3328 = vmatprep.subr.bf16.mxu0 0
    %3329 = vmatpush1.bf16.msra.mxu0 0
    %3330 = vmatprep.subr.bf16.mxu0 0
    %3331 = vmatpush1.bf16.msra.mxu0 0
    %3332 = vmatprep.subr.bf16.mxu0 0
    %3333 = vmatpush1.bf16.msra.mxu0 0
    %3334 = vmatprep.subr.bf16.mxu0 0
    %3335 = vmatpush1.bf16.msra.mxu0 0
    %3336 = vmatprep.subr.bf16.mxu0 0
    %3337 = vmatpush1.bf16.msra.mxu0 0
    %3338 = vmatprep.mubr.bf16.mxu0 0
    %3339 = vmatmul.mubr.bf16.gmra.mrb[0].mxu0 %v3077
    %v3340 = vpop.f32.mrb[0].mxu0
    %v3341 = vadd.f32 %v3298, %v3340
    %v3342 = vpop.f32.mrb[0].mxu0
    %v3343 = vadd.f32 %v3300, %v3342
    %v3344 = vpop.f32.mrb[0].mxu0
    %v3345 = vadd.f32 %v3302, %v3344
    %v3346 = vpop.f32.mrb[0].mxu0
    %v3347 = vadd.f32 %v3304, %v3346
    %3348 = vdwg.mxu0
    %s3349 = sshll.u32 %s2976, 4
    %3350 = dma.done %s520, %s3349
    %v3351 = vld [vmem:[#allocation4] sm:$0xff]
    %v3352 = vld [vmem:[#allocation4 + $0x8] sm:$0xff]
    %v3353 = vld [vmem:[#allocation4 + $0x10] sm:$0xff]
    %v3354 = vld [vmem:[#allocation4 + $0x18] sm:$0xff]
    %v3355 = vld [vmem:[#allocation4 + $0x20] sm:$0xff]
    %v3356 = vld [vmem:[#allocation4 + $0x28] sm:$0xff]
    %v3357 = vld [vmem:[#allocation4 + $0x30] sm:$0xff]
    %v3358 = vld [vmem:[#allocation4 + $0x38] sm:$0xff]
    %v3359 = vld [vmem:[#allocation4 + $0x40] sm:$0xff]
    %v3360 = vld [vmem:[#allocation4 + $0x48] sm:$0xff]
    %v3361 = vld [vmem:[#allocation4 + $0x50] sm:$0xff]
    %v3362 = vld [vmem:[#allocation4 + $0x58] sm:$0xff]
    %v3363 = vld [vmem:[#allocation4 + $0x60] sm:$0xff]
    %v3364 = vld [vmem:[#allocation4 + $0x68] sm:$0xff]
    %v3365 = vld [vmem:[#allocation4 + $0x70] sm:$0xff]
    %v3366 = vld [vmem:[#allocation4 + $0x78] sm:$0xff]
    %v3367 = vld [vmem:[#allocation4 + $0x80] sm:$0xff]
    %v3368 = vld [vmem:[#allocation4 + $0x88] sm:$0xff]
    %v3369 = vld [vmem:[#allocation4 + $0x90] sm:$0xff]
    %v3370 = vld [vmem:[#allocation4 + $0x98] sm:$0xff]
    %v3371 = vld [vmem:[#allocation4 + $0xa0] sm:$0xff]
    %v3372 = vld [vmem:[#allocation4 + $0xa8] sm:$0xff]
    %v3373 = vld [vmem:[#allocation4 + $0xb0] sm:$0xff]
    %v3374 = vld [vmem:[#allocation4 + $0xb8] sm:$0xff]
    %v3375 = vld [vmem:[#allocation4 + $0xc0] sm:$0xff]
    %v3376 = vld [vmem:[#allocation4 + $0xc8] sm:$0xff]
    %v3377 = vld [vmem:[#allocation4 + $0xd0] sm:$0xff]
    %v3378 = vld [vmem:[#allocation4 + $0xd8] sm:$0xff]
    %v3379 = vld [vmem:[#allocation4 + $0xe0] sm:$0xff]
    %v3380 = vld [vmem:[#allocation4 + $0xe8] sm:$0xff]
    %v3381 = vld [vmem:[#allocation4 + $0xf0] sm:$0xff]
    %v3382 = vld [vmem:[#allocation4 + $0xf8] sm:$0xff]
    %v3383 = vld [vmem:[#allocation4 + $0x100] sm:$0xff]
    %v3384 = vld [vmem:[#allocation4 + $0x108] sm:$0xff]
    %v3385 = vld [vmem:[#allocation4 + $0x110] sm:$0xff]
    %v3386 = vld [vmem:[#allocation4 + $0x118] sm:$0xff]
    %v3387 = vld [vmem:[#allocation4 + $0x120] sm:$0xff]
    %v3388 = vld [vmem:[#allocation4 + $0x128] sm:$0xff]
    %v3389 = vld [vmem:[#allocation4 + $0x130] sm:$0xff]
    %v3390 = vld [vmem:[#allocation4 + $0x138] sm:$0xff]
    %v3391 = vld [vmem:[#allocation4 + $0x140] sm:$0xff]
    %v3392 = vld [vmem:[#allocation4 + $0x148] sm:$0xff]
    %v3393 = vld [vmem:[#allocation4 + $0x150] sm:$0xff]
    %v3394 = vld [vmem:[#allocation4 + $0x158] sm:$0xff]
    %v3395 = vld [vmem:[#allocation4 + $0x160] sm:$0xff]
    %v3396 = vld [vmem:[#allocation4 + $0x168] sm:$0xff]
    %v3397 = vld [vmem:[#allocation4 + $0x170] sm:$0xff]
    %v3398 = vld [vmem:[#allocation4 + $0x178] sm:$0xff]
    %v3399 = vld [vmem:[#allocation4 + $0x180] sm:$0xff]
    %v3400 = vld [vmem:[#allocation4 + $0x188] sm:$0xff]
    %v3401 = vld [vmem:[#allocation4 + $0x190] sm:$0xff]
    %v3402 = vld [vmem:[#allocation4 + $0x198] sm:$0xff]
    %v3403 = vld [vmem:[#allocation4 + $0x1a0] sm:$0xff]
    %v3404 = vld [vmem:[#allocation4 + $0x1a8] sm:$0xff]
    %v3405 = vld [vmem:[#allocation4 + $0x1b0] sm:$0xff]
    %v3406 = vld [vmem:[#allocation4 + $0x1b8] sm:$0xff]
    %v3407 = vld [vmem:[#allocation4 + $0x1c0] sm:$0xff]
    %v3408 = vld [vmem:[#allocation4 + $0x1c8] sm:$0xff]
    %v3409 = vld [vmem:[#allocation4 + $0x1d0] sm:$0xff]
    %v3410 = vld [vmem:[#allocation4 + $0x1d8] sm:$0xff]
    %v3411 = vld [vmem:[#allocation4 + $0x1e0] sm:$0xff]
    %v3412 = vld [vmem:[#allocation4 + $0x1e8] sm:$0xff]
    %v3413 = vld [vmem:[#allocation4 + $0x1f0] sm:$0xff]
    %v3414 = vld [vmem:[#allocation4 + $0x1f8] sm:$0xff]
    %v3415 = vld [vmem:[#allocation4 + $0x200] sm:$0xff]
    %v3416 = vld [vmem:[#allocation4 + $0x208] sm:$0xff]
    %v3417 = vld [vmem:[#allocation4 + $0x210] sm:$0xff]
    %v3418 = vld [vmem:[#allocation4 + $0x218] sm:$0xff]
    %v3419 = vld [vmem:[#allocation4 + $0x220] sm:$0xff]
    %v3420 = vld [vmem:[#allocation4 + $0x228] sm:$0xff]
    %v3421 = vld [vmem:[#allocation4 + $0x230] sm:$0xff]
    %v3422 = vld [vmem:[#allocation4 + $0x238] sm:$0xff]
    %v3423 = vld [vmem:[#allocation4 + $0x240] sm:$0xff]
    %v3424 = vld [vmem:[#allocation4 + $0x248] sm:$0xff]
    %v3425 = vld [vmem:[#allocation4 + $0x250] sm:$0xff]
    %v3426 = vld [vmem:[#allocation4 + $0x258] sm:$0xff]
    %v3427 = vld [vmem:[#allocation4 + $0x260] sm:$0xff]
    %v3428 = vld [vmem:[#allocation4 + $0x268] sm:$0xff]
    %v3429 = vld [vmem:[#allocation4 + $0x270] sm:$0xff]
    %v3430 = vld [vmem:[#allocation4 + $0x278] sm:$0xff]
    %v3431 = vld [vmem:[#allocation4 + $0x280] sm:$0xff]
    %v3432 = vld [vmem:[#allocation4 + $0x288] sm:$0xff]
    %v3433 = vld [vmem:[#allocation4 + $0x290] sm:$0xff]
    %v3434 = vld [vmem:[#allocation4 + $0x298] sm:$0xff]
    %v3435 = vld [vmem:[#allocation4 + $0x2a0] sm:$0xff]
    %v3436 = vld [vmem:[#allocation4 + $0x2a8] sm:$0xff]
    %v3437 = vld [vmem:[#allocation4 + $0x2b0] sm:$0xff]
    %v3438 = vld [vmem:[#allocation4 + $0x2b8] sm:$0xff]
    %v3439 = vld [vmem:[#allocation4 + $0x2c0] sm:$0xff]
    %v3440 = vld [vmem:[#allocation4 + $0x2c8] sm:$0xff]
    %v3441 = vld [vmem:[#allocation4 + $0x2d0] sm:$0xff]
    %v3442 = vld [vmem:[#allocation4 + $0x2d8] sm:$0xff]
    %v3443 = vld [vmem:[#allocation4 + $0x2e0] sm:$0xff]
    %v3444 = vld [vmem:[#allocation4 + $0x2e8] sm:$0xff]
    %v3445 = vld [vmem:[#allocation4 + $0x2f0] sm:$0xff]
    %v3446 = vld [vmem:[#allocation4 + $0x2f8] sm:$0xff]
    %v3447 = vld [vmem:[#allocation4 + $0x300] sm:$0xff]
    %v3448 = vld [vmem:[#allocation4 + $0x308] sm:$0xff]
    %v3449 = vld [vmem:[#allocation4 + $0x310] sm:$0xff]
    %v3450 = vld [vmem:[#allocation4 + $0x318] sm:$0xff]
    %v3451 = vld [vmem:[#allocation4 + $0x320] sm:$0xff]
    %v3452 = vld [vmem:[#allocation4 + $0x328] sm:$0xff]
    %v3453 = vld [vmem:[#allocation4 + $0x330] sm:$0xff]
    %v3454 = vld [vmem:[#allocation4 + $0x338] sm:$0xff]
    %3455 = vmatprep.subr.bf16.mxu0 %v3448
    %3456 = vmatpush1.bf16.msra.mxu0 %v3447
    %3457 = vmatprep.subr.bf16.mxu0 %v3452
    %3458 = vmatpush1.bf16.msra.mxu0 %v3451
    %3459 = vmatprep.subr.bf16.mxu0 0
    %3460 = vmatpush1.bf16.msra.mxu0 0
    %3461 = vmatprep.subr.bf16.mxu0 0
    %3462 = vmatpush1.bf16.msra.mxu0 0
    %3463 = vmatprep.subr.bf16.mxu0 0
    %3464 = vmatpush1.bf16.msra.mxu0 0
    %3465 = vmatprep.subr.bf16.mxu0 0
    %3466 = vmatpush1.bf16.msra.mxu0 0
    %3467 = vmatprep.subr.bf16.mxu0 0
    %3468 = vmatpush1.bf16.msra.mxu0 0
    %3469 = vmatprep.subr.bf16.mxu0 0
    %3470 = vmatpush1.bf16.msra.mxu0 0
    %3471 = vmatprep.subr.bf16.mxu0 0
    %3472 = vmatpush1.bf16.msra.mxu0 0
    %3473 = vmatprep.subr.bf16.mxu0 0
    %3474 = vmatpush1.bf16.msra.mxu0 0
    %3475 = vmatprep.subr.bf16.mxu0 0
    %3476 = vmatpush1.bf16.msra.mxu0 0
    %3477 = vmatprep.subr.bf16.mxu0 0
    %3478 = vmatpush1.bf16.msra.mxu0 0
    %3479 = vmatprep.subr.bf16.mxu0 0
    %3480 = vmatpush1.bf16.msra.mxu0 0
    %3481 = vmatprep.subr.bf16.mxu0 0
    %3482 = vmatpush1.bf16.msra.mxu0 0
    %3483 = vmatprep.subr.bf16.mxu0 0
    %3484 = vmatpush1.bf16.msra.mxu0 0
    %3485 = vmatprep.subr.bf16.mxu0 0
    %3486 = vmatpush1.bf16.msra.mxu0 0
    %3487 = vmatprep.mubr.bf16.mxu0 0
    %3488 = vmatmul.mubr.bf16.gmra.mrb[0].mxu0 %v3089
    %v3489 = vpop.f32.mrb[0].mxu0
    %v3490 = vadd.f32 0.0, %v3489
    %v3491 = vpop.f32.mrb[0].mxu0
    %v3492 = vadd.f32 0.0, %v3491
    %v3493 = vpop.f32.mrb[0].mxu0
    %v3494 = vadd.f32 0.0, %v3493
    %v3495 = vpop.f32.mrb[0].mxu0
    %v3496 = vadd.f32 0.0, %v3495
    %3497 = vdwg.mxu0
    %3498 = vmatprep.subr.bf16.mxu0 %v3450
    %3499 = vmatpush1.bf16.msra.mxu0 %v3449
    %3500 = vmatprep.subr.bf16.mxu0 %v3454
    %3501 = vmatpush1.bf16.msra.mxu0 %v3453
    %3502 = vmatprep.subr.bf16.mxu0 0
    %3503 = vmatpush1.bf16.msra.mxu0 0
    %3504 = vmatprep.subr.bf16.mxu0 0
    %3505 = vmatpush1.bf16.msra.mxu0 0
    %3506 = vmatprep.subr.bf16.mxu0 0
    %3507 = vmatpush1.bf16.msra.mxu0 0
    %3508 = vmatprep.subr.bf16.mxu0 0
    %3509 = vmatpush1.bf16.msra.mxu0 0
    %3510 = vmatprep.subr.bf16.mxu0 0
    %3511 = vmatpush1.bf16.msra.mxu0 0
    %3512 = vmatprep.subr.bf16.mxu0 0
    %3513 = vmatpush1.bf16.msra.mxu0 0
    %3514 = vmatprep.subr.bf16.mxu0 0
    %3515 = vmatpush1.bf16.msra.mxu0 0
    %3516 = vmatprep.subr.bf16.mxu0 0
    %3517 = vmatpush1.bf16.msra.mxu0 0
    %3518 = vmatprep.subr.bf16.mxu0 0
    %3519 = vmatpush1.bf16.msra.mxu0 0
    %3520 = vmatprep.subr.bf16.mxu0 0
    %3521 = vmatpush1.bf16.msra.mxu0 0
    %3522 = vmatprep.subr.bf16.mxu0 0
    %3523 = vmatpush1.bf16.msra.mxu0 0
    %3524 = vmatprep.subr.bf16.mxu0 0
    %3525 = vmatpush1.bf16.msra.mxu0 0
    %3526 = vmatprep.subr.bf16.mxu0 0
    %3527 = vmatpush1.bf16.msra.mxu0 0
    %3528 = vmatprep.subr.bf16.mxu0 0
    %3529 = vmatpush1.bf16.msra.mxu0 0
    %3530 = vmatprep.mubr.bf16.mxu0 0
    %3531 = vmatmul.mubr.bf16.gmra.mrb[0].mxu0 %v3089
    %v3532 = vpop.f32.mrb[0].mxu0
    %v3533 = vadd.f32 0.0, %v3532
    %v3534 = vpop.f32.mrb[0].mxu0
    %v3535 = vadd.f32 0.0, %v3534
    %v3536 = vpop.f32.mrb[0].mxu0
    %v3537 = vadd.f32 0.0, %v3536
    %v3538 = vpop.f32.mrb[0].mxu0
    %v3539 = vadd.f32 0.0, %v3538
    %3540 = vdwg.mxu0
    %3541 = vmatprep.subr.bf16.mxu0 %v3352
    %3542 = vmatpush1.bf16.msra.mxu0 %v3351
    %3543 = vmatprep.subr.bf16.mxu0 %v3356
    %3544 = vmatpush1.bf16.msra.mxu0 %v3355
    %3545 = vmatprep.subr.bf16.mxu0 %v3360
    %3546 = vmatpush1.bf16.msra.mxu0 %v3359
    %3547 = vmatprep.subr.bf16.mxu0 %v3364
    %3548 = vmatpush1.bf16.msra.mxu0 %v3363
    %3549 = vmatprep.subr.bf16.mxu0 %v3368
    %3550 = vmatpush1.bf16.msra.mxu0 %v3367
    %3551 = vmatprep.subr.bf16.mxu0 %v3372
    %3552 = vmatpush1.bf16.msra.mxu0 %v3371
    %3553 = vmatprep.subr.bf16.mxu0 %v3376
    %3554 = vmatpush1.bf16.msra.mxu0 %v3375
    %3555 = vmatprep.subr.bf16.mxu0 %v3380
    %3556 = vmatpush1.bf16.msra.mxu0 %v3379
    %3557 = vmatprep.subr.bf16.mxu0 %v3384
    %3558 = vmatpush1.bf16.msra.mxu0 %v3383
    %3559 = vmatprep.subr.bf16.mxu0 %v3388
    %3560 = vmatpush1.bf16.msra.mxu0 %v3387
    %3561 = vmatprep.subr.bf16.mxu0 %v3392
    %3562 = vmatpush1.bf16.msra.mxu0 %v3391
    %3563 = vmatprep.subr.bf16.mxu0 %v3396
    %3564 = vmatpush1.bf16.msra.mxu0 %v3395
    %3565 = vmatprep.subr.bf16.mxu0 %v3400
    %3566 = vmatpush1.bf16.msra.mxu0 %v3399
    %3567 = vmatprep.subr.bf16.mxu0 %v3404
    %3568 = vmatpush1.bf16.msra.mxu0 %v3403
    %3569 = vmatprep.subr.bf16.mxu0 %v3408
    %3570 = vmatpush1.bf16.msra.mxu0 %v3407
    %3571 = vmatprep.subr.bf16.mxu0 %v3412
    %3572 = vmatpush1.bf16.msra.mxu0 %v3411
    %3573 = vmatprep.mubr.bf16.mxu0 %v3076
    %3574 = vmatmul.mubr.bf16.gmra.mrb[0].mxu0 %v3075
    %v3575 = vpop.f32.mrb[0].mxu0
    %v3576 = vadd.f32 %v3490, %v3575
    %v3577 = vpop.f32.mrb[0].mxu0
    %v3578 = vadd.f32 %v3492, %v3577
    %v3579 = vpop.f32.mrb[0].mxu0
    %v3580 = vadd.f32 %v3494, %v3579
    %v3581 = vpop.f32.mrb[0].mxu0
    %v3582 = vadd.f32 %v3496, %v3581
    %3583 = vdwg.mxu0
    %3584 = vmatprep.subr.bf16.mxu0 %v3416
    %3585 = vmatpush1.bf16.msra.mxu0 %v3415
    %3586 = vmatprep.subr.bf16.mxu0 %v3420
    %3587 = vmatpush1.bf16.msra.mxu0 %v3419
    %3588 = vmatprep.subr.bf16.mxu0 %v3424
    %3589 = vmatpush1.bf16.msra.mxu0 %v3423
    %3590 = vmatprep.subr.bf16.mxu0 %v3428
    %3591 = vmatpush1.bf16.msra.mxu0 %v3427
    %3592 = vmatprep.subr.bf16.mxu0 %v3432
    %3593 = vmatpush1.bf16.msra.mxu0 %v3431
    %3594 = vmatprep.subr.bf16.mxu0 %v3436
    %3595 = vmatpush1.bf16.msra.mxu0 %v3435
    %3596 = vmatprep.subr.bf16.mxu0 %v3440
    %3597 = vmatpush1.bf16.msra.mxu0 %v3439
    %3598 = vmatprep.subr.bf16.mxu0 %v3444
    %3599 = vmatpush1.bf16.msra.mxu0 %v3443
    %3600 = vmatprep.subr.bf16.mxu0 0
    %3601 = vmatpush1.bf16.msra.mxu0 0
    %3602 = vmatprep.subr.bf16.mxu0 0
    %3603 = vmatpush1.bf16.msra.mxu0 0
    %3604 = vmatprep.subr.bf16.mxu0 0
    %3605 = vmatpush1.bf16.msra.mxu0 0
    %3606 = vmatprep.subr.bf16.mxu0 0
    %3607 = vmatpush1.bf16.msra.mxu0 0
    %3608 = vmatprep.subr.bf16.mxu0 0
    %3609 = vmatpush1.bf16.msra.mxu0 0
    %3610 = vmatprep.subr.bf16.mxu0 0
    %3611 = vmatpush1.bf16.msra.mxu0 0
    %3612 = vmatprep.subr.bf16.mxu0 0
    %3613 = vmatpush1.bf16.msra.mxu0 0
    %3614 = vmatprep.subr.bf16.mxu0 0
    %3615 = vmatpush1.bf16.msra.mxu0 0
    %3616 = vmatprep.mubr.bf16.mxu0 0
    %3617 = vmatmul.mubr.bf16.gmra.mrb[0].mxu0 %v3077
    %v3618 = vpop.f32.mrb[0].mxu0
    %v3619 = vadd.f32 %v3576, %v3618
    %v3620 = vpop.f32.mrb[0].mxu0
    %v3621 = vadd.f32 %v3578, %v3620
    %v3622 = vpop.f32.mrb[0].mxu0
    %v3623 = vadd.f32 %v3580, %v3622
    %v3624 = vpop.f32.mrb[0].mxu0
    %v3625 = vadd.f32 %v3582, %v3624
    %3626 = vdwg.mxu0
    %3627 = vmatprep.subr.bf16.mxu0 %v3354
    %3628 = vmatpush1.bf16.msra.mxu0 %v3353
    %3629 = vmatprep.subr.bf16.mxu0 %v3358
    %3630 = vmatpush1.bf16.msra.mxu0 %v3357
    %3631 = vmatprep.subr.bf16.mxu0 %v3362
    %3632 = vmatpush1.bf16.msra.mxu0 %v3361
    %3633 = vmatprep.subr.bf16.mxu0 %v3366
    %3634 = vmatpush1.bf16.msra.mxu0 %v3365
    %3635 = vmatprep.subr.bf16.mxu0 %v3370
    %3636 = vmatpush1.bf16.msra.mxu0 %v3369
    %3637 = vmatprep.subr.bf16.mxu0 %v3374
    %3638 = vmatpush1.bf16.msra.mxu0 %v3373
    %3639 = vmatprep.subr.bf16.mxu0 %v3378
    %3640 = vmatpush1.bf16.msra.mxu0 %v3377
    %3641 = vmatprep.subr.bf16.mxu0 %v3382
    %3642 = vmatpush1.bf16.msra.mxu0 %v3381
    %3643 = vmatprep.subr.bf16.mxu0 %v3386
    %3644 = vmatpush1.bf16.msra.mxu0 %v3385
    %3645 = vmatprep.subr.bf16.mxu0 %v3390
    %3646 = vmatpush1.bf16.msra.mxu0 %v3389
    %3647 = vmatprep.subr.bf16.mxu0 %v3394
    %3648 = vmatpush1.bf16.msra.mxu0 %v3393
    %3649 = vmatprep.subr.bf16.mxu0 %v3398
    %3650 = vmatpush1.bf16.msra.mxu0 %v3397
    %3651 = vmatprep.subr.bf16.mxu0 %v3402
    %3652 = vmatpush1.bf16.msra.mxu0 %v3401
    %3653 = vmatprep.subr.bf16.mxu0 %v3406
    %3654 = vmatpush1.bf16.msra.mxu0 %v3405
    %3655 = vmatprep.subr.bf16.mxu0 %v3410
    %3656 = vmatpush1.bf16.msra.mxu0 %v3409
    %3657 = vmatprep.subr.bf16.mxu0 %v3414
    %3658 = vmatpush1.bf16.msra.mxu0 %v3413
    %3659 = vmatprep.mubr.bf16.mxu0 %v3076
    %3660 = vmatmul.mubr.bf16.gmra.mrb[0].mxu0 %v3075
    %v3661 = vpop.f32.mrb[0].mxu0
    %v3662 = vadd.f32 %v3533, %v3661
    %v3663 = vpop.f32.mrb[0].mxu0
    %v3664 = vadd.f32 %v3535, %v3663
    %v3665 = vpop.f32.mrb[0].mxu0
    %v3666 = vadd.f32 %v3537, %v3665
    %v3667 = vpop.f32.mrb[0].mxu0
    %v3668 = vadd.f32 %v3539, %v3667
    %3669 = vdwg.mxu0
    %3670 = vmatprep.subr.bf16.mxu0 %v3418
    %3671 = vmatpush1.bf16.msra.mxu0 %v3417
    %3672 = vmatprep.subr.bf16.mxu0 %v3422
    %3673 = vmatpush1.bf16.msra.mxu0 %v3421
    %3674 = vmatprep.subr.bf16.mxu0 %v3426
    %3675 = vmatpush1.bf16.msra.mxu0 %v3425
    %3676 = vmatprep.subr.bf16.mxu0 %v3430
    %3677 = vmatpush1.bf16.msra.mxu0 %v3429
    %3678 = vmatprep.subr.bf16.mxu0 %v3434
    %3679 = vmatpush1.bf16.msra.mxu0 %v3433
    %3680 = vmatprep.subr.bf16.mxu0 %v3438
    %3681 = vmatpush1.bf16.msra.mxu0 %v3437
    %3682 = vmatprep.subr.bf16.mxu0 %v3442
    %3683 = vmatpush1.bf16.msra.mxu0 %v3441
    %3684 = vmatprep.subr.bf16.mxu0 %v3446
    %3685 = vmatpush1.bf16.msra.mxu0 %v3445
    %3686 = vmatprep.subr.bf16.mxu0 0
    %3687 = vmatpush1.bf16.msra.mxu0 0
    %3688 = vmatprep.subr.bf16.mxu0 0
    %3689 = vmatpush1.bf16.msra.mxu0 0
    %3690 = vmatprep.subr.bf16.mxu0 0
    %3691 = vmatpush1.bf16.msra.mxu0 0
    %3692 = vmatprep.subr.bf16.mxu0 0
    %3693 = vmatpush1.bf16.msra.mxu0 0
    %3694 = vmatprep.subr.bf16.mxu0 0
    %3695 = vmatpush1.bf16.msra.mxu0 0
    %3696 = vmatprep.subr.bf16.mxu0 0
    %3697 = vmatpush1.bf16.msra.mxu0 0
    %3698 = vmatprep.subr.bf16.mxu0 0
    %3699 = vmatpush1.bf16.msra.mxu0 0
    %3700 = vmatprep.subr.bf16.mxu0 0
    %3701 = vmatpush1.bf16.msra.mxu0 0
    %3702 = vmatprep.mubr.bf16.mxu0 0
    %3703 = vmatmul.mubr.bf16.gmra.mrb[0].mxu0 %v3077
    %v3704 = vpop.f32.mrb[0].mxu0
    %v3705 = vadd.f32 %v3662, %v3704
    %v3706 = vpop.f32.mrb[0].mxu0
    %v3707 = vadd.f32 %v3664, %v3706
    %v3708 = vpop.f32.mrb[0].mxu0
    %v3709 = vadd.f32 %v3666, %v3708
    %v3710 = vpop.f32.mrb[0].mxu0
    %v3711 = vadd.f32 %v3668, %v3710
    %3712 = vdwg.mxu0
    %v3713 = vld [vmem:[#allocation34] sm:$0xf]
    %v3715 = vlaneseq
    %v3716 = vshrl.u32 %v3715, 7
    %v3717 = vsub.s32 0, %v3716
    %v3718 = vrot.slane %v3713, %v3717
    %v3719 = vlaneseq
    %v3720 = vshrl.u32 %v3719, 7
    %v3721 = vsub.s32 1, %v3720
    %v3722 = vrot.slane %v3713, %v3721
    %v3723 = vlaneseq
    %v3724 = vshrl.u32 %v3723, 7
    %v3725 = vsub.s32 2, %v3724
    %v3726 = vrot.slane %v3713, %v3725
    %v3727 = vlaneseq
    %v3728 = vshrl.u32 %v3727, 7
    %v3729 = vsub.s32 3, %v3728
    %v3730 = vrot.slane %v3713, %v3729
    %v3735 = vadd.f32 %v3619, %v3718
    %v3736 = vadd.f32 %v3621, %v3722
    %v3737 = vadd.f32 %v3705, %v3726
    %v3738 = vadd.f32 %v3707, %v3730
    %v3739 = vadd.f32 %v3623, %v3718
    %v3740 = vadd.f32 %v3625, %v3722
    %v3741 = vadd.f32 %v3709, %v3726
    %v3742 = vadd.f32 %v3711, %v3730
    %v3743 = vld [vmem:[#allocation32] sm:$0xff]
    %v3744 = vld [vmem:[#allocation32 + $0x8] sm:$0xff]
    %v3747 = vcombine.high %v3743, %v3743
    %v3748 = vcombine.high %v3744, %v3744
    %v3749 = vsel %vm1350, %v3743, 0
    %v3751 = vsel %vm1350, %v3747, 0
    %v3753 = vsel %vm1350, %v3744, 0
    %v3755 = vsel %vm1350, %v3748, 0
    %3757 = vmatprep.subr.mxu0 %v3751
    %3758 = vmatpush1.msra.mxu0 %v3749
    %3759 = vmatprep.subr.mxu0 0.0
    %3760 = vmatpush1.msra.mxu0 0.0
    %3761 = vmatprep.subr.mxu0 0.0
    %3762 = vmatpush1.msra.mxu0 0.0
    %3763 = vmatprep.subr.mxu0 0.0
    %3764 = vmatpush1.msra.mxu0 0.0
    %3765 = vmatprep.subr.mxu0 0.0
    %3766 = vmatpush1.msra.mxu0 0.0
    %3767 = vmatprep.subr.mxu0 0.0
    %3768 = vmatpush1.msra.mxu0 0.0
    %3769 = vmatprep.subr.mxu0 0.0
    %3770 = vmatpush1.msra.mxu0 0.0
    %3771 = vmatprep.subr.mxu0 0.0
    %3772 = vmatpush1.msra.mxu0 0.0
    %3773 = vmatprep.subr.mxu0 0.0
    %3774 = vmatpush1.msra.mxu0 0.0
    %3775 = vmatprep.subr.mxu0 0.0
    %3776 = vmatpush1.msra.mxu0 0.0
    %3777 = vmatprep.subr.mxu0 0.0
    %3778 = vmatpush1.msra.mxu0 0.0
    %3779 = vmatprep.subr.mxu0 0.0
    %3780 = vmatpush1.msra.mxu0 0.0
    %3781 = vmatprep.subr.mxu0 0.0
    %3782 = vmatpush1.msra.mxu0 0.0
    %3783 = vmatprep.subr.mxu0 0.0
    %3784 = vmatpush1.msra.mxu0 0.0
    %3785 = vmatprep.subr.mxu0 0.0
    %3786 = vmatpush1.msra.mxu0 0.0
    %3787 = vmatprep.subr.mxu0 0.0
    %3788 = vmatpush1.msra.mxu0 0.0
    %3789 = vmatprep.subr.mxu0 0.0
    %3790 = vmatpush1.msra.mxu0 0.0
    %3791 = vmatprep.subr.mxu0 0.0
    %3792 = vmatpush1.msra.mxu0 0.0
    %3793 = vmatprep.subr.mxu0 0.0
    %3794 = vmatpush1.msra.mxu0 0.0
    %3795 = vmatprep.subr.mxu0 0.0
    %3796 = vmatpush1.msra.mxu0 0.0
    %3797 = vmatprep.subr.mxu0 0.0
    %3798 = vmatpush1.msra.mxu0 0.0
    %3799 = vmatprep.subr.mxu0 0.0
    %3800 = vmatpush1.msra.mxu0 0.0
    %3801 = vmatprep.subr.mxu0 0.0
    %3802 = vmatpush1.msra.mxu0 0.0
    %3803 = vmatprep.subr.mxu0 0.0
    %3804 = vmatpush1.msra.mxu0 0.0
    %3805 = vmatprep.subr.mxu0 0.0
    %3806 = vmatpush1.msra.mxu0 0.0
    %3807 = vmatprep.subr.mxu0 0.0
    %3808 = vmatpush1.msra.mxu0 0.0
    %3809 = vmatprep.subr.mxu0 0.0
    %3810 = vmatpush1.msra.mxu0 0.0
    %3811 = vmatprep.subr.mxu0 0.0
    %3812 = vmatpush1.msra.mxu0 0.0
    %3813 = vmatprep.subr.mxu0 0.0
    %3814 = vmatpush1.msra.mxu0 0.0
    %3815 = vmatprep.subr.mxu0 0.0
    %3816 = vmatpush1.msra.mxu0 0.0
    %3817 = vmatprep.subr.mxu0 0.0
    %3818 = vmatpush1.msra.mxu0 0.0
    %3819 = vmatprep.subr.mxu0 0.0
    %3820 = vmatpush1.msra.mxu0 0.0
    %3821 = vmatprep.mubr.f32.mxu0 0.0
    %3822 = vmatmul.mubr.f32.gmra.mrb[0].mxu0 %v1303
    %v3823 = vpop.f32.mrb[0].mxu0
    %v3824 = vadd.f32 0.0, %v3823
    %v3825 = vpop.f32.mrb[0].mxu0
    %v3826 = vadd.f32 0.0, %v3825
    %3827 = vmatprep.mubr.f32.mxu0 0.0
    %3828 = vmatmul.mubr.f32.gmra.mrb[0].mxu0 %v1306
    %v3829 = vpop.f32.mrb[0].mxu0
    %v3830 = vadd.f32 0.0, %v3829
    %v3831 = vpop.f32.mrb[0].mxu0
    %v3832 = vadd.f32 0.0, %v3831
    %3833 = vmatprep.mubr.f32.mxu0 0.0
    %3834 = vmatmul.mubr.f32.gmra.mrb[0].mxu0 %v1309
    %v3835 = vpop.f32.mrb[0].mxu0
    %v3836 = vadd.f32 0.0, %v3835
    %v3837 = vpop.f32.mrb[0].mxu0
    %v3838 = vadd.f32 0.0, %v3837
    %3839 = vmatprep.mubr.f32.mxu0 0.0
    %3840 = vmatmul.mubr.f32.gmra.mrb[0].mxu0 %v1312
    %v3841 = vpop.f32.mrb[0].mxu0
    %v3842 = vadd.f32 0.0, %v3841
    %v3843 = vpop.f32.mrb[0].mxu0
    %v3844 = vadd.f32 0.0, %v3843
    %3845 = vmatprep.mubr.f32.mxu0 0.0
    %3846 = vmatmul.mubr.f32.gmra.mrb[0].mxu0 %v1315
    %v3847 = vpop.f32.mrb[0].mxu0
    %v3848 = vadd.f32 0.0, %v3847
    %v3849 = vpop.f32.mrb[0].mxu0
    %v3850 = vadd.f32 0.0, %v3849
    %3851 = vmatprep.mubr.f32.mxu0 0.0
    %3852 = vmatmul.mubr.f32.gmra.mrb[0].mxu0 %v1318
    %v3853 = vpop.f32.mrb[0].mxu0
    %v3854 = vadd.f32 0.0, %v3853
    %v3855 = vpop.f32.mrb[0].mxu0
    %v3856 = vadd.f32 0.0, %v3855
    %3857 = vmatprep.mubr.f32.mxu0 0.0
    %3858 = vmatmul.mubr.f32.gmra.mrb[0].mxu0 %v1321
    %v3859 = vpop.f32.mrb[0].mxu0
    %v3860 = vadd.f32 0.0, %v3859
    %v3861 = vpop.f32.mrb[0].mxu0
    %v3862 = vadd.f32 0.0, %v3861
    %3863 = vmatprep.mubr.f32.mxu0 0.0
    %3864 = vmatmul.mubr.f32.gmra.mrb[0].mxu0 %v1324
    %v3865 = vpop.f32.mrb[0].mxu0
    %v3866 = vadd.f32 0.0, %v3865
    %v3867 = vpop.f32.mrb[0].mxu0
    %v3868 = vadd.f32 0.0, %v3867
    %3869 = vmatprep.mubr.f32.mxu0 0.0
    %3870 = vmatmul.mubr.f32.gmra.mrb[0].mxu0 %v1327
    %v3871 = vpop.f32.mrb[0].mxu0
    %v3872 = vadd.f32 0.0, %v3871
    %v3873 = vpop.f32.mrb[0].mxu0
    %v3874 = vadd.f32 0.0, %v3873
    %3875 = vmatprep.mubr.f32.mxu0 0.0
    %3876 = vmatmul.mubr.f32.gmra.mrb[0].mxu0 %v1330
    %v3877 = vpop.f32.mrb[0].mxu0
    %v3878 = vadd.f32 0.0, %v3877
    %v3879 = vpop.f32.mrb[0].mxu0
    %v3880 = vadd.f32 0.0, %v3879
    %3881 = vmatprep.mubr.f32.mxu0 0.0
    %3882 = vmatmul.mubr.f32.gmra.mrb[0].mxu0 %v1333
    %v3883 = vpop.f32.mrb[0].mxu0
    %v3884 = vadd.f32 0.0, %v3883
    %v3885 = vpop.f32.mrb[0].mxu0
    %v3886 = vadd.f32 0.0, %v3885
    %3887 = vmatprep.mubr.f32.mxu0 0.0
    %3888 = vmatmul.mubr.f32.gmra.mrb[0].mxu0 %v1336
    %v3889 = vpop.f32.mrb[0].mxu0
    %v3890 = vadd.f32 0.0, %v3889
    %v3891 = vpop.f32.mrb[0].mxu0
    %v3892 = vadd.f32 0.0, %v3891
    %3893 = vmatprep.mubr.f32.mxu0 0.0
    %3894 = vmatmul.mubr.f32.gmra.mrb[0].mxu0 %v1339
    %v3895 = vpop.f32.mrb[0].mxu0
    %v3896 = vadd.f32 0.0, %v3895
    %v3897 = vpop.f32.mrb[0].mxu0
    %v3898 = vadd.f32 0.0, %v3897
    %3899 = vmatprep.mubr.f32.mxu0 0.0
    %3900 = vmatmul.mubr.f32.gmra.mrb[0].mxu0 %v1342
    %v3901 = vpop.f32.mrb[0].mxu0
    %v3902 = vadd.f32 0.0, %v3901
    %v3903 = vpop.f32.mrb[0].mxu0
    %v3904 = vadd.f32 0.0, %v3903
    %3905 = vmatprep.mubr.f32.mxu0 0.0
    %3906 = vmatmul.mubr.f32.gmra.mrb[0].mxu0 %v1345
    %v3907 = vpop.f32.mrb[0].mxu0
    %v3908 = vadd.f32 0.0, %v3907
    %v3909 = vpop.f32.mrb[0].mxu0
    %v3910 = vadd.f32 0.0, %v3909
    %3911 = vmatprep.mubr.f32.mxu0 0.0
    %3912 = vmatmul.mubr.f32.gmra.mrb[0].mxu0 %v1348
    %v3913 = vpop.f32.mrb[0].mxu0
    %v3914 = vadd.f32 0.0, %v3913
    %v3915 = vpop.f32.mrb[0].mxu0
    %v3916 = vadd.f32 0.0, %v3915
    %3917 = vdwg.mxu0
    %3918 = vmatprep.subr.mxu0 %v3755
    %3919 = vmatpush1.msra.mxu0 %v3753
    %3920 = vmatprep.subr.mxu0 0.0
    %3921 = vmatpush1.msra.mxu0 0.0
    %3922 = vmatprep.subr.mxu0 0.0
    %3923 = vmatpush1.msra.mxu0 0.0
    %3924 = vmatprep.subr.mxu0 0.0
    %3925 = vmatpush1.msra.mxu0 0.0
    %3926 = vmatprep.subr.mxu0 0.0
    %3927 = vmatpush1.msra.mxu0 0.0
    %3928 = vmatprep.subr.mxu0 0.0
    %3929 = vmatpush1.msra.mxu0 0.0
    %3930 = vmatprep.subr.mxu0 0.0
    %3931 = vmatpush1.msra.mxu0 0.0
    %3932 = vmatprep.subr.mxu0 0.0
    %3933 = vmatpush1.msra.mxu0 0.0
    %3934 = vmatprep.subr.mxu0 0.0
    %3935 = vmatpush1.msra.mxu0 0.0
    %3936 = vmatprep.subr.mxu0 0.0
    %3937 = vmatpush1.msra.mxu0 0.0
    %3938 = vmatprep.subr.mxu0 0.0
    %3939 = vmatpush1.msra.mxu0 0.0
    %3940 = vmatprep.subr.mxu0 0.0
    %3941 = vmatpush1.msra.mxu0 0.0
    %3942 = vmatprep.subr.mxu0 0.0
    %3943 = vmatpush1.msra.mxu0 0.0
    %3944 = vmatprep.subr.mxu0 0.0
    %3945 = vmatpush1.msra.mxu0 0.0
    %3946 = vmatprep.subr.mxu0 0.0
    %3947 = vmatpush1.msra.mxu0 0.0
    %3948 = vmatprep.subr.mxu0 0.0
    %3949 = vmatpush1.msra.mxu0 0.0
    %3950 = vmatprep.subr.mxu0 0.0
    %3951 = vmatpush1.msra.mxu0 0.0
    %3952 = vmatprep.subr.mxu0 0.0
    %3953 = vmatpush1.msra.mxu0 0.0
    %3954 = vmatprep.subr.mxu0 0.0
    %3955 = vmatpush1.msra.mxu0 0.0
    %3956 = vmatprep.subr.mxu0 0.0
    %3957 = vmatpush1.msra.mxu0 0.0
    %3958 = vmatprep.subr.mxu0 0.0
    %3959 = vmatpush1.msra.mxu0 0.0
    %3960 = vmatprep.subr.mxu0 0.0
    %3961 = vmatpush1.msra.mxu0 0.0
    %3962 = vmatprep.subr.mxu0 0.0
    %3963 = vmatpush1.msra.mxu0 0.0
    %3964 = vmatprep.subr.mxu0 0.0
    %3965 = vmatpush1.msra.mxu0 0.0
    %3966 = vmatprep.subr.mxu0 0.0
    %3967 = vmatpush1.msra.mxu0 0.0
    %3968 = vmatprep.subr.mxu0 0.0
    %3969 = vmatpush1.msra.mxu0 0.0
    %3970 = vmatprep.subr.mxu0 0.0
    %3971 = vmatpush1.msra.mxu0 0.0
    %3972 = vmatprep.subr.mxu0 0.0
    %3973 = vmatpush1.msra.mxu0 0.0
    %3974 = vmatprep.subr.mxu0 0.0
    %3975 = vmatpush1.msra.mxu0 0.0
    %3976 = vmatprep.subr.mxu0 0.0
    %3977 = vmatpush1.msra.mxu0 0.0
    %3978 = vmatprep.subr.mxu0 0.0
    %3979 = vmatpush1.msra.mxu0 0.0
    %3980 = vmatprep.subr.mxu0 0.0
    %3981 = vmatpush1.msra.mxu0 0.0
    %3982 = vmatprep.mubr.f32.mxu0 0.0
    %3983 = vmatmul.mubr.f32.gmra.mrb[0].mxu0 %v1303
    %v3984 = vpop.f32.mrb[0].mxu0
    %v3985 = vadd.f32 0.0, %v3984
    %v3986 = vpop.f32.mrb[0].mxu0
    %v3987 = vadd.f32 0.0, %v3986
    %3988 = vmatprep.mubr.f32.mxu0 0.0
    %3989 = vmatmul.mubr.f32.gmra.mrb[0].mxu0 %v1306
    %v3990 = vpop.f32.mrb[0].mxu0
    %v3991 = vadd.f32 0.0, %v3990
    %v3992 = vpop.f32.mrb[0].mxu0
    %v3993 = vadd.f32 0.0, %v3992
    %3994 = vmatprep.mubr.f32.mxu0 0.0
    %3995 = vmatmul.mubr.f32.gmra.mrb[0].mxu0 %v1309
    %v3996 = vpop.f32.mrb[0].mxu0
    %v3997 = vadd.f32 0.0, %v3996
    %v3998 = vpop.f32.mrb[0].mxu0
    %v3999 = vadd.f32 0.0, %v3998
    %4000 = vmatprep.mubr.f32.mxu0 0.0
    %4001 = vmatmul.mubr.f32.gmra.mrb[0].mxu0 %v1312
    %v4002 = vpop.f32.mrb[0].mxu0
    %v4003 = vadd.f32 0.0, %v4002
    %v4004 = vpop.f32.mrb[0].mxu0
    %v4005 = vadd.f32 0.0, %v4004
    %4006 = vmatprep.mubr.f32.mxu0 0.0
    %4007 = vmatmul.mubr.f32.gmra.mrb[0].mxu0 %v1315
    %v4008 = vpop.f32.mrb[0].mxu0
    %v4009 = vadd.f32 0.0, %v4008
    %v4010 = vpop.f32.mrb[0].mxu0
    %v4011 = vadd.f32 0.0, %v4010
    %4012 = vmatprep.mubr.f32.mxu0 0.0
    %4013 = vmatmul.mubr.f32.gmra.mrb[0].mxu0 %v1318
    %v4014 = vpop.f32.mrb[0].mxu0
    %v4015 = vadd.f32 0.0, %v4014
    %v4016 = vpop.f32.mrb[0].mxu0
    %v4017 = vadd.f32 0.0, %v4016
    %4018 = vmatprep.mubr.f32.mxu0 0.0
    %4019 = vmatmul.mubr.f32.gmra.mrb[0].mxu0 %v1321
    %v4020 = vpop.f32.mrb[0].mxu0
    %v4021 = vadd.f32 0.0, %v4020
    %v4022 = vpop.f32.mrb[0].mxu0
    %v4023 = vadd.f32 0.0, %v4022
    %4024 = vmatprep.mubr.f32.mxu0 0.0
    %4025 = vmatmul.mubr.f32.gmra.mrb[0].mxu0 %v1324
    %v4026 = vpop.f32.mrb[0].mxu0
    %v4027 = vadd.f32 0.0, %v4026
    %v4028 = vpop.f32.mrb[0].mxu0
    %v4029 = vadd.f32 0.0, %v4028
    %4030 = vmatprep.mubr.f32.mxu0 0.0
    %4031 = vmatmul.mubr.f32.gmra.mrb[0].mxu0 %v1327
    %v4032 = vpop.f32.mrb[0].mxu0
    %v4033 = vadd.f32 0.0, %v4032
    %v4034 = vpop.f32.mrb[0].mxu0
    %v4035 = vadd.f32 0.0, %v4034
    %4036 = vmatprep.mubr.f32.mxu0 0.0
    %4037 = vmatmul.mubr.f32.gmra.mrb[0].mxu0 %v1330
    %v4038 = vpop.f32.mrb[0].mxu0
    %v4039 = vadd.f32 0.0, %v4038
    %v4040 = vpop.f32.mrb[0].mxu0
    %v4041 = vadd.f32 0.0, %v4040
    %4042 = vmatprep.mubr.f32.mxu0 0.0
    %4043 = vmatmul.mubr.f32.gmra.mrb[0].mxu0 %v1333
    %v4044 = vpop.f32.mrb[0].mxu0
    %v4045 = vadd.f32 0.0, %v4044
    %v4046 = vpop.f32.mrb[0].mxu0
    %v4047 = vadd.f32 0.0, %v4046
    %4048 = vmatprep.mubr.f32.mxu0 0.0
    %4049 = vmatmul.mubr.f32.gmra.mrb[0].mxu0 %v1336
    %v4050 = vpop.f32.mrb[0].mxu0
    %v4051 = vadd.f32 0.0, %v4050
    %v4052 = vpop.f32.mrb[0].mxu0
    %v4053 = vadd.f32 0.0, %v4052
    %4054 = vmatprep.mubr.f32.mxu0 0.0
    %4055 = vmatmul.mubr.f32.gmra.mrb[0].mxu0 %v1339
    %v4056 = vpop.f32.mrb[0].mxu0
    %v4057 = vadd.f32 0.0, %v4056
    %v4058 = vpop.f32.mrb[0].mxu0
    %v4059 = vadd.f32 0.0, %v4058
    %4060 = vmatprep.mubr.f32.mxu0 0.0
    %4061 = vmatmul.mubr.f32.gmra.mrb[0].mxu0 %v1342
    %v4062 = vpop.f32.mrb[0].mxu0
    %v4063 = vadd.f32 0.0, %v4062
    %v4064 = vpop.f32.mrb[0].mxu0
    %v4065 = vadd.f32 0.0, %v4064
    %4066 = vmatprep.mubr.f32.mxu0 0.0
    %4067 = vmatmul.mubr.f32.gmra.mrb[0].mxu0 %v1345
    %v4068 = vpop.f32.mrb[0].mxu0
    %v4069 = vadd.f32 0.0, %v4068
    %v4070 = vpop.f32.mrb[0].mxu0
    %v4071 = vadd.f32 0.0, %v4070
    %4072 = vmatprep.mubr.f32.mxu0 0.0
    %4073 = vmatmul.mubr.f32.gmra.mrb[0].mxu0 %v1348
    %v4074 = vpop.f32.mrb[0].mxu0
    %v4075 = vadd.f32 0.0, %v4074
    %v4076 = vpop.f32.mrb[0].mxu0
    %v4077 = vadd.f32 0.0, %v4076
    %4078 = vdwg.mxu0
    %v4083 = vcombine.low %v3255, %v3257
    %v4084 = vcombine.high %v3255, %v3257
    %v4085 = vcombine.low %v3341, %v3343
    %v4086 = vcombine.high %v3341, %v3343
    %v4088 = vunpack.c.l.s4 1966171168
    %v4089 = vunpack.c.0.s8 %v4088
    %v4090 = vlaneseq
    %v4091 = vshrl.u32 %v4090, 7
    %v4092 = vsub.s32 %v4089, %v4091
    %v4093 = vrot.slane %v4083, %v4092
    %v4095 = vunpack.c.l.s4 1966171168
    %v4096 = vunpack.c.0.s8 %v4095
    %v4097 = vlaneseq
    %v4098 = vshrl.u32 %v4097, 7
    %v4099 = vsub.s32 %v4096, %v4098
    %v4100 = vrot.slane %v4084, %v4099
    %v4102 = vunpack.c.l.s4 1966171168
    %v4103 = vunpack.c.0.s8 %v4102
    %v4104 = vlaneseq
    %v4105 = vshrl.u32 %v4104, 7
    %v4106 = vsub.s32 %v4103, %v4105
    %v4107 = vrot.slane %v4085, %v4106
    %v4109 = vunpack.c.l.s4 1966171168
    %v4110 = vunpack.c.0.s8 %v4109
    %v4111 = vlaneseq
    %v4112 = vshrl.u32 %v4111, 7
    %v4113 = vsub.s32 %v4110, %v4112
    %v4114 = vrot.slane %v4086, %v4113
    %v4115 = vcombine.low %v4093, %v4107
    %v4116 = vcombine.high %v4093, %v4107
    %v4117 = vcombine.low %v4100, %v4114
    %v4118 = vcombine.high %v4100, %v4114
    %v4120 = vunpack.c.l.s4 1966171168
    %v4121 = vunpack.c.0.s8 %v4120
    %v4122 = vlaneseq
    %v4123 = vshrl.u32 %v4122, 7
    %v4124 = vsub.s32 %v4121, %v4123
    %v4125 = vrot.slane %v4115, %v4124
    %v4127 = vunpack.c.l.s4 1966171168
    %v4128 = vunpack.c.0.s8 %v4127
    %v4129 = vlaneseq
    %v4130 = vshrl.u32 %v4129, 7
    %v4131 = vsub.s32 %v4128, %v4130
    %v4132 = vrot.slane %v4117, %v4131
    %v4134 = vunpack.c.l.s4 1966171168
    %v4135 = vunpack.c.0.s8 %v4134
    %v4136 = vlaneseq
    %v4137 = vshrl.u32 %v4136, 7
    %v4138 = vsub.s32 %v4135, %v4137
    %v4139 = vrot.slane %v4116, %v4138
    %v4141 = vunpack.c.l.s4 1966171168
    %v4142 = vunpack.c.0.s8 %v4141
    %v4143 = vlaneseq
    %v4144 = vshrl.u32 %v4143, 7
    %v4145 = vsub.s32 %v4142, %v4144
    %v4146 = vrot.slane %v4118, %v4145
    %v4147 = vcombine.high %v4125, %v4125
    %v4148 = vcombine.high %v4132, %v4132
    %v4149 = vcombine.high %v4139, %v4139
    %v4150 = vcombine.high %v4146, %v4146
    %v4151 = vlaneseq
    %v4152 = vshrl.u32 %v4151, 7
    %v4153 = vsub.s32 0, %v4152
    %v4154 = vrot.slane %v4125, %v4153
    %v4155 = vlaneseq
    %v4156 = vshrl.u32 %v4155, 7
    %v4157 = vsub.s32 1, %v4156
    %v4158 = vrot.slane %v4125, %v4157
    %v4159 = vlaneseq
    %v4160 = vshrl.u32 %v4159, 7
    %v4161 = vsub.s32 2, %v4160
    %v4162 = vrot.slane %v4125, %v4161
    %v4163 = vlaneseq
    %v4164 = vshrl.u32 %v4163, 7
    %v4165 = vsub.s32 3, %v4164
    %v4166 = vrot.slane %v4125, %v4165
    %v4167 = vlaneseq
    %v4168 = vshrl.u32 %v4167, 7
    %v4169 = vsub.s32 0, %v4168
    %v4170 = vrot.slane %v4139, %v4169
    %v4171 = vlaneseq
    %v4172 = vshrl.u32 %v4171, 7
    %v4173 = vsub.s32 1, %v4172
    %v4174 = vrot.slane %v4139, %v4173
    %v4175 = vlaneseq
    %v4176 = vshrl.u32 %v4175, 7
    %v4177 = vsub.s32 2, %v4176
    %v4178 = vrot.slane %v4139, %v4177
    %v4179 = vlaneseq
    %v4180 = vshrl.u32 %v4179, 7
    %v4181 = vsub.s32 3, %v4180
    %v4182 = vrot.slane %v4139, %v4181
    %v4183 = vlaneseq
    %v4184 = vshrl.u32 %v4183, 7
    %v4185 = vsub.s32 0, %v4184
    %v4186 = vrot.slane %v4147, %v4185
    %v4187 = vlaneseq
    %v4188 = vshrl.u32 %v4187, 7
    %v4189 = vsub.s32 1, %v4188
    %v4190 = vrot.slane %v4147, %v4189
    %v4191 = vlaneseq
    %v4192 = vshrl.u32 %v4191, 7
    %v4193 = vsub.s32 2, %v4192
    %v4194 = vrot.slane %v4147, %v4193
    %v4195 = vlaneseq
    %v4196 = vshrl.u32 %v4195, 7
    %v4197 = vsub.s32 3, %v4196
    %v4198 = vrot.slane %v4147, %v4197
    %v4199 = vlaneseq
    %v4200 = vshrl.u32 %v4199, 7
    %v4201 = vsub.s32 0, %v4200
    %v4202 = vrot.slane %v4149, %v4201
    %v4203 = vlaneseq
    %v4204 = vshrl.u32 %v4203, 7
    %v4205 = vsub.s32 1, %v4204
    %v4206 = vrot.slane %v4149, %v4205
    %v4207 = vlaneseq
    %v4208 = vshrl.u32 %v4207, 7
    %v4209 = vsub.s32 2, %v4208
    %v4210 = vrot.slane %v4149, %v4209
    %v4211 = vlaneseq
    %v4212 = vshrl.u32 %v4211, 7
    %v4213 = vsub.s32 3, %v4212
    %v4214 = vrot.slane %v4149, %v4213
    %v4215 = vlaneseq
    %v4216 = vshrl.u32 %v4215, 7
    %v4217 = vsub.s32 0, %v4216
    %v4218 = vrot.slane %v4132, %v4217
    %v4219 = vlaneseq
    %v4220 = vshrl.u32 %v4219, 7
    %v4221 = vsub.s32 1, %v4220
    %v4222 = vrot.slane %v4132, %v4221
    %v4223 = vlaneseq
    %v4224 = vshrl.u32 %v4223, 7
    %v4225 = vsub.s32 2, %v4224
    %v4226 = vrot.slane %v4132, %v4225
    %v4227 = vlaneseq
    %v4228 = vshrl.u32 %v4227, 7
    %v4229 = vsub.s32 3, %v4228
    %v4230 = vrot.slane %v4132, %v4229
    %v4231 = vlaneseq
    %v4232 = vshrl.u32 %v4231, 7
    %v4233 = vsub.s32 0, %v4232
    %v4234 = vrot.slane %v4146, %v4233
    %v4235 = vlaneseq
    %v4236 = vshrl.u32 %v4235, 7
    %v4237 = vsub.s32 1, %v4236
    %v4238 = vrot.slane %v4146, %v4237
    %v4239 = vlaneseq
    %v4240 = vshrl.u32 %v4239, 7
    %v4241 = vsub.s32 2, %v4240
    %v4242 = vrot.slane %v4146, %v4241
    %v4243 = vlaneseq
    %v4244 = vshrl.u32 %v4243, 7
    %v4245 = vsub.s32 3, %v4244
    %v4246 = vrot.slane %v4146, %v4245
    %v4247 = vlaneseq
    %v4248 = vshrl.u32 %v4247, 7
    %v4249 = vsub.s32 0, %v4248
    %v4250 = vrot.slane %v4148, %v4249
    %v4251 = vlaneseq
    %v4252 = vshrl.u32 %v4251, 7
    %v4253 = vsub.s32 1, %v4252
    %v4254 = vrot.slane %v4148, %v4253
    %v4255 = vlaneseq
    %v4256 = vshrl.u32 %v4255, 7
    %v4257 = vsub.s32 2, %v4256
    %v4258 = vrot.slane %v4148, %v4257
    %v4259 = vlaneseq
    %v4260 = vshrl.u32 %v4259, 7
    %v4261 = vsub.s32 3, %v4260
    %v4262 = vrot.slane %v4148, %v4261
    %v4263 = vlaneseq
    %v4264 = vshrl.u32 %v4263, 7
    %v4265 = vsub.s32 0, %v4264
    %v4266 = vrot.slane %v4150, %v4265
    %v4267 = vlaneseq
    %v4268 = vshrl.u32 %v4267, 7
    %v4269 = vsub.s32 1, %v4268
    %v4270 = vrot.slane %v4150, %v4269
    %v4271 = vlaneseq
    %v4272 = vshrl.u32 %v4271, 7
    %v4273 = vsub.s32 2, %v4272
    %v4274 = vrot.slane %v4150, %v4273
    %v4275 = vlaneseq
    %v4276 = vshrl.u32 %v4275, 7
    %v4277 = vsub.s32 3, %v4276
    %v4278 = vrot.slane %v4150, %v4277
    %v4311 = vadd.f32 %v4154, %v3824
    %v4312 = vadd.f32 %v4158, %v3826
    %v4313 = vadd.f32 %v4162, %v3985
    %v4314 = vadd.f32 %v4166, %v3987
    %v4315 = vadd.f32 %v4170, %v3830
    %v4316 = vadd.f32 %v4174, %v3832
    %v4317 = vadd.f32 %v4178, %v3991
    %v4318 = vadd.f32 %v4182, %v3993
    %v4319 = vadd.f32 %v4186, %v3836
    %v4320 = vadd.f32 %v4190, %v3838
    %v4321 = vadd.f32 %v4194, %v3997
    %v4322 = vadd.f32 %v4198, %v3999
    %v4323 = vadd.f32 %v4202, %v3842
    %v4324 = vadd.f32 %v4206, %v3844
    %v4325 = vadd.f32 %v4210, %v4003
    %v4326 = vadd.f32 %v4214, %v4005
    %v4327 = vadd.f32 %v4218, %v3848
    %v4328 = vadd.f32 %v4222, %v3850
    %v4329 = vadd.f32 %v4226, %v4009
    %v4330 = vadd.f32 %v4230, %v4011
    %v4331 = vadd.f32 %v4234, %v3854
    %v4332 = vadd.f32 %v4238, %v3856
    %v4333 = vadd.f32 %v4242, %v4015
    %v4334 = vadd.f32 %v4246, %v4017
    %v4335 = vadd.f32 %v4250, %v3860
    %v4336 = vadd.f32 %v4254, %v3862
    %v4337 = vadd.f32 %v4258, %v4021
    %v4338 = vadd.f32 %v4262, %v4023
    %v4339 = vadd.f32 %v4266, %v3866
    %v4340 = vadd.f32 %v4270, %v3868
    %v4341 = vadd.f32 %v4274, %v4027
    %v4342 = vadd.f32 %v4278, %v4029
    %v4343 = vadd.f32 %v4311, %v4315
    %v4344 = vadd.f32 %v4343, %v4319
    %v4345 = vadd.f32 %v4344, %v4323
    %v4346 = vadd.f32 %v4345, %v4327
    %v4347 = vadd.f32 %v4346, %v4331
    %v4348 = vadd.f32 %v4347, %v4335
    %v4349 = vadd.f32 %v4348, %v4339
    %v4350 = vadd.f32 %v4312, %v4316
    %v4351 = vadd.f32 %v4350, %v4320
    %v4352 = vadd.f32 %v4351, %v4324
    %v4353 = vadd.f32 %v4352, %v4328
    %v4354 = vadd.f32 %v4353, %v4332
    %v4355 = vadd.f32 %v4354, %v4336
    %v4356 = vadd.f32 %v4355, %v4340
    %v4357 = vadd.f32 %v4313, %v4317
    %v4358 = vadd.f32 %v4357, %v4321
    %v4359 = vadd.f32 %v4358, %v4325
    %v4360 = vadd.f32 %v4359, %v4329
    %v4361 = vadd.f32 %v4360, %v4333
    %v4362 = vadd.f32 %v4361, %v4337
    %v4363 = vadd.f32 %v4362, %v4341
    %v4364 = vsel %vm3087, %v4314, 0.0
    %v4365 = vsel %vm3087, %v4318, 0.0
    %v4366 = vadd.f32 %v4364, %v4365
    %v4367 = vsel %vm3087, %v4322, 0.0
    %v4368 = vadd.f32 %v4366, %v4367
    %v4369 = vsel %vm3087, %v4326, 0.0
    %v4370 = vadd.f32 %v4368, %v4369
    %v4371 = vsel %vm3087, %v4330, 0.0
    %v4372 = vadd.f32 %v4370, %v4371
    %v4373 = vsel %vm3087, %v4334, 0.0
    %v4374 = vadd.f32 %v4372, %v4373
    %v4375 = vsel %vm3087, %v4338, 0.0
    %v4376 = vadd.f32 %v4374, %v4375
    %v4377 = vsel %vm3087, %v4342, 0.0
    %v4378 = vadd.f32 %v4376, %v4377
    %v4379 = vmax.f32 %v4311, %v4315
    %v4380 = vmax.f32 %v4379, %v4319
    %v4381 = vmax.f32 %v4380, %v4323
    %v4382 = vmax.f32 %v4381, %v4327
    %v4383 = vmax.f32 %v4382, %v4331
    %v4384 = vmax.f32 %v4383, %v4335
    %v4385 = vmax.f32 %v4384, %v4339
    %v4386 = vmax.f32 %v4312, %v4316
    %v4387 = vmax.f32 %v4386, %v4320
    %v4388 = vmax.f32 %v4387, %v4324
    %v4389 = vmax.f32 %v4388, %v4328
    %v4390 = vmax.f32 %v4389, %v4332
    %v4391 = vmax.f32 %v4390, %v4336
    %v4392 = vmax.f32 %v4391, %v4340
    %v4393 = vmax.f32 %v4313, %v4317
    %v4394 = vmax.f32 %v4393, %v4321
    %v4395 = vmax.f32 %v4394, %v4325
    %v4396 = vmax.f32 %v4395, %v4329
    %v4397 = vmax.f32 %v4396, %v4333
    %v4398 = vmax.f32 %v4397, %v4337
    %v4399 = vmax.f32 %v4398, %v4341
    %v4400 = vsel %vm3087, %v4314, -inf
    %v4401 = vsel %vm3087, %v4318, -inf
    %v4402 = vmax.f32 %v4400, %v4401
    %v4403 = vsel %vm3087, %v4322, -inf
    %v4404 = vmax.f32 %v4402, %v4403
    %v4405 = vsel %vm3087, %v4326, -inf
    %v4406 = vmax.f32 %v4404, %v4405
    %v4407 = vsel %vm3087, %v4330, -inf
    %v4408 = vmax.f32 %v4406, %v4407
    %v4409 = vsel %vm3087, %v4334, -inf
    %v4410 = vmax.f32 %v4408, %v4409
    %v4411 = vsel %vm3087, %v4338, -inf
    %v4412 = vmax.f32 %v4410, %v4411
    %v4413 = vsel %vm3087, %v4342, -inf
    %v4414 = vmax.f32 %v4412, %v4413
    %v4415 = vmul.f32 %v4311, %v4311
    %v4416 = vmul.f32 %v4312, %v4312
    %v4417 = vmul.f32 %v4313, %v4313
    %v4418 = vmul.f32 %v4314, %v4314
    %v4419 = vmul.f32 %v4315, %v4315
    %v4420 = vmul.f32 %v4316, %v4316
    %v4421 = vmul.f32 %v4317, %v4317
    %v4422 = vmul.f32 %v4318, %v4318
    %v4423 = vmul.f32 %v4319, %v4319
    %v4424 = vmul.f32 %v4320, %v4320
    %v4425 = vmul.f32 %v4321, %v4321
    %v4426 = vmul.f32 %v4322, %v4322
    %v4427 = vmul.f32 %v4323, %v4323
    %v4428 = vmul.f32 %v4324, %v4324
    %v4429 = vmul.f32 %v4325, %v4325
    %v4430 = vmul.f32 %v4326, %v4326
    %v4431 = vmul.f32 %v4327, %v4327
    %v4432 = vmul.f32 %v4328, %v4328
    %v4433 = vmul.f32 %v4329, %v4329
    %v4434 = vmul.f32 %v4330, %v4330
    %v4435 = vmul.f32 %v4331, %v4331
    %v4436 = vmul.f32 %v4332, %v4332
    %v4437 = vmul.f32 %v4333, %v4333
    %v4438 = vmul.f32 %v4334, %v4334
    %v4439 = vmul.f32 %v4335, %v4335
    %v4440 = vmul.f32 %v4336, %v4336
    %v4441 = vmul.f32 %v4337, %v4337
    %v4442 = vmul.f32 %v4338, %v4338
    %v4443 = vmul.f32 %v4339, %v4339
    %v4444 = vmul.f32 %v4340, %v4340
    %v4445 = vmul.f32 %v4341, %v4341
    %v4446 = vmul.f32 %v4342, %v4342
    %v4447 = vadd.f32 %v4415, %v4419
    %v4448 = vadd.f32 %v4447, %v4423
    %v4449 = vadd.f32 %v4448, %v4427
    %v4450 = vadd.f32 %v4449, %v4431
    %v4451 = vadd.f32 %v4450, %v4435
    %v4452 = vadd.f32 %v4451, %v4439
    %v4453 = vadd.f32 %v4452, %v4443
    %v4454 = vadd.f32 %v4416, %v4420
    %v4455 = vadd.f32 %v4454, %v4424
    %v4456 = vadd.f32 %v4455, %v4428
    %v4457 = vadd.f32 %v4456, %v4432
    %v4458 = vadd.f32 %v4457, %v4436
    %v4459 = vadd.f32 %v4458, %v4440
    %v4460 = vadd.f32 %v4459, %v4444
    %v4461 = vadd.f32 %v4417, %v4421
    %v4462 = vadd.f32 %v4461, %v4425
    %v4463 = vadd.f32 %v4462, %v4429
    %v4464 = vadd.f32 %v4463, %v4433
    %v4465 = vadd.f32 %v4464, %v4437
    %v4466 = vadd.f32 %v4465, %v4441
    %v4467 = vadd.f32 %v4466, %v4445
    %v4468 = vsel %vm3087, %v4418, 0.0
    %v4469 = vsel %vm3087, %v4422, 0.0
    %v4470 = vadd.f32 %v4468, %v4469
    %v4471 = vsel %vm3087, %v4426, 0.0
    %v4472 = vadd.f32 %v4470, %v4471
    %v4473 = vsel %vm3087, %v4430, 0.0
    %v4474 = vadd.f32 %v4472, %v4473
    %v4475 = vsel %vm3087, %v4434, 0.0
    %v4476 = vadd.f32 %v4474, %v4475
    %v4477 = vsel %vm3087, %v4438, 0.0
    %v4478 = vadd.f32 %v4476, %v4477
    %v4479 = vsel %vm3087, %v4442, 0.0
    %v4480 = vadd.f32 %v4478, %v4479
    %v4481 = vsel %vm3087, %v4446, 0.0
    %v4482 = vadd.f32 %v4480, %v4481
    %v4483 = vmul.f32 %v4349, 0.125
    %v4484 = vmul.f32 %v4356, 0.125
    %v4485 = vmul.f32 %v4363, 0.125
    %v4486 = vmul.f32 %v4378, 0.125
    %v4487 = vmul.f32 %v4453, 0.125
    %v4488 = vmul.f32 %v4460, 0.125
    %v4489 = vmul.f32 %v4467, 0.125
    %v4490 = vmul.f32 %v4482, 0.125
    %v4491 = vmul.f32 %v4483, %v4483
    %v4492 = vmul.f32 %v4484, %v4484
    %v4493 = vmul.f32 %v4485, %v4485
    %v4494 = vmul.f32 %v4486, %v4486
    %v4495 = vsub.f32 %v4487, %v4491
    %v4496 = vsub.f32 %v4488, %v4492
    %v4497 = vsub.f32 %v4489, %v4493
    %v4498 = vsub.f32 %v4490, %v4494
    %v4499 = vmax.f32 %v4495, 0.0
    %v4500 = vmax.f32 %v4496, 0.0
    %v4501 = vmax.f32 %v4497, 0.0
    %v4502 = vmax.f32 %v4498, 0.0
    %v4503 = vmul.f32 %v3735, 8.0
    %v4504 = vmul.f32 %v3736, 8.0
    %v4505 = vmul.f32 %v3737, 8.0
    %v4506 = vmul.f32 %v3738, 8.0
    %v4507 = vadd.f32 %v4349, %v4503
    %v4508 = vadd.f32 %v4356, %v4504
    %v4509 = vadd.f32 %v4363, %v4505
    %v4510 = vadd.f32 %v4378, %v4506
    %v4511 = vadd.f32 %v4385, %v3735
    %v4512 = vadd.f32 %v4392, %v3736
    %v4513 = vadd.f32 %v4399, %v3737
    %v4514 = vadd.f32 %v4414, %v3738
    %v4515 = vadd.f32 %v4499, 1e-30
    %v4516 = vadd.f32 %v4500, 1e-30
    %v4517 = vadd.f32 %v4501, 1e-30
    %v4518 = vadd.f32 %v4502, 1e-30
    %v4519 = vrsqrt.pop %v4515
    %v4520 = vmul.f32 %v4515, %v4519
    %vm4521 = vcmp.eq.f32.partialorder %v4515, inf
    %v4522 = vsel %vm4521, %v4515, %v4520
    %vm4523 = vcmp.eq.f32.partialorder %v4515, 0.0
    %v4524 = vand.u32 %v4515, 2147483648
    %v4525 = vsel %vm4523, %v4524, %v4522
    %v4526 = vrsqrt.pop %v4516
    %v4527 = vmul.f32 %v4516, %v4526
    %vm4528 = vcmp.eq.f32.partialorder %v4516, inf
    %v4529 = vsel %vm4528, %v4516, %v4527
    %vm4530 = vcmp.eq.f32.partialorder %v4516, 0.0
    %v4531 = vand.u32 %v4516, 2147483648
    %v4532 = vsel %vm4530, %v4531, %v4529
    %v4533 = vrsqrt.pop %v4517
    %v4534 = vmul.f32 %v4517, %v4533
    %vm4535 = vcmp.eq.f32.partialorder %v4517, inf
    %v4536 = vsel %vm4535, %v4517, %v4534
    %vm4537 = vcmp.eq.f32.partialorder %v4517, 0.0
    %v4538 = vand.u32 %v4517, 2147483648
    %v4539 = vsel %vm4537, %v4538, %v4536
    %v4540 = vrsqrt.pop %v4518
    %v4541 = vmul.f32 %v4518, %v4540
    %vm4542 = vcmp.eq.f32.partialorder %v4518, inf
    %v4543 = vsel %vm4542, %v4518, %v4541
    %vm4544 = vcmp.eq.f32.partialorder %v4518, 0.0
    %v4545 = vand.u32 %v4518, 2147483648
    %v4546 = vsel %vm4544, %v4545, %v4543
    %v4551 = vcombine.low %v3259, %v3261
    %v4552 = vcombine.high %v3259, %v3261
    %v4553 = vcombine.low %v3345, %v3347
    %v4554 = vcombine.high %v3345, %v3347
    %v4556 = vunpack.c.l.s4 1966171168
    %v4557 = vunpack.c.0.s8 %v4556
    %v4558 = vlaneseq
    %v4559 = vshrl.u32 %v4558, 7
    %v4560 = vsub.s32 %v4557, %v4559
    %v4561 = vrot.slane %v4551, %v4560
    %v4563 = vunpack.c.l.s4 1966171168
    %v4564 = vunpack.c.0.s8 %v4563
    %v4565 = vlaneseq
    %v4566 = vshrl.u32 %v4565, 7
    %v4567 = vsub.s32 %v4564, %v4566
    %v4568 = vrot.slane %v4552, %v4567
    %v4570 = vunpack.c.l.s4 1966171168
    %v4571 = vunpack.c.0.s8 %v4570
    %v4572 = vlaneseq
    %v4573 = vshrl.u32 %v4572, 7
    %v4574 = vsub.s32 %v4571, %v4573
    %v4575 = vrot.slane %v4553, %v4574
    %v4577 = vunpack.c.l.s4 1966171168
    %v4578 = vunpack.c.0.s8 %v4577
    %v4579 = vlaneseq
    %v4580 = vshrl.u32 %v4579, 7
    %v4581 = vsub.s32 %v4578, %v4580
    %v4582 = vrot.slane %v4554, %v4581
    %v4583 = vcombine.low %v4561, %v4575
    %v4584 = vcombine.high %v4561, %v4575
    %v4585 = vcombine.low %v4568, %v4582
    %v4586 = vcombine.high %v4568, %v4582
    %v4588 = vunpack.c.l.s4 1966171168
    %v4589 = vunpack.c.0.s8 %v4588
    %v4590 = vlaneseq
    %v4591 = vshrl.u32 %v4590, 7
    %v4592 = vsub.s32 %v4589, %v4591
    %v4593 = vrot.slane %v4583, %v4592
    %v4595 = vunpack.c.l.s4 1966171168
    %v4596 = vunpack.c.0.s8 %v4595
    %v4597 = vlaneseq
    %v4598 = vshrl.u32 %v4597, 7
    %v4599 = vsub.s32 %v4596, %v4598
    %v4600 = vrot.slane %v4585, %v4599
    %v4602 = vunpack.c.l.s4 1966171168
    %v4603 = vunpack.c.0.s8 %v4602
    %v4604 = vlaneseq
    %v4605 = vshrl.u32 %v4604, 7
    %v4606 = vsub.s32 %v4603, %v4605
    %v4607 = vrot.slane %v4584, %v4606
    %v4609 = vunpack.c.l.s4 1966171168
    %v4610 = vunpack.c.0.s8 %v4609
    %v4611 = vlaneseq
    %v4612 = vshrl.u32 %v4611, 7
    %v4613 = vsub.s32 %v4610, %v4612
    %v4614 = vrot.slane %v4586, %v4613
    %v4615 = vcombine.high %v4593, %v4593
    %v4616 = vcombine.high %v4600, %v4600
    %v4617 = vcombine.high %v4607, %v4607
    %v4618 = vcombine.high %v4614, %v4614
    %v4619 = vlaneseq
    %v4620 = vshrl.u32 %v4619, 7
    %v4621 = vsub.s32 0, %v4620
    %v4622 = vrot.slane %v4593, %v4621
    %v4623 = vlaneseq
    %v4624 = vshrl.u32 %v4623, 7
    %v4625 = vsub.s32 1, %v4624
    %v4626 = vrot.slane %v4593, %v4625
    %v4627 = vlaneseq
    %v4628 = vshrl.u32 %v4627, 7
    %v4629 = vsub.s32 2, %v4628
    %v4630 = vrot.slane %v4593, %v4629
    %v4631 = vlaneseq
    %v4632 = vshrl.u32 %v4631, 7
    %v4633 = vsub.s32 3, %v4632
    %v4634 = vrot.slane %v4593, %v4633
    %v4635 = vlaneseq
    %v4636 = vshrl.u32 %v4635, 7
    %v4637 = vsub.s32 0, %v4636
    %v4638 = vrot.slane %v4607, %v4637
    %v4639 = vlaneseq
    %v4640 = vshrl.u32 %v4639, 7
    %v4641 = vsub.s32 1, %v4640
    %v4642 = vrot.slane %v4607, %v4641
    %v4643 = vlaneseq
    %v4644 = vshrl.u32 %v4643, 7
    %v4645 = vsub.s32 2, %v4644
    %v4646 = vrot.slane %v4607, %v4645
    %v4647 = vlaneseq
    %v4648 = vshrl.u32 %v4647, 7
    %v4649 = vsub.s32 3, %v4648
    %v4650 = vrot.slane %v4607, %v4649
    %v4651 = vlaneseq
    %v4652 = vshrl.u32 %v4651, 7
    %v4653 = vsub.s32 0, %v4652
    %v4654 = vrot.slane %v4615, %v4653
    %v4655 = vlaneseq
    %v4656 = vshrl.u32 %v4655, 7
    %v4657 = vsub.s32 1, %v4656
    %v4658 = vrot.slane %v4615, %v4657
    %v4659 = vlaneseq
    %v4660 = vshrl.u32 %v4659, 7
    %v4661 = vsub.s32 2, %v4660
    %v4662 = vrot.slane %v4615, %v4661
    %v4663 = vlaneseq
    %v4664 = vshrl.u32 %v4663, 7
    %v4665 = vsub.s32 3, %v4664
    %v4666 = vrot.slane %v4615, %v4665
    %v4667 = vlaneseq
    %v4668 = vshrl.u32 %v4667, 7
    %v4669 = vsub.s32 0, %v4668
    %v4670 = vrot.slane %v4617, %v4669
    %v4671 = vlaneseq
    %v4672 = vshrl.u32 %v4671, 7
    %v4673 = vsub.s32 1, %v4672
    %v4674 = vrot.slane %v4617, %v4673
    %v4675 = vlaneseq
    %v4676 = vshrl.u32 %v4675, 7
    %v4677 = vsub.s32 2, %v4676
    %v4678 = vrot.slane %v4617, %v4677
    %v4679 = vlaneseq
    %v4680 = vshrl.u32 %v4679, 7
    %v4681 = vsub.s32 3, %v4680
    %v4682 = vrot.slane %v4617, %v4681
    %v4683 = vlaneseq
    %v4684 = vshrl.u32 %v4683, 7
    %v4685 = vsub.s32 0, %v4684
    %v4686 = vrot.slane %v4600, %v4685
    %v4687 = vlaneseq
    %v4688 = vshrl.u32 %v4687, 7
    %v4689 = vsub.s32 1, %v4688
    %v4690 = vrot.slane %v4600, %v4689
    %v4691 = vlaneseq
    %v4692 = vshrl.u32 %v4691, 7
    %v4693 = vsub.s32 2, %v4692
    %v4694 = vrot.slane %v4600, %v4693
    %v4695 = vlaneseq
    %v4696 = vshrl.u32 %v4695, 7
    %v4697 = vsub.s32 3, %v4696
    %v4698 = vrot.slane %v4600, %v4697
    %v4699 = vlaneseq
    %v4700 = vshrl.u32 %v4699, 7
    %v4701 = vsub.s32 0, %v4700
    %v4702 = vrot.slane %v4614, %v4701
    %v4703 = vlaneseq
    %v4704 = vshrl.u32 %v4703, 7
    %v4705 = vsub.s32 1, %v4704
    %v4706 = vrot.slane %v4614, %v4705
    %v4707 = vlaneseq
    %v4708 = vshrl.u32 %v4707, 7
    %v4709 = vsub.s32 2, %v4708
    %v4710 = vrot.slane %v4614, %v4709
    %v4711 = vlaneseq
    %v4712 = vshrl.u32 %v4711, 7
    %v4713 = vsub.s32 3, %v4712
    %v4714 = vrot.slane %v4614, %v4713
    %v4715 = vlaneseq
    %v4716 = vshrl.u32 %v4715, 7
    %v4717 = vsub.s32 0, %v4716
    %v4718 = vrot.slane %v4616, %v4717
    %v4719 = vlaneseq
    %v4720 = vshrl.u32 %v4719, 7
    %v4721 = vsub.s32 1, %v4720
    %v4722 = vrot.slane %v4616, %v4721
    %v4723 = vlaneseq
    %v4724 = vshrl.u32 %v4723, 7
    %v4725 = vsub.s32 2, %v4724
    %v4726 = vrot.slane %v4616, %v4725
    %v4727 = vlaneseq
    %v4728 = vshrl.u32 %v4727, 7
    %v4729 = vsub.s32 3, %v4728
    %v4730 = vrot.slane %v4616, %v4729
    %v4731 = vlaneseq
    %v4732 = vshrl.u32 %v4731, 7
    %v4733 = vsub.s32 0, %v4732
    %v4734 = vrot.slane %v4618, %v4733
    %v4735 = vlaneseq
    %v4736 = vshrl.u32 %v4735, 7
    %v4737 = vsub.s32 1, %v4736
    %v4738 = vrot.slane %v4618, %v4737
    %v4739 = vlaneseq
    %v4740 = vshrl.u32 %v4739, 7
    %v4741 = vsub.s32 2, %v4740
    %v4742 = vrot.slane %v4618, %v4741
    %v4743 = vlaneseq
    %v4744 = vshrl.u32 %v4743, 7
    %v4745 = vsub.s32 3, %v4744
    %v4746 = vrot.slane %v4618, %v4745
    %v4779 = vadd.f32 %v4622, %v3872
    %v4780 = vadd.f32 %v4626, %v3874
    %v4781 = vadd.f32 %v4630, %v4033
    %v4782 = vadd.f32 %v4634, %v4035
    %v4783 = vadd.f32 %v4638, %v3878
    %v4784 = vadd.f32 %v4642, %v3880
    %v4785 = vadd.f32 %v4646, %v4039
    %v4786 = vadd.f32 %v4650, %v4041
    %v4787 = vadd.f32 %v4654, %v3884
    %v4788 = vadd.f32 %v4658, %v3886
    %v4789 = vadd.f32 %v4662, %v4045
    %v4790 = vadd.f32 %v4666, %v4047
    %v4791 = vadd.f32 %v4670, %v3890
    %v4792 = vadd.f32 %v4674, %v3892
    %v4793 = vadd.f32 %v4678, %v4051
    %v4794 = vadd.f32 %v4682, %v4053
    %v4795 = vadd.f32 %v4686, %v3896
    %v4796 = vadd.f32 %v4690, %v3898
    %v4797 = vadd.f32 %v4694, %v4057
    %v4798 = vadd.f32 %v4698, %v4059
    %v4799 = vadd.f32 %v4702, %v3902
    %v4800 = vadd.f32 %v4706, %v3904
    %v4801 = vadd.f32 %v4710, %v4063
    %v4802 = vadd.f32 %v4714, %v4065
    %v4803 = vadd.f32 %v4718, %v3908
    %v4804 = vadd.f32 %v4722, %v3910
    %v4805 = vadd.f32 %v4726, %v4069
    %v4806 = vadd.f32 %v4730, %v4071
    %v4807 = vadd.f32 %v4734, %v3914
    %v4808 = vadd.f32 %v4738, %v3916
    %v4809 = vadd.f32 %v4742, %v4075
    %v4810 = vadd.f32 %v4746, %v4077
    %v4811 = vadd.f32 %v4779, %v4783
    %v4812 = vadd.f32 %v4811, %v4787
    %v4813 = vadd.f32 %v4812, %v4791
    %v4814 = vadd.f32 %v4813, %v4795
    %v4815 = vadd.f32 %v4814, %v4799
    %v4816 = vadd.f32 %v4815, %v4803
    %v4817 = vadd.f32 %v4816, %v4807
    %v4818 = vadd.f32 %v4780, %v4784
    %v4819 = vadd.f32 %v4818, %v4788
    %v4820 = vadd.f32 %v4819, %v4792
    %v4821 = vadd.f32 %v4820, %v4796
    %v4822 = vadd.f32 %v4821, %v4800
    %v4823 = vadd.f32 %v4822, %v4804
    %v4824 = vadd.f32 %v4823, %v4808
    %v4825 = vadd.f32 %v4781, %v4785
    %v4826 = vadd.f32 %v4825, %v4789
    %v4827 = vadd.f32 %v4826, %v4793
    %v4828 = vadd.f32 %v4827, %v4797
    %v4829 = vadd.f32 %v4828, %v4801
    %v4830 = vadd.f32 %v4829, %v4805
    %v4831 = vadd.f32 %v4830, %v4809
    %v4832 = vsel %vm3087, %v4782, 0.0
    %v4833 = vsel %vm3087, %v4786, 0.0
    %v4834 = vadd.f32 %v4832, %v4833
    %v4835 = vsel %vm3087, %v4790, 0.0
    %v4836 = vadd.f32 %v4834, %v4835
    %v4837 = vsel %vm3087, %v4794, 0.0
    %v4838 = vadd.f32 %v4836, %v4837
    %v4839 = vsel %vm3087, %v4798, 0.0
    %v4840 = vadd.f32 %v4838, %v4839
    %v4841 = vsel %vm3087, %v4802, 0.0
    %v4842 = vadd.f32 %v4840, %v4841
    %v4843 = vsel %vm3087, %v4806, 0.0
    %v4844 = vadd.f32 %v4842, %v4843
    %v4845 = vsel %vm3087, %v4810, 0.0
    %v4846 = vadd.f32 %v4844, %v4845
    %v4847 = vmax.f32 %v4779, %v4783
    %v4848 = vmax.f32 %v4847, %v4787
    %v4849 = vmax.f32 %v4848, %v4791
    %v4850 = vmax.f32 %v4849, %v4795
    %v4851 = vmax.f32 %v4850, %v4799
    %v4852 = vmax.f32 %v4851, %v4803
    %v4853 = vmax.f32 %v4852, %v4807
    %v4854 = vmax.f32 %v4780, %v4784
    %v4855 = vmax.f32 %v4854, %v4788
    %v4856 = vmax.f32 %v4855, %v4792
    %v4857 = vmax.f32 %v4856, %v4796
    %v4858 = vmax.f32 %v4857, %v4800
    %v4859 = vmax.f32 %v4858, %v4804
    %v4860 = vmax.f32 %v4859, %v4808
    %v4861 = vmax.f32 %v4781, %v4785
    %v4862 = vmax.f32 %v4861, %v4789
    %v4863 = vmax.f32 %v4862, %v4793
    %v4864 = vmax.f32 %v4863, %v4797
    %v4865 = vmax.f32 %v4864, %v4801
    %v4866 = vmax.f32 %v4865, %v4805
    %v4867 = vmax.f32 %v4866, %v4809
    %v4868 = vsel %vm3087, %v4782, -inf
    %v4869 = vsel %vm3087, %v4786, -inf
    %v4870 = vmax.f32 %v4868, %v4869
    %v4871 = vsel %vm3087, %v4790, -inf
    %v4872 = vmax.f32 %v4870, %v4871
    %v4873 = vsel %vm3087, %v4794, -inf
    %v4874 = vmax.f32 %v4872, %v4873
    %v4875 = vsel %vm3087, %v4798, -inf
    %v4876 = vmax.f32 %v4874, %v4875
    %v4877 = vsel %vm3087, %v4802, -inf
    %v4878 = vmax.f32 %v4876, %v4877
    %v4879 = vsel %vm3087, %v4806, -inf
    %v4880 = vmax.f32 %v4878, %v4879
    %v4881 = vsel %vm3087, %v4810, -inf
    %v4882 = vmax.f32 %v4880, %v4881
    %v4883 = vmul.f32 %v4779, %v4779
    %v4884 = vmul.f32 %v4780, %v4780
    %v4885 = vmul.f32 %v4781, %v4781
    %v4886 = vmul.f32 %v4782, %v4782
    %v4887 = vmul.f32 %v4783, %v4783
    %v4888 = vmul.f32 %v4784, %v4784
    %v4889 = vmul.f32 %v4785, %v4785
    %v4890 = vmul.f32 %v4786, %v4786
    %v4891 = vmul.f32 %v4787, %v4787
    %v4892 = vmul.f32 %v4788, %v4788
    %v4893 = vmul.f32 %v4789, %v4789
    %v4894 = vmul.f32 %v4790, %v4790
    %v4895 = vmul.f32 %v4791, %v4791
    %v4896 = vmul.f32 %v4792, %v4792
    %v4897 = vmul.f32 %v4793, %v4793
    %v4898 = vmul.f32 %v4794, %v4794
    %v4899 = vmul.f32 %v4795, %v4795
    %v4900 = vmul.f32 %v4796, %v4796
    %v4901 = vmul.f32 %v4797, %v4797
    %v4902 = vmul.f32 %v4798, %v4798
    %v4903 = vmul.f32 %v4799, %v4799
    %v4904 = vmul.f32 %v4800, %v4800
    %v4905 = vmul.f32 %v4801, %v4801
    %v4906 = vmul.f32 %v4802, %v4802
    %v4907 = vmul.f32 %v4803, %v4803
    %v4908 = vmul.f32 %v4804, %v4804
    %v4909 = vmul.f32 %v4805, %v4805
    %v4910 = vmul.f32 %v4806, %v4806
    %v4911 = vmul.f32 %v4807, %v4807
    %v4912 = vmul.f32 %v4808, %v4808
    %v4913 = vmul.f32 %v4809, %v4809
    %v4914 = vmul.f32 %v4810, %v4810
    %v4915 = vadd.f32 %v4883, %v4887
    %v4916 = vadd.f32 %v4915, %v4891
    %v4917 = vadd.f32 %v4916, %v4895
    %v4918 = vadd.f32 %v4917, %v4899
    %v4919 = vadd.f32 %v4918, %v4903
    %v4920 = vadd.f32 %v4919, %v4907
    %v4921 = vadd.f32 %v4920, %v4911
    %v4922 = vadd.f32 %v4884, %v4888
    %v4923 = vadd.f32 %v4922, %v4892
    %v4924 = vadd.f32 %v4923, %v4896
    %v4925 = vadd.f32 %v4924, %v4900
    %v4926 = vadd.f32 %v4925, %v4904
    %v4927 = vadd.f32 %v4926, %v4908
    %v4928 = vadd.f32 %v4927, %v4912
    %v4929 = vadd.f32 %v4885, %v4889
    %v4930 = vadd.f32 %v4929, %v4893
    %v4931 = vadd.f32 %v4930, %v4897
    %v4932 = vadd.f32 %v4931, %v4901
    %v4933 = vadd.f32 %v4932, %v4905
    %v4934 = vadd.f32 %v4933, %v4909
    %v4935 = vadd.f32 %v4934, %v4913
    %v4936 = vsel %vm3087, %v4886, 0.0
    %v4937 = vsel %vm3087, %v4890, 0.0
    %v4938 = vadd.f32 %v4936, %v4937
    %v4939 = vsel %vm3087, %v4894, 0.0
    %v4940 = vadd.f32 %v4938, %v4939
    %v4941 = vsel %vm3087, %v4898, 0.0
    %v4942 = vadd.f32 %v4940, %v4941
    %v4943 = vsel %vm3087, %v4902, 0.0
    %v4944 = vadd.f32 %v4942, %v4943
    %v4945 = vsel %vm3087, %v4906, 0.0
    %v4946 = vadd.f32 %v4944, %v4945
    %v4947 = vsel %vm3087, %v4910, 0.0
    %v4948 = vadd.f32 %v4946, %v4947
    %v4949 = vsel %vm3087, %v4914, 0.0
    %v4950 = vadd.f32 %v4948, %v4949
    %v4951 = vmul.f32 %v4817, 0.125
    %v4952 = vmul.f32 %v4824, 0.125
    %v4953 = vmul.f32 %v4831, 0.125
    %v4954 = vmul.f32 %v4846, 0.125
    %v4955 = vmul.f32 %v4921, 0.125
    %v4956 = vmul.f32 %v4928, 0.125
    %v4957 = vmul.f32 %v4935, 0.125
    %v4958 = vmul.f32 %v4950, 0.125
    %v4959 = vmul.f32 %v4951, %v4951
    %v4960 = vmul.f32 %v4952, %v4952
    %v4961 = vmul.f32 %v4953, %v4953
    %v4962 = vmul.f32 %v4954, %v4954
    %v4963 = vsub.f32 %v4955, %v4959
    %v4964 = vsub.f32 %v4956, %v4960
    %v4965 = vsub.f32 %v4957, %v4961
    %v4966 = vsub.f32 %v4958, %v4962
    %v4967 = vmax.f32 %v4963, 0.0
    %v4968 = vmax.f32 %v4964, 0.0
    %v4969 = vmax.f32 %v4965, 0.0
    %v4970 = vmax.f32 %v4966, 0.0
    %v4971 = vmul.f32 %v3739, 8.0
    %v4972 = vmul.f32 %v3740, 8.0
    %v4973 = vmul.f32 %v3741, 8.0
    %v4974 = vmul.f32 %v3742, 8.0
    %v4975 = vadd.f32 %v4817, %v4971
    %v4976 = vadd.f32 %v4824, %v4972
    %v4977 = vadd.f32 %v4831, %v4973
    %v4978 = vadd.f32 %v4846, %v4974
    %v4979 = vadd.f32 %v4853, %v3739
    %v4980 = vadd.f32 %v4860, %v3740
    %v4981 = vadd.f32 %v4867, %v3741
    %v4982 = vadd.f32 %v4882, %v3742
    %v4983 = vadd.f32 %v4967, 1e-30
    %v4984 = vadd.f32 %v4968, 1e-30
    %v4985 = vadd.f32 %v4969, 1e-30
    %v4986 = vadd.f32 %v4970, 1e-30
    %v4987 = vrsqrt.pop %v4983
    %v4988 = vmul.f32 %v4983, %v4987
    %vm4989 = vcmp.eq.f32.partialorder %v4983, inf
    %v4990 = vsel %vm4989, %v4983, %v4988
    %vm4991 = vcmp.eq.f32.partialorder %v4983, 0.0
    %v4992 = vand.u32 %v4983, 2147483648
    %v4993 = vsel %vm4991, %v4992, %v4990
    %v4994 = vrsqrt.pop %v4984
    %v4995 = vmul.f32 %v4984, %v4994
    %vm4996 = vcmp.eq.f32.partialorder %v4984, inf
    %v4997 = vsel %vm4996, %v4984, %v4995
    %vm4998 = vcmp.eq.f32.partialorder %v4984, 0.0
    %v4999 = vand.u32 %v4984, 2147483648
    %v5000 = vsel %vm4998, %v4999, %v4997
    %v5001 = vrsqrt.pop %v4985
    %v5002 = vmul.f32 %v4985, %v5001
    %vm5003 = vcmp.eq.f32.partialorder %v4985, inf
    %v5004 = vsel %vm5003, %v4985, %v5002
    %vm5005 = vcmp.eq.f32.partialorder %v4985, 0.0
    %v5006 = vand.u32 %v4985, 2147483648
    %v5007 = vsel %vm5005, %v5006, %v5004
    %v5008 = vrsqrt.pop %v4986
    %v5009 = vmul.f32 %v4986, %v5008
    %vm5010 = vcmp.eq.f32.partialorder %v4986, inf
    %v5011 = vsel %vm5010, %v4986, %v5009
    %vm5012 = vcmp.eq.f32.partialorder %v4986, 0.0
    %v5013 = vand.u32 %v4986, 2147483648
    %v5014 = vsel %vm5012, %v5013, %v5011
    %s5015 = smul.u32 4, 208
    %s5016 = smul.u32 %s5015, 3
    %s5017 = sshll.u32 %s5016, 4
    %5018 = dma.done %s555, %s5017
    %v5019 = vld [vmem:[#allocation5] sm:$0xff]
    %v5020 = vld [vmem:[#allocation5 + $0x8] sm:$0xff]
    %v5021 = vld [vmem:[#allocation5 + $0x10] sm:$0xff]
    %v5022 = vld [vmem:[#allocation5 + $0x18] sm:$0xff]
    %v5023 = vld [vmem:[#allocation5 + $0x20] sm:$0xff]
    %v5024 = vld [vmem:[#allocation5 + $0x28] sm:$0xff]
    %v5025 = vld [vmem:[#allocation5 + $0x30] sm:$0xff]
    %v5026 = vld [vmem:[#allocation5 + $0x38] sm:$0xff]
    %v5027 = vld [vmem:[#allocation5 + $0x40] sm:$0xff]
    %v5028 = vld [vmem:[#allocation5 + $0x48] sm:$0xff]
    %v5029 = vld [vmem:[#allocation5 + $0x50] sm:$0xff]
    %v5030 = vld [vmem:[#allocation5 + $0x58] sm:$0xff]
    %v5031 = vld [vmem:[#allocation5 + $0x60] sm:$0xff]
    %v5032 = vld [vmem:[#allocation5 + $0x68] sm:$0xff]
    %v5033 = vld [vmem:[#allocation5 + $0x70] sm:$0xff]
    %v5034 = vld [vmem:[#allocation5 + $0x78] sm:$0xff]
    %v5035 = vld [vmem:[#allocation5 + $0x80] sm:$0xff]
    %v5036 = vld [vmem:[#allocation5 + $0x88] sm:$0xff]
    %v5037 = vld [vmem:[#allocation5 + $0x90] sm:$0xff]
    %v5038 = vld [vmem:[#allocation5 + $0x98] sm:$0xff]
    %v5039 = vld [vmem:[#allocation5 + $0xa0] sm:$0xff]
    %v5040 = vld [vmem:[#allocation5 + $0xa8] sm:$0xff]
    %v5041 = vld [vmem:[#allocation5 + $0xb0] sm:$0xff]
    %v5042 = vld [vmem:[#allocation5 + $0xb8] sm:$0xff]
    %v5043 = vld [vmem:[#allocation5 + $0xc0] sm:$0xff]
    %v5044 = vld [vmem:[#allocation5 + $0xc8] sm:$0xff]
    %v5045 = vld [vmem:[#allocation5 + $0xd0] sm:$0xff]
    %v5046 = vld [vmem:[#allocation5 + $0xd8] sm:$0xff]
    %v5047 = vld [vmem:[#allocation5 + $0xe0] sm:$0xff]
    %v5048 = vld [vmem:[#allocation5 + $0xe8] sm:$0xff]
    %v5049 = vld [vmem:[#allocation5 + $0xf0] sm:$0xff]
    %v5050 = vld [vmem:[#allocation5 + $0xf8] sm:$0xff]
    %v5051 = vld [vmem:[#allocation5 + $0x100] sm:$0xff]
    %v5052 = vld [vmem:[#allocation5 + $0x108] sm:$0xff]
    %v5053 = vld [vmem:[#allocation5 + $0x110] sm:$0xff]
    %v5054 = vld [vmem:[#allocation5 + $0x118] sm:$0xff]
    %v5055 = vld [vmem:[#allocation5 + $0x120] sm:$0xff]
    %v5056 = vld [vmem:[#allocation5 + $0x128] sm:$0xff]
    %v5057 = vld [vmem:[#allocation5 + $0x130] sm:$0xff]
    %v5058 = vld [vmem:[#allocation5 + $0x138] sm:$0xff]
    %v5059 = vld [vmem:[#allocation5 + $0x140] sm:$0xff]
    %v5060 = vld [vmem:[#allocation5 + $0x148] sm:$0xff]
    %v5061 = vld [vmem:[#allocation5 + $0x150] sm:$0xff]
    %v5062 = vld [vmem:[#allocation5 + $0x158] sm:$0xff]
    %v5063 = vld [vmem:[#allocation5 + $0x160] sm:$0xff]
    %v5064 = vld [vmem:[#allocation5 + $0x168] sm:$0xff]
    %v5065 = vld [vmem:[#allocation5 + $0x170] sm:$0xff]
    %v5066 = vld [vmem:[#allocation5 + $0x178] sm:$0xff]
    %v5067 = vld [vmem:[#allocation5 + $0x180] sm:$0xff]
    %v5068 = vld [vmem:[#allocation5 + $0x188] sm:$0xff]
    %v5069 = vld [vmem:[#allocation5 + $0x190] sm:$0xff]
    %v5070 = vld [vmem:[#allocation5 + $0x198] sm:$0xff]
    %v5071 = vld [vmem:[#allocation5 + $0x1a0] sm:$0xff]
    %v5072 = vld [vmem:[#allocation5 + $0x1a8] sm:$0xff]
    %v5073 = vld [vmem:[#allocation5 + $0x1b0] sm:$0xff]
    %v5074 = vld [vmem:[#allocation5 + $0x1b8] sm:$0xff]
    %v5075 = vld [vmem:[#allocation5 + $0x1c0] sm:$0xff]
    %v5076 = vld [vmem:[#allocation5 + $0x1c8] sm:$0xff]
    %v5077 = vld [vmem:[#allocation5 + $0x1d0] sm:$0xff]
    %v5078 = vld [vmem:[#allocation5 + $0x1d8] sm:$0xff]
    %v5079 = vld [vmem:[#allocation5 + $0x1e0] sm:$0xff]
    %v5080 = vld [vmem:[#allocation5 + $0x1e8] sm:$0xff]
    %v5081 = vld [vmem:[#allocation5 + $0x1f0] sm:$0xff]
    %v5082 = vld [vmem:[#allocation5 + $0x1f8] sm:$0xff]
    %v5083 = vld [vmem:[#allocation5 + $0x200] sm:$0xff]
    %v5084 = vld [vmem:[#allocation5 + $0x208] sm:$0xff]
    %v5085 = vld [vmem:[#allocation5 + $0x210] sm:$0xff]
    %v5086 = vld [vmem:[#allocation5 + $0x218] sm:$0xff]
    %v5087 = vld [vmem:[#allocation5 + $0x220] sm:$0xff]
    %v5088 = vld [vmem:[#allocation5 + $0x228] sm:$0xff]
    %v5089 = vld [vmem:[#allocation5 + $0x230] sm:$0xff]
    %v5090 = vld [vmem:[#allocation5 + $0x238] sm:$0xff]
    %v5091 = vld [vmem:[#allocation5 + $0x240] sm:$0xff]
    %v5092 = vld [vmem:[#allocation5 + $0x248] sm:$0xff]
    %v5093 = vld [vmem:[#allocation5 + $0x250] sm:$0xff]
    %v5094 = vld [vmem:[#allocation5 + $0x258] sm:$0xff]
    %v5095 = vld [vmem:[#allocation5 + $0x260] sm:$0xff]
    %v5096 = vld [vmem:[#allocation5 + $0x268] sm:$0xff]
    %5097 = vmatprep.subr.bf16.mxu0 %v5092
    %5098 = vmatpush1.bf16.msra.mxu0 %v5091
    %5099 = vmatprep.subr.bf16.mxu0 %v5095
    %5100 = vmatpush1.bf16.msra.mxu0 %v5094
    %5101 = vmatprep.subr.bf16.mxu0 0
    %5102 = vmatpush1.bf16.msra.mxu0 0
    %5103 = vmatprep.subr.bf16.mxu0 0
    %5104 = vmatpush1.bf16.msra.mxu0 0
    %5105 = vmatprep.subr.bf16.mxu0 0
    %5106 = vmatpush1.bf16.msra.mxu0 0
    %5107 = vmatprep.subr.bf16.mxu0 0
    %5108 = vmatpush1.bf16.msra.mxu0 0
    %5109 = vmatprep.subr.bf16.mxu0 0
    %5110 = vmatpush1.bf16.msra.mxu0 0
    %5111 = vmatprep.subr.bf16.mxu0 0
    %5112 = vmatpush1.bf16.msra.mxu0 0
    %5113 = vmatprep.subr.bf16.mxu0 0
    %5114 = vmatpush1.bf16.msra.mxu0 0
    %5115 = vmatprep.subr.bf16.mxu0 0
    %5116 = vmatpush1.bf16.msra.mxu0 0
    %5117 = vmatprep.subr.bf16.mxu0 0
    %5118 = vmatpush1.bf16.msra.mxu0 0
    %5119 = vmatprep.subr.bf16.mxu0 0
    %5120 = vmatpush1.bf16.msra.mxu0 0
    %5121 = vmatprep.subr.bf16.mxu0 0
    %5122 = vmatpush1.bf16.msra.mxu0 0
    %5123 = vmatprep.subr.bf16.mxu0 0
    %5124 = vmatpush1.bf16.msra.mxu0 0
    %5125 = vmatprep.subr.bf16.mxu0 0
    %5126 = vmatpush1.bf16.msra.mxu0 0
    %5127 = vmatprep.subr.bf16.mxu0 0
    %5128 = vmatpush1.bf16.msra.mxu0 0
    %5129 = vmatprep.mubr.bf16.mxu0 0
    %5130 = vmatmul.mubr.bf16.gmra.mrb[0].mxu0 %v3089
    %v5131 = vpop.f32.mrb[0].mxu0
    %v5132 = vadd.f32 0.0, %v5131
    %v5133 = vpop.f32.mrb[0].mxu0
    %v5134 = vadd.f32 0.0, %v5133
    %v5135 = vpop.f32.mrb[0].mxu0
    %v5136 = vadd.f32 0.0, %v5135
    %v5137 = vpop.f32.mrb[0].mxu0
    %v5138 = vadd.f32 0.0, %v5137
    %5139 = vdwg.mxu0
    %5140 = vmatprep.subr.bf16.mxu0 0
    %5141 = vmatpush1.bf16.msra.mxu0 %v5093
    %5142 = vmatprep.subr.bf16.mxu0 0
    %5143 = vmatpush1.bf16.msra.mxu0 %v5096
    %5144 = vmatprep.subr.bf16.mxu0 0
    %5145 = vmatpush1.bf16.msra.mxu0 0
    %5146 = vmatprep.subr.bf16.mxu0 0
    %5147 = vmatpush1.bf16.msra.mxu0 0
    %5148 = vmatprep.subr.bf16.mxu0 0
    %5149 = vmatpush1.bf16.msra.mxu0 0
    %5150 = vmatprep.subr.bf16.mxu0 0
    %5151 = vmatpush1.bf16.msra.mxu0 0
    %5152 = vmatprep.subr.bf16.mxu0 0
    %5153 = vmatpush1.bf16.msra.mxu0 0
    %5154 = vmatprep.subr.bf16.mxu0 0
    %5155 = vmatpush1.bf16.msra.mxu0 0
    %5156 = vmatprep.subr.bf16.mxu0 0
    %5157 = vmatpush1.bf16.msra.mxu0 0
    %5158 = vmatprep.subr.bf16.mxu0 0
    %5159 = vmatpush1.bf16.msra.mxu0 0
    %5160 = vmatprep.subr.bf16.mxu0 0
    %5161 = vmatpush1.bf16.msra.mxu0 0
    %5162 = vmatprep.subr.bf16.mxu0 0
    %5163 = vmatpush1.bf16.msra.mxu0 0
    %5164 = vmatprep.subr.bf16.mxu0 0
    %5165 = vmatpush1.bf16.msra.mxu0 0
    %5166 = vmatprep.subr.bf16.mxu0 0
    %5167 = vmatpush1.bf16.msra.mxu0 0
    %5168 = vmatprep.subr.bf16.mxu0 0
    %5169 = vmatpush1.bf16.msra.mxu0 0
    %5170 = vmatprep.subr.bf16.mxu0 0
    %5171 = vmatpush1.bf16.msra.mxu0 0
    %5172 = vmatprep.mubr.bf16.mxu0 0
    %5173 = vmatmul.mubr.bf16.gmra.mrb[0].mxu0 %v3089
    %v5174 = vpop.f32.mrb[0].mxu0
    %v5175 = vadd.f32 0.0, %v5174
    %v5176 = vpop.f32.mrb[0].mxu0
    %v5177 = vpop.f32.mrb[0].mxu0
    %v5178 = vadd.f32 0.0, %v5177
    %v5179 = vpop.f32.mrb[0].mxu0
    %5180 = vdwg.mxu0
    %5181 = vmatprep.subr.bf16.mxu0 %v5020
    %5182 = vmatpush1.bf16.msra.mxu0 %v5019
    %5183 = vmatprep.subr.bf16.mxu0 %v5023
    %5184 = vmatpush1.bf16.msra.mxu0 %v5022
    %5185 = vmatprep.subr.bf16.mxu0 %v5026
    %5186 = vmatpush1.bf16.msra.mxu0 %v5025
    %5187 = vmatprep.subr.bf16.mxu0 %v5029
    %5188 = vmatpush1.bf16.msra.mxu0 %v5028
    %5189 = vmatprep.subr.bf16.mxu0 %v5032
    %5190 = vmatpush1.bf16.msra.mxu0 %v5031
    %5191 = vmatprep.subr.bf16.mxu0 %v5035
    %5192 = vmatpush1.bf16.msra.mxu0 %v5034
    %5193 = vmatprep.subr.bf16.mxu0 %v5038
    %5194 = vmatpush1.bf16.msra.mxu0 %v5037
    %5195 = vmatprep.subr.bf16.mxu0 %v5041
    %5196 = vmatpush1.bf16.msra.mxu0 %v5040
    %5197 = vmatprep.subr.bf16.mxu0 %v5044
    %5198 = vmatpush1.bf16.msra.mxu0 %v5043
    %5199 = vmatprep.subr.bf16.mxu0 %v5047
    %5200 = vmatpush1.bf16.msra.mxu0 %v5046
    %5201 = vmatprep.subr.bf16.mxu0 %v5050
    %5202 = vmatpush1.bf16.msra.mxu0 %v5049
    %5203 = vmatprep.subr.bf16.mxu0 %v5053
    %5204 = vmatpush1.bf16.msra.mxu0 %v5052
    %5205 = vmatprep.subr.bf16.mxu0 %v5056
    %5206 = vmatpush1.bf16.msra.mxu0 %v5055
    %5207 = vmatprep.subr.bf16.mxu0 %v5059
    %5208 = vmatpush1.bf16.msra.mxu0 %v5058
    %5209 = vmatprep.subr.bf16.mxu0 %v5062
    %5210 = vmatpush1.bf16.msra.mxu0 %v5061
    %5211 = vmatprep.subr.bf16.mxu0 %v5065
    %5212 = vmatpush1.bf16.msra.mxu0 %v5064
    %5213 = vmatprep.mubr.bf16.mxu0 %v3076
    %5214 = vmatmul.mubr.bf16.gmra.mrb[0].mxu0 %v3075
    %v5215 = vpop.f32.mrb[0].mxu0
    %v5216 = vadd.f32 %v5132, %v5215
    %v5217 = vpop.f32.mrb[0].mxu0
    %v5218 = vadd.f32 %v5134, %v5217
    %v5219 = vpop.f32.mrb[0].mxu0
    %v5220 = vadd.f32 %v5136, %v5219
    %v5221 = vpop.f32.mrb[0].mxu0
    %v5222 = vadd.f32 %v5138, %v5221
    %5223 = vdwg.mxu0
    %5224 = vmatprep.subr.bf16.mxu0 %v5068
    %5225 = vmatpush1.bf16.msra.mxu0 %v5067
    %5226 = vmatprep.subr.bf16.mxu0 %v5071
    %5227 = vmatpush1.bf16.msra.mxu0 %v5070
    %5228 = vmatprep.subr.bf16.mxu0 %v5074
    %5229 = vmatpush1.bf16.msra.mxu0 %v5073
    %5230 = vmatprep.subr.bf16.mxu0 %v5077
    %5231 = vmatpush1.bf16.msra.mxu0 %v5076
    %5232 = vmatprep.subr.bf16.mxu0 %v5080
    %5233 = vmatpush1.bf16.msra.mxu0 %v5079
    %5234 = vmatprep.subr.bf16.mxu0 %v5083
    %5235 = vmatpush1.bf16.msra.mxu0 %v5082
    %5236 = vmatprep.subr.bf16.mxu0 %v5086
    %5237 = vmatpush1.bf16.msra.mxu0 %v5085
    %5238 = vmatprep.subr.bf16.mxu0 %v5089
    %5239 = vmatpush1.bf16.msra.mxu0 %v5088
    %5240 = vmatprep.subr.bf16.mxu0 0
    %5241 = vmatpush1.bf16.msra.mxu0 0
    %5242 = vmatprep.subr.bf16.mxu0 0
    %5243 = vmatpush1.bf16.msra.mxu0 0
    %5244 = vmatprep.subr.bf16.mxu0 0
    %5245 = vmatpush1.bf16.msra.mxu0 0
    %5246 = vmatprep.subr.bf16.mxu0 0
    %5247 = vmatpush1.bf16.msra.mxu0 0
    %5248 = vmatprep.subr.bf16.mxu0 0
    %5249 = vmatpush1.bf16.msra.mxu0 0
    %5250 = vmatprep.subr.bf16.mxu0 0
    %5251 = vmatpush1.bf16.msra.mxu0 0
    %5252 = vmatprep.subr.bf16.mxu0 0
    %5253 = vmatpush1.bf16.msra.mxu0 0
    %5254 = vmatprep.subr.bf16.mxu0 0
    %5255 = vmatpush1.bf16.msra.mxu0 0
    %5256 = vmatprep.mubr.bf16.mxu0 0
    %5257 = vmatmul.mubr.bf16.gmra.mrb[0].mxu0 %v3077
    %v5258 = vpop.f32.mrb[0].mxu0
    %v5259 = vadd.f32 %v5216, %v5258
    %v5260 = vpop.f32.mrb[0].mxu0
    %v5261 = vadd.f32 %v5218, %v5260
    %v5262 = vpop.f32.mrb[0].mxu0
    %v5263 = vadd.f32 %v5220, %v5262
    %v5264 = vpop.f32.mrb[0].mxu0
    %v5265 = vadd.f32 %v5222, %v5264
    %5266 = vdwg.mxu0
    %5267 = vmatprep.subr.bf16.mxu0 0
    %5268 = vmatpush1.bf16.msra.mxu0 %v5021
    %5269 = vmatprep.subr.bf16.mxu0 0
    %5270 = vmatpush1.bf16.msra.mxu0 %v5024
    %5271 = vmatprep.subr.bf16.mxu0 0
    %5272 = vmatpush1.bf16.msra.mxu0 %v5027
    %5273 = vmatprep.subr.bf16.mxu0 0
    %5274 = vmatpush1.bf16.msra.mxu0 %v5030
    %5275 = vmatprep.subr.bf16.mxu0 0
    %5276 = vmatpush1.bf16.msra.mxu0 %v5033
    %5277 = vmatprep.subr.bf16.mxu0 0
    %5278 = vmatpush1.bf16.msra.mxu0 %v5036
    %5279 = vmatprep.subr.bf16.mxu0 0
    %5280 = vmatpush1.bf16.msra.mxu0 %v5039
    %5281 = vmatprep.subr.bf16.mxu0 0
    %5282 = vmatpush1.bf16.msra.mxu0 %v5042
    %5283 = vmatprep.subr.bf16.mxu0 0
    %5284 = vmatpush1.bf16.msra.mxu0 %v5045
    %5285 = vmatprep.subr.bf16.mxu0 0
    %5286 = vmatpush1.bf16.msra.mxu0 %v5048
    %5287 = vmatprep.subr.bf16.mxu0 0
    %5288 = vmatpush1.bf16.msra.mxu0 %v5051
    %5289 = vmatprep.subr.bf16.mxu0 0
    %5290 = vmatpush1.bf16.msra.mxu0 %v5054
    %5291 = vmatprep.subr.bf16.mxu0 0
    %5292 = vmatpush1.bf16.msra.mxu0 %v5057
    %5293 = vmatprep.subr.bf16.mxu0 0
    %5294 = vmatpush1.bf16.msra.mxu0 %v5060
    %5295 = vmatprep.subr.bf16.mxu0 0
    %5296 = vmatpush1.bf16.msra.mxu0 %v5063
    %5297 = vmatprep.subr.bf16.mxu0 0
    %5298 = vmatpush1.bf16.msra.mxu0 %v5066
    %5299 = vmatprep.mubr.bf16.mxu0 %v3076
    %5300 = vmatmul.mubr.bf16.gmra.mrb[0].mxu0 %v3075
    %v5301 = vpop.f32.mrb[0].mxu0
    %v5302 = vadd.f32 %v5175, %v5301
    %v5303 = vpop.f32.mrb[0].mxu0
    %v5304 = vpop.f32.mrb[0].mxu0
    %v5305 = vadd.f32 %v5178, %v5304
    %v5306 = vpop.f32.mrb[0].mxu0
    %5307 = vdwg.mxu0
    %5308 = vmatprep.subr.bf16.mxu0 0
    %5309 = vmatpush1.bf16.msra.mxu0 %v5069
    %5310 = vmatprep.subr.bf16.mxu0 0
    %5311 = vmatpush1.bf16.msra.mxu0 %v5072
    %5312 = vmatprep.subr.bf16.mxu0 0
    %5313 = vmatpush1.bf16.msra.mxu0 %v5075
    %5314 = vmatprep.subr.bf16.mxu0 0
    %5315 = vmatpush1.bf16.msra.mxu0 %v5078
    %5316 = vmatprep.subr.bf16.mxu0 0
    %5317 = vmatpush1.bf16.msra.mxu0 %v5081
    %5318 = vmatprep.subr.bf16.mxu0 0
    %5319 = vmatpush1.bf16.msra.mxu0 %v5084
    %5320 = vmatprep.subr.bf16.mxu0 0
    %5321 = vmatpush1.bf16.msra.mxu0 %v5087
    %5322 = vmatprep.subr.bf16.mxu0 0
    %5323 = vmatpush1.bf16.msra.mxu0 %v5090
    %5324 = vmatprep.subr.bf16.mxu0 0
    %5325 = vmatpush1.bf16.msra.mxu0 0
    %5326 = vmatprep.subr.bf16.mxu0 0
    %5327 = vmatpush1.bf16.msra.mxu0 0
    %5328 = vmatprep.subr.bf16.mxu0 0
    %5329 = vmatpush1.bf16.msra.mxu0 0
    %5330 = vmatprep.subr.bf16.mxu0 0
    %5331 = vmatpush1.bf16.msra.mxu0 0
    %5332 = vmatprep.subr.bf16.mxu0 0
    %5333 = vmatpush1.bf16.msra.mxu0 0
    %5334 = vmatprep.subr.bf16.mxu0 0
    %5335 = vmatpush1.bf16.msra.mxu0 0
    %5336 = vmatprep.subr.bf16.mxu0 0
    %5337 = vmatpush1.bf16.msra.mxu0 0
    %5338 = vmatprep.subr.bf16.mxu0 0
    %5339 = vmatpush1.bf16.msra.mxu0 0
    %5340 = vmatprep.mubr.bf16.mxu0 0
    %5341 = vmatmul.mubr.bf16.gmra.mrb[0].mxu0 %v3077
    %v5342 = vpop.f32.mrb[0].mxu0
    %v5343 = vadd.f32 %v5302, %v5342
    %v5344 = vpop.f32.mrb[0].mxu0
    %v5345 = vpop.f32.mrb[0].mxu0
    %v5346 = vadd.f32 %v5305, %v5345
    %v5347 = vpop.f32.mrb[0].mxu0
    %5348 = vdwg.mxu0
    %v5349 = vld [vmem:[#allocation5 + $0x270] sm:$0xff]
    %v5350 = vld [vmem:[#allocation5 + $0x278] sm:$0xff]
    %v5351 = vld [vmem:[#allocation5 + $0x280] sm:$0xff]
    %v5352 = vld [vmem:[#allocation5 + $0x288] sm:$0xff]
    %v5353 = vld [vmem:[#allocation5 + $0x290] sm:$0xff]
    %v5354 = vld [vmem:[#allocation5 + $0x298] sm:$0xff]
    %v5355 = vld [vmem:[#allocation5 + $0x2a0] sm:$0xff]
    %v5356 = vld [vmem:[#allocation5 + $0x2a8] sm:$0xff]
    %v5357 = vld [vmem:[#allocation5 + $0x2b0] sm:$0xff]
    %v5358 = vld [vmem:[#allocation5 + $0x2b8] sm:$0xff]
    %v5359 = vld [vmem:[#allocation5 + $0x2c0] sm:$0xff]
    %v5360 = vld [vmem:[#allocation5 + $0x2c8] sm:$0xff]
    %v5361 = vld [vmem:[#allocation5 + $0x2d0] sm:$0xff]
    %v5362 = vld [vmem:[#allocation5 + $0x2d8] sm:$0xff]
    %v5363 = vld [vmem:[#allocation5 + $0x2e0] sm:$0xff]
    %v5364 = vld [vmem:[#allocation5 + $0x2e8] sm:$0xff]
    %v5365 = vld [vmem:[#allocation5 + $0x2f0] sm:$0xff]
    %v5366 = vld [vmem:[#allocation5 + $0x2f8] sm:$0xff]
    %v5367 = vld [vmem:[#allocation5 + $0x300] sm:$0xff]
    %v5368 = vld [vmem:[#allocation5 + $0x308] sm:$0xff]
    %v5369 = vld [vmem:[#allocation5 + $0x310] sm:$0xff]
    %v5370 = vld [vmem:[#allocation5 + $0x318] sm:$0xff]
    %v5371 = vld [vmem:[#allocation5 + $0x320] sm:$0xff]
    %v5372 = vld [vmem:[#allocation5 + $0x328] sm:$0xff]
    %v5373 = vld [vmem:[#allocation5 + $0x330] sm:$0xff]
    %v5374 = vld [vmem:[#allocation5 + $0x338] sm:$0xff]
    %v5375 = vld [vmem:[#allocation5 + $0x340] sm:$0xff]
    %v5376 = vld [vmem:[#allocation5 + $0x348] sm:$0xff]
    %v5377 = vld [vmem:[#allocation5 + $0x350] sm:$0xff]
    %v5378 = vld [vmem:[#allocation5 + $0x358] sm:$0xff]
    %v5379 = vld [vmem:[#allocation5 + $0x360] sm:$0xff]
    %v5380 = vld [vmem:[#allocation5 + $0x368] sm:$0xff]
    %v5381 = vld [vmem:[#allocation5 + $0x370] sm:$0xff]
    %v5382 = vld [vmem:[#allocation5 + $0x378] sm:$0xff]
    %v5383 = vld [vmem:[#allocation5 + $0x380] sm:$0xff]
    %v5384 = vld [vmem:[#allocation5 + $0x388] sm:$0xff]
    %v5385 = vld [vmem:[#allocation5 + $0x390] sm:$0xff]
    %v5386 = vld [vmem:[#allocation5 + $0x398] sm:$0xff]
    %v5387 = vld [vmem:[#allocation5 + $0x3a0] sm:$0xff]
    %v5388 = vld [vmem:[#allocation5 + $0x3a8] sm:$0xff]
    %v5389 = vld [vmem:[#allocation5 + $0x3b0] sm:$0xff]
    %v5390 = vld [vmem:[#allocation5 + $0x3b8] sm:$0xff]
    %v5391 = vld [vmem:[#allocation5 + $0x3c0] sm:$0xff]
    %v5392 = vld [vmem:[#allocation5 + $0x3c8] sm:$0xff]
    %v5393 = vld [vmem:[#allocation5 + $0x3d0] sm:$0xff]
    %v5394 = vld [vmem:[#allocation5 + $0x3d8] sm:$0xff]
    %v5395 = vld [vmem:[#allocation5 + $0x3e0] sm:$0xff]
    %v5396 = vld [vmem:[#allocation5 + $0x3e8] sm:$0xff]
    %v5397 = vld [vmem:[#allocation5 + $0x3f0] sm:$0xff]
    %v5398 = vld [vmem:[#allocation5 + $0x3f8] sm:$0xff]
    %v5399 = vld [vmem:[#allocation5 + $0x400] sm:$0xff]
    %v5400 = vld [vmem:[#allocation5 + $0x408] sm:$0xff]
    %v5401 = vld [vmem:[#allocation5 + $0x410] sm:$0xff]
    %v5402 = vld [vmem:[#allocation5 + $0x418] sm:$0xff]
    %v5403 = vld [vmem:[#allocation5 + $0x420] sm:$0xff]
    %v5404 = vld [vmem:[#allocation5 + $0x428] sm:$0xff]
    %v5405 = vld [vmem:[#allocation5 + $0x430] sm:$0xff]
    %v5406 = vld [vmem:[#allocation5 + $0x438] sm:$0xff]
    %v5407 = vld [vmem:[#allocation5 + $0x440] sm:$0xff]
    %v5408 = vld [vmem:[#allocation5 + $0x448] sm:$0xff]
    %v5409 = vld [vmem:[#allocation5 + $0x450] sm:$0xff]
    %v5410 = vld [vmem:[#allocation5 + $0x458] sm:$0xff]
    %v5411 = vld [vmem:[#allocation5 + $0x460] sm:$0xff]
    %v5412 = vld [vmem:[#allocation5 + $0x468] sm:$0xff]
    %v5413 = vld [vmem:[#allocation5 + $0x470] sm:$0xff]
    %v5414 = vld [vmem:[#allocation5 + $0x478] sm:$0xff]
    %v5415 = vld [vmem:[#allocation5 + $0x480] sm:$0xff]
    %v5416 = vld [vmem:[#allocation5 + $0x488] sm:$0xff]
    %v5417 = vld [vmem:[#allocation5 + $0x490] sm:$0xff]
    %v5418 = vld [vmem:[#allocation5 + $0x498] sm:$0xff]
    %v5419 = vld [vmem:[#allocation5 + $0x4a0] sm:$0xff]
    %v5420 = vld [vmem:[#allocation5 + $0x4a8] sm:$0xff]
    %v5421 = vld [vmem:[#allocation5 + $0x4b0] sm:$0xff]
    %v5422 = vld [vmem:[#allocation5 + $0x4b8] sm:$0xff]
    %v5423 = vld [vmem:[#allocation5 + $0x4c0] sm:$0xff]
    %v5424 = vld [vmem:[#allocation5 + $0x4c8] sm:$0xff]
    %v5425 = vld [vmem:[#allocation5 + $0x4d0] sm:$0xff]
    %v5426 = vld [vmem:[#allocation5 + $0x4d8] sm:$0xff]
    %v5427 = vpack.c.bf16 %v4979, %v4511
    %v5428 = vpack.c.bf16 %v4980, %v4512
    %v5429 = vpack.c.bf16 %v4981, %v4513
    %v5430 = vpack.c.bf16 %v4982, %v4514
    %v5432 = vsel %vm3087, %v5430, 0
    %5434 = vmatprep.subr.bf16.mxu0 %v5350
    %5435 = vmatpush1.bf16.msra.mxu0 %v5349
    %5436 = vmatprep.subr.bf16.mxu0 %v5353
    %5437 = vmatpush1.bf16.msra.mxu0 %v5352
    %5438 = vmatprep.subr.bf16.mxu0 %v5356
    %5439 = vmatpush1.bf16.msra.mxu0 %v5355
    %5440 = vmatprep.subr.bf16.mxu0 %v5359
    %5441 = vmatpush1.bf16.msra.mxu0 %v5358
    %5442 = vmatprep.subr.bf16.mxu0 %v5362
    %5443 = vmatpush1.bf16.msra.mxu0 %v5361
    %5444 = vmatprep.subr.bf16.mxu0 %v5365
    %5445 = vmatpush1.bf16.msra.mxu0 %v5364
    %5446 = vmatprep.subr.bf16.mxu0 %v5368
    %5447 = vmatpush1.bf16.msra.mxu0 %v5367
    %5448 = vmatprep.subr.bf16.mxu0 %v5371
    %5449 = vmatpush1.bf16.msra.mxu0 %v5370
    %5450 = vmatprep.subr.bf16.mxu0 %v5374
    %5451 = vmatpush1.bf16.msra.mxu0 %v5373
    %5452 = vmatprep.subr.bf16.mxu0 %v5377
    %5453 = vmatpush1.bf16.msra.mxu0 %v5376
    %5454 = vmatprep.subr.bf16.mxu0 %v5380
    %5455 = vmatpush1.bf16.msra.mxu0 %v5379
    %5456 = vmatprep.subr.bf16.mxu0 %v5383
    %5457 = vmatpush1.bf16.msra.mxu0 %v5382
    %5458 = vmatprep.subr.bf16.mxu0 %v5386
    %5459 = vmatpush1.bf16.msra.mxu0 %v5385
    %5460 = vmatprep.subr.bf16.mxu0 %v5389
    %5461 = vmatpush1.bf16.msra.mxu0 %v5388
    %5462 = vmatprep.subr.bf16.mxu0 %v5392
    %5463 = vmatpush1.bf16.msra.mxu0 %v5391
    %5464 = vmatprep.subr.bf16.mxu0 %v5395
    %5465 = vmatpush1.bf16.msra.mxu0 %v5394
    %5466 = vmatprep.mubr.bf16.mxu0 %v5428
    %5467 = vmatmul.mubr.bf16.gmra.mrb[0].mxu0 %v5427
    %v5468 = vpop.f32.mrb[0].mxu0
    %v5469 = vadd.f32 0.0, %v5468
    %v5470 = vpop.f32.mrb[0].mxu0
    %v5471 = vadd.f32 0.0, %v5470
    %v5472 = vpop.f32.mrb[0].mxu0
    %v5473 = vadd.f32 0.0, %v5472
    %v5474 = vpop.f32.mrb[0].mxu0
    %v5475 = vadd.f32 0.0, %v5474
    %5476 = vdwg.mxu0
    %5477 = vmatprep.subr.bf16.mxu0 %v5398
    %5478 = vmatpush1.bf16.msra.mxu0 %v5397
    %5479 = vmatprep.subr.bf16.mxu0 %v5401
    %5480 = vmatpush1.bf16.msra.mxu0 %v5400
    %5481 = vmatprep.subr.bf16.mxu0 %v5404
    %5482 = vmatpush1.bf16.msra.mxu0 %v5403
    %5483 = vmatprep.subr.bf16.mxu0 %v5407
    %5484 = vmatpush1.bf16.msra.mxu0 %v5406
    %5485 = vmatprep.subr.bf16.mxu0 %v5410
    %5486 = vmatpush1.bf16.msra.mxu0 %v5409
    %5487 = vmatprep.subr.bf16.mxu0 %v5413
    %5488 = vmatpush1.bf16.msra.mxu0 %v5412
    %5489 = vmatprep.subr.bf16.mxu0 %v5416
    %5490 = vmatpush1.bf16.msra.mxu0 %v5415
    %5491 = vmatprep.subr.bf16.mxu0 %v5419
    %5492 = vmatpush1.bf16.msra.mxu0 %v5418
    %5493 = vmatprep.subr.bf16.mxu0 %v5422
    %5494 = vmatpush1.bf16.msra.mxu0 %v5421
    %5495 = vmatprep.subr.bf16.mxu0 %v5425
    %5496 = vmatpush1.bf16.msra.mxu0 %v5424
    %5497 = vmatprep.subr.bf16.mxu0 0
    %5498 = vmatpush1.bf16.msra.mxu0 0
    %5499 = vmatprep.subr.bf16.mxu0 0
    %5500 = vmatpush1.bf16.msra.mxu0 0
    %5501 = vmatprep.subr.bf16.mxu0 0
    %5502 = vmatpush1.bf16.msra.mxu0 0
    %5503 = vmatprep.subr.bf16.mxu0 0
    %5504 = vmatpush1.bf16.msra.mxu0 0
    %5505 = vmatprep.subr.bf16.mxu0 0
    %5506 = vmatpush1.bf16.msra.mxu0 0
    %5507 = vmatprep.subr.bf16.mxu0 0
    %5508 = vmatpush1.bf16.msra.mxu0 0
    %5509 = vmatprep.mubr.bf16.mxu0 %v5432
    %5510 = vmatmul.mubr.bf16.gmra.mrb[0].mxu0 %v5429
    %v5511 = vpop.f32.mrb[0].mxu0
    %v5512 = vadd.f32 %v5469, %v5511
    %v5513 = vpop.f32.mrb[0].mxu0
    %v5514 = vadd.f32 %v5471, %v5513
    %v5515 = vpop.f32.mrb[0].mxu0
    %v5516 = vadd.f32 %v5473, %v5515
    %v5517 = vpop.f32.mrb[0].mxu0
    %v5518 = vadd.f32 %v5475, %v5517
    %5519 = vdwg.mxu0
    %5520 = vmatprep.subr.bf16.mxu0 0
    %5521 = vmatpush1.bf16.msra.mxu0 %v5351
    %5522 = vmatprep.subr.bf16.mxu0 0
    %5523 = vmatpush1.bf16.msra.mxu0 %v5354
    %5524 = vmatprep.subr.bf16.mxu0 0
    %5525 = vmatpush1.bf16.msra.mxu0 %v5357
    %5526 = vmatprep.subr.bf16.mxu0 0
    %5527 = vmatpush1.bf16.msra.mxu0 %v5360
    %5528 = vmatprep.subr.bf16.mxu0 0
    %5529 = vmatpush1.bf16.msra.mxu0 %v5363
    %5530 = vmatprep.subr.bf16.mxu0 0
    %5531 = vmatpush1.bf16.msra.mxu0 %v5366
    %5532 = vmatprep.subr.bf16.mxu0 0
    %5533 = vmatpush1.bf16.msra.mxu0 %v5369
    %5534 = vmatprep.subr.bf16.mxu0 0
    %5535 = vmatpush1.bf16.msra.mxu0 %v5372
    %5536 = vmatprep.subr.bf16.mxu0 0
    %5537 = vmatpush1.bf16.msra.mxu0 %v5375
    %5538 = vmatprep.subr.bf16.mxu0 0
    %5539 = vmatpush1.bf16.msra.mxu0 %v5378
    %5540 = vmatprep.subr.bf16.mxu0 0
    %5541 = vmatpush1.bf16.msra.mxu0 %v5381
    %5542 = vmatprep.subr.bf16.mxu0 0
    %5543 = vmatpush1.bf16.msra.mxu0 %v5384
    %5544 = vmatprep.subr.bf16.mxu0 0
    %5545 = vmatpush1.bf16.msra.mxu0 %v5387
    %5546 = vmatprep.subr.bf16.mxu0 0
    %5547 = vmatpush1.bf16.msra.mxu0 %v5390
    %5548 = vmatprep.subr.bf16.mxu0 0
    %5549 = vmatpush1.bf16.msra.mxu0 %v5393
    %5550 = vmatprep.subr.bf16.mxu0 0
    %5551 = vmatpush1.bf16.msra.mxu0 %v5396
    %5552 = vmatprep.mubr.bf16.mxu0 %v5428
    %5553 = vmatmul.mubr.bf16.gmra.mrb[0].mxu0 %v5427
    %v5554 = vpop.f32.mrb[0].mxu0
    %v5555 = vadd.f32 0.0, %v5554
    %v5556 = vpop.f32.mrb[0].mxu0
    %v5557 = vpop.f32.mrb[0].mxu0
    %v5558 = vadd.f32 0.0, %v5557
    %v5559 = vpop.f32.mrb[0].mxu0
    %5560 = vdwg.mxu0
    %5561 = vmatprep.subr.bf16.mxu0 0
    %5562 = vmatpush1.bf16.msra.mxu0 %v5399
    %5563 = vmatprep.subr.bf16.mxu0 0
    %5564 = vmatpush1.bf16.msra.mxu0 %v5402
    %5565 = vmatprep.subr.bf16.mxu0 0
    %5566 = vmatpush1.bf16.msra.mxu0 %v5405
    %5567 = vmatprep.subr.bf16.mxu0 0
    %5568 = vmatpush1.bf16.msra.mxu0 %v5408
    %5569 = vmatprep.subr.bf16.mxu0 0
    %5570 = vmatpush1.bf16.msra.mxu0 %v5411
    %5571 = vmatprep.subr.bf16.mxu0 0
    %5572 = vmatpush1.bf16.msra.mxu0 %v5414
    %5573 = vmatprep.subr.bf16.mxu0 0
    %5574 = vmatpush1.bf16.msra.mxu0 %v5417
    %5575 = vmatprep.subr.bf16.mxu0 0
    %5576 = vmatpush1.bf16.msra.mxu0 %v5420
    %5577 = vmatprep.subr.bf16.mxu0 0
    %5578 = vmatpush1.bf16.msra.mxu0 %v5423
    %5579 = vmatprep.subr.bf16.mxu0 0
    %5580 = vmatpush1.bf16.msra.mxu0 %v5426
    %5581 = vmatprep.subr.bf16.mxu0 0
    %5582 = vmatpush1.bf16.msra.mxu0 0
    %5583 = vmatprep.subr.bf16.mxu0 0
    %5584 = vmatpush1.bf16.msra.mxu0 0
    %5585 = vmatprep.subr.bf16.mxu0 0
    %5586 = vmatpush1.bf16.msra.mxu0 0
    %5587 = vmatprep.subr.bf16.mxu0 0
    %5588 = vmatpush1.bf16.msra.mxu0 0
    %5589 = vmatprep.subr.bf16.mxu0 0
    %5590 = vmatpush1.bf16.msra.mxu0 0
    %5591 = vmatprep.subr.bf16.mxu0 0
    %5592 = vmatpush1.bf16.msra.mxu0 0
    %5593 = vmatprep.mubr.bf16.mxu0 %v5432
    %5594 = vmatmul.mubr.bf16.gmra.mrb[0].mxu0 %v5429
    %v5595 = vpop.f32.mrb[0].mxu0
    %v5596 = vadd.f32 %v5555, %v5595
    %v5597 = vpop.f32.mrb[0].mxu0
    %v5598 = vpop.f32.mrb[0].mxu0
    %v5599 = vadd.f32 %v5558, %v5598
    %v5600 = vpop.f32.mrb[0].mxu0
    %5601 = vdwg.mxu0
    %v5602 = vadd.f32 %v5259, %v5512
    %v5603 = vadd.f32 %v5261, %v5514
    %v5604 = vadd.f32 %v5343, %v5596
    %v5605 = vadd.f32 %v5263, %v5516
    %v5606 = vadd.f32 %v5265, %v5518
    %v5607 = vadd.f32 %v5346, %v5599
    %v5608 = vld [vmem:[#allocation5 + $0x4e0] sm:$0xff]
    %v5609 = vld [vmem:[#allocation5 + $0x4e8] sm:$0xff]
    %v5610 = vld [vmem:[#allocation5 + $0x4f0] sm:$0xff]
    %v5611 = vld [vmem:[#allocation5 + $0x4f8] sm:$0xff]
    %v5612 = vld [vmem:[#allocation5 + $0x500] sm:$0xff]
    %v5613 = vld [vmem:[#allocation5 + $0x508] sm:$0xff]
    %v5614 = vld [vmem:[#allocation5 + $0x510] sm:$0xff]
    %v5615 = vld [vmem:[#allocation5 + $0x518] sm:$0xff]
    %v5616 = vld [vmem:[#allocation5 + $0x520] sm:$0xff]
    %v5617 = vld [vmem:[#allocation5 + $0x528] sm:$0xff]
    %v5618 = vld [vmem:[#allocation5 + $0x530] sm:$0xff]
    %v5619 = vld [vmem:[#allocation5 + $0x538] sm:$0xff]
    %v5620 = vld [vmem:[#allocation5 + $0x540] sm:$0xff]
    %v5621 = vld [vmem:[#allocation5 + $0x548] sm:$0xff]
    %v5622 = vld [vmem:[#allocation5 + $0x550] sm:$0xff]
    %v5623 = vld [vmem:[#allocation5 + $0x558] sm:$0xff]
    %v5624 = vld [vmem:[#allocation5 + $0x560] sm:$0xff]
    %v5625 = vld [vmem:[#allocation5 + $0x568] sm:$0xff]
    %v5626 = vld [vmem:[#allocation5 + $0x570] sm:$0xff]
    %v5627 = vld [vmem:[#allocation5 + $0x578] sm:$0xff]
    %v5628 = vld [vmem:[#allocation5 + $0x580] sm:$0xff]
    %v5629 = vld [vmem:[#allocation5 + $0x588] sm:$0xff]
    %v5630 = vld [vmem:[#allocation5 + $0x590] sm:$0xff]
    %v5631 = vld [vmem:[#allocation5 + $0x598] sm:$0xff]
    %v5632 = vld [vmem:[#allocation5 + $0x5a0] sm:$0xff]
    %v5633 = vld [vmem:[#allocation5 + $0x5a8] sm:$0xff]
    %v5634 = vld [vmem:[#allocation5 + $0x5b0] sm:$0xff]
    %v5635 = vld [vmem:[#allocation5 + $0x5b8] sm:$0xff]
    %v5636 = vld [vmem:[#allocation5 + $0x5c0] sm:$0xff]
    %v5637 = vld [vmem:[#allocation5 + $0x5c8] sm:$0xff]
    %v5638 = vld [vmem:[#allocation5 + $0x5d0] sm:$0xff]
    %v5639 = vld [vmem:[#allocation5 + $0x5d8] sm:$0xff]
    %v5640 = vld [vmem:[#allocation5 + $0x5e0] sm:$0xff]
    %v5641 = vld [vmem:[#allocation5 + $0x5e8] sm:$0xff]
    %v5642 = vld [vmem:[#allocation5 + $0x5f0] sm:$0xff]
    %v5643 = vld [vmem:[#allocation5 + $0x5f8] sm:$0xff]
    %v5644 = vld [vmem:[#allocation5 + $0x600] sm:$0xff]
    %v5645 = vld [vmem:[#allocation5 + $0x608] sm:$0xff]
    %v5646 = vld [vmem:[#allocation5 + $0x610] sm:$0xff]
    %v5647 = vld [vmem:[#allocation5 + $0x618] sm:$0xff]
    %v5648 = vld [vmem:[#allocation5 + $0x620] sm:$0xff]
    %v5649 = vld [vmem:[#allocation5 + $0x628] sm:$0xff]
    %v5650 = vld [vmem:[#allocation5 + $0x630] sm:$0xff]
    %v5651 = vld [vmem:[#allocation5 + $0x638] sm:$0xff]
    %v5652 = vld [vmem:[#allocation5 + $0x640] sm:$0xff]
    %v5653 = vld [vmem:[#allocation5 + $0x648] sm:$0xff]
    %v5654 = vld [vmem:[#allocation5 + $0x650] sm:$0xff]
    %v5655 = vld [vmem:[#allocation5 + $0x658] sm:$0xff]
    %v5656 = vld [vmem:[#allocation5 + $0x660] sm:$0xff]
    %v5657 = vld [vmem:[#allocation5 + $0x668] sm:$0xff]
    %v5658 = vld [vmem:[#allocation5 + $0x670] sm:$0xff]
    %v5659 = vld [vmem:[#allocation5 + $0x678] sm:$0xff]
    %v5660 = vld [vmem:[#allocation5 + $0x680] sm:$0xff]
    %v5661 = vld [vmem:[#allocation5 + $0x688] sm:$0xff]
    %v5662 = vld [vmem:[#allocation5 + $0x690] sm:$0xff]
    %v5663 = vld [vmem:[#allocation5 + $0x698] sm:$0xff]
    %v5664 = vld [vmem:[#allocation5 + $0x6a0] sm:$0xff]
    %v5665 = vld [vmem:[#allocation5 + $0x6a8] sm:$0xff]
    %v5666 = vld [vmem:[#allocation5 + $0x6b0] sm:$0xff]
    %v5667 = vld [vmem:[#allocation5 + $0x6b8] sm:$0xff]
    %v5668 = vld [vmem:[#allocation5 + $0x6c0] sm:$0xff]
    %v5669 = vld [vmem:[#allocation5 + $0x6c8] sm:$0xff]
    %v5670 = vld [vmem:[#allocation5 + $0x6d0] sm:$0xff]
    %v5671 = vld [vmem:[#allocation5 + $0x6d8] sm:$0xff]
    %v5672 = vld [vmem:[#allocation5 + $0x6e0] sm:$0xff]
    %v5673 = vld [vmem:[#allocation5 + $0x6e8] sm:$0xff]
    %v5674 = vld [vmem:[#allocation5 + $0x6f0] sm:$0xff]
    %v5675 = vld [vmem:[#allocation5 + $0x6f8] sm:$0xff]
    %v5676 = vld [vmem:[#allocation5 + $0x700] sm:$0xff]
    %v5677 = vld [vmem:[#allocation5 + $0x708] sm:$0xff]
    %v5678 = vld [vmem:[#allocation5 + $0x710] sm:$0xff]
    %v5679 = vld [vmem:[#allocation5 + $0x718] sm:$0xff]
    %v5680 = vld [vmem:[#allocation5 + $0x720] sm:$0xff]
    %v5681 = vld [vmem:[#allocation5 + $0x728] sm:$0xff]
    %v5682 = vld [vmem:[#allocation5 + $0x730] sm:$0xff]
    %v5683 = vld [vmem:[#allocation5 + $0x738] sm:$0xff]
    %v5684 = vld [vmem:[#allocation5 + $0x740] sm:$0xff]
    %v5685 = vld [vmem:[#allocation5 + $0x748] sm:$0xff]
    %v5686 = vpack.c.bf16 %v4975, %v4507
    %v5687 = vpack.c.bf16 %v4976, %v4508
    %v5688 = vpack.c.bf16 %v4977, %v4509
    %v5689 = vpack.c.bf16 %v4978, %v4510
    %v5691 = vsel %vm3087, %v5689, 0
    %5693 = vmatprep.subr.bf16.mxu0 %v5609
    %5694 = vmatpush1.bf16.msra.mxu0 %v5608
    %5695 = vmatprep.subr.bf16.mxu0 %v5612
    %5696 = vmatpush1.bf16.msra.mxu0 %v5611
    %5697 = vmatprep.subr.bf16.mxu0 %v5615
    %5698 = vmatpush1.bf16.msra.mxu0 %v5614
    %5699 = vmatprep.subr.bf16.mxu0 %v5618
    %5700 = vmatpush1.bf16.msra.mxu0 %v5617
    %5701 = vmatprep.subr.bf16.mxu0 %v5621
    %5702 = vmatpush1.bf16.msra.mxu0 %v5620
    %5703 = vmatprep.subr.bf16.mxu0 %v5624
    %5704 = vmatpush1.bf16.msra.mxu0 %v5623
    %5705 = vmatprep.subr.bf16.mxu0 %v5627
    %5706 = vmatpush1.bf16.msra.mxu0 %v5626
    %5707 = vmatprep.subr.bf16.mxu0 %v5630
    %5708 = vmatpush1.bf16.msra.mxu0 %v5629
    %5709 = vmatprep.subr.bf16.mxu0 %v5633
    %5710 = vmatpush1.bf16.msra.mxu0 %v5632
    %5711 = vmatprep.subr.bf16.mxu0 %v5636
    %5712 = vmatpush1.bf16.msra.mxu0 %v5635
    %5713 = vmatprep.subr.bf16.mxu0 %v5639
    %5714 = vmatpush1.bf16.msra.mxu0 %v5638
    %5715 = vmatprep.subr.bf16.mxu0 %v5642
    %5716 = vmatpush1.bf16.msra.mxu0 %v5641
    %5717 = vmatprep.subr.bf16.mxu0 %v5645
    %5718 = vmatpush1.bf16.msra.mxu0 %v5644
    %5719 = vmatprep.subr.bf16.mxu0 %v5648
    %5720 = vmatpush1.bf16.msra.mxu0 %v5647
    %5721 = vmatprep.subr.bf16.mxu0 %v5651
    %5722 = vmatpush1.bf16.msra.mxu0 %v5650
    %5723 = vmatprep.subr.bf16.mxu0 %v5654
    %5724 = vmatpush1.bf16.msra.mxu0 %v5653
    %5725 = vmatprep.mubr.bf16.mxu0 %v5687
    %5726 = vmatmul.mubr.bf16.gmra.mrb[0].mxu0 %v5686
    %v5727 = vpop.f32.mrb[0].mxu0
    %v5728 = vadd.f32 0.0, %v5727
    %v5729 = vpop.f32.mrb[0].mxu0
    %v5730 = vadd.f32 0.0, %v5729
    %v5731 = vpop.f32.mrb[0].mxu0
    %v5732 = vadd.f32 0.0, %v5731
    %v5733 = vpop.f32.mrb[0].mxu0
    %v5734 = vadd.f32 0.0, %v5733
    %5735 = vdwg.mxu0
    %5736 = vmatprep.subr.bf16.mxu0 %v5657
    %5737 = vmatpush1.bf16.msra.mxu0 %v5656
    %5738 = vmatprep.subr.bf16.mxu0 %v5660
    %5739 = vmatpush1.bf16.msra.mxu0 %v5659
    %5740 = vmatprep.subr.bf16.mxu0 %v5663
    %5741 = vmatpush1.bf16.msra.mxu0 %v5662
    %5742 = vmatprep.subr.bf16.mxu0 %v5666
    %5743 = vmatpush1.bf16.msra.mxu0 %v5665
    %5744 = vmatprep.subr.bf16.mxu0 %v5669
    %5745 = vmatpush1.bf16.msra.mxu0 %v5668
    %5746 = vmatprep.subr.bf16.mxu0 %v5672
    %5747 = vmatpush1.bf16.msra.mxu0 %v5671
    %5748 = vmatprep.subr.bf16.mxu0 %v5675
    %5749 = vmatpush1.bf16.msra.mxu0 %v5674
    %5750 = vmatprep.subr.bf16.mxu0 %v5678
    %5751 = vmatpush1.bf16.msra.mxu0 %v5677
    %5752 = vmatprep.subr.bf16.mxu0 %v5681
    %5753 = vmatpush1.bf16.msra.mxu0 %v5680
    %5754 = vmatprep.subr.bf16.mxu0 %v5684
    %5755 = vmatpush1.bf16.msra.mxu0 %v5683
    %5756 = vmatprep.subr.bf16.mxu0 0
    %5757 = vmatpush1.bf16.msra.mxu0 0
    %5758 = vmatprep.subr.bf16.mxu0 0
    %5759 = vmatpush1.bf16.msra.mxu0 0
    %5760 = vmatprep.subr.bf16.mxu0 0
    %5761 = vmatpush1.bf16.msra.mxu0 0
    %5762 = vmatprep.subr.bf16.mxu0 0
    %5763 = vmatpush1.bf16.msra.mxu0 0
    %5764 = vmatprep.subr.bf16.mxu0 0
    %5765 = vmatpush1.bf16.msra.mxu0 0
    %5766 = vmatprep.subr.bf16.mxu0 0
    %5767 = vmatpush1.bf16.msra.mxu0 0
    %5768 = vmatprep.mubr.bf16.mxu0 %v5691
    %5769 = vmatmul.mubr.bf16.gmra.mrb[0].mxu0 %v5688
    %v5770 = vpop.f32.mrb[0].mxu0
    %v5771 = vadd.f32 %v5728, %v5770
    %v5772 = vpop.f32.mrb[0].mxu0
    %v5773 = vadd.f32 %v5730, %v5772
    %v5774 = vpop.f32.mrb[0].mxu0
    %v5775 = vadd.f32 %v5732, %v5774
    %v5776 = vpop.f32.mrb[0].mxu0
    %v5777 = vadd.f32 %v5734, %v5776
    %5778 = vdwg.mxu0
    %5779 = vmatprep.subr.bf16.mxu0 0
    %5780 = vmatpush1.bf16.msra.mxu0 %v5610
    %5781 = vmatprep.subr.bf16.mxu0 0
    %5782 = vmatpush1.bf16.msra.mxu0 %v5613
    %5783 = vmatprep.subr.bf16.mxu0 0
    %5784 = vmatpush1.bf16.msra.mxu0 %v5616
    %5785 = vmatprep.subr.bf16.mxu0 0
    %5786 = vmatpush1.bf16.msra.mxu0 %v5619
    %5787 = vmatprep.subr.bf16.mxu0 0
    %5788 = vmatpush1.bf16.msra.mxu0 %v5622
    %5789 = vmatprep.subr.bf16.mxu0 0
    %5790 = vmatpush1.bf16.msra.mxu0 %v5625
    %5791 = vmatprep.subr.bf16.mxu0 0
    %5792 = vmatpush1.bf16.msra.mxu0 %v5628
    %5793 = vmatprep.subr.bf16.mxu0 0
    %5794 = vmatpush1.bf16.msra.mxu0 %v5631
    %5795 = vmatprep.subr.bf16.mxu0 0
    %5796 = vmatpush1.bf16.msra.mxu0 %v5634
    %5797 = vmatprep.subr.bf16.mxu0 0
    %5798 = vmatpush1.bf16.msra.mxu0 %v5637
    %5799 = vmatprep.subr.bf16.mxu0 0
    %5800 = vmatpush1.bf16.msra.mxu0 %v5640
    %5801 = vmatprep.subr.bf16.mxu0 0
    %5802 = vmatpush1.bf16.msra.mxu0 %v5643
    %5803 = vmatprep.subr.bf16.mxu0 0
    %5804 = vmatpush1.bf16.msra.mxu0 %v5646
    %5805 = vmatprep.subr.bf16.mxu0 0
    %5806 = vmatpush1.bf16.msra.mxu0 %v5649
    %5807 = vmatprep.subr.bf16.mxu0 0
    %5808 = vmatpush1.bf16.msra.mxu0 %v5652
    %5809 = vmatprep.subr.bf16.mxu0 0
    %5810 = vmatpush1.bf16.msra.mxu0 %v5655
    %5811 = vmatprep.mubr.bf16.mxu0 %v5687
    %5812 = vmatmul.mubr.bf16.gmra.mrb[0].mxu0 %v5686
    %v5813 = vpop.f32.mrb[0].mxu0
    %v5814 = vadd.f32 0.0, %v5813
    %v5815 = vpop.f32.mrb[0].mxu0
    %v5816 = vpop.f32.mrb[0].mxu0
    %v5817 = vadd.f32 0.0, %v5816
    %v5818 = vpop.f32.mrb[0].mxu0
    %5819 = vdwg.mxu0
    %5820 = vmatprep.subr.bf16.mxu0 0
    %5821 = vmatpush1.bf16.msra.mxu0 %v5658
    %5822 = vmatprep.subr.bf16.mxu0 0
    %5823 = vmatpush1.bf16.msra.mxu0 %v5661
    %5824 = vmatprep.subr.bf16.mxu0 0
    %5825 = vmatpush1.bf16.msra.mxu0 %v5664
    %5826 = vmatprep.subr.bf16.mxu0 0
    %5827 = vmatpush1.bf16.msra.mxu0 %v5667
    %5828 = vmatprep.subr.bf16.mxu0 0
    %5829 = vmatpush1.bf16.msra.mxu0 %v5670
    %5830 = vmatprep.subr.bf16.mxu0 0
    %5831 = vmatpush1.bf16.msra.mxu0 %v5673
    %5832 = vmatprep.subr.bf16.mxu0 0
    %5833 = vmatpush1.bf16.msra.mxu0 %v5676
    %5834 = vmatprep.subr.bf16.mxu0 0
    %5835 = vmatpush1.bf16.msra.mxu0 %v5679
    %5836 = vmatprep.subr.bf16.mxu0 0
    %5837 = vmatpush1.bf16.msra.mxu0 %v5682
    %5838 = vmatprep.subr.bf16.mxu0 0
    %5839 = vmatpush1.bf16.msra.mxu0 %v5685
    %5840 = vmatprep.subr.bf16.mxu0 0
    %5841 = vmatpush1.bf16.msra.mxu0 0
    %5842 = vmatprep.subr.bf16.mxu0 0
    %5843 = vmatpush1.bf16.msra.mxu0 0
    %5844 = vmatprep.subr.bf16.mxu0 0
    %5845 = vmatpush1.bf16.msra.mxu0 0
    %5846 = vmatprep.subr.bf16.mxu0 0
    %5847 = vmatpush1.bf16.msra.mxu0 0
    %5848 = vmatprep.subr.bf16.mxu0 0
    %5849 = vmatpush1.bf16.msra.mxu0 0
    %5850 = vmatprep.subr.bf16.mxu0 0
    %5851 = vmatpush1.bf16.msra.mxu0 0
    %5852 = vmatprep.mubr.bf16.mxu0 %v5691
    %5853 = vmatmul.mubr.bf16.gmra.mrb[0].mxu0 %v5688
    %v5854 = vpop.f32.mrb[0].mxu0
    %v5855 = vadd.f32 %v5814, %v5854
    %v5856 = vpop.f32.mrb[0].mxu0
    %v5857 = vpop.f32.mrb[0].mxu0
    %v5858 = vadd.f32 %v5817, %v5857
    %v5859 = vpop.f32.mrb[0].mxu0
    %5860 = vdwg.mxu0
    %v5861 = vadd.f32 %v5602, %v5771
    %v5862 = vadd.f32 %v5603, %v5773
    %v5863 = vadd.f32 %v5604, %v5855
    %v5864 = vadd.f32 %v5605, %v5775
    %v5865 = vadd.f32 %v5606, %v5777
    %v5866 = vadd.f32 %v5607, %v5858
    %v5867 = vld [vmem:[#allocation5 + $0x750] sm:$0xff]
    %v5868 = vld [vmem:[#allocation5 + $0x758] sm:$0xff]
    %v5869 = vld [vmem:[#allocation5 + $0x760] sm:$0xff]
    %v5870 = vld [vmem:[#allocation5 + $0x768] sm:$0xff]
    %v5871 = vld [vmem:[#allocation5 + $0x770] sm:$0xff]
    %v5872 = vld [vmem:[#allocation5 + $0x778] sm:$0xff]
    %v5873 = vld [vmem:[#allocation5 + $0x780] sm:$0xff]
    %v5874 = vld [vmem:[#allocation5 + $0x788] sm:$0xff]
    %v5875 = vld [vmem:[#allocation5 + $0x790] sm:$0xff]
    %v5876 = vld [vmem:[#allocation5 + $0x798] sm:$0xff]
    %v5877 = vld [vmem:[#allocation5 + $0x7a0] sm:$0xff]
    %v5878 = vld [vmem:[#allocation5 + $0x7a8] sm:$0xff]
    %v5879 = vld [vmem:[#allocation5 + $0x7b0] sm:$0xff]
    %v5880 = vld [vmem:[#allocation5 + $0x7b8] sm:$0xff]
    %v5881 = vld [vmem:[#allocation5 + $0x7c0] sm:$0xff]
    %v5882 = vld [vmem:[#allocation5 + $0x7c8] sm:$0xff]
    %v5883 = vld [vmem:[#allocation5 + $0x7d0] sm:$0xff]
    %v5884 = vld [vmem:[#allocation5 + $0x7d8] sm:$0xff]
    %v5885 = vld [vmem:[#allocation5 + $0x7e0] sm:$0xff]
    %v5886 = vld [vmem:[#allocation5 + $0x7e8] sm:$0xff]
    %v5887 = vld [vmem:[#allocation5 + $0x7f0] sm:$0xff]
    %v5888 = vld [vmem:[#allocation5 + $0x7f8] sm:$0xff]
    %v5889 = vld [vmem:[#allocation5 + $0x800] sm:$0xff]
    %v5890 = vld [vmem:[#allocation5 + $0x808] sm:$0xff]
    %v5891 = vld [vmem:[#allocation5 + $0x810] sm:$0xff]
    %v5892 = vld [vmem:[#allocation5 + $0x818] sm:$0xff]
    %v5893 = vld [vmem:[#allocation5 + $0x820] sm:$0xff]
    %v5894 = vld [vmem:[#allocation5 + $0x828] sm:$0xff]
    %v5895 = vld [vmem:[#allocation5 + $0x830] sm:$0xff]
    %v5896 = vld [vmem:[#allocation5 + $0x838] sm:$0xff]
    %v5897 = vld [vmem:[#allocation5 + $0x840] sm:$0xff]
    %v5898 = vld [vmem:[#allocation5 + $0x848] sm:$0xff]
    %v5899 = vld [vmem:[#allocation5 + $0x850] sm:$0xff]
    %v5900 = vld [vmem:[#allocation5 + $0x858] sm:$0xff]
    %v5901 = vld [vmem:[#allocation5 + $0x860] sm:$0xff]
    %v5902 = vld [vmem:[#allocation5 + $0x868] sm:$0xff]
    %v5903 = vld [vmem:[#allocation5 + $0x870] sm:$0xff]
    %v5904 = vld [vmem:[#allocation5 + $0x878] sm:$0xff]
    %v5905 = vld [vmem:[#allocation5 + $0x880] sm:$0xff]
    %v5906 = vld [vmem:[#allocation5 + $0x888] sm:$0xff]
    %v5907 = vld [vmem:[#allocation5 + $0x890] sm:$0xff]
    %v5908 = vld [vmem:[#allocation5 + $0x898] sm:$0xff]
    %v5909 = vld [vmem:[#allocation5 + $0x8a0] sm:$0xff]
    %v5910 = vld [vmem:[#allocation5 + $0x8a8] sm:$0xff]
    %v5911 = vld [vmem:[#allocation5 + $0x8b0] sm:$0xff]
    %v5912 = vld [vmem:[#allocation5 + $0x8b8] sm:$0xff]
    %v5913 = vld [vmem:[#allocation5 + $0x8c0] sm:$0xff]
    %v5914 = vld [vmem:[#allocation5 + $0x8c8] sm:$0xff]
    %v5915 = vld [vmem:[#allocation5 + $0x8d0] sm:$0xff]
    %v5916 = vld [vmem:[#allocation5 + $0x8d8] sm:$0xff]
    %v5917 = vld [vmem:[#allocation5 + $0x8e0] sm:$0xff]
    %v5918 = vld [vmem:[#allocation5 + $0x8e8] sm:$0xff]
    %v5919 = vld [vmem:[#allocation5 + $0x8f0] sm:$0xff]
    %v5920 = vld [vmem:[#allocation5 + $0x8f8] sm:$0xff]
    %v5921 = vld [vmem:[#allocation5 + $0x900] sm:$0xff]
    %v5922 = vld [vmem:[#allocation5 + $0x908] sm:$0xff]
    %v5923 = vld [vmem:[#allocation5 + $0x910] sm:$0xff]
    %v5924 = vld [vmem:[#allocation5 + $0x918] sm:$0xff]
    %v5925 = vld [vmem:[#allocation5 + $0x920] sm:$0xff]
    %v5926 = vld [vmem:[#allocation5 + $0x928] sm:$0xff]
    %v5927 = vld [vmem:[#allocation5 + $0x930] sm:$0xff]
    %v5928 = vld [vmem:[#allocation5 + $0x938] sm:$0xff]
    %v5929 = vld [vmem:[#allocation5 + $0x940] sm:$0xff]
    %v5930 = vld [vmem:[#allocation5 + $0x948] sm:$0xff]
    %v5931 = vld [vmem:[#allocation5 + $0x950] sm:$0xff]
    %v5932 = vld [vmem:[#allocation5 + $0x958] sm:$0xff]
    %v5933 = vld [vmem:[#allocation5 + $0x960] sm:$0xff]
    %v5934 = vld [vmem:[#allocation5 + $0x968] sm:$0xff]
    %v5935 = vld [vmem:[#allocation5 + $0x970] sm:$0xff]
    %v5936 = vld [vmem:[#allocation5 + $0x978] sm:$0xff]
    %v5937 = vld [vmem:[#allocation5 + $0x980] sm:$0xff]
    %v5938 = vld [vmem:[#allocation5 + $0x988] sm:$0xff]
    %v5939 = vld [vmem:[#allocation5 + $0x990] sm:$0xff]
    %v5940 = vld [vmem:[#allocation5 + $0x998] sm:$0xff]
    %v5941 = vld [vmem:[#allocation5 + $0x9a0] sm:$0xff]
    %v5942 = vld [vmem:[#allocation5 + $0x9a8] sm:$0xff]
    %v5943 = vld [vmem:[#allocation5 + $0x9b0] sm:$0xff]
    %v5944 = vld [vmem:[#allocation5 + $0x9b8] sm:$0xff]
    %v5945 = vpack.c.bf16 %v4993, %v4525
    %v5946 = vpack.c.bf16 %v5000, %v4532
    %v5947 = vpack.c.bf16 %v5007, %v4539
    %v5948 = vpack.c.bf16 %v5014, %v4546
    %v5950 = vsel %vm3087, %v5948, 0
    %5952 = vmatprep.subr.bf16.mxu0 %v5868
    %5953 = vmatpush1.bf16.msra.mxu0 %v5867
    %5954 = vmatprep.subr.bf16.mxu0 %v5871
    %5955 = vmatpush1.bf16.msra.mxu0 %v5870
    %5956 = vmatprep.subr.bf16.mxu0 %v5874
    %5957 = vmatpush1.bf16.msra.mxu0 %v5873
    %5958 = vmatprep.subr.bf16.mxu0 %v5877
    %5959 = vmatpush1.bf16.msra.mxu0 %v5876
    %5960 = vmatprep.subr.bf16.mxu0 %v5880
    %5961 = vmatpush1.bf16.msra.mxu0 %v5879
    %5962 = vmatprep.subr.bf16.mxu0 %v5883
    %5963 = vmatpush1.bf16.msra.mxu0 %v5882
    %5964 = vmatprep.subr.bf16.mxu0 %v5886
    %5965 = vmatpush1.bf16.msra.mxu0 %v5885
    %5966 = vmatprep.subr.bf16.mxu0 %v5889
    %5967 = vmatpush1.bf16.msra.mxu0 %v5888
    %5968 = vmatprep.subr.bf16.mxu0 %v5892
    %5969 = vmatpush1.bf16.msra.mxu0 %v5891
    %5970 = vmatprep.subr.bf16.mxu0 %v5895
    %5971 = vmatpush1.bf16.msra.mxu0 %v5894
    %5972 = vmatprep.subr.bf16.mxu0 %v5898
    %5973 = vmatpush1.bf16.msra.mxu0 %v5897
    %5974 = vmatprep.subr.bf16.mxu0 %v5901
    %5975 = vmatpush1.bf16.msra.mxu0 %v5900
    %5976 = vmatprep.subr.bf16.mxu0 %v5904
    %5977 = vmatpush1.bf16.msra.mxu0 %v5903
    %5978 = vmatprep.subr.bf16.mxu0 %v5907
    %5979 = vmatpush1.bf16.msra.mxu0 %v5906
    %5980 = vmatprep.subr.bf16.mxu0 %v5910
    %5981 = vmatpush1.bf16.msra.mxu0 %v5909
    %5982 = vmatprep.subr.bf16.mxu0 %v5913
    %5983 = vmatpush1.bf16.msra.mxu0 %v5912
    %5984 = vmatprep.mubr.bf16.mxu0 %v5946
    %5985 = vmatmul.mubr.bf16.gmra.mrb[0].mxu0 %v5945
    %v5986 = vpop.f32.mrb[0].mxu0
    %v5987 = vadd.f32 0.0, %v5986
    %v5988 = vpop.f32.mrb[0].mxu0
    %v5989 = vadd.f32 0.0, %v5988
    %v5990 = vpop.f32.mrb[0].mxu0
    %v5991 = vadd.f32 0.0, %v5990
    %v5992 = vpop.f32.mrb[0].mxu0
    %v5993 = vadd.f32 0.0, %v5992
    %5994 = vdwg.mxu0
    %5995 = vmatprep.subr.bf16.mxu0 %v5916
    %5996 = vmatpush1.bf16.msra.mxu0 %v5915
    %5997 = vmatprep.subr.bf16.mxu0 %v5919
    %5998 = vmatpush1.bf16.msra.mxu0 %v5918
    %5999 = vmatprep.subr.bf16.mxu0 %v5922
    %6000 = vmatpush1.bf16.msra.mxu0 %v5921
    %6001 = vmatprep.subr.bf16.mxu0 %v5925
    %6002 = vmatpush1.bf16.msra.mxu0 %v5924
    %6003 = vmatprep.subr.bf16.mxu0 %v5928
    %6004 = vmatpush1.bf16.msra.mxu0 %v5927
    %6005 = vmatprep.subr.bf16.mxu0 %v5931
    %6006 = vmatpush1.bf16.msra.mxu0 %v5930
    %6007 = vmatprep.subr.bf16.mxu0 %v5934
    %6008 = vmatpush1.bf16.msra.mxu0 %v5933
    %6009 = vmatprep.subr.bf16.mxu0 %v5937
    %6010 = vmatpush1.bf16.msra.mxu0 %v5936
    %6011 = vmatprep.subr.bf16.mxu0 %v5940
    %6012 = vmatpush1.bf16.msra.mxu0 %v5939
    %6013 = vmatprep.subr.bf16.mxu0 %v5943
    %6014 = vmatpush1.bf16.msra.mxu0 %v5942
    %6015 = vmatprep.subr.bf16.mxu0 0
    %6016 = vmatpush1.bf16.msra.mxu0 0
    %6017 = vmatprep.subr.bf16.mxu0 0
    %6018 = vmatpush1.bf16.msra.mxu0 0
    %6019 = vmatprep.subr.bf16.mxu0 0
    %6020 = vmatpush1.bf16.msra.mxu0 0
    %6021 = vmatprep.subr.bf16.mxu0 0
    %6022 = vmatpush1.bf16.msra.mxu0 0
    %6023 = vmatprep.subr.bf16.mxu0 0
    %6024 = vmatpush1.bf16.msra.mxu0 0
    %6025 = vmatprep.subr.bf16.mxu0 0
    %6026 = vmatpush1.bf16.msra.mxu0 0
    %6027 = vmatprep.mubr.bf16.mxu0 %v5950
    %6028 = vmatmul.mubr.bf16.gmra.mrb[0].mxu0 %v5947
    %v6029 = vpop.f32.mrb[0].mxu0
    %v6030 = vadd.f32 %v5987, %v6029
    %v6031 = vpop.f32.mrb[0].mxu0
    %v6032 = vadd.f32 %v5989, %v6031
    %v6033 = vpop.f32.mrb[0].mxu0
    %v6034 = vadd.f32 %v5991, %v6033
    %v6035 = vpop.f32.mrb[0].mxu0
    %v6036 = vadd.f32 %v5993, %v6035
    %6037 = vdwg.mxu0
    %6038 = vmatprep.subr.bf16.mxu0 0
    %6039 = vmatpush1.bf16.msra.mxu0 %v5869
    %6040 = vmatprep.subr.bf16.mxu0 0
    %6041 = vmatpush1.bf16.msra.mxu0 %v5872
    %6042 = vmatprep.subr.bf16.mxu0 0
    %6043 = vmatpush1.bf16.msra.mxu0 %v5875
    %6044 = vmatprep.subr.bf16.mxu0 0
    %6045 = vmatpush1.bf16.msra.mxu0 %v5878
    %6046 = vmatprep.subr.bf16.mxu0 0
    %6047 = vmatpush1.bf16.msra.mxu0 %v5881
    %6048 = vmatprep.subr.bf16.mxu0 0
    %6049 = vmatpush1.bf16.msra.mxu0 %v5884
    %6050 = vmatprep.subr.bf16.mxu0 0
    %6051 = vmatpush1.bf16.msra.mxu0 %v5887
    %6052 = vmatprep.subr.bf16.mxu0 0
    %6053 = vmatpush1.bf16.msra.mxu0 %v5890
    %6054 = vmatprep.subr.bf16.mxu0 0
    %6055 = vmatpush1.bf16.msra.mxu0 %v5893
    %6056 = vmatprep.subr.bf16.mxu0 0
    %6057 = vmatpush1.bf16.msra.mxu0 %v5896
    %6058 = vmatprep.subr.bf16.mxu0 0
    %6059 = vmatpush1.bf16.msra.mxu0 %v5899
    %6060 = vmatprep.subr.bf16.mxu0 0
    %6061 = vmatpush1.bf16.msra.mxu0 %v5902
    %6062 = vmatprep.subr.bf16.mxu0 0
    %6063 = vmatpush1.bf16.msra.mxu0 %v5905
    %6064 = vmatprep.subr.bf16.mxu0 0
    %6065 = vmatpush1.bf16.msra.mxu0 %v5908
    %6066 = vmatprep.subr.bf16.mxu0 0
    %6067 = vmatpush1.bf16.msra.mxu0 %v5911
    %6068 = vmatprep.subr.bf16.mxu0 0
    %6069 = vmatpush1.bf16.msra.mxu0 %v5914
    %6070 = vmatprep.mubr.bf16.mxu0 %v5946
    %6071 = vmatmul.mubr.bf16.gmra.mrb[0].mxu0 %v5945
    %v6072 = vpop.f32.mrb[0].mxu0
    %v6073 = vadd.f32 0.0, %v6072
    %v6074 = vpop.f32.mrb[0].mxu0
    %v6075 = vpop.f32.mrb[0].mxu0
    %v6076 = vadd.f32 0.0, %v6075
    %v6077 = vpop.f32.mrb[0].mxu0
    %6078 = vdwg.mxu0
    %6079 = vmatprep.subr.bf16.mxu0 0
    %6080 = vmatpush1.bf16.msra.mxu0 %v5917
    %6081 = vmatprep.subr.bf16.mxu0 0
    %6082 = vmatpush1.bf16.msra.mxu0 %v5920
    %6083 = vmatprep.subr.bf16.mxu0 0
    %6084 = vmatpush1.bf16.msra.mxu0 %v5923
    %6085 = vmatprep.subr.bf16.mxu0 0
    %6086 = vmatpush1.bf16.msra.mxu0 %v5926
    %6087 = vmatprep.subr.bf16.mxu0 0
    %6088 = vmatpush1.bf16.msra.mxu0 %v5929
    %6089 = vmatprep.subr.bf16.mxu0 0
    %6090 = vmatpush1.bf16.msra.mxu0 %v5932
    %6091 = vmatprep.subr.bf16.mxu0 0
    %6092 = vmatpush1.bf16.msra.mxu0 %v5935
    %6093 = vmatprep.subr.bf16.mxu0 0
    %6094 = vmatpush1.bf16.msra.mxu0 %v5938
    %6095 = vmatprep.subr.bf16.mxu0 0
    %6096 = vmatpush1.bf16.msra.mxu0 %v5941
    %6097 = vmatprep.subr.bf16.mxu0 0
    %6098 = vmatpush1.bf16.msra.mxu0 %v5944
    %6099 = vmatprep.subr.bf16.mxu0 0
    %6100 = vmatpush1.bf16.msra.mxu0 0
    %6101 = vmatprep.subr.bf16.mxu0 0
    %6102 = vmatpush1.bf16.msra.mxu0 0
    %6103 = vmatprep.subr.bf16.mxu0 0
    %6104 = vmatpush1.bf16.msra.mxu0 0
    %6105 = vmatprep.subr.bf16.mxu0 0
    %6106 = vmatpush1.bf16.msra.mxu0 0
    %6107 = vmatprep.subr.bf16.mxu0 0
    %6108 = vmatpush1.bf16.msra.mxu0 0
    %6109 = vmatprep.subr.bf16.mxu0 0
    %6110 = vmatpush1.bf16.msra.mxu0 0
    %6111 = vmatprep.mubr.bf16.mxu0 %v5950
    %6112 = vmatmul.mubr.bf16.gmra.mrb[0].mxu0 %v5947
    %v6113 = vpop.f32.mrb[0].mxu0
    %v6114 = vadd.f32 %v6073, %v6113
    %v6115 = vpop.f32.mrb[0].mxu0
    %v6116 = vpop.f32.mrb[0].mxu0
    %v6117 = vadd.f32 %v6076, %v6116
    %v6118 = vpop.f32.mrb[0].mxu0
    %6119 = vdwg.mxu0
    %v6120 = vadd.f32 %v5861, %v6030
    %v6121 = vadd.f32 %v5862, %v6032
    %v6122 = vadd.f32 %v5863, %v6114
    %v6123 = vadd.f32 %v5864, %v6034
    %v6124 = vadd.f32 %v5865, %v6036
    %v6125 = vadd.f32 %v5866, %v6117
    %v6126 = vld [vmem:[#allocation35] sm:$0x7]
    %v6128 = vlaneseq
    %v6129 = vshrl.u32 %v6128, 7
    %v6130 = vsub.s32 0, %v6129
    %v6131 = vrot.slane %v6126, %v6130
    %v6132 = vlaneseq
    %v6133 = vshrl.u32 %v6132, 7
    %v6134 = vsub.s32 1, %v6133
    %v6135 = vrot.slane %v6126, %v6134
    %v6136 = vlaneseq
    %v6137 = vshrl.u32 %v6136, 7
    %v6138 = vsub.s32 2, %v6137
    %v6139 = vrot.slane %v6126, %v6138
    %v6143 = vadd.f32 %v6120, %v6131
    %v6144 = vadd.f32 %v6121, %v6135
    %v6145 = vadd.f32 %v6122, %v6139
    %v6146 = vadd.f32 %v6123, %v6131
    %v6147 = vadd.f32 %v6124, %v6135
    %v6148 = vadd.f32 %v6125, %v6139
    %v6149 = vmul.f32 %v6143, 2.828427
    %v6150 = vmul.f32 %v6144, 2.828427
    %v6151 = vmul.f32 %v6145, 2.828427
    %v6152 = vmul.f32 %v6146, 2.828427
    %v6153 = vmul.f32 %v6147, 2.828427
    %v6154 = vmul.f32 %v6148, 2.828427
    %v6155 = vadd.f32 %v6149, %v6152
    %v6156 = vrot.slane %v6155, 4
    %v6157 = vadd.f32 %v6155, %v6156
    %v6158 = vrot.slane %v6157, 2
    %v6159 = vadd.f32 %v6157, %v6158
    %v6160 = vrot.slane %v6159, 1
    %v6161 = vadd.f32 %v6159, %v6160
    %v6162 = vadd.f32 %v6150, %v6153
    %v6163 = vrot.slane %v6162, 4
    %v6164 = vadd.f32 %v6162, %v6163
    %v6165 = vrot.slane %v6164, 2
    %v6166 = vadd.f32 %v6164, %v6165
    %v6167 = vrot.slane %v6166, 1
    %v6168 = vadd.f32 %v6166, %v6167
    %v6169 = vadd.f32 %v6151, %v6154
    %v6170 = vrot.slane %v6169, 4
    %v6171 = vadd.f32 %v6169, %v6170
    %v6172 = vrot.slane %v6171, 2
    %v6173 = vadd.f32 %v6171, %v6172
    %v6174 = vrot.slane %v6173, 1
    %v6175 = vadd.f32 %v6173, %v6174
    %v6176 = vmul.f32 %v6161, %v2533
    %v6177 = vmul.f32 %v6168, %v2533
    %v6178 = vmul.f32 %v6175, %v2533
    %v6179 = vmul.f32 %v6149, %v6149
    %v6180 = vmul.f32 %v6150, %v6150
    %v6181 = vmul.f32 %v6151, %v6151
    %v6182 = vmul.f32 %v6152, %v6152
    %v6183 = vmul.f32 %v6153, %v6153
    %v6184 = vmul.f32 %v6154, %v6154
    %v6185 = vadd.f32 %v6179, %v6182
    %v6186 = vrot.slane %v6185, 4
    %v6187 = vadd.f32 %v6185, %v6186
    %v6188 = vrot.slane %v6187, 2
    %v6189 = vadd.f32 %v6187, %v6188
    %v6190 = vrot.slane %v6189, 1
    %v6191 = vadd.f32 %v6189, %v6190
    %v6192 = vadd.f32 %v6180, %v6183
    %v6193 = vrot.slane %v6192, 4
    %v6194 = vadd.f32 %v6192, %v6193
    %v6195 = vrot.slane %v6194, 2
    %v6196 = vadd.f32 %v6194, %v6195
    %v6197 = vrot.slane %v6196, 1
    %v6198 = vadd.f32 %v6196, %v6197
    %v6199 = vadd.f32 %v6181, %v6184
    %v6200 = vrot.slane %v6199, 4
    %v6201 = vadd.f32 %v6199, %v6200
    %v6202 = vrot.slane %v6201, 2
    %v6203 = vadd.f32 %v6201, %v6202
    %v6204 = vrot.slane %v6203, 1
    %v6205 = vadd.f32 %v6203, %v6204
    %v6206 = vmul.f32 %v6191, %v2533
    %v6207 = vmul.f32 %v6198, %v2533
    %v6208 = vmul.f32 %v6205, %v2533
    %v6209 = vmul.f32 %v6176, %v6176
    %v6210 = vmul.f32 %v6177, %v6177
    %v6211 = vmul.f32 %v6178, %v6178
    %v6212 = vsub.f32 %v6206, %v6209
    %v6213 = vsub.f32 %v6207, %v6210
    %v6214 = vsub.f32 %v6208, %v6211
    %v6215 = vmax.f32 %v6212, 0.0
    %v6216 = vmax.f32 %v6213, 0.0
    %v6217 = vmax.f32 %v6214, 0.0
    %v6218 = vld [vmem:[#allocation37] sm:$0x7]
    %v6219 = vadd.f32 %v6215, 1e-05
    %v6220 = vadd.f32 %v6216, 1e-05
    %v6221 = vadd.f32 %v6217, 1e-05
    %v6222 = vrsqrt.pop %v6219
    %v6223 = vrsqrt.pop %v6220
    %v6224 = vrsqrt.pop %v6221
    %v6228 = vcombine.low %v6222, %v6223
    %v6230 = vunpack.c.l.s4 1966171168
    %v6231 = vunpack.c.0.s8 %v6230
    %v6232 = vlaneseq
    %v6233 = vshrl.u32 %v6232, 7
    %v6234 = vsub.s32 %v6231, %v6233
    %v6235 = vrot.slane %v6228, %v6234
    %v6237 = vunpack.c.l.s4 1966171168
    %v6238 = vunpack.c.0.s8 %v6237
    %v6239 = vlaneseq
    %v6240 = vshrl.u32 %v6239, 7
    %v6241 = vsub.s32 %v6238, %v6240
    %v6242 = vrot.slane %v6224, %v6241
    %v6243 = vcombine.low %v6235, %v6242
    %v6245 = vunpack.c.l.s4 1966171168
    %v6246 = vunpack.c.0.s8 %v6245
    %v6247 = vlaneseq
    %v6248 = vshrl.u32 %v6247, 7
    %v6249 = vsub.s32 %v6246, %v6248
    %v6250 = vrot.slane %v6243, %v6249
    %v6252 = vmul.f32 %v6218, %v6250
    %v6253 = vld [vmem:[#allocation38] sm:$0x7]
    %v6255 = vlaneseq
    %v6256 = vshrl.u32 %v6255, 7
    %v6257 = vsub.s32 0, %v6256
    %v6258 = vrot.slane %v6252, %v6257
    %v6259 = vlaneseq
    %v6260 = vshrl.u32 %v6259, 7
    %v6261 = vsub.s32 1, %v6260
    %v6262 = vrot.slane %v6252, %v6261
    %v6263 = vlaneseq
    %v6264 = vshrl.u32 %v6263, 7
    %v6265 = vsub.s32 2, %v6264
    %v6266 = vrot.slane %v6252, %v6265
    %v6270 = vmul.f32 %v6176, %v6258
    %v6271 = vmul.f32 %v6177, %v6262
    %v6272 = vmul.f32 %v6178, %v6266
    %v6276 = vcombine.low %v6270, %v6271
    %v6278 = vunpack.c.l.s4 1966171168
    %v6279 = vunpack.c.0.s8 %v6278
    %v6280 = vlaneseq
    %v6281 = vshrl.u32 %v6280, 7
    %v6282 = vsub.s32 %v6279, %v6281
    %v6283 = vrot.slane %v6276, %v6282
    %v6285 = vunpack.c.l.s4 1966171168
    %v6286 = vunpack.c.0.s8 %v6285
    %v6287 = vlaneseq
    %v6288 = vshrl.u32 %v6287, 7
    %v6289 = vsub.s32 %v6286, %v6288
    %v6290 = vrot.slane %v6272, %v6289
    %v6291 = vcombine.low %v6283, %v6290
    %v6293 = vunpack.c.l.s4 1966171168
    %v6294 = vunpack.c.0.s8 %v6293
    %v6295 = vlaneseq
    %v6296 = vshrl.u32 %v6295, 7
    %v6297 = vsub.s32 %v6294, %v6296
    %v6298 = vrot.slane %v6291, %v6297
    %v6300 = vsub.f32 %v6253, %v6298
    %v6301 = vmul.f32 %v6149, %v6258
    %v6302 = vmul.f32 %v6150, %v6262
    %v6303 = vmul.f32 %v6151, %v6266
    %v6304 = vmul.f32 %v6152, %v6258
    %v6305 = vmul.f32 %v6153, %v6262
    %v6306 = vmul.f32 %v6154, %v6266
    %v6308 = vlaneseq
    %v6309 = vshrl.u32 %v6308, 7
    %v6310 = vsub.s32 0, %v6309
    %v6311 = vrot.slane %v6300, %v6310
    %v6312 = vlaneseq
    %v6313 = vshrl.u32 %v6312, 7
    %v6314 = vsub.s32 1, %v6313
    %v6315 = vrot.slane %v6300, %v6314
    %v6316 = vlaneseq
    %v6317 = vshrl.u32 %v6316, 7
    %v6318 = vsub.s32 2, %v6317
    %v6319 = vrot.slane %v6300, %v6318
    %v6323 = vadd.f32 %v6301, %v6311
    %v6324 = vadd.f32 %v6302, %v6315
    %v6325 = vadd.f32 %v6303, %v6319
    %v6326 = vadd.f32 %v6304, %v6311
    %v6327 = vadd.f32 %v6305, %v6315
    %v6328 = vadd.f32 %v6306, %v6319
    %s6329 = sshll.u32 %s2688, 4
    %6330 = dma.done %s590, %s6329
    %v6331 = vld [vmem:[#allocation6] sm:$0xff]
    %v6332 = vld [vmem:[#allocation6 + $0x8] sm:$0xff]
    %v6333 = vld [vmem:[#allocation6 + $0x10] sm:$0xff]
    %v6334 = vld [vmem:[#allocation6 + $0x18] sm:$0xff]
    %v6335 = vld [vmem:[#allocation6 + $0x20] sm:$0xff]
    %v6336 = vld [vmem:[#allocation6 + $0x28] sm:$0xff]
    %v6337 = vld [vmem:[#allocation6 + $0x30] sm:$0xff]
    %v6338 = vld [vmem:[#allocation6 + $0x38] sm:$0xff]
    %v6339 = vld [vmem:[#allocation6 + $0x40] sm:$0xff]
    %v6340 = vld [vmem:[#allocation6 + $0x48] sm:$0xff]
    %v6341 = vld [vmem:[#allocation6 + $0x50] sm:$0xff]
    %v6342 = vld [vmem:[#allocation6 + $0x58] sm:$0xff]
    %v6343 = vld [vmem:[#allocation6 + $0x60] sm:$0xff]
    %v6344 = vld [vmem:[#allocation6 + $0x68] sm:$0xff]
    %v6345 = vld [vmem:[#allocation6 + $0x70] sm:$0xff]
    %v6346 = vld [vmem:[#allocation6 + $0x78] sm:$0xff]
    %v6347 = vld [vmem:[#allocation6 + $0x80] sm:$0xff]
    %v6348 = vld [vmem:[#allocation6 + $0x88] sm:$0xff]
    %v6349 = vld [vmem:[#allocation6 + $0x90] sm:$0xff]
    %v6350 = vld [vmem:[#allocation6 + $0x98] sm:$0xff]
    %v6351 = vld [vmem:[#allocation6 + $0xa0] sm:$0xff]
    %v6352 = vld [vmem:[#allocation6 + $0xa8] sm:$0xff]
    %v6353 = vld [vmem:[#allocation6 + $0xb0] sm:$0xff]
    %v6354 = vld [vmem:[#allocation6 + $0xb8] sm:$0xff]
    %v6355 = vld [vmem:[#allocation6 + $0xc0] sm:$0xff]
    %v6356 = vld [vmem:[#allocation6 + $0xc8] sm:$0xff]
    %v6357 = vld [vmem:[#allocation6 + $0xd0] sm:$0xff]
    %v6358 = vld [vmem:[#allocation6 + $0xd8] sm:$0xff]
    %v6359 = vld [vmem:[#allocation6 + $0xe0] sm:$0xff]
    %v6360 = vld [vmem:[#allocation6 + $0xe8] sm:$0xff]
    %v6361 = vld [vmem:[#allocation6 + $0xf0] sm:$0xff]
    %v6362 = vld [vmem:[#allocation6 + $0xf8] sm:$0xff]
    %v6363 = vld [vmem:[#allocation6 + $0x100] sm:$0xff]
    %v6364 = vld [vmem:[#allocation6 + $0x108] sm:$0xff]
    %v6365 = vld [vmem:[#allocation6 + $0x110] sm:$0xff]
    %v6366 = vld [vmem:[#allocation6 + $0x118] sm:$0xff]
    %v6367 = vld [vmem:[#allocation6 + $0x120] sm:$0xff]
    %v6368 = vld [vmem:[#allocation6 + $0x128] sm:$0xff]
    %v6369 = vld [vmem:[#allocation6 + $0x130] sm:$0xff]
    %v6370 = vld [vmem:[#allocation6 + $0x138] sm:$0xff]
    %v6371 = vld [vmem:[#allocation6 + $0x140] sm:$0xff]
    %v6372 = vld [vmem:[#allocation6 + $0x148] sm:$0xff]
    %v6373 = vld [vmem:[#allocation6 + $0x150] sm:$0xff]
    %v6374 = vld [vmem:[#allocation6 + $0x158] sm:$0xff]
    %v6375 = vld [vmem:[#allocation6 + $0x160] sm:$0xff]
    %v6376 = vld [vmem:[#allocation6 + $0x168] sm:$0xff]
    %v6377 = vld [vmem:[#allocation6 + $0x170] sm:$0xff]
    %v6378 = vld [vmem:[#allocation6 + $0x178] sm:$0xff]
    %v6379 = vld [vmem:[#allocation6 + $0x180] sm:$0xff]
    %v6380 = vld [vmem:[#allocation6 + $0x188] sm:$0xff]
    %v6381 = vld [vmem:[#allocation6 + $0x190] sm:$0xff]
    %v6382 = vld [vmem:[#allocation6 + $0x198] sm:$0xff]
    %v6383 = vld [vmem:[#allocation6 + $0x1a0] sm:$0xff]
    %v6384 = vld [vmem:[#allocation6 + $0x1a8] sm:$0xff]
    %v6385 = vld [vmem:[#allocation6 + $0x1b0] sm:$0xff]
    %v6386 = vld [vmem:[#allocation6 + $0x1b8] sm:$0xff]
    %v6387 = vld [vmem:[#allocation6 + $0x1c0] sm:$0xff]
    %v6388 = vld [vmem:[#allocation6 + $0x1c8] sm:$0xff]
    %v6389 = vld [vmem:[#allocation6 + $0x1d0] sm:$0xff]
    %v6390 = vld [vmem:[#allocation6 + $0x1d8] sm:$0xff]
    %v6391 = vld [vmem:[#allocation6 + $0x1e0] sm:$0xff]
    %v6392 = vld [vmem:[#allocation6 + $0x1e8] sm:$0xff]
    %v6393 = vld [vmem:[#allocation6 + $0x1f0] sm:$0xff]
    %v6394 = vld [vmem:[#allocation6 + $0x1f8] sm:$0xff]
    %v6395 = vld [vmem:[#allocation6 + $0x200] sm:$0xff]
    %v6396 = vld [vmem:[#allocation6 + $0x208] sm:$0xff]
    %v6397 = vld [vmem:[#allocation6 + $0x210] sm:$0xff]
    %v6398 = vld [vmem:[#allocation6 + $0x218] sm:$0xff]
    %v6399 = vld [vmem:[#allocation6 + $0x220] sm:$0xff]
    %v6400 = vld [vmem:[#allocation6 + $0x228] sm:$0xff]
    %v6401 = vld [vmem:[#allocation6 + $0x230] sm:$0xff]
    %v6402 = vld [vmem:[#allocation6 + $0x238] sm:$0xff]
    %v6403 = vpack.c.bf16 %v6326, %v6323
    %v6404 = vpack.c.bf16 %v6327, %v6324
    %v6405 = vpack.c.bf16 %v6328, %v6325
    %v6406 = vld [vmem:[#allocation40] sm:$0x7]
    %v6408 = vlaneseq
    %v6409 = vshrl.u32 %v6408, 7
    %v6410 = vsub.s32 0, %v6409
    %v6411 = vrot.slane %v6406, %v6410
    %v6412 = vlaneseq
    %v6413 = vshrl.u32 %v6412, 7
    %v6414 = vsub.s32 1, %v6413
    %v6415 = vrot.slane %v6406, %v6414
    %v6416 = vlaneseq
    %v6417 = vshrl.u32 %v6416, 7
    %v6418 = vsub.s32 2, %v6417
    %v6419 = vrot.slane %v6406, %v6418
    %6423 = vmatprep.subr.bf16.mxu0 %v6332
    %6424 = vmatpush1.bf16.msra.mxu0 %v6331
    %6425 = vmatprep.subr.bf16.mxu0 %v6335
    %6426 = vmatpush1.bf16.msra.mxu0 %v6334
    %6427 = vmatprep.subr.bf16.mxu0 %v6338
    %6428 = vmatpush1.bf16.msra.mxu0 %v6337
    %6429 = vmatprep.subr.bf16.mxu0 %v6341
    %6430 = vmatpush1.bf16.msra.mxu0 %v6340
    %6431 = vmatprep.subr.bf16.mxu0 %v6344
    %6432 = vmatpush1.bf16.msra.mxu0 %v6343
    %6433 = vmatprep.subr.bf16.mxu0 %v6347
    %6434 = vmatpush1.bf16.msra.mxu0 %v6346
    %6435 = vmatprep.subr.bf16.mxu0 %v6350
    %6436 = vmatpush1.bf16.msra.mxu0 %v6349
    %6437 = vmatprep.subr.bf16.mxu0 %v6353
    %6438 = vmatpush1.bf16.msra.mxu0 %v6352
    %6439 = vmatprep.subr.bf16.mxu0 %v6356
    %6440 = vmatpush1.bf16.msra.mxu0 %v6355
    %6441 = vmatprep.subr.bf16.mxu0 %v6359
    %6442 = vmatpush1.bf16.msra.mxu0 %v6358
    %6443 = vmatprep.subr.bf16.mxu0 %v6362
    %6444 = vmatpush1.bf16.msra.mxu0 %v6361
    %6445 = vmatprep.subr.bf16.mxu0 %v6365
    %6446 = vmatpush1.bf16.msra.mxu0 %v6364
    %6447 = vmatprep.subr.bf16.mxu0 %v6368
    %6448 = vmatpush1.bf16.msra.mxu0 %v6367
    %6449 = vmatprep.subr.bf16.mxu0 %v6371
    %6450 = vmatpush1.bf16.msra.mxu0 %v6370
    %6451 = vmatprep.subr.bf16.mxu0 %v6374
    %6452 = vmatpush1.bf16.msra.mxu0 %v6373
    %6453 = vmatprep.subr.bf16.mxu0 %v6377
    %6454 = vmatpush1.bf16.msra.mxu0 %v6376
    %6455 = vmatprep.mubr.bf16.mxu0 %v6404
    %6456 = vmatmul.mubr.bf16.gmra.mrb[0].mxu0 %v6403
    %v6457 = vpop.f32.mrb[0].mxu0
    %v6458 = vadd.f32 %v6411, %v6457
    %v6459 = vpop.f32.mrb[0].mxu0
    %v6460 = vadd.f32 %v6415, %v6459
    %v6461 = vpop.f32.mrb[0].mxu0
    %v6462 = vadd.f32 %v6411, %v6461
    %v6463 = vpop.f32.mrb[0].mxu0
    %v6464 = vadd.f32 %v6415, %v6463
    %6465 = vdwg.mxu0
    %6466 = vmatprep.subr.bf16.mxu0 %v6380
    %6467 = vmatpush1.bf16.msra.mxu0 %v6379
    %6468 = vmatprep.subr.bf16.mxu0 %v6383
    %6469 = vmatpush1.bf16.msra.mxu0 %v6382
    %6470 = vmatprep.subr.bf16.mxu0 %v6386
    %6471 = vmatpush1.bf16.msra.mxu0 %v6385
    %6472 = vmatprep.subr.bf16.mxu0 %v6389
    %6473 = vmatpush1.bf16.msra.mxu0 %v6388
    %6474 = vmatprep.subr.bf16.mxu0 %v6392
    %6475 = vmatpush1.bf16.msra.mxu0 %v6391
    %6476 = vmatprep.subr.bf16.mxu0 %v6395
    %6477 = vmatpush1.bf16.msra.mxu0 %v6394
    %6478 = vmatprep.subr.bf16.mxu0 %v6398
    %6479 = vmatpush1.bf16.msra.mxu0 %v6397
    %6480 = vmatprep.subr.bf16.mxu0 %v6401
    %6481 = vmatpush1.bf16.msra.mxu0 %v6400
    %6482 = vmatprep.subr.bf16.mxu0 0
    %6483 = vmatpush1.bf16.msra.mxu0 0
    %6484 = vmatprep.subr.bf16.mxu0 0
    %6485 = vmatpush1.bf16.msra.mxu0 0
    %6486 = vmatprep.subr.bf16.mxu0 0
    %6487 = vmatpush1.bf16.msra.mxu0 0
    %6488 = vmatprep.subr.bf16.mxu0 0
    %6489 = vmatpush1.bf16.msra.mxu0 0
    %6490 = vmatprep.subr.bf16.mxu0 0
    %6491 = vmatpush1.bf16.msra.mxu0 0
    %6492 = vmatprep.subr.bf16.mxu0 0
    %6493 = vmatpush1.bf16.msra.mxu0 0
    %6494 = vmatprep.subr.bf16.mxu0 0
    %6495 = vmatpush1.bf16.msra.mxu0 0
    %6496 = vmatprep.subr.bf16.mxu0 0
    %6497 = vmatpush1.bf16.msra.mxu0 0
    %6498 = vmatprep.mubr.bf16.mxu0 0
    %6499 = vmatmul.mubr.bf16.gmra.mrb[0].mxu0 %v6405
    %v6500 = vpop.f32.mrb[0].mxu0
    %v6501 = vadd.f32 %v6458, %v6500
    %v6502 = vpop.f32.mrb[0].mxu0
    %v6503 = vadd.f32 %v6460, %v6502
    %v6504 = vpop.f32.mrb[0].mxu0
    %v6505 = vadd.f32 %v6462, %v6504
    %v6506 = vpop.f32.mrb[0].mxu0
    %v6507 = vadd.f32 %v6464, %v6506
    %6508 = vdwg.mxu0
    %6509 = vmatprep.subr.bf16.mxu0 0
    %6510 = vmatpush1.bf16.msra.mxu0 %v6333
    %6511 = vmatprep.subr.bf16.mxu0 0
    %6512 = vmatpush1.bf16.msra.mxu0 %v6336
    %6513 = vmatprep.subr.bf16.mxu0 0
    %6514 = vmatpush1.bf16.msra.mxu0 %v6339
    %6515 = vmatprep.subr.bf16.mxu0 0
    %6516 = vmatpush1.bf16.msra.mxu0 %v6342
    %6517 = vmatprep.subr.bf16.mxu0 0
    %6518 = vmatpush1.bf16.msra.mxu0 %v6345
    %6519 = vmatprep.subr.bf16.mxu0 0
    %6520 = vmatpush1.bf16.msra.mxu0 %v6348
    %6521 = vmatprep.subr.bf16.mxu0 0
    %6522 = vmatpush1.bf16.msra.mxu0 %v6351
    %6523 = vmatprep.subr.bf16.mxu0 0
    %6524 = vmatpush1.bf16.msra.mxu0 %v6354
    %6525 = vmatprep.subr.bf16.mxu0 0
    %6526 = vmatpush1.bf16.msra.mxu0 %v6357
    %6527 = vmatprep.subr.bf16.mxu0 0
    %6528 = vmatpush1.bf16.msra.mxu0 %v6360
    %6529 = vmatprep.subr.bf16.mxu0 0
    %6530 = vmatpush1.bf16.msra.mxu0 %v6363
    %6531 = vmatprep.subr.bf16.mxu0 0
    %6532 = vmatpush1.bf16.msra.mxu0 %v6366
    %6533 = vmatprep.subr.bf16.mxu0 0
    %6534 = vmatpush1.bf16.msra.mxu0 %v6369
    %6535 = vmatprep.subr.bf16.mxu0 0
    %6536 = vmatpush1.bf16.msra.mxu0 %v6372
    %6537 = vmatprep.subr.bf16.mxu0 0
    %6538 = vmatpush1.bf16.msra.mxu0 %v6375
    %6539 = vmatprep.subr.bf16.mxu0 0
    %6540 = vmatpush1.bf16.msra.mxu0 %v6378
    %6541 = vmatprep.mubr.bf16.mxu0 %v6404
    %6542 = vmatmul.mubr.bf16.gmra.mrb[0].mxu0 %v6403
    %v6543 = vpop.f32.mrb[0].mxu0
    %v6544 = vadd.f32 %v6419, %v6543
    %v6545 = vpop.f32.mrb[0].mxu0
    %v6546 = vpop.f32.mrb[0].mxu0
    %v6547 = vadd.f32 %v6419, %v6546
    %v6548 = vpop.f32.mrb[0].mxu0
    %6549 = vdwg.mxu0
    %6550 = vmatprep.subr.bf16.mxu0 0
    %6551 = vmatpush1.bf16.msra.mxu0 %v6381
    %6552 = vmatprep.subr.bf16.mxu0 0
    %6553 = vmatpush1.bf16.msra.mxu0 %v6384
    %6554 = vmatprep.subr.bf16.mxu0 0
    %6555 = vmatpush1.bf16.msra.mxu0 %v6387
    %6556 = vmatprep.subr.bf16.mxu0 0
    %6557 = vmatpush1.bf16.msra.mxu0 %v6390
    %6558 = vmatprep.subr.bf16.mxu0 0
    %6559 = vmatpush1.bf16.msra.mxu0 %v6393
    %6560 = vmatprep.subr.bf16.mxu0 0
    %6561 = vmatpush1.bf16.msra.mxu0 %v6396
    %6562 = vmatprep.subr.bf16.mxu0 0
    %6563 = vmatpush1.bf16.msra.mxu0 %v6399
    %6564 = vmatprep.subr.bf16.mxu0 0
    %6565 = vmatpush1.bf16.msra.mxu0 %v6402
    %6566 = vmatprep.subr.bf16.mxu0 0
    %6567 = vmatpush1.bf16.msra.mxu0 0
    %6568 = vmatprep.subr.bf16.mxu0 0
    %6569 = vmatpush1.bf16.msra.mxu0 0
    %6570 = vmatprep.subr.bf16.mxu0 0
    %6571 = vmatpush1.bf16.msra.mxu0 0
    %6572 = vmatprep.subr.bf16.mxu0 0
    %6573 = vmatpush1.bf16.msra.mxu0 0
    %6574 = vmatprep.subr.bf16.mxu0 0
    %6575 = vmatpush1.bf16.msra.mxu0 0
    %6576 = vmatprep.subr.bf16.mxu0 0
    %6577 = vmatpush1.bf16.msra.mxu0 0
    %6578 = vmatprep.subr.bf16.mxu0 0
    %6579 = vmatpush1.bf16.msra.mxu0 0
    %6580 = vmatprep.subr.bf16.mxu0 0
    %6581 = vmatpush1.bf16.msra.mxu0 0
    %6582 = vmatprep.mubr.bf16.mxu0 0
    %6583 = vmatmul.mubr.bf16.gmra.mrb[0].mxu0 %v6405
    %v6584 = vpop.f32.mrb[0].mxu0
    %v6585 = vadd.f32 %v6544, %v6584
    %v6586 = vpop.f32.mrb[0].mxu0
    %v6587 = vpop.f32.mrb[0].mxu0
    %v6588 = vadd.f32 %v6547, %v6587
    %v6589 = vpop.f32.mrb[0].mxu0
    %6590 = vdwg.mxu0
    %vm6591 = vcmp.gt.f32.partialorder %v6501, 0.0
    %vm6592 = vcmp.gt.f32.partialorder %v6503, 0.0
    %vm6593 = vcmp.gt.f32.partialorder %v6585, 0.0
    %vm6594 = vcmp.gt.f32.partialorder %v6505, 0.0
    %vm6595 = vcmp.gt.f32.partialorder %v6507, 0.0
    %vm6596 = vcmp.gt.f32.partialorder %v6588, 0.0
    %v6597 = vmul.f32 %v6501, 0.01
    %v6598 = vmul.f32 %v6503, 0.01
    %v6599 = vmul.f32 %v6585, 0.01
    %v6600 = vmul.f32 %v6505, 0.01
    %v6601 = vmul.f32 %v6507, 0.01
    %v6602 = vmul.f32 %v6588, 0.01
    %v6603 = vsel %vm6591, %v6501, %v6597
    %v6604 = vsel %vm6592, %v6503, %v6598
    %v6605 = vsel %vm6593, %v6585, %v6599
    %v6606 = vsel %vm6594, %v6505, %v6600
    %v6607 = vsel %vm6595, %v6507, %v6601
    %v6608 = vsel %vm6596, %v6588, %v6602
    %v6609 = vmax.f32 %v6603, 0.0
    %v6610 = vmax.f32 %v6604, 0.0
    %v6611 = vmax.f32 %v6605, 0.0
    %v6612 = vmax.f32 %v6606, 0.0
    %v6613 = vmax.f32 %v6607, 0.0
    %v6614 = vmax.f32 %v6608, 0.0
    %s6615 = sshll.u32 %s2688, 4
    %6616 = dma.done %s625, %s6615
    %v6617 = vld [vmem:[#allocation7] sm:$0xff]
    %v6618 = vld [vmem:[#allocation7 + $0x8] sm:$0xff]
    %v6619 = vld [vmem:[#allocation7 + $0x10] sm:$0xff]
    %v6620 = vld [vmem:[#allocation7 + $0x18] sm:$0xff]
    %v6621 = vld [vmem:[#allocation7 + $0x20] sm:$0xff]
    %v6622 = vld [vmem:[#allocation7 + $0x28] sm:$0xff]
    %v6623 = vld [vmem:[#allocation7 + $0x30] sm:$0xff]
    %v6624 = vld [vmem:[#allocation7 + $0x38] sm:$0xff]
    %v6625 = vld [vmem:[#allocation7 + $0x40] sm:$0xff]
    %v6626 = vld [vmem:[#allocation7 + $0x48] sm:$0xff]
    %v6627 = vld [vmem:[#allocation7 + $0x50] sm:$0xff]
    %v6628 = vld [vmem:[#allocation7 + $0x58] sm:$0xff]
    %v6629 = vld [vmem:[#allocation7 + $0x60] sm:$0xff]
    %v6630 = vld [vmem:[#allocation7 + $0x68] sm:$0xff]
    %v6631 = vld [vmem:[#allocation7 + $0x70] sm:$0xff]
    %v6632 = vld [vmem:[#allocation7 + $0x78] sm:$0xff]
    %v6633 = vld [vmem:[#allocation7 + $0x80] sm:$0xff]
    %v6634 = vld [vmem:[#allocation7 + $0x88] sm:$0xff]
    %v6635 = vld [vmem:[#allocation7 + $0x90] sm:$0xff]
    %v6636 = vld [vmem:[#allocation7 + $0x98] sm:$0xff]
    %v6637 = vld [vmem:[#allocation7 + $0xa0] sm:$0xff]
    %v6638 = vld [vmem:[#allocation7 + $0xa8] sm:$0xff]
    %v6639 = vld [vmem:[#allocation7 + $0xb0] sm:$0xff]
    %v6640 = vld [vmem:[#allocation7 + $0xb8] sm:$0xff]
    %v6641 = vld [vmem:[#allocation7 + $0xc0] sm:$0xff]
    %v6642 = vld [vmem:[#allocation7 + $0xc8] sm:$0xff]
    %v6643 = vld [vmem:[#allocation7 + $0xd0] sm:$0xff]
    %v6644 = vld [vmem:[#allocation7 + $0xd8] sm:$0xff]
    %v6645 = vld [vmem:[#allocation7 + $0xe0] sm:$0xff]
    %v6646 = vld [vmem:[#allocation7 + $0xe8] sm:$0xff]
    %v6647 = vld [vmem:[#allocation7 + $0xf0] sm:$0xff]
    %v6648 = vld [vmem:[#allocation7 + $0xf8] sm:$0xff]
    %v6649 = vld [vmem:[#allocation7 + $0x100] sm:$0xff]
    %v6650 = vld [vmem:[#allocation7 + $0x108] sm:$0xff]
    %v6651 = vld [vmem:[#allocation7 + $0x110] sm:$0xff]
    %v6652 = vld [vmem:[#allocation7 + $0x118] sm:$0xff]
    %v6653 = vld [vmem:[#allocation7 + $0x120] sm:$0xff]
    %v6654 = vld [vmem:[#allocation7 + $0x128] sm:$0xff]
    %v6655 = vld [vmem:[#allocation7 + $0x130] sm:$0xff]
    %v6656 = vld [vmem:[#allocation7 + $0x138] sm:$0xff]
    %v6657 = vld [vmem:[#allocation7 + $0x140] sm:$0xff]
    %v6658 = vld [vmem:[#allocation7 + $0x148] sm:$0xff]
    %v6659 = vld [vmem:[#allocation7 + $0x150] sm:$0xff]
    %v6660 = vld [vmem:[#allocation7 + $0x158] sm:$0xff]
    %v6661 = vld [vmem:[#allocation7 + $0x160] sm:$0xff]
    %v6662 = vld [vmem:[#allocation7 + $0x168] sm:$0xff]
    %v6663 = vld [vmem:[#allocation7 + $0x170] sm:$0xff]
    %v6664 = vld [vmem:[#allocation7 + $0x178] sm:$0xff]
    %v6665 = vld [vmem:[#allocation7 + $0x180] sm:$0xff]
    %v6666 = vld [vmem:[#allocation7 + $0x188] sm:$0xff]
    %v6667 = vld [vmem:[#allocation7 + $0x190] sm:$0xff]
    %v6668 = vld [vmem:[#allocation7 + $0x198] sm:$0xff]
    %v6669 = vld [vmem:[#allocation7 + $0x1a0] sm:$0xff]
    %v6670 = vld [vmem:[#allocation7 + $0x1a8] sm:$0xff]
    %v6671 = vld [vmem:[#allocation7 + $0x1b0] sm:$0xff]
    %v6672 = vld [vmem:[#allocation7 + $0x1b8] sm:$0xff]
    %v6673 = vld [vmem:[#allocation7 + $0x1c0] sm:$0xff]
    %v6674 = vld [vmem:[#allocation7 + $0x1c8] sm:$0xff]
    %v6675 = vld [vmem:[#allocation7 + $0x1d0] sm:$0xff]
    %v6676 = vld [vmem:[#allocation7 + $0x1d8] sm:$0xff]
    %v6677 = vld [vmem:[#allocation7 + $0x1e0] sm:$0xff]
    %v6678 = vld [vmem:[#allocation7 + $0x1e8] sm:$0xff]
    %v6679 = vld [vmem:[#allocation7 + $0x1f0] sm:$0xff]
    %v6680 = vld [vmem:[#allocation7 + $0x1f8] sm:$0xff]
    %v6681 = vld [vmem:[#allocation7 + $0x200] sm:$0xff]
    %v6682 = vld [vmem:[#allocation7 + $0x208] sm:$0xff]
    %v6683 = vld [vmem:[#allocation7 + $0x210] sm:$0xff]
    %v6684 = vld [vmem:[#allocation7 + $0x218] sm:$0xff]
    %v6685 = vld [vmem:[#allocation7 + $0x220] sm:$0xff]
    %v6686 = vld [vmem:[#allocation7 + $0x228] sm:$0xff]
    %v6687 = vld [vmem:[#allocation7 + $0x230] sm:$0xff]
    %v6688 = vld [vmem:[#allocation7 + $0x238] sm:$0xff]
    %v6689 = vpack.c.bf16 %v6612, %v6609
    %v6690 = vpack.c.bf16 %v6613, %v6610
    %v6691 = vpack.c.bf16 %v6614, %v6611
    %6692 = vmatprep.subr.bf16.mxu0 %v6618
    %6693 = vmatpush1.bf16.msra.mxu0 %v6617
    %6694 = vmatprep.subr.bf16.mxu0 %v6621
    %6695 = vmatpush1.bf16.msra.mxu0 %v6620
    %6696 = vmatprep.subr.bf16.mxu0 %v6624
    %6697 = vmatpush1.bf16.msra.mxu0 %v6623
    %6698 = vmatprep.subr.bf16.mxu0 %v6627
    %6699 = vmatpush1.bf16.msra.mxu0 %v6626
    %6700 = vmatprep.subr.bf16.mxu0 %v6630
    %6701 = vmatpush1.bf16.msra.mxu0 %v6629
    %6702 = vmatprep.subr.bf16.mxu0 %v6633
    %6703 = vmatpush1.bf16.msra.mxu0 %v6632
    %6704 = vmatprep.subr.bf16.mxu0 %v6636
    %6705 = vmatpush1.bf16.msra.mxu0 %v6635
    %6706 = vmatprep.subr.bf16.mxu0 %v6639
    %6707 = vmatpush1.bf16.msra.mxu0 %v6638
    %6708 = vmatprep.subr.bf16.mxu0 %v6642
    %6709 = vmatpush1.bf16.msra.mxu0 %v6641
    %6710 = vmatprep.subr.bf16.mxu0 %v6645
    %6711 = vmatpush1.bf16.msra.mxu0 %v6644
    %6712 = vmatprep.subr.bf16.mxu0 %v6648
    %6713 = vmatpush1.bf16.msra.mxu0 %v6647
    %6714 = vmatprep.subr.bf16.mxu0 %v6651
    %6715 = vmatpush1.bf16.msra.mxu0 %v6650
    %6716 = vmatprep.subr.bf16.mxu0 %v6654
    %6717 = vmatpush1.bf16.msra.mxu0 %v6653
    %6718 = vmatprep.subr.bf16.mxu0 %v6657
    %6719 = vmatpush1.bf16.msra.mxu0 %v6656
    %6720 = vmatprep.subr.bf16.mxu0 %v6660
    %6721 = vmatpush1.bf16.msra.mxu0 %v6659
    %6722 = vmatprep.subr.bf16.mxu0 %v6663
    %6723 = vmatpush1.bf16.msra.mxu0 %v6662
    %6724 = vmatprep.mubr.bf16.mxu0 %v6690
    %6725 = vmatmul.mubr.bf16.gmra.mrb[0].mxu0 %v6689
    %v6726 = vpop.f32.mrb[0].mxu0
    %v6727 = vadd.f32 0.0, %v6726
    %v6728 = vpop.f32.mrb[0].mxu0
    %v6729 = vadd.f32 0.0, %v6728
    %v6730 = vpop.f32.mrb[0].mxu0
    %v6731 = vadd.f32 0.0, %v6730
    %v6732 = vpop.f32.mrb[0].mxu0
    %v6733 = vadd.f32 0.0, %v6732
    %6734 = vdwg.mxu0
    %6735 = vmatprep.subr.bf16.mxu0 %v6666
    %6736 = vmatpush1.bf16.msra.mxu0 %v6665
    %6737 = vmatprep.subr.bf16.mxu0 %v6669
    %6738 = vmatpush1.bf16.msra.mxu0 %v6668
    %6739 = vmatprep.subr.bf16.mxu0 %v6672
    %6740 = vmatpush1.bf16.msra.mxu0 %v6671
    %6741 = vmatprep.subr.bf16.mxu0 %v6675
    %6742 = vmatpush1.bf16.msra.mxu0 %v6674
    %6743 = vmatprep.subr.bf16.mxu0 %v6678
    %6744 = vmatpush1.bf16.msra.mxu0 %v6677
    %6745 = vmatprep.subr.bf16.mxu0 %v6681
    %6746 = vmatpush1.bf16.msra.mxu0 %v6680
    %6747 = vmatprep.subr.bf16.mxu0 %v6684
    %6748 = vmatpush1.bf16.msra.mxu0 %v6683
    %6749 = vmatprep.subr.bf16.mxu0 %v6687
    %6750 = vmatpush1.bf16.msra.mxu0 %v6686
    %6751 = vmatprep.subr.bf16.mxu0 0
    %6752 = vmatpush1.bf16.msra.mxu0 0
    %6753 = vmatprep.subr.bf16.mxu0 0
    %6754 = vmatpush1.bf16.msra.mxu0 0
    %6755 = vmatprep.subr.bf16.mxu0 0
    %6756 = vmatpush1.bf16.msra.mxu0 0
    %6757 = vmatprep.subr.bf16.mxu0 0
    %6758 = vmatpush1.bf16.msra.mxu0 0
    %6759 = vmatprep.subr.bf16.mxu0 0
    %6760 = vmatpush1.bf16.msra.mxu0 0
    %6761 = vmatprep.subr.bf16.mxu0 0
    %6762 = vmatpush1.bf16.msra.mxu0 0
    %6763 = vmatprep.subr.bf16.mxu0 0
    %6764 = vmatpush1.bf16.msra.mxu0 0
    %6765 = vmatprep.subr.bf16.mxu0 0
    %6766 = vmatpush1.bf16.msra.mxu0 0
    %6767 = vmatprep.mubr.bf16.mxu0 0
    %6768 = vmatmul.mubr.bf16.gmra.mrb[0].mxu0 %v6691
    %v6769 = vpop.f32.mrb[0].mxu0
    %v6770 = vadd.f32 %v6727, %v6769
    %v6771 = vpop.f32.mrb[0].mxu0
    %v6772 = vadd.f32 %v6729, %v6771
    %v6773 = vpop.f32.mrb[0].mxu0
    %v6774 = vadd.f32 %v6731, %v6773
    %v6775 = vpop.f32.mrb[0].mxu0
    %v6776 = vadd.f32 %v6733, %v6775
    %6777 = vdwg.mxu0
    %6778 = vmatprep.subr.bf16.mxu0 0
    %6779 = vmatpush1.bf16.msra.mxu0 %v6619
    %6780 = vmatprep.subr.bf16.mxu0 0
    %6781 = vmatpush1.bf16.msra.mxu0 %v6622
    %6782 = vmatprep.subr.bf16.mxu0 0
    %6783 = vmatpush1.bf16.msra.mxu0 %v6625
    %6784 = vmatprep.subr.bf16.mxu0 0
    %6785 = vmatpush1.bf16.msra.mxu0 %v6628
    %6786 = vmatprep.subr.bf16.mxu0 0
    %6787 = vmatpush1.bf16.msra.mxu0 %v6631
    %6788 = vmatprep.subr.bf16.mxu0 0
    %6789 = vmatpush1.bf16.msra.mxu0 %v6634
    %6790 = vmatprep.subr.bf16.mxu0 0
    %6791 = vmatpush1.bf16.msra.mxu0 %v6637
    %6792 = vmatprep.subr.bf16.mxu0 0
    %6793 = vmatpush1.bf16.msra.mxu0 %v6640
    %6794 = vmatprep.subr.bf16.mxu0 0
    %6795 = vmatpush1.bf16.msra.mxu0 %v6643
    %6796 = vmatprep.subr.bf16.mxu0 0
    %6797 = vmatpush1.bf16.msra.mxu0 %v6646
    %6798 = vmatprep.subr.bf16.mxu0 0
    %6799 = vmatpush1.bf16.msra.mxu0 %v6649
    %6800 = vmatprep.subr.bf16.mxu0 0
    %6801 = vmatpush1.bf16.msra.mxu0 %v6652
    %6802 = vmatprep.subr.bf16.mxu0 0
    %6803 = vmatpush1.bf16.msra.mxu0 %v6655
    %6804 = vmatprep.subr.bf16.mxu0 0
    %6805 = vmatpush1.bf16.msra.mxu0 %v6658
    %6806 = vmatprep.subr.bf16.mxu0 0
    %6807 = vmatpush1.bf16.msra.mxu0 %v6661
    %6808 = vmatprep.subr.bf16.mxu0 0
    %6809 = vmatpush1.bf16.msra.mxu0 %v6664
    %6810 = vmatprep.mubr.bf16.mxu0 %v6690
    %6811 = vmatmul.mubr.bf16.gmra.mrb[0].mxu0 %v6689
    %v6812 = vpop.f32.mrb[0].mxu0
    %v6813 = vadd.f32 0.0, %v6812
    %v6814 = vpop.f32.mrb[0].mxu0
    %v6815 = vpop.f32.mrb[0].mxu0
    %v6816 = vadd.f32 0.0, %v6815
    %v6817 = vpop.f32.mrb[0].mxu0
    %6818 = vdwg.mxu0
    %6819 = vmatprep.subr.bf16.mxu0 0
    %6820 = vmatpush1.bf16.msra.mxu0 %v6667
    %6821 = vmatprep.subr.bf16.mxu0 0
    %6822 = vmatpush1.bf16.msra.mxu0 %v6670
    %6823 = vmatprep.subr.bf16.mxu0 0
    %6824 = vmatpush1.bf16.msra.mxu0 %v6673
    %6825 = vmatprep.subr.bf16.mxu0 0
    %6826 = vmatpush1.bf16.msra.mxu0 %v6676
    %6827 = vmatprep.subr.bf16.mxu0 0
    %6828 = vmatpush1.bf16.msra.mxu0 %v6679
    %6829 = vmatprep.subr.bf16.mxu0 0
    %6830 = vmatpush1.bf16.msra.mxu0 %v6682
    %6831 = vmatprep.subr.bf16.mxu0 0
    %6832 = vmatpush1.bf16.msra.mxu0 %v6685
    %6833 = vmatprep.subr.bf16.mxu0 0
    %6834 = vmatpush1.bf16.msra.mxu0 %v6688
    %6835 = vmatprep.subr.bf16.mxu0 0
    %6836 = vmatpush1.bf16.msra.mxu0 0
    %6837 = vmatprep.subr.bf16.mxu0 0
    %6838 = vmatpush1.bf16.msra.mxu0 0
    %6839 = vmatprep.subr.bf16.mxu0 0
    %6840 = vmatpush1.bf16.msra.mxu0 0
    %6841 = vmatprep.subr.bf16.mxu0 0
    %6842 = vmatpush1.bf16.msra.mxu0 0
    %6843 = vmatprep.subr.bf16.mxu0 0
    %6844 = vmatpush1.bf16.msra.mxu0 0
    %6845 = vmatprep.subr.bf16.mxu0 0
    %6846 = vmatpush1.bf16.msra.mxu0 0
    %6847 = vmatprep.subr.bf16.mxu0 0
    %6848 = vmatpush1.bf16.msra.mxu0 0
    %6849 = vmatprep.subr.bf16.mxu0 0
    %6850 = vmatpush1.bf16.msra.mxu0 0
    %6851 = vmatprep.mubr.bf16.mxu0 0
    %6852 = vmatmul.mubr.bf16.gmra.mrb[0].mxu0 %v6691
    %v6853 = vpop.f32.mrb[0].mxu0
    %v6854 = vadd.f32 %v6813, %v6853
    %v6855 = vpop.f32.mrb[0].mxu0
    %v6856 = vpop.f32.mrb[0].mxu0
    %v6857 = vadd.f32 %v6816, %v6856
    %v6858 = vpop.f32.mrb[0].mxu0
    %6859 = vdwg.mxu0
    %s6860 = sshll.u32 %s2688, 4
    %6861 = dma.done %s660, %s6860
    %v6862 = vld [vmem:[#allocation8] sm:$0xff]
    %v6863 = vld [vmem:[#allocation8 + $0x8] sm:$0xff]
    %v6864 = vld [vmem:[#allocation8 + $0x10] sm:$0xff]
    %v6865 = vld [vmem:[#allocation8 + $0x18] sm:$0xff]
    %v6866 = vld [vmem:[#allocation8 + $0x20] sm:$0xff]
    %v6867 = vld [vmem:[#allocation8 + $0x28] sm:$0xff]
    %v6868 = vld [vmem:[#allocation8 + $0x30] sm:$0xff]
    %v6869 = vld [vmem:[#allocation8 + $0x38] sm:$0xff]
    %v6870 = vld [vmem:[#allocation8 + $0x40] sm:$0xff]
    %v6871 = vld [vmem:[#allocation8 + $0x48] sm:$0xff]
    %v6872 = vld [vmem:[#allocation8 + $0x50] sm:$0xff]
    %v6873 = vld [vmem:[#allocation8 + $0x58] sm:$0xff]
    %v6874 = vld [vmem:[#allocation8 + $0x60] sm:$0xff]
    %v6875 = vld [vmem:[#allocation8 + $0x68] sm:$0xff]
    %v6876 = vld [vmem:[#allocation8 + $0x70] sm:$0xff]
    %v6877 = vld [vmem:[#allocation8 + $0x78] sm:$0xff]
    %v6878 = vld [vmem:[#allocation8 + $0x80] sm:$0xff]
    %v6879 = vld [vmem:[#allocation8 + $0x88] sm:$0xff]
    %v6880 = vld [vmem:[#allocation8 + $0x90] sm:$0xff]
    %v6881 = vld [vmem:[#allocation8 + $0x98] sm:$0xff]
    %v6882 = vld [vmem:[#allocation8 + $0xa0] sm:$0xff]
    %v6883 = vld [vmem:[#allocation8 + $0xa8] sm:$0xff]
    %v6884 = vld [vmem:[#allocation8 + $0xb0] sm:$0xff]
    %v6885 = vld [vmem:[#allocation8 + $0xb8] sm:$0xff]
    %v6886 = vld [vmem:[#allocation8 + $0xc0] sm:$0xff]
    %v6887 = vld [vmem:[#allocation8 + $0xc8] sm:$0xff]
    %v6888 = vld [vmem:[#allocation8 + $0xd0] sm:$0xff]
    %v6889 = vld [vmem:[#allocation8 + $0xd8] sm:$0xff]
    %v6890 = vld [vmem:[#allocation8 + $0xe0] sm:$0xff]
    %v6891 = vld [vmem:[#allocation8 + $0xe8] sm:$0xff]
    %v6892 = vld [vmem:[#allocation8 + $0xf0] sm:$0xff]
    %v6893 = vld [vmem:[#allocation8 + $0xf8] sm:$0xff]
    %v6894 = vld [vmem:[#allocation8 + $0x100] sm:$0xff]
    %v6895 = vld [vmem:[#allocation8 + $0x108] sm:$0xff]
    %v6896 = vld [vmem:[#allocation8 + $0x110] sm:$0xff]
    %v6897 = vld [vmem:[#allocation8 + $0x118] sm:$0xff]
    %v6898 = vld [vmem:[#allocation8 + $0x120] sm:$0xff]
    %v6899 = vld [vmem:[#allocation8 + $0x128] sm:$0xff]
    %v6900 = vld [vmem:[#allocation8 + $0x130] sm:$0xff]
    %v6901 = vld [vmem:[#allocation8 + $0x138] sm:$0xff]
    %v6902 = vld [vmem:[#allocation8 + $0x140] sm:$0xff]
    %v6903 = vld [vmem:[#allocation8 + $0x148] sm:$0xff]
    %v6904 = vld [vmem:[#allocation8 + $0x150] sm:$0xff]
    %v6905 = vld [vmem:[#allocation8 + $0x158] sm:$0xff]
    %v6906 = vld [vmem:[#allocation8 + $0x160] sm:$0xff]
    %v6907 = vld [vmem:[#allocation8 + $0x168] sm:$0xff]
    %v6908 = vld [vmem:[#allocation8 + $0x170] sm:$0xff]
    %v6909 = vld [vmem:[#allocation8 + $0x178] sm:$0xff]
    %v6910 = vld [vmem:[#allocation8 + $0x180] sm:$0xff]
    %v6911 = vld [vmem:[#allocation8 + $0x188] sm:$0xff]
    %v6912 = vld [vmem:[#allocation8 + $0x190] sm:$0xff]
    %v6913 = vld [vmem:[#allocation8 + $0x198] sm:$0xff]
    %v6914 = vld [vmem:[#allocation8 + $0x1a0] sm:$0xff]
    %v6915 = vld [vmem:[#allocation8 + $0x1a8] sm:$0xff]
    %v6916 = vld [vmem:[#allocation8 + $0x1b0] sm:$0xff]
    %v6917 = vld [vmem:[#allocation8 + $0x1b8] sm:$0xff]
    %v6918 = vld [vmem:[#allocation8 + $0x1c0] sm:$0xff]
    %v6919 = vld [vmem:[#allocation8 + $0x1c8] sm:$0xff]
    %v6920 = vld [vmem:[#allocation8 + $0x1d0] sm:$0xff]
    %v6921 = vld [vmem:[#allocation8 + $0x1d8] sm:$0xff]
    %v6922 = vld [vmem:[#allocation8 + $0x1e0] sm:$0xff]
    %v6923 = vld [vmem:[#allocation8 + $0x1e8] sm:$0xff]
    %v6924 = vld [vmem:[#allocation8 + $0x1f0] sm:$0xff]
    %v6925 = vld [vmem:[#allocation8 + $0x1f8] sm:$0xff]
    %v6926 = vld [vmem:[#allocation8 + $0x200] sm:$0xff]
    %v6927 = vld [vmem:[#allocation8 + $0x208] sm:$0xff]
    %v6928 = vld [vmem:[#allocation8 + $0x210] sm:$0xff]
    %v6929 = vld [vmem:[#allocation8 + $0x218] sm:$0xff]
    %v6930 = vld [vmem:[#allocation8 + $0x220] sm:$0xff]
    %v6931 = vld [vmem:[#allocation8 + $0x228] sm:$0xff]
    %v6932 = vld [vmem:[#allocation8 + $0x230] sm:$0xff]
    %v6933 = vld [vmem:[#allocation8 + $0x238] sm:$0xff]
    %v6934 = vld [vmem:[#allocation43] sm:$0x7]
    %v6936 = vlaneseq
    %v6937 = vshrl.u32 %v6936, 7
    %v6938 = vsub.s32 0, %v6937
    %v6939 = vrot.slane %v6934, %v6938
    %v6940 = vlaneseq
    %v6941 = vshrl.u32 %v6940, 7
    %v6942 = vsub.s32 1, %v6941
    %v6943 = vrot.slane %v6934, %v6942
    %v6944 = vlaneseq
    %v6945 = vshrl.u32 %v6944, 7
    %v6946 = vsub.s32 2, %v6945
    %v6947 = vrot.slane %v6934, %v6946
    %6951 = vmatprep.subr.bf16.mxu0 %v6863
    %6952 = vmatpush1.bf16.msra.mxu0 %v6862
    %6953 = vmatprep.subr.bf16.mxu0 %v6866
    %6954 = vmatpush1.bf16.msra.mxu0 %v6865
    %6955 = vmatprep.subr.bf16.mxu0 %v6869
    %6956 = vmatpush1.bf16.msra.mxu0 %v6868
    %6957 = vmatprep.subr.bf16.mxu0 %v6872
    %6958 = vmatpush1.bf16.msra.mxu0 %v6871
    %6959 = vmatprep.subr.bf16.mxu0 %v6875
    %6960 = vmatpush1.bf16.msra.mxu0 %v6874
    %6961 = vmatprep.subr.bf16.mxu0 %v6878
    %6962 = vmatpush1.bf16.msra.mxu0 %v6877
    %6963 = vmatprep.subr.bf16.mxu0 %v6881
    %6964 = vmatpush1.bf16.msra.mxu0 %v6880
    %6965 = vmatprep.subr.bf16.mxu0 %v6884
    %6966 = vmatpush1.bf16.msra.mxu0 %v6883
    %6967 = vmatprep.subr.bf16.mxu0 %v6887
    %6968 = vmatpush1.bf16.msra.mxu0 %v6886
    %6969 = vmatprep.subr.bf16.mxu0 %v6890
    %6970 = vmatpush1.bf16.msra.mxu0 %v6889
    %6971 = vmatprep.subr.bf16.mxu0 %v6893
    %6972 = vmatpush1.bf16.msra.mxu0 %v6892
    %6973 = vmatprep.subr.bf16.mxu0 %v6896
    %6974 = vmatpush1.bf16.msra.mxu0 %v6895
    %6975 = vmatprep.subr.bf16.mxu0 %v6899
    %6976 = vmatpush1.bf16.msra.mxu0 %v6898
    %6977 = vmatprep.subr.bf16.mxu0 %v6902
    %6978 = vmatpush1.bf16.msra.mxu0 %v6901
    %6979 = vmatprep.subr.bf16.mxu0 %v6905
    %6980 = vmatpush1.bf16.msra.mxu0 %v6904
    %6981 = vmatprep.subr.bf16.mxu0 %v6908
    %6982 = vmatpush1.bf16.msra.mxu0 %v6907
    %6983 = vmatprep.mubr.bf16.mxu0 %v6690
    %6984 = vmatmul.mubr.bf16.gmra.mrb[0].mxu0 %v6689
    %v6985 = vpop.f32.mrb[0].mxu0
    %v6986 = vadd.f32 %v6939, %v6985
    %v6987 = vpop.f32.mrb[0].mxu0
    %v6988 = vadd.f32 %v6943, %v6987
    %v6989 = vpop.f32.mrb[0].mxu0
    %v6990 = vadd.f32 %v6939, %v6989
    %v6991 = vpop.f32.mrb[0].mxu0
    %v6992 = vadd.f32 %v6943, %v6991
    %6993 = vdwg.mxu0
    %6994 = vmatprep.subr.bf16.mxu0 %v6911
    %6995 = vmatpush1.bf16.msra.mxu0 %v6910
    %6996 = vmatprep.subr.bf16.mxu0 %v6914
    %6997 = vmatpush1.bf16.msra.mxu0 %v6913
    %6998 = vmatprep.subr.bf16.mxu0 %v6917
    %6999 = vmatpush1.bf16.msra.mxu0 %v6916
    %7000 = vmatprep.subr.bf16.mxu0 %v6920
    %7001 = vmatpush1.bf16.msra.mxu0 %v6919
    %7002 = vmatprep.subr.bf16.mxu0 %v6923
    %7003 = vmatpush1.bf16.msra.mxu0 %v6922
    %7004 = vmatprep.subr.bf16.mxu0 %v6926
    %7005 = vmatpush1.bf16.msra.mxu0 %v6925
    %7006 = vmatprep.subr.bf16.mxu0 %v6929
    %7007 = vmatpush1.bf16.msra.mxu0 %v6928
    %7008 = vmatprep.subr.bf16.mxu0 %v6932
    %7009 = vmatpush1.bf16.msra.mxu0 %v6931
    %7010 = vmatprep.subr.bf16.mxu0 0
    %7011 = vmatpush1.bf16.msra.mxu0 0
    %7012 = vmatprep.subr.bf16.mxu0 0
    %7013 = vmatpush1.bf16.msra.mxu0 0
    %7014 = vmatprep.subr.bf16.mxu0 0
    %7015 = vmatpush1.bf16.msra.mxu0 0
    %7016 = vmatprep.subr.bf16.mxu0 0
    %7017 = vmatpush1.bf16.msra.mxu0 0
    %7018 = vmatprep.subr.bf16.mxu0 0
    %7019 = vmatpush1.bf16.msra.mxu0 0
    %7020 = vmatprep.subr.bf16.mxu0 0
    %7021 = vmatpush1.bf16.msra.mxu0 0
    %7022 = vmatprep.subr.bf16.mxu0 0
    %7023 = vmatpush1.bf16.msra.mxu0 0
    %7024 = vmatprep.subr.bf16.mxu0 0
    %7025 = vmatpush1.bf16.msra.mxu0 0
    %7026 = vmatprep.mubr.bf16.mxu0 0
    %7027 = vmatmul.mubr.bf16.gmra.mrb[0].mxu0 %v6691
    %v7028 = vpop.f32.mrb[0].mxu0
    %v7029 = vadd.f32 %v6986, %v7028
    %v7030 = vpop.f32.mrb[0].mxu0
    %v7031 = vadd.f32 %v6988, %v7030
    %v7032 = vpop.f32.mrb[0].mxu0
    %v7033 = vadd.f32 %v6990, %v7032
    %v7034 = vpop.f32.mrb[0].mxu0
    %v7035 = vadd.f32 %v6992, %v7034
    %7036 = vdwg.mxu0
    %7037 = vmatprep.subr.bf16.mxu0 0
    %7038 = vmatpush1.bf16.msra.mxu0 %v6864
    %7039 = vmatprep.subr.bf16.mxu0 0
    %7040 = vmatpush1.bf16.msra.mxu0 %v6867
    %7041 = vmatprep.subr.bf16.mxu0 0
    %7042 = vmatpush1.bf16.msra.mxu0 %v6870
    %7043 = vmatprep.subr.bf16.mxu0 0
    %7044 = vmatpush1.bf16.msra.mxu0 %v6873
    %7045 = vmatprep.subr.bf16.mxu0 0
    %7046 = vmatpush1.bf16.msra.mxu0 %v6876
    %7047 = vmatprep.subr.bf16.mxu0 0
    %7048 = vmatpush1.bf16.msra.mxu0 %v6879
    %7049 = vmatprep.subr.bf16.mxu0 0
    %7050 = vmatpush1.bf16.msra.mxu0 %v6882
    %7051 = vmatprep.subr.bf16.mxu0 0
    %7052 = vmatpush1.bf16.msra.mxu0 %v6885
    %7053 = vmatprep.subr.bf16.mxu0 0
    %7054 = vmatpush1.bf16.msra.mxu0 %v6888
    %7055 = vmatprep.subr.bf16.mxu0 0
    %7056 = vmatpush1.bf16.msra.mxu0 %v6891
    %7057 = vmatprep.subr.bf16.mxu0 0
    %7058 = vmatpush1.bf16.msra.mxu0 %v6894
    %7059 = vmatprep.subr.bf16.mxu0 0
    %7060 = vmatpush1.bf16.msra.mxu0 %v6897
    %7061 = vmatprep.subr.bf16.mxu0 0
    %7062 = vmatpush1.bf16.msra.mxu0 %v6900
    %7063 = vmatprep.subr.bf16.mxu0 0
    %7064 = vmatpush1.bf16.msra.mxu0 %v6903
    %7065 = vmatprep.subr.bf16.mxu0 0
    %7066 = vmatpush1.bf16.msra.mxu0 %v6906
    %7067 = vmatprep.subr.bf16.mxu0 0
    %7068 = vmatpush1.bf16.msra.mxu0 %v6909
    %7069 = vmatprep.mubr.bf16.mxu0 %v6690
    %7070 = vmatmul.mubr.bf16.gmra.mrb[0].mxu0 %v6689
    %v7071 = vpop.f32.mrb[0].mxu0
    %v7072 = vadd.f32 %v6947, %v7071
    %v7073 = vpop.f32.mrb[0].mxu0
    %v7074 = vpop.f32.mrb[0].mxu0
    %v7075 = vadd.f32 %v6947, %v7074
    %v7076 = vpop.f32.mrb[0].mxu0
    %7077 = vdwg.mxu0
    %7078 = vmatprep.subr.bf16.mxu0 0
    %7079 = vmatpush1.bf16.msra.mxu0 %v6912
    %7080 = vmatprep.subr.bf16.mxu0 0
    %7081 = vmatpush1.bf16.msra.mxu0 %v6915
    %7082 = vmatprep.subr.bf16.mxu0 0
    %7083 = vmatpush1.bf16.msra.mxu0 %v6918
    %7084 = vmatprep.subr.bf16.mxu0 0
    %7085 = vmatpush1.bf16.msra.mxu0 %v6921
    %7086 = vmatprep.subr.bf16.mxu0 0
    %7087 = vmatpush1.bf16.msra.mxu0 %v6924
    %7088 = vmatprep.subr.bf16.mxu0 0
    %7089 = vmatpush1.bf16.msra.mxu0 %v6927
    %7090 = vmatprep.subr.bf16.mxu0 0
    %7091 = vmatpush1.bf16.msra.mxu0 %v6930
    %7092 = vmatprep.subr.bf16.mxu0 0
    %7093 = vmatpush1.bf16.msra.mxu0 %v6933
    %7094 = vmatprep.subr.bf16.mxu0 0
    %7095 = vmatpush1.bf16.msra.mxu0 0
    %7096 = vmatprep.subr.bf16.mxu0 0
    %7097 = vmatpush1.bf16.msra.mxu0 0
    %7098 = vmatprep.subr.bf16.mxu0 0
    %7099 = vmatpush1.bf16.msra.mxu0 0
    %7100 = vmatprep.subr.bf16.mxu0 0
    %7101 = vmatpush1.bf16.msra.mxu0 0
    %7102 = vmatprep.subr.bf16.mxu0 0
    %7103 = vmatpush1.bf16.msra.mxu0 0
    %7104 = vmatprep.subr.bf16.mxu0 0
    %7105 = vmatpush1.bf16.msra.mxu0 0
    %7106 = vmatprep.subr.bf16.mxu0 0
    %7107 = vmatpush1.bf16.msra.mxu0 0
    %7108 = vmatprep.subr.bf16.mxu0 0
    %7109 = vmatpush1.bf16.msra.mxu0 0
    %7110 = vmatprep.mubr.bf16.mxu0 0
    %7111 = vmatmul.mubr.bf16.gmra.mrb[0].mxu0 %v6691
    %v7112 = vpop.f32.mrb[0].mxu0
    %v7113 = vadd.f32 %v7072, %v7112
    %v7114 = vpop.f32.mrb[0].mxu0
    %v7115 = vpop.f32.mrb[0].mxu0
    %v7116 = vadd.f32 %v7075, %v7115
    %v7117 = vpop.f32.mrb[0].mxu0
    %7118 = vdwg.mxu0
    %v7119 = vld [vmem:[#allocation41] sm:$0xff]
    %v7120 = vld [vmem:[#allocation41 + $0x8] sm:$0xf]
    %v7123 = vcombine.high %v7119, %v7119
    %v7124 = vsel %vm1350, %v7119, 0
    %v7126 = vsel %vm1350, %v7123, 0
    %v7128 = vsel %vm1350, %v7120, 0
    %7130 = vmatprep.subr.mxu0 %v7126
    %7131 = vmatpush1.msra.mxu0 %v7124
    %7132 = vmatprep.subr.mxu0 0.0
    %7133 = vmatpush1.msra.mxu0 0.0
    %7134 = vmatprep.subr.mxu0 0.0
    %7135 = vmatpush1.msra.mxu0 0.0
    %7136 = vmatprep.subr.mxu0 0.0
    %7137 = vmatpush1.msra.mxu0 0.0
    %7138 = vmatprep.subr.mxu0 0.0
    %7139 = vmatpush1.msra.mxu0 0.0
    %7140 = vmatprep.subr.mxu0 0.0
    %7141 = vmatpush1.msra.mxu0 0.0
    %7142 = vmatprep.subr.mxu0 0.0
    %7143 = vmatpush1.msra.mxu0 0.0
    %7144 = vmatprep.subr.mxu0 0.0
    %7145 = vmatpush1.msra.mxu0 0.0
    %7146 = vmatprep.subr.mxu0 0.0
    %7147 = vmatpush1.msra.mxu0 0.0
    %7148 = vmatprep.subr.mxu0 0.0
    %7149 = vmatpush1.msra.mxu0 0.0
    %7150 = vmatprep.subr.mxu0 0.0
    %7151 = vmatpush1.msra.mxu0 0.0
    %7152 = vmatprep.subr.mxu0 0.0
    %7153 = vmatpush1.msra.mxu0 0.0
    %7154 = vmatprep.subr.mxu0 0.0
    %7155 = vmatpush1.msra.mxu0 0.0
    %7156 = vmatprep.subr.mxu0 0.0
    %7157 = vmatpush1.msra.mxu0 0.0
    %7158 = vmatprep.subr.mxu0 0.0
    %7159 = vmatpush1.msra.mxu0 0.0
    %7160 = vmatprep.subr.mxu0 0.0
    %7161 = vmatpush1.msra.mxu0 0.0
    %7162 = vmatprep.subr.mxu0 0.0
    %7163 = vmatpush1.msra.mxu0 0.0
    %7164 = vmatprep.subr.mxu0 0.0
    %7165 = vmatpush1.msra.mxu0 0.0
    %7166 = vmatprep.subr.mxu0 0.0
    %7167 = vmatpush1.msra.mxu0 0.0
    %7168 = vmatprep.subr.mxu0 0.0
    %7169 = vmatpush1.msra.mxu0 0.0
    %7170 = vmatprep.subr.mxu0 0.0
    %7171 = vmatpush1.msra.mxu0 0.0
    %7172 = vmatprep.subr.mxu0 0.0
    %7173 = vmatpush1.msra.mxu0 0.0
    %7174 = vmatprep.subr.mxu0 0.0
    %7175 = vmatpush1.msra.mxu0 0.0
    %7176 = vmatprep.subr.mxu0 0.0
    %7177 = vmatpush1.msra.mxu0 0.0
    %7178 = vmatprep.subr.mxu0 0.0
    %7179 = vmatpush1.msra.mxu0 0.0
    %7180 = vmatprep.subr.mxu0 0.0
    %7181 = vmatpush1.msra.mxu0 0.0
    %7182 = vmatprep.subr.mxu0 0.0
    %7183 = vmatpush1.msra.mxu0 0.0
    %7184 = vmatprep.subr.mxu0 0.0
    %7185 = vmatpush1.msra.mxu0 0.0
    %7186 = vmatprep.subr.mxu0 0.0
    %7187 = vmatpush1.msra.mxu0 0.0
    %7188 = vmatprep.subr.mxu0 0.0
    %7189 = vmatpush1.msra.mxu0 0.0
    %7190 = vmatprep.subr.mxu0 0.0
    %7191 = vmatpush1.msra.mxu0 0.0
    %7192 = vmatprep.subr.mxu0 0.0
    %7193 = vmatpush1.msra.mxu0 0.0
    %7194 = vmatprep.mubr.f32.mxu0 0.0
    %7195 = vmatmul.mubr.f32.gmra.mrb[0].mxu0 %v1303
    %v7196 = vpop.f32.mrb[0].mxu0
    %v7197 = vadd.f32 0.0, %v7196
    %v7198 = vpop.f32.mrb[0].mxu0
    %v7199 = vadd.f32 0.0, %v7198
    %7200 = vmatprep.mubr.f32.mxu0 0.0
    %7201 = vmatmul.mubr.f32.gmra.mrb[0].mxu0 %v1306
    %v7202 = vpop.f32.mrb[0].mxu0
    %v7203 = vadd.f32 0.0, %v7202
    %v7204 = vpop.f32.mrb[0].mxu0
    %v7205 = vadd.f32 0.0, %v7204
    %7206 = vmatprep.mubr.f32.mxu0 0.0
    %7207 = vmatmul.mubr.f32.gmra.mrb[0].mxu0 %v1309
    %v7208 = vpop.f32.mrb[0].mxu0
    %v7209 = vadd.f32 0.0, %v7208
    %v7210 = vpop.f32.mrb[0].mxu0
    %v7211 = vadd.f32 0.0, %v7210
    %7212 = vmatprep.mubr.f32.mxu0 0.0
    %7213 = vmatmul.mubr.f32.gmra.mrb[0].mxu0 %v1312
    %v7214 = vpop.f32.mrb[0].mxu0
    %v7215 = vadd.f32 0.0, %v7214
    %v7216 = vpop.f32.mrb[0].mxu0
    %v7217 = vadd.f32 0.0, %v7216
    %7218 = vmatprep.mubr.f32.mxu0 0.0
    %7219 = vmatmul.mubr.f32.gmra.mrb[0].mxu0 %v1315
    %v7220 = vpop.f32.mrb[0].mxu0
    %v7221 = vadd.f32 0.0, %v7220
    %v7222 = vpop.f32.mrb[0].mxu0
    %v7223 = vadd.f32 0.0, %v7222
    %7224 = vmatprep.mubr.f32.mxu0 0.0
    %7225 = vmatmul.mubr.f32.gmra.mrb[0].mxu0 %v1318
    %v7226 = vpop.f32.mrb[0].mxu0
    %v7227 = vadd.f32 0.0, %v7226
    %v7228 = vpop.f32.mrb[0].mxu0
    %v7229 = vadd.f32 0.0, %v7228
    %7230 = vmatprep.mubr.f32.mxu0 0.0
    %7231 = vmatmul.mubr.f32.gmra.mrb[0].mxu0 %v1321
    %v7232 = vpop.f32.mrb[0].mxu0
    %v7233 = vadd.f32 0.0, %v7232
    %v7234 = vpop.f32.mrb[0].mxu0
    %v7235 = vadd.f32 0.0, %v7234
    %7236 = vmatprep.mubr.f32.mxu0 0.0
    %7237 = vmatmul.mubr.f32.gmra.mrb[0].mxu0 %v1324
    %v7238 = vpop.f32.mrb[0].mxu0
    %v7239 = vadd.f32 0.0, %v7238
    %v7240 = vpop.f32.mrb[0].mxu0
    %v7241 = vadd.f32 0.0, %v7240
    %7242 = vmatprep.mubr.f32.mxu0 0.0
    %7243 = vmatmul.mubr.f32.gmra.mrb[0].mxu0 %v1327
    %v7244 = vpop.f32.mrb[0].mxu0
    %v7245 = vadd.f32 0.0, %v7244
    %v7246 = vpop.f32.mrb[0].mxu0
    %v7247 = vadd.f32 0.0, %v7246
    %7248 = vmatprep.mubr.f32.mxu0 0.0
    %7249 = vmatmul.mubr.f32.gmra.mrb[0].mxu0 %v1330
    %v7250 = vpop.f32.mrb[0].mxu0
    %v7251 = vadd.f32 0.0, %v7250
    %v7252 = vpop.f32.mrb[0].mxu0
    %v7253 = vadd.f32 0.0, %v7252
    %7254 = vmatprep.mubr.f32.mxu0 0.0
    %7255 = vmatmul.mubr.f32.gmra.mrb[0].mxu0 %v1333
    %v7256 = vpop.f32.mrb[0].mxu0
    %v7257 = vadd.f32 0.0, %v7256
    %v7258 = vpop.f32.mrb[0].mxu0
    %v7259 = vadd.f32 0.0, %v7258
    %7260 = vmatprep.mubr.f32.mxu0 0.0
    %7261 = vmatmul.mubr.f32.gmra.mrb[0].mxu0 %v1336
    %v7262 = vpop.f32.mrb[0].mxu0
    %v7263 = vadd.f32 0.0, %v7262
    %v7264 = vpop.f32.mrb[0].mxu0
    %v7265 = vadd.f32 0.0, %v7264
    %7266 = vmatprep.mubr.f32.mxu0 0.0
    %7267 = vmatmul.mubr.f32.gmra.mrb[0].mxu0 %v1339
    %v7268 = vpop.f32.mrb[0].mxu0
    %v7269 = vadd.f32 0.0, %v7268
    %v7270 = vpop.f32.mrb[0].mxu0
    %v7271 = vadd.f32 0.0, %v7270
    %7272 = vmatprep.mubr.f32.mxu0 0.0
    %7273 = vmatmul.mubr.f32.gmra.mrb[0].mxu0 %v1342
    %v7274 = vpop.f32.mrb[0].mxu0
    %v7275 = vadd.f32 0.0, %v7274
    %v7276 = vpop.f32.mrb[0].mxu0
    %v7277 = vadd.f32 0.0, %v7276
    %7278 = vmatprep.mubr.f32.mxu0 0.0
    %7279 = vmatmul.mubr.f32.gmra.mrb[0].mxu0 %v1345
    %v7280 = vpop.f32.mrb[0].mxu0
    %v7281 = vadd.f32 0.0, %v7280
    %v7282 = vpop.f32.mrb[0].mxu0
    %v7283 = vadd.f32 0.0, %v7282
    %7284 = vmatprep.mubr.f32.mxu0 0.0
    %7285 = vmatmul.mubr.f32.gmra.mrb[0].mxu0 %v1348
    %v7286 = vpop.f32.mrb[0].mxu0
    %v7287 = vadd.f32 0.0, %v7286
    %v7288 = vpop.f32.mrb[0].mxu0
    %v7289 = vadd.f32 0.0, %v7288
    %7290 = vdwg.mxu0
    %7291 = vmatprep.subr.mxu0 0.0
    %7292 = vmatpush1.msra.mxu0 %v7128
    %7293 = vmatprep.subr.mxu0 0.0
    %7294 = vmatpush1.msra.mxu0 0.0
    %7295 = vmatprep.subr.mxu0 0.0
    %7296 = vmatpush1.msra.mxu0 0.0
    %7297 = vmatprep.subr.mxu0 0.0
    %7298 = vmatpush1.msra.mxu0 0.0
    %7299 = vmatprep.subr.mxu0 0.0
    %7300 = vmatpush1.msra.mxu0 0.0
    %7301 = vmatprep.subr.mxu0 0.0
    %7302 = vmatpush1.msra.mxu0 0.0
    %7303 = vmatprep.subr.mxu0 0.0
    %7304 = vmatpush1.msra.mxu0 0.0
    %7305 = vmatprep.subr.mxu0 0.0
    %7306 = vmatpush1.msra.mxu0 0.0
    %7307 = vmatprep.subr.mxu0 0.0
    %7308 = vmatpush1.msra.mxu0 0.0
    %7309 = vmatprep.subr.mxu0 0.0
    %7310 = vmatpush1.msra.mxu0 0.0
    %7311 = vmatprep.subr.mxu0 0.0
    %7312 = vmatpush1.msra.mxu0 0.0
    %7313 = vmatprep.subr.mxu0 0.0
    %7314 = vmatpush1.msra.mxu0 0.0
    %7315 = vmatprep.subr.mxu0 0.0
    %7316 = vmatpush1.msra.mxu0 0.0
    %7317 = vmatprep.subr.mxu0 0.0
    %7318 = vmatpush1.msra.mxu0 0.0
    %7319 = vmatprep.subr.mxu0 0.0
    %7320 = vmatpush1.msra.mxu0 0.0
    %7321 = vmatprep.subr.mxu0 0.0
    %7322 = vmatpush1.msra.mxu0 0.0
    %7323 = vmatprep.subr.mxu0 0.0
    %7324 = vmatpush1.msra.mxu0 0.0
    %7325 = vmatprep.subr.mxu0 0.0
    %7326 = vmatpush1.msra.mxu0 0.0
    %7327 = vmatprep.subr.mxu0 0.0
    %7328 = vmatpush1.msra.mxu0 0.0
    %7329 = vmatprep.subr.mxu0 0.0
    %7330 = vmatpush1.msra.mxu0 0.0
    %7331 = vmatprep.subr.mxu0 0.0
    %7332 = vmatpush1.msra.mxu0 0.0
    %7333 = vmatprep.subr.mxu0 0.0
    %7334 = vmatpush1.msra.mxu0 0.0
    %7335 = vmatprep.subr.mxu0 0.0
    %7336 = vmatpush1.msra.mxu0 0.0
    %7337 = vmatprep.subr.mxu0 0.0
    %7338 = vmatpush1.msra.mxu0 0.0
    %7339 = vmatprep.subr.mxu0 0.0
    %7340 = vmatpush1.msra.mxu0 0.0
    %7341 = vmatprep.subr.mxu0 0.0
    %7342 = vmatpush1.msra.mxu0 0.0
    %7343 = vmatprep.subr.mxu0 0.0
    %7344 = vmatpush1.msra.mxu0 0.0
    %7345 = vmatprep.subr.mxu0 0.0
    %7346 = vmatpush1.msra.mxu0 0.0
    %7347 = vmatprep.subr.mxu0 0.0
    %7348 = vmatpush1.msra.mxu0 0.0
    %7349 = vmatprep.subr.mxu0 0.0
    %7350 = vmatpush1.msra.mxu0 0.0
    %7351 = vmatprep.subr.mxu0 0.0
    %7352 = vmatpush1.msra.mxu0 0.0
    %7353 = vmatprep.subr.mxu0 0.0
    %7354 = vmatpush1.msra.mxu0 0.0
    %7355 = vmatprep.mubr.f32.mxu0 0.0
    %7356 = vmatmul.mubr.f32.gmra.mrb[0].mxu0 %v1303
    %v7357 = vpop.f32.mrb[0].mxu0
    %v7358 = vadd.f32 0.0, %v7357
    %v7359 = vpop.f32.mrb[0].mxu0
    %7360 = vmatprep.mubr.f32.mxu0 0.0
    %7361 = vmatmul.mubr.f32.gmra.mrb[0].mxu0 %v1306
    %v7362 = vpop.f32.mrb[0].mxu0
    %v7363 = vadd.f32 0.0, %v7362
    %v7364 = vpop.f32.mrb[0].mxu0
    %7365 = vmatprep.mubr.f32.mxu0 0.0
    %7366 = vmatmul.mubr.f32.gmra.mrb[0].mxu0 %v1309
    %v7367 = vpop.f32.mrb[0].mxu0
    %v7368 = vadd.f32 0.0, %v7367
    %v7369 = vpop.f32.mrb[0].mxu0
    %7370 = vmatprep.mubr.f32.mxu0 0.0
    %7371 = vmatmul.mubr.f32.gmra.mrb[0].mxu0 %v1312
    %v7372 = vpop.f32.mrb[0].mxu0
    %v7373 = vadd.f32 0.0, %v7372
    %v7374 = vpop.f32.mrb[0].mxu0
    %7375 = vmatprep.mubr.f32.mxu0 0.0
    %7376 = vmatmul.mubr.f32.gmra.mrb[0].mxu0 %v1315
    %v7377 = vpop.f32.mrb[0].mxu0
    %v7378 = vadd.f32 0.0, %v7377
    %v7379 = vpop.f32.mrb[0].mxu0
    %7380 = vmatprep.mubr.f32.mxu0 0.0
    %7381 = vmatmul.mubr.f32.gmra.mrb[0].mxu0 %v1318
    %v7382 = vpop.f32.mrb[0].mxu0
    %v7383 = vadd.f32 0.0, %v7382
    %v7384 = vpop.f32.mrb[0].mxu0
    %7385 = vmatprep.mubr.f32.mxu0 0.0
    %7386 = vmatmul.mubr.f32.gmra.mrb[0].mxu0 %v1321
    %v7387 = vpop.f32.mrb[0].mxu0
    %v7388 = vadd.f32 0.0, %v7387
    %v7389 = vpop.f32.mrb[0].mxu0
    %7390 = vmatprep.mubr.f32.mxu0 0.0
    %7391 = vmatmul.mubr.f32.gmra.mrb[0].mxu0 %v1324
    %v7392 = vpop.f32.mrb[0].mxu0
    %v7393 = vadd.f32 0.0, %v7392
    %v7394 = vpop.f32.mrb[0].mxu0
    %7395 = vmatprep.mubr.f32.mxu0 0.0
    %7396 = vmatmul.mubr.f32.gmra.mrb[0].mxu0 %v1327
    %v7397 = vpop.f32.mrb[0].mxu0
    %v7398 = vadd.f32 0.0, %v7397
    %v7399 = vpop.f32.mrb[0].mxu0
    %7400 = vmatprep.mubr.f32.mxu0 0.0
    %7401 = vmatmul.mubr.f32.gmra.mrb[0].mxu0 %v1330
    %v7402 = vpop.f32.mrb[0].mxu0
    %v7403 = vadd.f32 0.0, %v7402
    %v7404 = vpop.f32.mrb[0].mxu0
    %7405 = vmatprep.mubr.f32.mxu0 0.0
    %7406 = vmatmul.mubr.f32.gmra.mrb[0].mxu0 %v1333
    %v7407 = vpop.f32.mrb[0].mxu0
    %v7408 = vadd.f32 0.0, %v7407
    %v7409 = vpop.f32.mrb[0].mxu0
    %7410 = vmatprep.mubr.f32.mxu0 0.0
    %7411 = vmatmul.mubr.f32.gmra.mrb[0].mxu0 %v1336
    %v7412 = vpop.f32.mrb[0].mxu0
    %v7413 = vadd.f32 0.0, %v7412
    %v7414 = vpop.f32.mrb[0].mxu0
    %7415 = vmatprep.mubr.f32.mxu0 0.0
    %7416 = vmatmul.mubr.f32.gmra.mrb[0].mxu0 %v1339
    %v7417 = vpop.f32.mrb[0].mxu0
    %v7418 = vadd.f32 0.0, %v7417
    %v7419 = vpop.f32.mrb[0].mxu0
    %7420 = vmatprep.mubr.f32.mxu0 0.0
    %7421 = vmatmul.mubr.f32.gmra.mrb[0].mxu0 %v1342
    %v7422 = vpop.f32.mrb[0].mxu0
    %v7423 = vadd.f32 0.0, %v7422
    %v7424 = vpop.f32.mrb[0].mxu0
    %7425 = vmatprep.mubr.f32.mxu0 0.0
    %7426 = vmatmul.mubr.f32.gmra.mrb[0].mxu0 %v1345
    %v7427 = vpop.f32.mrb[0].mxu0
    %v7428 = vadd.f32 0.0, %v7427
    %v7429 = vpop.f32.mrb[0].mxu0
    %7430 = vmatprep.mubr.f32.mxu0 0.0
    %7431 = vmatmul.mubr.f32.gmra.mrb[0].mxu0 %v1348
    %v7432 = vpop.f32.mrb[0].mxu0
    %v7433 = vadd.f32 0.0, %v7432
    %v7434 = vpop.f32.mrb[0].mxu0
    %7435 = vdwg.mxu0
    %v7439 = vcombine.low %v6770, %v6772
    %v7440 = vcombine.high %v6770, %v6772
    %v7441 = vcombine.high %v6854, %v6854
    %v7443 = vunpack.c.l.s4 1966171168
    %v7444 = vunpack.c.0.s8 %v7443
    %v7445 = vlaneseq
    %v7446 = vshrl.u32 %v7445, 7
    %v7447 = vsub.s32 %v7444, %v7446
    %v7448 = vrot.slane %v7439, %v7447
    %v7450 = vunpack.c.l.s4 1966171168
    %v7451 = vunpack.c.0.s8 %v7450
    %v7452 = vlaneseq
    %v7453 = vshrl.u32 %v7452, 7
    %v7454 = vsub.s32 %v7451, %v7453
    %v7455 = vrot.slane %v7440, %v7454
    %v7457 = vunpack.c.l.s4 1966171168
    %v7458 = vunpack.c.0.s8 %v7457
    %v7459 = vlaneseq
    %v7460 = vshrl.u32 %v7459, 7
    %v7461 = vsub.s32 %v7458, %v7460
    %v7462 = vrot.slane %v6854, %v7461
    %v7464 = vunpack.c.l.s4 1966171168
    %v7465 = vunpack.c.0.s8 %v7464
    %v7466 = vlaneseq
    %v7467 = vshrl.u32 %v7466, 7
    %v7468 = vsub.s32 %v7465, %v7467
    %v7469 = vrot.slane %v7441, %v7468
    %v7470 = vcombine.low %v7448, %v7462
    %v7471 = vcombine.high %v7448, %v7462
    %v7472 = vcombine.low %v7455, %v7469
    %v7473 = vcombine.high %v7455, %v7469
    %v7475 = vunpack.c.l.s4 1966171168
    %v7476 = vunpack.c.0.s8 %v7475
    %v7477 = vlaneseq
    %v7478 = vshrl.u32 %v7477, 7
    %v7479 = vsub.s32 %v7476, %v7478
    %v7480 = vrot.slane %v7470, %v7479
    %v7482 = vunpack.c.l.s4 1966171168
    %v7483 = vunpack.c.0.s8 %v7482
    %v7484 = vlaneseq
    %v7485 = vshrl.u32 %v7484, 7
    %v7486 = vsub.s32 %v7483, %v7485
    %v7487 = vrot.slane %v7472, %v7486
    %v7489 = vunpack.c.l.s4 1966171168
    %v7490 = vunpack.c.0.s8 %v7489
    %v7491 = vlaneseq
    %v7492 = vshrl.u32 %v7491, 7
    %v7493 = vsub.s32 %v7490, %v7492
    %v7494 = vrot.slane %v7471, %v7493
    %v7496 = vunpack.c.l.s4 1966171168
    %v7497 = vunpack.c.0.s8 %v7496
    %v7498 = vlaneseq
    %v7499 = vshrl.u32 %v7498, 7
    %v7500 = vsub.s32 %v7497, %v7499
    %v7501 = vrot.slane %v7473, %v7500
    %v7502 = vcombine.high %v7480, %v7480
    %v7503 = vcombine.high %v7487, %v7487
    %v7504 = vcombine.high %v7494, %v7494
    %v7505 = vcombine.high %v7501, %v7501
    %v7506 = vlaneseq
    %v7507 = vshrl.u32 %v7506, 7
    %v7508 = vsub.s32 0, %v7507
    %v7509 = vrot.slane %v7480, %v7508
    %v7510 = vlaneseq
    %v7511 = vshrl.u32 %v7510, 7
    %v7512 = vsub.s32 1, %v7511
    %v7513 = vrot.slane %v7480, %v7512
    %v7514 = vlaneseq
    %v7515 = vshrl.u32 %v7514, 7
    %v7516 = vsub.s32 2, %v7515
    %v7517 = vrot.slane %v7480, %v7516
    %v7518 = vlaneseq
    %v7519 = vshrl.u32 %v7518, 7
    %v7520 = vsub.s32 0, %v7519
    %v7521 = vrot.slane %v7494, %v7520
    %v7522 = vlaneseq
    %v7523 = vshrl.u32 %v7522, 7
    %v7524 = vsub.s32 1, %v7523
    %v7525 = vrot.slane %v7494, %v7524
    %v7526 = vlaneseq
    %v7527 = vshrl.u32 %v7526, 7
    %v7528 = vsub.s32 2, %v7527
    %v7529 = vrot.slane %v7494, %v7528
    %v7530 = vlaneseq
    %v7531 = vshrl.u32 %v7530, 7
    %v7532 = vsub.s32 0, %v7531
    %v7533 = vrot.slane %v7502, %v7532
    %v7534 = vlaneseq
    %v7535 = vshrl.u32 %v7534, 7
    %v7536 = vsub.s32 1, %v7535
    %v7537 = vrot.slane %v7502, %v7536
    %v7538 = vlaneseq
    %v7539 = vshrl.u32 %v7538, 7
    %v7540 = vsub.s32 2, %v7539
    %v7541 = vrot.slane %v7502, %v7540
    %v7542 = vlaneseq
    %v7543 = vshrl.u32 %v7542, 7
    %v7544 = vsub.s32 0, %v7543
    %v7545 = vrot.slane %v7504, %v7544
    %v7546 = vlaneseq
    %v7547 = vshrl.u32 %v7546, 7
    %v7548 = vsub.s32 1, %v7547
    %v7549 = vrot.slane %v7504, %v7548
    %v7550 = vlaneseq
    %v7551 = vshrl.u32 %v7550, 7
    %v7552 = vsub.s32 2, %v7551
    %v7553 = vrot.slane %v7504, %v7552
    %v7554 = vlaneseq
    %v7555 = vshrl.u32 %v7554, 7
    %v7556 = vsub.s32 0, %v7555
    %v7557 = vrot.slane %v7487, %v7556
    %v7558 = vlaneseq
    %v7559 = vshrl.u32 %v7558, 7
    %v7560 = vsub.s32 1, %v7559
    %v7561 = vrot.slane %v7487, %v7560
    %v7562 = vlaneseq
    %v7563 = vshrl.u32 %v7562, 7
    %v7564 = vsub.s32 2, %v7563
    %v7565 = vrot.slane %v7487, %v7564
    %v7566 = vlaneseq
    %v7567 = vshrl.u32 %v7566, 7
    %v7568 = vsub.s32 0, %v7567
    %v7569 = vrot.slane %v7501, %v7568
    %v7570 = vlaneseq
    %v7571 = vshrl.u32 %v7570, 7
    %v7572 = vsub.s32 1, %v7571
    %v7573 = vrot.slane %v7501, %v7572
    %v7574 = vlaneseq
    %v7575 = vshrl.u32 %v7574, 7
    %v7576 = vsub.s32 2, %v7575
    %v7577 = vrot.slane %v7501, %v7576
    %v7578 = vlaneseq
    %v7579 = vshrl.u32 %v7578, 7
    %v7580 = vsub.s32 0, %v7579
    %v7581 = vrot.slane %v7503, %v7580
    %v7582 = vlaneseq
    %v7583 = vshrl.u32 %v7582, 7
    %v7584 = vsub.s32 1, %v7583
    %v7585 = vrot.slane %v7503, %v7584
    %v7586 = vlaneseq
    %v7587 = vshrl.u32 %v7586, 7
    %v7588 = vsub.s32 2, %v7587
    %v7589 = vrot.slane %v7503, %v7588
    %v7590 = vlaneseq
    %v7591 = vshrl.u32 %v7590, 7
    %v7592 = vsub.s32 0, %v7591
    %v7593 = vrot.slane %v7505, %v7592
    %v7594 = vlaneseq
    %v7595 = vshrl.u32 %v7594, 7
    %v7596 = vsub.s32 1, %v7595
    %v7597 = vrot.slane %v7505, %v7596
    %v7598 = vlaneseq
    %v7599 = vshrl.u32 %v7598, 7
    %v7600 = vsub.s32 2, %v7599
    %v7601 = vrot.slane %v7505, %v7600
    %v7626 = vadd.f32 %v7509, %v7197
    %v7627 = vadd.f32 %v7513, %v7199
    %v7628 = vadd.f32 %v7517, %v7358
    %v7629 = vadd.f32 %v7521, %v7203
    %v7630 = vadd.f32 %v7525, %v7205
    %v7631 = vadd.f32 %v7529, %v7363
    %v7632 = vadd.f32 %v7533, %v7209
    %v7633 = vadd.f32 %v7537, %v7211
    %v7634 = vadd.f32 %v7541, %v7368
    %v7635 = vadd.f32 %v7545, %v7215
    %v7636 = vadd.f32 %v7549, %v7217
    %v7637 = vadd.f32 %v7553, %v7373
    %v7638 = vadd.f32 %v7557, %v7221
    %v7639 = vadd.f32 %v7561, %v7223
    %v7640 = vadd.f32 %v7565, %v7378
    %v7641 = vadd.f32 %v7569, %v7227
    %v7642 = vadd.f32 %v7573, %v7229
    %v7643 = vadd.f32 %v7577, %v7383
    %v7644 = vadd.f32 %v7581, %v7233
    %v7645 = vadd.f32 %v7585, %v7235
    %v7646 = vadd.f32 %v7589, %v7388
    %v7647 = vadd.f32 %v7593, %v7239
    %v7648 = vadd.f32 %v7597, %v7241
    %v7649 = vadd.f32 %v7601, %v7393
    %v7650 = vadd.f32 %v7626, %v7629
    %v7651 = vadd.f32 %v7650, %v7632
    %v7652 = vadd.f32 %v7651, %v7635
    %v7653 = vadd.f32 %v7652, %v7638
    %v7654 = vadd.f32 %v7653, %v7641
    %v7655 = vadd.f32 %v7654, %v7644
    %v7656 = vadd.f32 %v7655, %v7647
    %v7657 = vadd.f32 %v7627, %v7630
    %v7658 = vadd.f32 %v7657, %v7633
    %v7659 = vadd.f32 %v7658, %v7636
    %v7660 = vadd.f32 %v7659, %v7639
    %v7661 = vadd.f32 %v7660, %v7642
    %v7662 = vadd.f32 %v7661, %v7645
    %v7663 = vadd.f32 %v7662, %v7648
    %v7664 = vadd.f32 %v7628, %v7631
    %v7665 = vadd.f32 %v7664, %v7634
    %v7666 = vadd.f32 %v7665, %v7637
    %v7667 = vadd.f32 %v7666, %v7640
    %v7668 = vadd.f32 %v7667, %v7643
    %v7669 = vadd.f32 %v7668, %v7646
    %v7670 = vadd.f32 %v7669, %v7649
    %v7671 = vmax.f32 %v7626, %v7632
    %v7672 = vmax.f32 %v7629, %v7635
    %v7673 = vmax.f32 %v7671, %v7638
    %v7674 = vmax.f32 %v7672, %v7641
    %v7675 = vmax.f32 %v7673, %v7644
    %v7676 = vmax.f32 %v7674, %v7647
    %v7677 = vmax.f32 %v7675, %v7676
    %v7678 = vmax.f32 %v7627, %v7633
    %v7679 = vmax.f32 %v7630, %v7636
    %v7680 = vmax.f32 %v7678, %v7639
    %v7681 = vmax.f32 %v7679, %v7642
    %v7682 = vmax.f32 %v7680, %v7645
    %v7683 = vmax.f32 %v7681, %v7648
    %v7684 = vmax.f32 %v7682, %v7683
    %v7685 = vmax.f32 %v7628, %v7634
    %v7686 = vmax.f32 %v7631, %v7637
    %v7687 = vmax.f32 %v7685, %v7640
    %v7688 = vmax.f32 %v7686, %v7643
    %v7689 = vmax.f32 %v7687, %v7646
    %v7690 = vmax.f32 %v7688, %v7649
    %v7691 = vmax.f32 %v7689, %v7690
    %v7692 = vmul.f32 %v7626, %v7626
    %v7693 = vmul.f32 %v7627, %v7627
    %v7694 = vmul.f32 %v7628, %v7628
    %v7695 = vmul.f32 %v7629, %v7629
    %v7696 = vmul.f32 %v7630, %v7630
    %v7697 = vmul.f32 %v7631, %v7631
    %v7698 = vmul.f32 %v7632, %v7632
    %v7699 = vmul.f32 %v7633, %v7633
    %v7700 = vmul.f32 %v7634, %v7634
    %v7701 = vmul.f32 %v7635, %v7635
    %v7702 = vmul.f32 %v7636, %v7636
    %v7703 = vmul.f32 %v7637, %v7637
    %v7704 = vmul.f32 %v7638, %v7638
    %v7705 = vmul.f32 %v7639, %v7639
    %v7706 = vmul.f32 %v7640, %v7640
    %v7707 = vmul.f32 %v7641, %v7641
    %v7708 = vmul.f32 %v7642, %v7642
    %v7709 = vmul.f32 %v7643, %v7643
    %v7710 = vmul.f32 %v7644, %v7644
    %v7711 = vmul.f32 %v7645, %v7645
    %v7712 = vmul.f32 %v7646, %v7646
    %v7713 = vmul.f32 %v7647, %v7647
    %v7714 = vmul.f32 %v7648, %v7648
    %v7715 = vmul.f32 %v7649, %v7649
    %v7716 = vadd.f32 %v7692, %v7695
    %v7717 = vadd.f32 %v7716, %v7698
    %v7718 = vadd.f32 %v7717, %v7701
    %v7719 = vadd.f32 %v7718, %v7704
    %v7720 = vadd.f32 %v7719, %v7707
    %v7721 = vadd.f32 %v7720, %v7710
    %v7722 = vadd.f32 %v7721, %v7713
    %v7723 = vadd.f32 %v7693, %v7696
    %v7724 = vadd.f32 %v7723, %v7699
    %v7725 = vadd.f32 %v7724, %v7702
    %v7726 = vadd.f32 %v7725, %v7705
    %v7727 = vadd.f32 %v7726, %v7708
    %v7728 = vadd.f32 %v7727, %v7711
    %v7729 = vadd.f32 %v7728, %v7714
    %v7730 = vadd.f32 %v7694, %v7697
    %v7731 = vadd.f32 %v7730, %v7700
    %v7732 = vadd.f32 %v7731, %v7703
    %v7733 = vadd.f32 %v7732, %v7706
    %v7734 = vadd.f32 %v7733, %v7709
    %v7735 = vadd.f32 %v7734, %v7712
    %v7736 = vadd.f32 %v7735, %v7715
    %v7737 = vmul.f32 %v7656, 0.125
    %v7738 = vmul.f32 %v7663, 0.125
    %v7739 = vmul.f32 %v7670, 0.125
    %v7740 = vmul.f32 %v7722, 0.125
    %v7741 = vmul.f32 %v7729, 0.125
    %v7742 = vmul.f32 %v7736, 0.125
    %v7743 = vmul.f32 %v7737, %v7737
    %v7744 = vmul.f32 %v7738, %v7738
    %v7745 = vmul.f32 %v7739, %v7739
    %v7746 = vsub.f32 %v7740, %v7743
    %v7747 = vsub.f32 %v7741, %v7744
    %v7748 = vsub.f32 %v7742, %v7745
    %v7749 = vmax.f32 %v7746, 0.0
    %v7750 = vmax.f32 %v7747, 0.0
    %v7751 = vmax.f32 %v7748, 0.0
    %v7752 = vmul.f32 %v7029, 8.0
    %v7753 = vmul.f32 %v7031, 8.0
    %v7754 = vmul.f32 %v7113, 8.0
    %v7755 = vadd.f32 %v7656, %v7752
    %v7756 = vadd.f32 %v7663, %v7753
    %v7757 = vadd.f32 %v7670, %v7754
    %v7758 = vadd.f32 %v7677, %v7029
    %v7759 = vadd.f32 %v7684, %v7031
    %v7760 = vadd.f32 %v7691, %v7113
    %v7761 = vadd.f32 %v7749, 1e-30
    %v7762 = vadd.f32 %v7750, 1e-30
    %v7763 = vadd.f32 %v7751, 1e-30
    %v7764 = vrsqrt.pop %v7761
    %v7765 = vmul.f32 %v7761, %v7764
    %vm7766 = vcmp.eq.f32.partialorder %v7761, inf
    %v7767 = vsel %vm7766, %v7761, %v7765
    %vm7768 = vcmp.eq.f32.partialorder %v7761, 0.0
    %v7769 = vand.u32 %v7761, 2147483648
    %v7770 = vsel %vm7768, %v7769, %v7767
    %v7771 = vrsqrt.pop %v7762
    %v7772 = vmul.f32 %v7762, %v7771
    %vm7773 = vcmp.eq.f32.partialorder %v7762, inf
    %v7774 = vsel %vm7773, %v7762, %v7772
    %vm7775 = vcmp.eq.f32.partialorder %v7762, 0.0
    %v7776 = vand.u32 %v7762, 2147483648
    %v7777 = vsel %vm7775, %v7776, %v7774
    %v7778 = vrsqrt.pop %v7763
    %v7779 = vmul.f32 %v7763, %v7778
    %vm7780 = vcmp.eq.f32.partialorder %v7763, inf
    %v7781 = vsel %vm7780, %v7763, %v7779
    %vm7782 = vcmp.eq.f32.partialorder %v7763, 0.0
    %v7783 = vand.u32 %v7763, 2147483648
    %v7784 = vsel %vm7782, %v7783, %v7781
    %v7788 = vcombine.low %v6774, %v6776
    %v7789 = vcombine.high %v6774, %v6776
    %v7790 = vcombine.high %v6857, %v6857
    %v7792 = vunpack.c.l.s4 1966171168
    %v7793 = vunpack.c.0.s8 %v7792
    %v7794 = vlaneseq
    %v7795 = vshrl.u32 %v7794, 7
    %v7796 = vsub.s32 %v7793, %v7795
    %v7797 = vrot.slane %v7788, %v7796
    %v7799 = vunpack.c.l.s4 1966171168
    %v7800 = vunpack.c.0.s8 %v7799
    %v7801 = vlaneseq
    %v7802 = vshrl.u32 %v7801, 7
    %v7803 = vsub.s32 %v7800, %v7802
    %v7804 = vrot.slane %v7789, %v7803
    %v7806 = vunpack.c.l.s4 1966171168
    %v7807 = vunpack.c.0.s8 %v7806
    %v7808 = vlaneseq
    %v7809 = vshrl.u32 %v7808, 7
    %v7810 = vsub.s32 %v7807, %v7809
    %v7811 = vrot.slane %v6857, %v7810
    %v7813 = vunpack.c.l.s4 1966171168
    %v7814 = vunpack.c.0.s8 %v7813
    %v7815 = vlaneseq
    %v7816 = vshrl.u32 %v7815, 7
    %v7817 = vsub.s32 %v7814, %v7816
    %v7818 = vrot.slane %v7790, %v7817
    %v7819 = vcombine.low %v7797, %v7811
    %v7820 = vcombine.high %v7797, %v7811
    %v7821 = vcombine.low %v7804, %v7818
    %v7822 = vcombine.high %v7804, %v7818
    %v7824 = vunpack.c.l.s4 1966171168
    %v7825 = vunpack.c.0.s8 %v7824
    %v7826 = vlaneseq
    %v7827 = vshrl.u32 %v7826, 7
    %v7828 = vsub.s32 %v7825, %v7827
    %v7829 = vrot.slane %v7819, %v7828
    %v7831 = vunpack.c.l.s4 1966171168
    %v7832 = vunpack.c.0.s8 %v7831
    %v7833 = vlaneseq
    %v7834 = vshrl.u32 %v7833, 7
    %v7835 = vsub.s32 %v7832, %v7834
    %v7836 = vrot.slane %v7821, %v7835
    %v7838 = vunpack.c.l.s4 1966171168
    %v7839 = vunpack.c.0.s8 %v7838
    %v7840 = vlaneseq
    %v7841 = vshrl.u32 %v7840, 7
    %v7842 = vsub.s32 %v7839, %v7841
    %v7843 = vrot.slane %v7820, %v7842
    %v7845 = vunpack.c.l.s4 1966171168
    %v7846 = vunpack.c.0.s8 %v7845
    %v7847 = vlaneseq
    %v7848 = vshrl.u32 %v7847, 7
    %v7849 = vsub.s32 %v7846, %v7848
    %v7850 = vrot.slane %v7822, %v7849
    %v7851 = vcombine.high %v7829, %v7829
    %v7852 = vcombine.high %v7836, %v7836
    %v7853 = vcombine.high %v7843, %v7843
    %v7854 = vcombine.high %v7850, %v7850
    %v7855 = vlaneseq
    %v7856 = vshrl.u32 %v7855, 7
    %v7857 = vsub.s32 0, %v7856
    %v7858 = vrot.slane %v7829, %v7857
    %v7859 = vlaneseq
    %v7860 = vshrl.u32 %v7859, 7
    %v7861 = vsub.s32 1, %v7860
    %v7862 = vrot.slane %v7829, %v7861
    %v7863 = vlaneseq
    %v7864 = vshrl.u32 %v7863, 7
    %v7865 = vsub.s32 2, %v7864
    %v7866 = vrot.slane %v7829, %v7865
    %v7867 = vlaneseq
    %v7868 = vshrl.u32 %v7867, 7
    %v7869 = vsub.s32 0, %v7868
    %v7870 = vrot.slane %v7843, %v7869
    %v7871 = vlaneseq
    %v7872 = vshrl.u32 %v7871, 7
    %v7873 = vsub.s32 1, %v7872
    %v7874 = vrot.slane %v7843, %v7873
    %v7875 = vlaneseq
    %v7876 = vshrl.u32 %v7875, 7
    %v7877 = vsub.s32 2, %v7876
    %v7878 = vrot.slane %v7843, %v7877
    %v7879 = vlaneseq
    %v7880 = vshrl.u32 %v7879, 7
    %v7881 = vsub.s32 0, %v7880
    %v7882 = vrot.slane %v7851, %v7881
    %v7883 = vlaneseq
    %v7884 = vshrl.u32 %v7883, 7
    %v7885 = vsub.s32 1, %v7884
    %v7886 = vrot.slane %v7851, %v7885
    %v7887 = vlaneseq
    %v7888 = vshrl.u32 %v7887, 7
    %v7889 = vsub.s32 2, %v7888
    %v7890 = vrot.slane %v7851, %v7889
    %v7891 = vlaneseq
    %v7892 = vshrl.u32 %v7891, 7
    %v7893 = vsub.s32 0, %v7892
    %v7894 = vrot.slane %v7853, %v7893
    %v7895 = vlaneseq
    %v7896 = vshrl.u32 %v7895, 7
    %v7897 = vsub.s32 1, %v7896
    %v7898 = vrot.slane %v7853, %v7897
    %v7899 = vlaneseq
    %v7900 = vshrl.u32 %v7899, 7
    %v7901 = vsub.s32 2, %v7900
    %v7902 = vrot.slane %v7853, %v7901
    %v7903 = vlaneseq
    %v7904 = vshrl.u32 %v7903, 7
    %v7905 = vsub.s32 0, %v7904
    %v7906 = vrot.slane %v7836, %v7905
    %v7907 = vlaneseq
    %v7908 = vshrl.u32 %v7907, 7
    %v7909 = vsub.s32 1, %v7908
    %v7910 = vrot.slane %v7836, %v7909
    %v7911 = vlaneseq
    %v7912 = vshrl.u32 %v7911, 7
    %v7913 = vsub.s32 2, %v7912
    %v7914 = vrot.slane %v7836, %v7913
    %v7915 = vlaneseq
    %v7916 = vshrl.u32 %v7915, 7
    %v7917 = vsub.s32 0, %v7916
    %v7918 = vrot.slane %v7850, %v7917
    %v7919 = vlaneseq
    %v7920 = vshrl.u32 %v7919, 7
    %v7921 = vsub.s32 1, %v7920
    %v7922 = vrot.slane %v7850, %v7921
    %v7923 = vlaneseq
    %v7924 = vshrl.u32 %v7923, 7
    %v7925 = vsub.s32 2, %v7924
    %v7926 = vrot.slane %v7850, %v7925
    %v7927 = vlaneseq
    %v7928 = vshrl.u32 %v7927, 7
    %v7929 = vsub.s32 0, %v7928
    %v7930 = vrot.slane %v7852, %v7929
    %v7931 = vlaneseq
    %v7932 = vshrl.u32 %v7931, 7
    %v7933 = vsub.s32 1, %v7932
    %v7934 = vrot.slane %v7852, %v7933
    %v7935 = vlaneseq
    %v7936 = vshrl.u32 %v7935, 7
    %v7937 = vsub.s32 2, %v7936
    %v7938 = vrot.slane %v7852, %v7937
    %v7939 = vlaneseq
    %v7940 = vshrl.u32 %v7939, 7
    %v7941 = vsub.s32 0, %v7940
    %v7942 = vrot.slane %v7854, %v7941
    %v7943 = vlaneseq
    %v7944 = vshrl.u32 %v7943, 7
    %v7945 = vsub.s32 1, %v7944
    %v7946 = vrot.slane %v7854, %v7945
    %v7947 = vlaneseq
    %v7948 = vshrl.u32 %v7947, 7
    %v7949 = vsub.s32 2, %v7948
    %v7950 = vrot.slane %v7854, %v7949
    %v7975 = vadd.f32 %v7858, %v7245
    %v7976 = vadd.f32 %v7862, %v7247
    %v7977 = vadd.f32 %v7866, %v7398
    %v7978 = vadd.f32 %v7870, %v7251
    %v7979 = vadd.f32 %v7874, %v7253
    %v7980 = vadd.f32 %v7878, %v7403
    %v7981 = vadd.f32 %v7882, %v7257
    %v7982 = vadd.f32 %v7886, %v7259
    %v7983 = vadd.f32 %v7890, %v7408
    %v7984 = vadd.f32 %v7894, %v7263
    %v7985 = vadd.f32 %v7898, %v7265
    %v7986 = vadd.f32 %v7902, %v7413
    %v7987 = vadd.f32 %v7906, %v7269
    %v7988 = vadd.f32 %v7910, %v7271
    %v7989 = vadd.f32 %v7914, %v7418
    %v7990 = vadd.f32 %v7918, %v7275
    %v7991 = vadd.f32 %v7922, %v7277
    %v7992 = vadd.f32 %v7926, %v7423
    %v7993 = vadd.f32 %v7930, %v7281
    %v7994 = vadd.f32 %v7934, %v7283
    %v7995 = vadd.f32 %v7938, %v7428
    %v7996 = vadd.f32 %v7942, %v7287
    %v7997 = vadd.f32 %v7946, %v7289
    %v7998 = vadd.f32 %v7950, %v7433
    %v7999 = vadd.f32 %v7975, %v7978
    %v8000 = vadd.f32 %v7999, %v7981
    %v8001 = vadd.f32 %v8000, %v7984
    %v8002 = vadd.f32 %v8001, %v7987
    %v8003 = vadd.f32 %v8002, %v7990
    %v8004 = vadd.f32 %v8003, %v7993
    %v8005 = vadd.f32 %v8004, %v7996
    %v8006 = vadd.f32 %v7976, %v7979
    %v8007 = vadd.f32 %v8006, %v7982
    %v8008 = vadd.f32 %v8007, %v7985
    %v8009 = vadd.f32 %v8008, %v7988
    %v8010 = vadd.f32 %v8009, %v7991
    %v8011 = vadd.f32 %v8010, %v7994
    %v8012 = vadd.f32 %v8011, %v7997
    %v8013 = vadd.f32 %v7977, %v7980
    %v8014 = vadd.f32 %v8013, %v7983
    %v8015 = vadd.f32 %v8014, %v7986
    %v8016 = vadd.f32 %v8015, %v7989
    %v8017 = vadd.f32 %v8016, %v7992
    %v8018 = vadd.f32 %v8017, %v7995
    %v8019 = vadd.f32 %v8018, %v7998
    %v8020 = vmax.f32 %v7975, %v7981
    %v8021 = vmax.f32 %v7978, %v7984
    %v8022 = vmax.f32 %v8020, %v7987
    %v8023 = vmax.f32 %v8021, %v7990
    %v8024 = vmax.f32 %v8022, %v7993
    %v8025 = vmax.f32 %v8023, %v7996
    %v8026 = vmax.f32 %v8024, %v8025
    %v8027 = vmax.f32 %v7976, %v7982
    %v8028 = vmax.f32 %v7979, %v7985
    %v8029 = vmax.f32 %v8027, %v7988
    %v8030 = vmax.f32 %v8028, %v7991
    %v8031 = vmax.f32 %v8029, %v7994
    %v8032 = vmax.f32 %v8030, %v7997
    %v8033 = vmax.f32 %v8031, %v8032
    %v8034 = vmax.f32 %v7977, %v7983
    %v8035 = vmax.f32 %v7980, %v7986
    %v8036 = vmax.f32 %v8034, %v7989
    %v8037 = vmax.f32 %v8035, %v7992
    %v8038 = vmax.f32 %v8036, %v7995
    %v8039 = vmax.f32 %v8037, %v7998
    %v8040 = vmax.f32 %v8038, %v8039
    %v8041 = vmul.f32 %v7975, %v7975
    %v8042 = vmul.f32 %v7976, %v7976
    %v8043 = vmul.f32 %v7977, %v7977
    %v8044 = vmul.f32 %v7978, %v7978
    %v8045 = vmul.f32 %v7979, %v7979
    %v8046 = vmul.f32 %v7980, %v7980
    %v8047 = vmul.f32 %v7981, %v7981
    %v8048 = vmul.f32 %v7982, %v7982
    %v8049 = vmul.f32 %v7983, %v7983
    %v8050 = vmul.f32 %v7984, %v7984
    %v8051 = vmul.f32 %v7985, %v7985
    %v8052 = vmul.f32 %v7986, %v7986
    %v8053 = vmul.f32 %v7987, %v7987
    %v8054 = vmul.f32 %v7988, %v7988
    %v8055 = vmul.f32 %v7989, %v7989
    %v8056 = vmul.f32 %v7990, %v7990
    %v8057 = vmul.f32 %v7991, %v7991
    %v8058 = vmul.f32 %v7992, %v7992
    %v8059 = vmul.f32 %v7993, %v7993
    %v8060 = vmul.f32 %v7994, %v7994
    %v8061 = vmul.f32 %v7995, %v7995
    %v8062 = vmul.f32 %v7996, %v7996
    %v8063 = vmul.f32 %v7997, %v7997
    %v8064 = vmul.f32 %v7998, %v7998
    %v8065 = vadd.f32 %v8041, %v8044
    %v8066 = vadd.f32 %v8065, %v8047
    %v8067 = vadd.f32 %v8066, %v8050
    %v8068 = vadd.f32 %v8067, %v8053
    %v8069 = vadd.f32 %v8068, %v8056
    %v8070 = vadd.f32 %v8069, %v8059
    %v8071 = vadd.f32 %v8070, %v8062
    %v8072 = vadd.f32 %v8042, %v8045
    %v8073 = vadd.f32 %v8072, %v8048
    %v8074 = vadd.f32 %v8073, %v8051
    %v8075 = vadd.f32 %v8074, %v8054
    %v8076 = vadd.f32 %v8075, %v8057
    %v8077 = vadd.f32 %v8076, %v8060
    %v8078 = vadd.f32 %v8077, %v8063
    %v8079 = vadd.f32 %v8043, %v8046
    %v8080 = vadd.f32 %v8079, %v8049
    %v8081 = vadd.f32 %v8080, %v8052
    %v8082 = vadd.f32 %v8081, %v8055
    %v8083 = vadd.f32 %v8082, %v8058
    %v8084 = vadd.f32 %v8083, %v8061
    %v8085 = vadd.f32 %v8084, %v8064
    %v8086 = vmul.f32 %v8005, 0.125
    %v8087 = vmul.f32 %v8012, 0.125
    %v8088 = vmul.f32 %v8019, 0.125
    %v8089 = vmul.f32 %v8071, 0.125
    %v8090 = vmul.f32 %v8078, 0.125
    %v8091 = vmul.f32 %v8085, 0.125
    %v8092 = vmul.f32 %v8086, %v8086
    %v8093 = vmul.f32 %v8087, %v8087
    %v8094 = vmul.f32 %v8088, %v8088
    %v8095 = vsub.f32 %v8089, %v8092
    %v8096 = vsub.f32 %v8090, %v8093
    %v8097 = vsub.f32 %v8091, %v8094
    %v8098 = vmax.f32 %v8095, 0.0
    %v8099 = vmax.f32 %v8096, 0.0
    %v8100 = vmax.f32 %v8097, 0.0
    %v8101 = vmul.f32 %v7033, 8.0
    %v8102 = vmul.f32 %v7035, 8.0
    %v8103 = vmul.f32 %v7116, 8.0
    %v8104 = vadd.f32 %v8005, %v8101
    %v8105 = vadd.f32 %v8012, %v8102
    %v8106 = vadd.f32 %v8019, %v8103
    %v8107 = vadd.f32 %v8026, %v7033
    %v8108 = vadd.f32 %v8033, %v7035
    %v8109 = vadd.f32 %v8040, %v7116
    %v8110 = vadd.f32 %v8098, 1e-30
    %v8111 = vadd.f32 %v8099, 1e-30
    %v8112 = vadd.f32 %v8100, 1e-30
    %v8113 = vrsqrt.pop %v8110
    %v8114 = vmul.f32 %v8110, %v8113
    %vm8115 = vcmp.eq.f32.partialorder %v8110, inf
    %v8116 = vsel %vm8115, %v8110, %v8114
    %vm8117 = vcmp.eq.f32.partialorder %v8110, 0.0
    %v8118 = vand.u32 %v8110, 2147483648
    %v8119 = vsel %vm8117, %v8118, %v8116
    %v8120 = vrsqrt.pop %v8111
    %v8121 = vmul.f32 %v8111, %v8120
    %vm8122 = vcmp.eq.f32.partialorder %v8111, inf
    %v8123 = vsel %vm8122, %v8111, %v8121
    %vm8124 = vcmp.eq.f32.partialorder %v8111, 0.0
    %v8125 = vand.u32 %v8111, 2147483648
    %v8126 = vsel %vm8124, %v8125, %v8123
    %v8127 = vrsqrt.pop %v8112
    %v8128 = vmul.f32 %v8112, %v8127
    %vm8129 = vcmp.eq.f32.partialorder %v8112, inf
    %v8130 = vsel %vm8129, %v8112, %v8128
    %vm8131 = vcmp.eq.f32.partialorder %v8112, 0.0
    %v8132 = vand.u32 %v8112, 2147483648
    %v8133 = vsel %vm8131, %v8132, %v8130
    %s8134 = smul.u32 4, 192
    %s8135 = smul.u32 %s8134, 1
    %s8136 = sshll.u32 %s8135, 4
    %8137 = dma.done %s695, %s8136
    %v8138 = vld [vmem:[#allocation9] sm:$0xff]
    %v8139 = vld [vmem:[#allocation9 + $0x8] sm:$0xff]
    %v8140 = vld [vmem:[#allocation9 + $0x10] sm:$0xff]
    %v8141 = vld [vmem:[#allocation9 + $0x18] sm:$0xff]
    %v8142 = vld [vmem:[#allocation9 + $0x20] sm:$0xff]
    %v8143 = vld [vmem:[#allocation9 + $0x28] sm:$0xff]
    %v8144 = vld [vmem:[#allocation9 + $0x30] sm:$0xff]
    %v8145 = vld [vmem:[#allocation9 + $0x38] sm:$0xff]
    %v8146 = vld [vmem:[#allocation9 + $0x40] sm:$0xff]
    %v8147 = vld [vmem:[#allocation9 + $0x48] sm:$0xff]
    %v8148 = vld [vmem:[#allocation9 + $0x50] sm:$0xff]
    %v8149 = vld [vmem:[#allocation9 + $0x58] sm:$0xff]
    %v8150 = vld [vmem:[#allocation9 + $0x60] sm:$0xff]
    %v8151 = vld [vmem:[#allocation9 + $0x68] sm:$0xff]
    %v8152 = vld [vmem:[#allocation9 + $0x70] sm:$0xff]
    %v8153 = vld [vmem:[#allocation9 + $0x78] sm:$0xff]
    %v8154 = vld [vmem:[#allocation9 + $0x80] sm:$0xff]
    %v8155 = vld [vmem:[#allocation9 + $0x88] sm:$0xff]
    %v8156 = vld [vmem:[#allocation9 + $0x90] sm:$0xff]
    %v8157 = vld [vmem:[#allocation9 + $0x98] sm:$0xff]
    %v8158 = vld [vmem:[#allocation9 + $0xa0] sm:$0xff]
    %v8159 = vld [vmem:[#allocation9 + $0xa8] sm:$0xff]
    %v8160 = vld [vmem:[#allocation9 + $0xb0] sm:$0xff]
    %v8161 = vld [vmem:[#allocation9 + $0xb8] sm:$0xff]
    %v8162 = vld [vmem:[#allocation9 + $0xc0] sm:$0xff]
    %v8163 = vld [vmem:[#allocation9 + $0xc8] sm:$0xff]
    %v8164 = vld [vmem:[#allocation9 + $0xd0] sm:$0xff]
    %v8165 = vld [vmem:[#allocation9 + $0xd8] sm:$0xff]
    %v8166 = vld [vmem:[#allocation9 + $0xe0] sm:$0xff]
    %v8167 = vld [vmem:[#allocation9 + $0xe8] sm:$0xff]
    %v8168 = vld [vmem:[#allocation9 + $0xf0] sm:$0xff]
    %v8169 = vld [vmem:[#allocation9 + $0xf8] sm:$0xff]
    %v8170 = vld [vmem:[#allocation9 + $0x100] sm:$0xff]
    %v8171 = vld [vmem:[#allocation9 + $0x108] sm:$0xff]
    %v8172 = vld [vmem:[#allocation9 + $0x110] sm:$0xff]
    %v8173 = vld [vmem:[#allocation9 + $0x118] sm:$0xff]
    %v8174 = vld [vmem:[#allocation9 + $0x120] sm:$0xff]
    %v8175 = vld [vmem:[#allocation9 + $0x128] sm:$0xff]
    %v8176 = vld [vmem:[#allocation9 + $0x130] sm:$0xff]
    %v8177 = vld [vmem:[#allocation9 + $0x138] sm:$0xff]
    %v8178 = vld [vmem:[#allocation9 + $0x140] sm:$0xff]
    %v8179 = vld [vmem:[#allocation9 + $0x148] sm:$0xff]
    %v8180 = vld [vmem:[#allocation9 + $0x150] sm:$0xff]
    %v8181 = vld [vmem:[#allocation9 + $0x158] sm:$0xff]
    %v8182 = vld [vmem:[#allocation9 + $0x160] sm:$0xff]
    %v8183 = vld [vmem:[#allocation9 + $0x168] sm:$0xff]
    %v8184 = vld [vmem:[#allocation9 + $0x170] sm:$0xff]
    %v8185 = vld [vmem:[#allocation9 + $0x178] sm:$0xff]
    %v8186 = vpack.c.bf16 %v8107, %v7758
    %v8187 = vpack.c.bf16 %v8108, %v7759
    %v8188 = vpack.c.bf16 %v8109, %v7760
    %8189 = vmatprep.subr.bf16.mxu0 0
    %8190 = vmatpush1.bf16.msra.mxu0 %v8162
    %8191 = vmatprep.subr.bf16.mxu0 0
    %8192 = vmatpush1.bf16.msra.mxu0 %v8163
    %8193 = vmatprep.subr.bf16.mxu0 0
    %8194 = vmatpush1.bf16.msra.mxu0 %v8164
    %8195 = vmatprep.subr.bf16.mxu0 0
    %8196 = vmatpush1.bf16.msra.mxu0 %v8165
    %8197 = vmatprep.subr.bf16.mxu0 0
    %8198 = vmatpush1.bf16.msra.mxu0 %v8166
    %8199 = vmatprep.subr.bf16.mxu0 0
    %8200 = vmatpush1.bf16.msra.mxu0 %v8167
    %8201 = vmatprep.subr.bf16.mxu0 0
    %8202 = vmatpush1.bf16.msra.mxu0 %v8168
    %8203 = vmatprep.subr.bf16.mxu0 0
    %8204 = vmatpush1.bf16.msra.mxu0 %v8169
    %8205 = vmatprep.subr.bf16.mxu0 0
    %8206 = vmatpush1.bf16.msra.mxu0 %v8170
    %8207 = vmatprep.subr.bf16.mxu0 0
    %8208 = vmatpush1.bf16.msra.mxu0 %v8171
    %8209 = vmatprep.subr.bf16.mxu0 0
    %8210 = vmatpush1.bf16.msra.mxu0 %v8172
    %8211 = vmatprep.subr.bf16.mxu0 0
    %8212 = vmatpush1.bf16.msra.mxu0 %v8173
    %8213 = vmatprep.subr.bf16.mxu0 0
    %8214 = vmatpush1.bf16.msra.mxu0 %v8174
    %8215 = vmatprep.subr.bf16.mxu0 0
    %8216 = vmatpush1.bf16.msra.mxu0 %v8175
    %8217 = vmatprep.subr.bf16.mxu0 0
    %8218 = vmatpush1.bf16.msra.mxu0 %v8176
    %8219 = vmatprep.subr.bf16.mxu0 0
    %8220 = vmatpush1.bf16.msra.mxu0 %v8177
    %8221 = vmatprep.mubr.bf16.mxu0 %v8187
    %8222 = vmatmul.mubr.bf16.gmra.mrb[0].mxu0 %v8186
    %v8223 = vpop.f32.mrb[0].mxu0
    %v8224 = vadd.f32 0.0, %v8223
    %v8225 = vpop.f32.mrb[0].mxu0
    %v8226 = vpop.f32.mrb[0].mxu0
    %v8227 = vadd.f32 0.0, %v8226
    %v8228 = vpop.f32.mrb[0].mxu0
    %8229 = vdwg.mxu0
    %8230 = vmatprep.subr.bf16.mxu0 0
    %8231 = vmatpush1.bf16.msra.mxu0 %v8178
    %8232 = vmatprep.subr.bf16.mxu0 0
    %8233 = vmatpush1.bf16.msra.mxu0 %v8179
    %8234 = vmatprep.subr.bf16.mxu0 0
    %8235 = vmatpush1.bf16.msra.mxu0 %v8180
    %8236 = vmatprep.subr.bf16.mxu0 0
    %8237 = vmatpush1.bf16.msra.mxu0 %v8181
    %8238 = vmatprep.subr.bf16.mxu0 0
    %8239 = vmatpush1.bf16.msra.mxu0 %v8182
    %8240 = vmatprep.subr.bf16.mxu0 0
    %8241 = vmatpush1.bf16.msra.mxu0 %v8183
    %8242 = vmatprep.subr.bf16.mxu0 0
    %8243 = vmatpush1.bf16.msra.mxu0 %v8184
    %8244 = vmatprep.subr.bf16.mxu0 0
    %8245 = vmatpush1.bf16.msra.mxu0 %v8185
    %8246 = vmatprep.subr.bf16.mxu0 0
    %8247 = vmatpush1.bf16.msra.mxu0 0
    %8248 = vmatprep.subr.bf16.mxu0 0
    %8249 = vmatpush1.bf16.msra.mxu0 0
    %8250 = vmatprep.subr.bf16.mxu0 0
    %8251 = vmatpush1.bf16.msra.mxu0 0
    %8252 = vmatprep.subr.bf16.mxu0 0
    %8253 = vmatpush1.bf16.msra.mxu0 0
    %8254 = vmatprep.subr.bf16.mxu0 0
    %8255 = vmatpush1.bf16.msra.mxu0 0
    %8256 = vmatprep.subr.bf16.mxu0 0
    %8257 = vmatpush1.bf16.msra.mxu0 0
    %8258 = vmatprep.subr.bf16.mxu0 0
    %8259 = vmatpush1.bf16.msra.mxu0 0
    %8260 = vmatprep.subr.bf16.mxu0 0
    %8261 = vmatpush1.bf16.msra.mxu0 0
    %8262 = vmatprep.mubr.bf16.mxu0 0
    %8263 = vmatmul.mubr.bf16.gmra.mrb[0].mxu0 %v8188
    %v8264 = vpop.f32.mrb[0].mxu0
    %v8265 = vadd.f32 %v8224, %v8264
    %v8266 = vpop.f32.mrb[0].mxu0
    %v8267 = vpop.f32.mrb[0].mxu0
    %v8268 = vadd.f32 %v8227, %v8267
    %v8269 = vpop.f32.mrb[0].mxu0
    %8270 = vdwg.mxu0
    %8271 = vmatprep.subr.bf16.mxu0 0
    %8272 = vmatpush1.bf16.msra.mxu0 %v8138
    %8273 = vmatprep.subr.bf16.mxu0 0
    %8274 = vmatpush1.bf16.msra.mxu0 %v8139
    %8275 = vmatprep.subr.bf16.mxu0 0
    %8276 = vmatpush1.bf16.msra.mxu0 %v8140
    %8277 = vmatprep.subr.bf16.mxu0 0
    %8278 = vmatpush1.bf16.msra.mxu0 %v8141
    %8279 = vmatprep.subr.bf16.mxu0 0
    %8280 = vmatpush1.bf16.msra.mxu0 %v8142
    %8281 = vmatprep.subr.bf16.mxu0 0
    %8282 = vmatpush1.bf16.msra.mxu0 %v8143
    %8283 = vmatprep.subr.bf16.mxu0 0
    %8284 = vmatpush1.bf16.msra.mxu0 %v8144
    %8285 = vmatprep.subr.bf16.mxu0 0
    %8286 = vmatpush1.bf16.msra.mxu0 %v8145
    %8287 = vmatprep.subr.bf16.mxu0 0
    %8288 = vmatpush1.bf16.msra.mxu0 %v8146
    %8289 = vmatprep.subr.bf16.mxu0 0
    %8290 = vmatpush1.bf16.msra.mxu0 %v8147
    %8291 = vmatprep.subr.bf16.mxu0 0
    %8292 = vmatpush1.bf16.msra.mxu0 %v8148
    %8293 = vmatprep.subr.bf16.mxu0 0
    %8294 = vmatpush1.bf16.msra.mxu0 %v8149
    %8295 = vmatprep.subr.bf16.mxu0 0
    %8296 = vmatpush1.bf16.msra.mxu0 %v8150
    %8297 = vmatprep.subr.bf16.mxu0 0
    %8298 = vmatpush1.bf16.msra.mxu0 %v8151
    %8299 = vmatprep.subr.bf16.mxu0 0
    %8300 = vmatpush1.bf16.msra.mxu0 %v8152
    %8301 = vmatprep.subr.bf16.mxu0 0
    %8302 = vmatpush1.bf16.msra.mxu0 %v8153
    %8303 = vmatprep.mubr.bf16.mxu0 %v6690
    %8304 = vmatmul.mubr.bf16.gmra.mrb[0].mxu0 %v6689
    %v8305 = vpop.f32.mrb[0].mxu0
    %v8306 = vadd.f32 %v8265, %v8305
    %v8307 = vpop.f32.mrb[0].mxu0
    %v8308 = vpop.f32.mrb[0].mxu0
    %v8309 = vadd.f32 %v8268, %v8308
    %v8310 = vpop.f32.mrb[0].mxu0
    %8311 = vdwg.mxu0
    %8312 = vmatprep.subr.bf16.mxu0 0
    %8313 = vmatpush1.bf16.msra.mxu0 %v8154
    %8314 = vmatprep.subr.bf16.mxu0 0
    %8315 = vmatpush1.bf16.msra.mxu0 %v8155
    %8316 = vmatprep.subr.bf16.mxu0 0
    %8317 = vmatpush1.bf16.msra.mxu0 %v8156
    %8318 = vmatprep.subr.bf16.mxu0 0
    %8319 = vmatpush1.bf16.msra.mxu0 %v8157
    %8320 = vmatprep.subr.bf16.mxu0 0
    %8321 = vmatpush1.bf16.msra.mxu0 %v8158
    %8322 = vmatprep.subr.bf16.mxu0 0
    %8323 = vmatpush1.bf16.msra.mxu0 %v8159
    %8324 = vmatprep.subr.bf16.mxu0 0
    %8325 = vmatpush1.bf16.msra.mxu0 %v8160
    %8326 = vmatprep.subr.bf16.mxu0 0
    %8327 = vmatpush1.bf16.msra.mxu0 %v8161
    %8328 = vmatprep.subr.bf16.mxu0 0
    %8329 = vmatpush1.bf16.msra.mxu0 0
    %8330 = vmatprep.subr.bf16.mxu0 0
    %8331 = vmatpush1.bf16.msra.mxu0 0
    %8332 = vmatprep.subr.bf16.mxu0 0
    %8333 = vmatpush1.bf16.msra.mxu0 0
    %8334 = vmatprep.subr.bf16.mxu0 0
    %8335 = vmatpush1.bf16.msra.mxu0 0
    %8336 = vmatprep.subr.bf16.mxu0 0
    %8337 = vmatpush1.bf16.msra.mxu0 0
    %8338 = vmatprep.subr.bf16.mxu0 0
    %8339 = vmatpush1.bf16.msra.mxu0 0
    %8340 = vmatprep.subr.bf16.mxu0 0
    %8341 = vmatpush1.bf16.msra.mxu0 0
    %8342 = vmatprep.subr.bf16.mxu0 0
    %8343 = vmatpush1.bf16.msra.mxu0 0
    %8344 = vmatprep.mubr.bf16.mxu0 0
    %8345 = vmatmul.mubr.bf16.gmra.mrb[0].mxu0 %v6691
    %v8346 = vpop.f32.mrb[0].mxu0
    %v8347 = vadd.f32 %v8306, %v8346
    %v8348 = vpop.f32.mrb[0].mxu0
    %v8349 = vpop.f32.mrb[0].mxu0
    %v8350 = vadd.f32 %v8309, %v8349
    %v8351 = vpop.f32.mrb[0].mxu0
    %8352 = vdwg.mxu0
    %v8353 = vld [vmem:[#allocation9 + $0x180] sm:$0xff]
    %v8354 = vld [vmem:[#allocation9 + $0x188] sm:$0xff]
    %v8355 = vld [vmem:[#allocation9 + $0x190] sm:$0xff]
    %v8356 = vld [vmem:[#allocation9 + $0x198] sm:$0xff]
    %v8357 = vld [vmem:[#allocation9 + $0x1a0] sm:$0xff]
    %v8358 = vld [vmem:[#allocation9 + $0x1a8] sm:$0xff]
    %v8359 = vld [vmem:[#allocation9 + $0x1b0] sm:$0xff]
    %v8360 = vld [vmem:[#allocation9 + $0x1b8] sm:$0xff]
    %v8361 = vld [vmem:[#allocation9 + $0x1c0] sm:$0xff]
    %v8362 = vld [vmem:[#allocation9 + $0x1c8] sm:$0xff]
    %v8363 = vld [vmem:[#allocation9 + $0x1d0] sm:$0xff]
    %v8364 = vld [vmem:[#allocation9 + $0x1d8] sm:$0xff]
    %v8365 = vld [vmem:[#allocation9 + $0x1e0] sm:$0xff]
    %v8366 = vld [vmem:[#allocation9 + $0x1e8] sm:$0xff]
    %v8367 = vld [vmem:[#allocation9 + $0x1f0] sm:$0xff]
    %v8368 = vld [vmem:[#allocation9 + $0x1f8] sm:$0xff]
    %v8369 = vld [vmem:[#allocation9 + $0x200] sm:$0xff]
    %v8370 = vld [vmem:[#allocation9 + $0x208] sm:$0xff]
    %v8371 = vld [vmem:[#allocation9 + $0x210] sm:$0xff]
    %v8372 = vld [vmem:[#allocation9 + $0x218] sm:$0xff]
    %v8373 = vld [vmem:[#allocation9 + $0x220] sm:$0xff]
    %v8374 = vld [vmem:[#allocation9 + $0x228] sm:$0xff]
    %v8375 = vld [vmem:[#allocation9 + $0x230] sm:$0xff]
    %v8376 = vld [vmem:[#allocation9 + $0x238] sm:$0xff]
    %v8377 = vpack.c.bf16 %v8104, %v7755
    %v8378 = vpack.c.bf16 %v8105, %v7756
    %v8379 = vpack.c.bf16 %v8106, %v7757
    %8380 = vmatprep.subr.bf16.mxu0 0
    %8381 = vmatpush1.bf16.msra.mxu0 %v8353
    %8382 = vmatprep.subr.bf16.mxu0 0
    %8383 = vmatpush1.bf16.msra.mxu0 %v8354
    %8384 = vmatprep.subr.bf16.mxu0 0
    %8385 = vmatpush1.bf16.msra.mxu0 %v8355
    %8386 = vmatprep.subr.bf16.mxu0 0
    %8387 = vmatpush1.bf16.msra.mxu0 %v8356
    %8388 = vmatprep.subr.bf16.mxu0 0
    %8389 = vmatpush1.bf16.msra.mxu0 %v8357
    %8390 = vmatprep.subr.bf16.mxu0 0
    %8391 = vmatpush1.bf16.msra.mxu0 %v8358
    %8392 = vmatprep.subr.bf16.mxu0 0
    %8393 = vmatpush1.bf16.msra.mxu0 %v8359
    %8394 = vmatprep.subr.bf16.mxu0 0
    %8395 = vmatpush1.bf16.msra.mxu0 %v8360
    %8396 = vmatprep.subr.bf16.mxu0 0
    %8397 = vmatpush1.bf16.msra.mxu0 %v8361
    %8398 = vmatprep.subr.bf16.mxu0 0
    %8399 = vmatpush1.bf16.msra.mxu0 %v8362
    %8400 = vmatprep.subr.bf16.mxu0 0
    %8401 = vmatpush1.bf16.msra.mxu0 %v8363
    %8402 = vmatprep.subr.bf16.mxu0 0
    %8403 = vmatpush1.bf16.msra.mxu0 %v8364
    %8404 = vmatprep.subr.bf16.mxu0 0
    %8405 = vmatpush1.bf16.msra.mxu0 %v8365
    %8406 = vmatprep.subr.bf16.mxu0 0
    %8407 = vmatpush1.bf16.msra.mxu0 %v8366
    %8408 = vmatprep.subr.bf16.mxu0 0
    %8409 = vmatpush1.bf16.msra.mxu0 %v8367
    %8410 = vmatprep.subr.bf16.mxu0 0
    %8411 = vmatpush1.bf16.msra.mxu0 %v8368
    %8412 = vmatprep.mubr.bf16.mxu0 %v8378
    %8413 = vmatmul.mubr.bf16.gmra.mrb[0].mxu0 %v8377
    %v8414 = vpop.f32.mrb[0].mxu0
    %v8415 = vadd.f32 0.0, %v8414
    %v8416 = vpop.f32.mrb[0].mxu0
    %v8417 = vpop.f32.mrb[0].mxu0
    %v8418 = vadd.f32 0.0, %v8417
    %v8419 = vpop.f32.mrb[0].mxu0
    %8420 = vdwg.mxu0
    %8421 = vmatprep.subr.bf16.mxu0 0
    %8422 = vmatpush1.bf16.msra.mxu0 %v8369
    %8423 = vmatprep.subr.bf16.mxu0 0
    %8424 = vmatpush1.bf16.msra.mxu0 %v8370
    %8425 = vmatprep.subr.bf16.mxu0 0
    %8426 = vmatpush1.bf16.msra.mxu0 %v8371
    %8427 = vmatprep.subr.bf16.mxu0 0
    %8428 = vmatpush1.bf16.msra.mxu0 %v8372
    %8429 = vmatprep.subr.bf16.mxu0 0
    %8430 = vmatpush1.bf16.msra.mxu0 %v8373
    %8431 = vmatprep.subr.bf16.mxu0 0
    %8432 = vmatpush1.bf16.msra.mxu0 %v8374
    %8433 = vmatprep.subr.bf16.mxu0 0
    %8434 = vmatpush1.bf16.msra.mxu0 %v8375
    %8435 = vmatprep.subr.bf16.mxu0 0
    %8436 = vmatpush1.bf16.msra.mxu0 %v8376
    %8437 = vmatprep.subr.bf16.mxu0 0
    %8438 = vmatpush1.bf16.msra.mxu0 0
    %8439 = vmatprep.subr.bf16.mxu0 0
    %8440 = vmatpush1.bf16.msra.mxu0 0
    %8441 = vmatprep.subr.bf16.mxu0 0
    %8442 = vmatpush1.bf16.msra.mxu0 0
    %8443 = vmatprep.subr.bf16.mxu0 0
    %8444 = vmatpush1.bf16.msra.mxu0 0
    %8445 = vmatprep.subr.bf16.mxu0 0
    %8446 = vmatpush1.bf16.msra.mxu0 0
    %8447 = vmatprep.subr.bf16.mxu0 0
    %8448 = vmatpush1.bf16.msra.mxu0 0
    %8449 = vmatprep.subr.bf16.mxu0 0
    %8450 = vmatpush1.bf16.msra.mxu0 0
    %8451 = vmatprep.subr.bf16.mxu0 0
    %8452 = vmatpush1.bf16.msra.mxu0 0
    %8453 = vmatprep.mubr.bf16.mxu0 0
    %8454 = vmatmul.mubr.bf16.gmra.mrb[0].mxu0 %v8379
    %v8455 = vpop.f32.mrb[0].mxu0
    %v8456 = vadd.f32 %v8415, %v8455
    %v8457 = vpop.f32.mrb[0].mxu0
    %v8458 = vpop.f32.mrb[0].mxu0
    %v8459 = vadd.f32 %v8418, %v8458
    %v8460 = vpop.f32.mrb[0].mxu0
    %8461 = vdwg.mxu0
    %v8462 = vadd.f32 %v8347, %v8456
    %v8463 = vadd.f32 %v8350, %v8459
    %v8464 = vld [vmem:[#allocation9 + $0x240] sm:$0xff]
    %v8465 = vld [vmem:[#allocation9 + $0x248] sm:$0xff]
    %v8466 = vld [vmem:[#allocation9 + $0x250] sm:$0xff]
    %v8467 = vld [vmem:[#allocation9 + $0x258] sm:$0xff]
    %v8468 = vld [vmem:[#allocation9 + $0x260] sm:$0xff]
    %v8469 = vld [vmem:[#allocation9 + $0x268] sm:$0xff]
    %v8470 = vld [vmem:[#allocation9 + $0x270] sm:$0xff]
    %v8471 = vld [vmem:[#allocation9 + $0x278] sm:$0xff]
    %v8472 = vld [vmem:[#allocation9 + $0x280] sm:$0xff]
    %v8473 = vld [vmem:[#allocation9 + $0x288] sm:$0xff]
    %v8474 = vld [vmem:[#allocation9 + $0x290] sm:$0xff]
    %v8475 = vld [vmem:[#allocation9 + $0x298] sm:$0xff]
    %v8476 = vld [vmem:[#allocation9 + $0x2a0] sm:$0xff]
    %v8477 = vld [vmem:[#allocation9 + $0x2a8] sm:$0xff]
    %v8478 = vld [vmem:[#allocation9 + $0x2b0] sm:$0xff]
    %v8479 = vld [vmem:[#allocation9 + $0x2b8] sm:$0xff]
    %v8480 = vld [vmem:[#allocation9 + $0x2c0] sm:$0xff]
    %v8481 = vld [vmem:[#allocation9 + $0x2c8] sm:$0xff]
    %v8482 = vld [vmem:[#allocation9 + $0x2d0] sm:$0xff]
    %v8483 = vld [vmem:[#allocation9 + $0x2d8] sm:$0xff]
    %v8484 = vld [vmem:[#allocation9 + $0x2e0] sm:$0xff]
    %v8485 = vld [vmem:[#allocation9 + $0x2e8] sm:$0xff]
    %v8486 = vld [vmem:[#allocation9 + $0x2f0] sm:$0xff]
    %v8487 = vld [vmem:[#allocation9 + $0x2f8] sm:$0xff]
    %v8488 = vpack.c.bf16 %v8119, %v7770
    %v8489 = vpack.c.bf16 %v8126, %v7777
    %v8490 = vpack.c.bf16 %v8133, %v7784
    %8491 = vmatprep.subr.bf16.mxu0 0
    %8492 = vmatpush1.bf16.msra.mxu0 %v8464
    %8493 = vmatprep.subr.bf16.mxu0 0
    %8494 = vmatpush1.bf16.msra.mxu0 %v8465
    %8495 = vmatprep.subr.bf16.mxu0 0
    %8496 = vmatpush1.bf16.msra.mxu0 %v8466
    %8497 = vmatprep.subr.bf16.mxu0 0
    %8498 = vmatpush1.bf16.msra.mxu0 %v8467
    %8499 = vmatprep.subr.bf16.mxu0 0
    %8500 = vmatpush1.bf16.msra.mxu0 %v8468
    %8501 = vmatprep.subr.bf16.mxu0 0
    %8502 = vmatpush1.bf16.msra.mxu0 %v8469
    %8503 = vmatprep.subr.bf16.mxu0 0
    %8504 = vmatpush1.bf16.msra.mxu0 %v8470
    %8505 = vmatprep.subr.bf16.mxu0 0
    %8506 = vmatpush1.bf16.msra.mxu0 %v8471
    %8507 = vmatprep.subr.bf16.mxu0 0
    %8508 = vmatpush1.bf16.msra.mxu0 %v8472
    %8509 = vmatprep.subr.bf16.mxu0 0
    %8510 = vmatpush1.bf16.msra.mxu0 %v8473
    %8511 = vmatprep.subr.bf16.mxu0 0
    %8512 = vmatpush1.bf16.msra.mxu0 %v8474
    %8513 = vmatprep.subr.bf16.mxu0 0
    %8514 = vmatpush1.bf16.msra.mxu0 %v8475
    %8515 = vmatprep.subr.bf16.mxu0 0
    %8516 = vmatpush1.bf16.msra.mxu0 %v8476
    %8517 = vmatprep.subr.bf16.mxu0 0
    %8518 = vmatpush1.bf16.msra.mxu0 %v8477
    %8519 = vmatprep.subr.bf16.mxu0 0
    %8520 = vmatpush1.bf16.msra.mxu0 %v8478
    %8521 = vmatprep.subr.bf16.mxu0 0
    %8522 = vmatpush1.bf16.msra.mxu0 %v8479
    %8523 = vmatprep.mubr.bf16.mxu0 %v8489
    %8524 = vmatmul.mubr.bf16.gmra.mrb[0].mxu0 %v8488
    %v8525 = vpop.f32.mrb[0].mxu0
    %v8526 = vadd.f32 0.0, %v8525
    %v8527 = vpop.f32.mrb[0].mxu0
    %v8528 = vpop.f32.mrb[0].mxu0
    %v8529 = vadd.f32 0.0, %v8528
    %v8530 = vpop.f32.mrb[0].mxu0
    %8531 = vdwg.mxu0
    %8532 = vmatprep.subr.bf16.mxu0 0
    %8533 = vmatpush1.bf16.msra.mxu0 %v8480
    %8534 = vmatprep.subr.bf16.mxu0 0
    %8535 = vmatpush1.bf16.msra.mxu0 %v8481
    %8536 = vmatprep.subr.bf16.mxu0 0
    %8537 = vmatpush1.bf16.msra.mxu0 %v8482
    %8538 = vmatprep.subr.bf16.mxu0 0
    %8539 = vmatpush1.bf16.msra.mxu0 %v8483
    %8540 = vmatprep.subr.bf16.mxu0 0
    %8541 = vmatpush1.bf16.msra.mxu0 %v8484
    %8542 = vmatprep.subr.bf16.mxu0 0
    %8543 = vmatpush1.bf16.msra.mxu0 %v8485
    %8544 = vmatprep.subr.bf16.mxu0 0
    %8545 = vmatpush1.bf16.msra.mxu0 %v8486
    %8546 = vmatprep.subr.bf16.mxu0 0
    %8547 = vmatpush1.bf16.msra.mxu0 %v8487
    %8548 = vmatprep.subr.bf16.mxu0 0
    %8549 = vmatpush1.bf16.msra.mxu0 0
    %8550 = vmatprep.subr.bf16.mxu0 0
    %8551 = vmatpush1.bf16.msra.mxu0 0
    %8552 = vmatprep.subr.bf16.mxu0 0
    %8553 = vmatpush1.bf16.msra.mxu0 0
    %8554 = vmatprep.subr.bf16.mxu0 0
    %8555 = vmatpush1.bf16.msra.mxu0 0
    %8556 = vmatprep.subr.bf16.mxu0 0
    %8557 = vmatpush1.bf16.msra.mxu0 0
    %8558 = vmatprep.subr.bf16.mxu0 0
    %8559 = vmatpush1.bf16.msra.mxu0 0
    %8560 = vmatprep.subr.bf16.mxu0 0
    %8561 = vmatpush1.bf16.msra.mxu0 0
    %8562 = vmatprep.subr.bf16.mxu0 0
    %8563 = vmatpush1.bf16.msra.mxu0 0
    %8564 = vmatprep.mubr.bf16.mxu0 0
    %8565 = vmatmul.mubr.bf16.gmra.mrb[0].mxu0 %v8490
    %v8566 = vpop.f32.mrb[0].mxu0
    %v8567 = vadd.f32 %v8526, %v8566
    %v8568 = vpop.f32.mrb[0].mxu0
    %v8569 = vpop.f32.mrb[0].mxu0
    %v8570 = vadd.f32 %v8529, %v8569
    %v8571 = vpop.f32.mrb[0].mxu0
    %8572 = vdwg.mxu0
    %v8573 = vadd.f32 %v8462, %v8567
    %v8574 = vadd.f32 %v8463, %v8570
    %v8575 = vld [vmem:[#allocation44] sm:$0x1]
    %v8577 = vlaneseq
    %v8578 = vshrl.u32 %v8577, 7
    %v8579 = vsub.s32 0, %v8578
    %v8580 = vrot.slane %v8575, %v8579
    %v8582 = vadd.f32 %v8573, %v8580
    %v8583 = vadd.f32 %v8574, %v8580
    %v8584 = vmul.f32 %v8582, 2.828427
    %v8585 = vmul.f32 %v8583, 2.828427
    %vm8586 = vcmask 130048
    %v8587 = vsel %vm8586, %v8584, 0.0
    %v8588 = vsel %vm8586, %v8585, 0.0
    %v8589 = vadd.f32 %v8587, %v8588
    %v8590 = vrot.slane %v8589, 4
    %v8591 = vadd.f32 %v8589, %v8590
    %v8592 = vrot.slane %v8591, 2
    %v8593 = vadd.f32 %v8591, %v8592
    %v8594 = vrot.slane %v8593, 1
    %v8595 = vadd.f32 %v8593, %v8594
    %v8596 = vmul.f32 %v8595, %v2533
    %v8597 = vmul.f32 %v8584, %v8584
    %v8598 = vmul.f32 %v8585, %v8585
    %v8599 = vsel %vm8586, %v8597, 0.0
    %v8600 = vsel %vm8586, %v8598, 0.0
    %v8601 = vadd.f32 %v8599, %v8600
    %v8602 = vrot.slane %v8601, 4
    %v8603 = vadd.f32 %v8601, %v8602
    %v8604 = vrot.slane %v8603, 2
    %v8605 = vadd.f32 %v8603, %v8604
    %v8606 = vrot.slane %v8605, 1
    %v8607 = vadd.f32 %v8605, %v8606
    %v8608 = vmul.f32 %v8607, %v2533
    %v8609 = vmul.f32 %v8596, %v8596
    %v8610 = vsub.f32 %v8608, %v8609
    %v8611 = vmax.f32 %v8610, 0.0
    %v8612 = vld [vmem:[#allocation46] sm:$0x1]
    %v8613 = vadd.f32 %v8611, 1e-05
    %v8614 = vrsqrt.pop %v8613
    %v8615 = vmul.f32 %v8612, %v8614
    %v8616 = vld [vmem:[#allocation47] sm:$0x1]
    %v8617 = vmul.f32 %v8596, %v8615
    %v8618 = vsub.f32 %v8616, %v8617
    %v8620 = vlaneseq
    %v8621 = vshrl.u32 %v8620, 7
    %v8622 = vsub.s32 0, %v8621
    %v8623 = vrot.slane %v8615, %v8622
    %v8625 = vmul.f32 %v8584, %v8623
    %v8626 = vmul.f32 %v8585, %v8623
    %v8628 = vlaneseq
    %v8629 = vshrl.u32 %v8628, 7
    %v8630 = vsub.s32 0, %v8629
    %v8631 = vrot.slane %v8618, %v8630
    %v8633 = vadd.f32 %v8625, %v8631
    %v8634 = vadd.f32 %v8626, %v8631
    %v8635 = vld [vmem:[#allocation49] sm:$0xff]
    %v8636 = vld [vmem:[#allocation49 + $0x8] sm:$0xff]
    %v8637 = vld [vmem:[#allocation50] sm:$0x1]
    %v8639 = vlaneseq
    %v8640 = vshrl.u32 %v8639, 7
    %v8641 = vsub.s32 0, %v8640
    %v8642 = vrot.slane %v8637, %v8641
    %v8645 = vsel %vm8586, %v8633, 0
    %v8648 = vsel %vm8586, %v8634, 0
    %8650 = vmatprep.subr.mxu0 0.0
    %8651 = vmatpush1.msra.mxu0 %v8635
    %8652 = vmatprep.subr.mxu0 0.0
    %8653 = vmatpush1.msra.mxu0 %v8636
    %8654 = vmatprep.subr.mxu0 0.0
    %8655 = vmatpush1.msra.mxu0 0.0
    %8656 = vmatprep.subr.mxu0 0.0
    %8657 = vmatpush1.msra.mxu0 0.0
    %8658 = vmatprep.subr.mxu0 0.0
    %8659 = vmatpush1.msra.mxu0 0.0
    %8660 = vmatprep.subr.mxu0 0.0
    %8661 = vmatpush1.msra.mxu0 0.0
    %8662 = vmatprep.subr.mxu0 0.0
    %8663 = vmatpush1.msra.mxu0 0.0
    %8664 = vmatprep.subr.mxu0 0.0
    %8665 = vmatpush1.msra.mxu0 0.0
    %8666 = vmatprep.subr.mxu0 0.0
    %8667 = vmatpush1.msra.mxu0 0.0
    %8668 = vmatprep.subr.mxu0 0.0
    %8669 = vmatpush1.msra.mxu0 0.0
    %8670 = vmatprep.subr.mxu0 0.0
    %8671 = vmatpush1.msra.mxu0 0.0
    %8672 = vmatprep.subr.mxu0 0.0
    %8673 = vmatpush1.msra.mxu0 0.0
    %8674 = vmatprep.subr.mxu0 0.0
    %8675 = vmatpush1.msra.mxu0 0.0
    %8676 = vmatprep.subr.mxu0 0.0
    %8677 = vmatpush1.msra.mxu0 0.0
    %8678 = vmatprep.subr.mxu0 0.0
    %8679 = vmatpush1.msra.mxu0 0.0
    %8680 = vmatprep.subr.mxu0 0.0
    %8681 = vmatpush1.msra.mxu0 0.0
    %8682 = vmatprep.subr.mxu0 0.0
    %8683 = vmatpush1.msra.mxu0 0.0
    %8684 = vmatprep.subr.mxu0 0.0
    %8685 = vmatpush1.msra.mxu0 0.0
    %8686 = vmatprep.subr.mxu0 0.0
    %8687 = vmatpush1.msra.mxu0 0.0
    %8688 = vmatprep.subr.mxu0 0.0
    %8689 = vmatpush1.msra.mxu0 0.0
    %8690 = vmatprep.subr.mxu0 0.0
    %8691 = vmatpush1.msra.mxu0 0.0
    %8692 = vmatprep.subr.mxu0 0.0
    %8693 = vmatpush1.msra.mxu0 0.0
    %8694 = vmatprep.subr.mxu0 0.0
    %8695 = vmatpush1.msra.mxu0 0.0
    %8696 = vmatprep.subr.mxu0 0.0
    %8697 = vmatpush1.msra.mxu0 0.0
    %8698 = vmatprep.subr.mxu0 0.0
    %8699 = vmatpush1.msra.mxu0 0.0
    %8700 = vmatprep.subr.mxu0 0.0
    %8701 = vmatpush1.msra.mxu0 0.0
    %8702 = vmatprep.subr.mxu0 0.0
    %8703 = vmatpush1.msra.mxu0 0.0
    %8704 = vmatprep.subr.mxu0 0.0
    %8705 = vmatpush1.msra.mxu0 0.0
    %8706 = vmatprep.subr.mxu0 0.0
    %8707 = vmatpush1.msra.mxu0 0.0
    %8708 = vmatprep.subr.mxu0 0.0
    %8709 = vmatpush1.msra.mxu0 0.0
    %8710 = vmatprep.subr.mxu0 0.0
    %8711 = vmatpush1.msra.mxu0 0.0
    %8712 = vmatprep.subr.mxu0 0.0
    %8713 = vmatpush1.msra.mxu0 0.0
    %8714 = vmatprep.mubr.f32.mxu0 0.0
    %8715 = vmatmul.mubr.f32.gmra.mrb[0].mxu0 %v8645
    %v8716 = vpop.f32.mrb[0].mxu0
    %v8717 = vadd.f32 %v8642, %v8716
    %v8718 = vpop.f32.mrb[0].mxu0
    %8719 = vmatprep.mubr.f32.mxu0 0.0
    %8720 = vmatmul.mubr.f32.gmra.mrb[0].mxu0 %v8648
    %v8721 = vpop.f32.mrb[0].mxu0
    %v8722 = vadd.f32 %v8642, %v8721
    %v8723 = vpop.f32.mrb[0].mxu0
    %8724 = vdwg.mxu0
    %vm8725 = vcmp.gt.f32.partialorder %v8717, 0.0
    %vm8726 = vcmp.gt.f32.partialorder %v8722, 0.0
    %v8727 = vmul.f32 %v8717, 0.01
    %v8728 = vmul.f32 %v8722, 0.01
    %v8729 = vsel %vm8725, %v8717, %v8727
    %v8730 = vsel %vm8726, %v8722, %v8728
    %v8731 = vld [vmem:[#allocation11] sm:$0xff]
    %v8732 = vld [vmem:[#allocation11 + $0x8] sm:$0xff]
    %vm8733 = vcmp.eq.f32.partialorder %v8731, 0.0
    %vm8734 = vcmp.eq.f32.partialorder %v8732, 0.0
    %v8735 = vsel %vm8733, -100000.0, %v8729
    %v8736 = vsel %vm8734, -100000.0, %v8730
    %v8737 = vsel %vm8586, %v8735, -inf
    %8738 = vmax.xlane.f32.xlu0 %v8737
    %v8739 = vpop.xlane.xlu0 %8738
    %v8740 = vsel %vm8586, %v8736, -inf
    %8741 = vmax.xlane.f32.xlu0 %v8740
    %v8742 = vpop.xlane.xlu0 %8741
    %v8743 = vrot.slane %v8739, 4
    %v8744 = vmax.f32 %v8739, %v8743
    %v8745 = vrot.slane %v8744, 2
    %v8746 = vmax.f32 %v8744, %v8745
    %v8747 = vrot.slane %v8746, 1
    %v8748 = vmax.f32 %v8746, %v8747
    %v8749 = vrot.slane %v8742, 4
    %v8750 = vmax.f32 %v8742, %v8749
    %v8751 = vrot.slane %v8750, 2
    %v8752 = vmax.f32 %v8750, %v8751
    %v8753 = vrot.slane %v8752, 1
    %v8754 = vmax.f32 %v8752, %v8753
    %v8755 = vsub.f32 %v8735, %v8748
    %v8756 = vsub.f32 %v8736, %v8754
    %v8757 = vmul.f32 %v8755, 1.442695
    %v8758 = vpow.pop %v8757
    %v8759 = vmul.f32 %v8756, 1.442695
    %v8760 = vpow.pop %v8759
    %v8761 = vsel %vm8586, %v8758, 0.0
    %8762 = vadd.xlane.f32.xlu0 %v8761
    %v8763 = vpop.xlane.xlu0 %8762
    %v8764 = vsel %vm8586, %v8760, 0.0
    %8765 = vadd.xlane.f32.xlu0 %v8764
    %v8766 = vpop.xlane.xlu0 %8765
    %v8767 = vrot.slane %v8763, 4
    %v8768 = vadd.f32 %v8763, %v8767
    %v8769 = vrot.slane %v8768, 2
    %v8770 = vadd.f32 %v8768, %v8769
    %v8771 = vrot.slane %v8770, 1
    %v8772 = vadd.f32 %v8770, %v8771
    %v8773 = vrot.slane %v8766, 4
    %v8774 = vadd.f32 %v8766, %v8773
    %v8775 = vrot.slane %v8774, 2
    %v8776 = vadd.f32 %v8774, %v8775
    %v8777 = vrot.slane %v8776, 1
    %v8778 = vadd.f32 %v8776, %v8777
    %v8779 = vrcp.pop %v8772
    %v8780 = vrcp.pop %v8778
    %v8781 = vmul.f32 %v8758, %v8779
    %v8782 = vmul.f32 %v8760, %v8780
    %8783 = vst.msk [vmem:[#allocation52] sm:$0xff] %vm8586, %v8781
    %8784 = vst.msk [vmem:[#allocation52 + $0x8] sm:$0xff] %vm8586, %v8782
    // Predicated region
    $region260: #{tpu_custom_call.1} parent=1 // pred_check
      _
    $region261: #{tpu_custom_call.1} parent=1 // pred_check_branch
      %8786 = sbr.rel (0) target = $region263
    $region262: #{tpu_custom_call.1} parent=1 // pred_region
      %s8788 = ssub.s32 256, 256
      %8789 = vsyncadd [#allocation13], %s8788
      %s8790 = sshll.u32 [#allocation52], 4
      %s8791 = int_to_ptr.vmem [resolvable:$true] %s8790
      %8796 = dma.vmem_to_hbm [thread:$0]  %s8791, 256, %s77, [#allocation13], 128, 128, 8
    $region263: #{tpu_custom_call.1} parent=1 // pred_fallthru
      _
    // Predicated region
    $region264: #{tpu_custom_call.1} parent=1 // pred_check
      _
    $region265: #{tpu_custom_call.1} parent=1 // pred_check_branch
      %8798 = sbr.rel (0) target = $region267
    $region266: #{tpu_custom_call.1} parent=1 // pred_region
      %8799 = dma.done [#allocation13], 256
    $region267: #{tpu_custom_call.1} parent=1 // pred_fallthru
      _
    %8800 = vsyncpa [#allocation12], 1
    %8801 = vsyncpa [#allocation15], 1
    %8802 = vsyncpa [#allocation18], 1
    %8803 = vsyncpa [#allocation21], 1
    %8804 = vsyncpa [#allocation24], 1
    %8805 = vsyncpa [#allocation27], 1
    %8806 = vsyncpa [#allocation30], 1
    %8807 = vsyncpa [#allocation33], 1
    %8808 = vsyncpa [#allocation36], 1
    %8809 = vsyncpa [#allocation39], 1
    %8810 = vsyncpa [#allocation42], 1
    %8811 = vsyncpa [#allocation45], 1
    %8812 = vsyncpa [#allocation48], 1
    %8813 = vsyncpa [#allocation51], 1
    %8814 = vsyncpa [#allocation13], 1
  %8815 = vsyncmov [#allocation10]
  %s8816 = vpop.sfrf %8815
  %p8817 = scmp.eq.s32.totalorder %s8816, 0
  %p8818 = pneg %p8817
  %8820 = shalt.err (%p8818)
  %s8821 = scalar_lea.sflag [#allocation10], 1
  %8822 = vsyncmov %s8821
  %s8823 = vpop.sfrf %8822
  %p8824 = scmp.eq.s32.totalorder %s8823, 0
  %p8825 = pneg %p8824
  %8827 = shalt.err (%p8825)
  %s8828 = scalar_lea.sflag [#allocation10], 2
  %8829 = vsyncmov %s8828
  %s8830 = vpop.sfrf %8829
  %p8831 = scmp.eq.s32.totalorder %s8830, 0
  %p8832 = pneg %p8831
  %8834 = shalt.err (%p8832)
  %s8835 = scalar_lea.sflag [#allocation10], 3
  %8836 = vsyncmov %s8835
  %s8837 = vpop.sfrf %8836
  %p8838 = scmp.eq.s32.totalorder %s8837, 0
  %p8839 = pneg %p8838
  %8841 = shalt.err (%p8839)
  %s8842 = scalar_lea.sflag [#allocation10], 4
  %8843 = vsyncmov %s8842
  %s8844 = vpop.sfrf %8843
  %p8845 = scmp.eq.s32.totalorder %s8844, 0
  %p8846 = pneg %p8845
  %8848 = shalt.err (%p8846)
  %s8849 = scalar_lea.sflag [#allocation10], 5
  %8850 = vsyncmov %s8849
  %s8851 = vpop.sfrf %8850
  %p8852 = scmp.eq.s32.totalorder %s8851, 0
  %p8853 = pneg %p8852
  %8855 = shalt.err (%p8853)
  %s8856 = scalar_lea.sflag [#allocation10], 6
  %8857 = vsyncmov %s8856
  %s8858 = vpop.sfrf %8857
  %p8859 = scmp.eq.s32.totalorder %s8858, 0
  %p8860 = pneg %p8859
  %8862 = shalt.err (%p8860)
  %s8863 = scalar_lea.sflag [#allocation10], 7
  %8864 = vsyncmov %s8863
  %s8865 = vpop.sfrf %8864
  %p8866 = scmp.eq.s32.totalorder %s8865, 0
  %p8867 = pneg %p8866
  %8869 = shalt.err (%p8867)

</llo_original>
